<compile_context>
chip_gen: v6e
topology: v6e:2x2x1
jax: 0.10.0
libtpu: 0.0.40
codegen_flags: <defaults>
</compile_context>

<pallas_src>
import functools

import jax
import jax.numpy as jnp
from jax.experimental import pallas as pl
from jax.experimental.pallas import tpu as pltpu


# ---------------------------------------------------------------------------
# Pallas kernels
# ---------------------------------------------------------------------------
def _conv_stats_kernel(fuse_input_bn_relu, use_mxu, x_ref, *rest):
    """3x3 conv (pad=1, no bias) on one whole image + per-image partial BN stats.

    x_ref   : (1, Hp, Wp, Cin)      input image (raw prev-layer conv output or pooled x)
    [scale_ref, shift_ref : (1, Cin) f32]   present iff fuse_input_bn_relu
    w_ref   : (9, Cin, Cout)        conv taps, order k = ky*3 + kx
    y_ref   : (1, Hp*Wp, Cout)      raw (pre-BN) conv output, bf16
    stat_ref: (1, 2, Cout)  f32     per-image partial stats [sum ; sum((y-mu_tile)^2)]
    pad_ref : VMEM (Hp+2, Wp+2, Cin) scratch for the zero-padded (halo'd) activated tile
    """
    if fuse_input_bn_relu:
        in_scale_ref, in_shift_ref, w_ref, y_ref, stat_ref, pad_ref = rest
    else:
        w_ref, y_ref, stat_ref, pad_ref = rest
        in_scale_ref = in_shift_ref = None

    _, hp, wp, cin = x_ref.shape
    cout = w_ref.shape[2]

    x = x_ref[0].astype(jnp.float32)                     # (hp, wp, cin)
    if fuse_input_bn_relu:
        # Previous layer's BatchNorm + ReLU fused into this conv's input path (f32).
        x = jnp.maximum(x * in_scale_ref[...] + in_shift_ref[...], 0.0)

    # Zero-padded halo tile in VMEM scratch.  Conv padding=1 zero-pads the *activated*
    # map, so padding must happen after the fused BN/ReLU (never in the wrapper / HBM).
    pad_ref[...] = jnp.zeros_like(pad_ref)
    pad_ref[1:hp + 1, 1:wp + 1, :] = x.astype(pad_ref.dtype)

    acc = jnp.zeros((hp * wp, cout), jnp.float32)
    if use_mxu:
        # 9 accumulated per-tap MXU dots (no concat-im2col relayout).
        # TODO(synk): for Cin/Cout >= 128, pad K/N toward 128 (256 on v6e/v7x).
        for k in range(9):
            ky, kx = divmod(k, 3)
            tap = pad_ref[ky:ky + hp, kx:kx + wp, :].reshape(hp * wp, cin)
            acc = acc + jnp.dot(tap, w_ref[k], preferred_element_type=jnp.float32)
    else:
        # Tiny channel counts: 9*Cin broadcast FMAs on the VPU (the MXU would idle at
        # K=Cin, N=Cout and its issue/drain overhead would dominate).
        for k in range(9):
            ky, kx = divmod(k, 3)
            tap = pad_ref[ky:ky + hp, kx:kx + wp, :].reshape(hp * wp, cin)
            w_k = w_ref[k]
            for ci in range(cin):
                acc = acc + tap[:, ci:ci + 1] * w_k[ci:ci + 1, :]

    # bf16 intermediate store (halves HBM traffic for the raw conv output).
    # TODO(synk): for production channel counts, also make this store lane-dense
    # ((rows, W*Cout) with W*Cout >= 128) or pad Cout toward 128; at this config the
    # whole per-image tile is under one vreg row so the masked store is negligible.
    y_ref[0] = acc.astype(y_ref.dtype)

    # Per-image, mean-shifted partial stats (Chan-combined in the wrapper).  Keeps the
    # grid axis "parallel" (v7x megacore) and avoids E[x^2]-E[x]^2 cancellation.
    inv_n = 1.0 / float(hp * wp)
    s = jnp.sum(acc, axis=0, keepdims=True)              # (1, cout)
    d = acc - s * inv_n
    m2 = jnp.sum(d * d, axis=0, keepdims=True)           # (1, cout)
    stat_ref[0] = jnp.concatenate([s, m2], axis=0)       # (2, cout)


def _bn_relu_kernel(y_ref, scale_ref, shift_ref, o_ref):
    """Final BN + ReLU: out = relu(y * scale + shift), one image per grid step."""
    y = y_ref[0].astype(jnp.float32)                      # (Hp*Wp, Cout)
    o_ref[0] = jnp.maximum(y * scale_ref[...] + shift_ref[...], 0.0)


# ---------------------------------------------------------------------------
# Wrappers around the pallas_calls
# ---------------------------------------------------------------------------
_VMEM_LIMIT = 32 * 1024 * 1024  # explicit scoped-VMEM budget (safe on v5e/v6e/v7x)


def conv_stats_pass(x4d, w_taps, in_scale=None, in_shift=None,
                    *, out_dtype=jnp.bfloat16):
    """One Conv3x3 pass over (B, Hp, Wp, Cin) -> ((B, Hp*Wp, Cout) raw y, (B,2,Cout) stats)."""
    B, Hp, Wp, Cin = x4d.shape
    Cout = w_taps.shape[2]
    fuse = in_scale is not None
    use_mxu = (Cin * Cout) >= 1024          # tiny channels stay on the VPU
    pad_dtype = jnp.bfloat16 if use_mxu else jnp.float32

    # Whole image per grid step: after the 2x2 pool these maps are tiny.
    # TODO(synk): for large feature maps, row-tile with a manual halo DMA
    # (memory_space=pl.ANY + pltpu.make_async_copy) instead of whole-image tiles.
    tile_bytes = ((Hp + 2) * (Wp + 2) * Cin + 2 * Hp * Wp * Cout) * 4
    assert tile_bytes < 8 * 1024 * 1024, "per-image tile too large; row-tile with halo DMA"

    kern = functools.partial(_conv_stats_kernel, fuse, use_mxu)

    in_specs = [pl.BlockSpec((1, Hp, Wp, Cin), lambda b: (b, 0, 0, 0))]
    args = [x4d]
    if fuse:
        in_specs += [pl.BlockSpec((1, Cin), lambda b: (0, 0)),
                     pl.BlockSpec((1, Cin), lambda b: (0, 0))]
        args += [in_scale.reshape(1, Cin).astype(jnp.float32),
                 in_shift.reshape(1, Cin).astype(jnp.float32)]
    in_specs += [pl.BlockSpec((9, Cin, Cout), lambda b: (0, 0, 0))]
    args += [w_taps.astype(jnp.bfloat16 if use_mxu else jnp.float32)]

    y, stats = pl.pallas_call(
        kern,
        out_shape=(jax.ShapeDtypeStruct((B, Hp * Wp, Cout), out_dtype),
                   jax.ShapeDtypeStruct((B, 2, Cout), jnp.float32)),
        grid=(B,),
        in_specs=in_specs,
        out_specs=(pl.BlockSpec((1, Hp * Wp, Cout), lambda b: (b, 0, 0)),
                   pl.BlockSpec((1, 2, Cout), lambda b: (b, 0, 0))),
        scratch_shapes=[pltpu.VMEM((Hp + 2, Wp + 2, Cin), pad_dtype)],
        compiler_params=pltpu.CompilerParams(
            dimension_semantics=("parallel",),          # partial stats -> safe to parallelize
            vmem_limit_bytes=_VMEM_LIMIT),
    )(*args)
    return y, stats


def bn_relu_pass(y, scale, shift):
    B, N, C = y.shape
    return pl.pallas_call(
        _bn_relu_kernel,
        out_shape=jax.ShapeDtypeStruct((B, N, C), jnp.float32),
        grid=(B,),
        in_specs=[pl.BlockSpec((1, N, C), lambda b: (b, 0, 0)),
                  pl.BlockSpec((1, C), lambda b: (0, 0)),
                  pl.BlockSpec((1, C), lambda b: (0, 0))],
        out_specs=pl.BlockSpec((1, N, C), lambda b: (b, 0, 0)),
        compiler_params=pltpu.CompilerParams(
            dimension_semantics=("parallel",),
            vmem_limit_bytes=_VMEM_LIMIT),
    )(y, scale.reshape(1, C).astype(jnp.float32), shift.reshape(1, C).astype(jnp.float32))


def _finalize_bn(stats, n_per_tile, gamma, beta, eps=1e-5):
    """Chan-combine per-tile [sum, M2] partials -> BN scale/shift (biased variance)."""
    s = stats[:, 0, :]                                   # (T, C) per-tile sums
    m2 = stats[:, 1, :]                                  # (T, C) per-tile sum((y-mu_t)^2)
    n_total = n_per_tile * stats.shape[0]
    mean = jnp.sum(s, axis=0) / n_total
    mu_t = s / n_per_tile
    var = (jnp.sum(m2, axis=0)
           + n_per_tile * jnp.sum((mu_t - mean) ** 2, axis=0)) / n_total
    var = jnp.maximum(var, 0.0)
    scale = gamma.reshape(-1) * jax.lax.rsqrt(var + eps)
    shift = beta.reshape(-1) - mean * scale
    return scale, shift


# ---------------------------------------------------------------------------
# DownScale forward:  NCHW in -> NCHW out (spatial / 2, channels = out_channels)
# ---------------------------------------------------------------------------
def downscale_forward(x_nchw, params, eps=1e-5):
    x = jnp.transpose(x_nchw, (0, 2, 3, 1))              # NCHW -> NHWC
    B, H, W, Cin = x.shape
    Hp, Wp = H // 2, W // 2

    # 2x2 max-pool in plain jnp; XLA fuses it with the bf16 cast feeding conv1.
    p = jnp.max(x.reshape(B, Hp, 2, Wp, 2, Cin), axis=(2, 4)).astype(jnp.bfloat16)

    # Layer 1: conv3x3 + per-image partial BN stats (raw pre-BN output kept bf16).
    y1, st1 = conv_stats_pass(p, params["w1"])
    scale1, shift1 = _finalize_bn(st1, Hp * Wp, params["g1"], params["b1"], eps)

    # Layer 2: BN1 + ReLU fused into the conv input path (saves a full HBM pass over y1).
    y1_4d = y1.reshape(B, Hp, Wp, -1)                    # metadata-only reshape
    y2, st2 = conv_stats_pass(y1_4d, params["w2"], scale1, shift1)
    scale2, shift2 = _finalize_bn(st2, Hp * Wp, params["g2"], params["b2"], eps)

    # Final BN2 + ReLU.
    out = bn_relu_pass(y2, scale2, shift2)               # (B, Hp*Wp, Cout) f32
    out = out.reshape(B, Hp, Wp, -1)
    # TODO(synk): if the consumer accepts NHWC, drop this transpose (extra HBM pass);
    # folding it into the BN kernel needs an in-kernel minor-dim transpose, avoided
    # here for lowering robustness.
    return jnp.transpose(out, (0, 3, 1, 2))              # NHWC -> NCHW


def torch_conv_weight_to_taps(w_oihw):
    # (Cout, Cin, 3, 3) -> (9, Cin, Cout), tap order k = ky*3 + kx.
    cout, cin = w_oihw.shape[0], w_oihw.shape[1]
    return jnp.transpose(w_oihw, (2, 3, 1, 0)).reshape(9, cin, cout)


# ---------------------------------------------------------------------------
# Pure-JAX reference (PyTorch training-mode BN semantics) for a sanity check
# ---------------------------------------------------------------------------
def _reference_forward(x_nchw, w1_oihw, w2_oihw, eps=1e-5):
    x = jnp.transpose(x_nchw, (0, 2, 3, 1))
    B, H, W, C = x.shape
    p = jnp.max(x.reshape(B, H // 2, 2, W // 2, 2, C), axis=(2, 4))

    def block(inp, w_oihw):
        y = jax.lax.conv_general_dilated(
            inp, jnp.transpose(w_oihw, (2, 3, 1, 0)),
            window_strides=(1, 1), padding="SAME",
            dimension_numbers=("NHWC", "HWIO", "NHWC"))
        mean = jnp.mean(y, axis=(0, 1, 2))
        var = jnp.mean((y - mean) ** 2, axis=(0, 1, 2))
        return jnp.maximum((y - mean) * jax.lax.rsqrt(var + eps), 0.0)

    y1 = block(p, w1_oihw)
    y2 = block(y1, w2_oihw)
    return jnp.transpose(y2, (0, 3, 1, 2))


# ---------------------------------------------------------------------------
if __name__ == "__main__":
    B, Cin, H, W = 2, 4, 16, 16
    Cout = 8
    Cmid = Cout  # mid_channels defaults to out_channels

    key = jax.random.PRNGKey(0)
    kx_, kw1, kw2 = jax.random.split(key, 3)
    x = jax.random.normal(kx_, (B, Cin, H, W), dtype=jnp.float32)

    # Deterministic synthetic parameters (shapes follow nn.Conv2d / nn.BatchNorm2d).
    w1_t = jax.random.normal(kw1, (Cmid, Cin, 3, 3), dtype=jnp.float32) * 0.1
    w2_t = jax.random.normal(kw2, (Cout, Cmid, 3, 3), dtype=jnp.float32) * 0.1
    params = {
        "w1": torch_conv_weight_to_taps(w1_t),
        "g1": jnp.ones((Cmid,), jnp.float32),
        "b1": jnp.zeros((Cmid,), jnp.float32),
        "w2": torch_conv_weight_to_taps(w2_t),
        "g2": jnp.ones((Cout,), jnp.float32),
        "b2": jnp.zeros((Cout,), jnp.float32),
    }

    out = jax.jit(downscale_forward)(x, params)
    jax.block_until_ready(out)

    assert out.shape == (B, Cout, H // 2, W // 2), out.shape
    assert out.dtype == jnp.float32

    ref = _reference_forward(x, w1_t, w2_t)
    max_err = float(jnp.max(jnp.abs(out - ref)))
    # Tolerance accounts for bf16 conv inputs AND bf16 pre-BN intermediates (vs f32 ref).
    assert max_err < 8e-2, f"max abs error vs reference: {max_err}"

    print("KERNEL_OK")
</pallas_src>

<mosaic_0001>
module attributes {stable_mosaic.version = 11 : i64} {
  func.func @_conv_stats_kernel(%arg0: i32, %arg1: memref<1x8x8x4xbf16, #tpu.memory_space<vmem>>, %arg2: memref<9x4x8xf32, #tpu.memory_space<vmem>>, %arg3: memref<1x64x8xbf16, #tpu.memory_space<vmem>>, %arg4: memref<1x2x8xf32, #tpu.memory_space<vmem>>, %arg5: memref<10x10x4xf32, #tpu.memory_space<vmem>>) attributes {dimension_semantics = [#tpu.dimension_semantics<parallel>], iteration_bounds = array<i64: 2>, scalar_prefetch = 0 : i64, scratch_operands = 1 : i64, tpu.core_type = #tpu.core_type<tc>, window_params = [{transform_indices = @transform_0, window_bounds = array<i64: 1, 8, 8, 4>}, {pipeline_mode = #tpu.pipeline_mode<synchronous>, transform_indices = @transform_1, window_bounds = array<i64: 9, 4, 8>}, {transform_indices = @transform_2, window_bounds = array<i64: 1, 64, 8>}, {transform_indices = @transform_3, window_bounds = array<i64: 1, 2, 8>}]} {
    %c0 = arith.constant 0 : index
    %c0_0 = arith.constant 0 : index
    %c0_1 = arith.constant 0 : index
    %c0_2 = arith.constant 0 : index
    %0 = vector.load %arg1[%c0, %c0_0, %c0_1, %c0_2] : memref<1x8x8x4xbf16, #tpu.memory_space<vmem>>, vector<1x8x8x4xbf16>
    %1 = vector.shape_cast %0 : vector<1x8x8x4xbf16> to vector<8x8x4xbf16>
    %2 = arith.extf %1 : vector<8x8x4xbf16> to vector<8x8x4xf32>
    %cst = arith.constant 0.000000e+00 : f32
    %3 = vector.broadcast %cst : f32 to vector<10x10x4xf32>
    %c0_3 = arith.constant 0 : index
    %c0_4 = arith.constant 0 : index
    %c0_5 = arith.constant 0 : index
    %4 = vector.load %arg5[%c0_3, %c0_4, %c0_5] : memref<10x10x4xf32, #tpu.memory_space<vmem>>, vector<10x10x4xf32>
    tpu.vector_store %arg5[%c0_3, %c0_4, %c0_5], %3 {strides = array<i32>} : memref<10x10x4xf32, #tpu.memory_space<vmem>>, vector<10x10x4xf32>,
    %c1 = arith.constant 1 : index
    %c1_6 = arith.constant 1 : index
    %c0_7 = arith.constant 0 : index
    %5 = vector.load %arg5[%c1, %c1_6, %c0_7] : memref<10x10x4xf32, #tpu.memory_space<vmem>>, vector<8x8x4xf32>
    tpu.vector_store %arg5[%c1, %c1_6, %c0_7], %2 {strides = array<i32>} : memref<10x10x4xf32, #tpu.memory_space<vmem>>, vector<8x8x4xf32>,
    %cst_8 = arith.constant 0.000000e+00 : f32
    %6 = vector.broadcast %cst_8 : f32 to vector<64x8xf32>
    %c0_9 = arith.constant 0 : index
    %c0_10 = arith.constant 0 : index
    %c0_11 = arith.constant 0 : index
    %7 = vector.load %arg5[%c0_9, %c0_10, %c0_11] : memref<10x10x4xf32, #tpu.memory_space<vmem>>, vector<8x8x4xf32>
    %8 = vector.shape_cast %7 : vector<8x8x4xf32> to vector<64x4xf32>
    %c0_12 = arith.constant 0 : index
    %c0_13 = arith.constant 0 : index
    %c0_14 = arith.constant 0 : index
    %9 = vector.load %arg2[%c0_12, %c0_13, %c0_14] : memref<9x4x8xf32, #tpu.memory_space<vmem>>, vector<1x4x8xf32>
    %10 = vector.shape_cast %9 : vector<1x4x8xf32> to vector<4x8xf32>
    %11 = vector.extract_strided_slice %8 {offsets = [0, 0], sizes = [64, 1], strides = [1, 1]} : vector<64x4xf32> to vector<64x1xf32>
    %12 = vector.extract_strided_slice %10 {offsets = [0, 0], sizes = [1, 8], strides = [1, 1]} : vector<4x8xf32> to vector<1x8xf32>
    %13 = vector.broadcast %11 : vector<64x1xf32> to vector<64x8xf32>
    %14 = vector.broadcast %12 : vector<1x8xf32> to vector<64x8xf32>
    %15 = arith.mulf %13, %14 : vector<64x8xf32>
    %16 = arith.addf %6, %15 : vector<64x8xf32>
    %17 = vector.extract_strided_slice %8 {offsets = [0, 1], sizes = [64, 1], strides = [1, 1]} : vector<64x4xf32> to vector<64x1xf32>
    %18 = vector.extract_strided_slice %10 {offsets = [1, 0], sizes = [1, 8], strides = [1, 1]} : vector<4x8xf32> to vector<1x8xf32>
    %19 = vector.broadcast %17 : vector<64x1xf32> to vector<64x8xf32>
    %20 = vector.broadcast %18 : vector<1x8xf32> to vector<64x8xf32>
    %21 = arith.mulf %19, %20 : vector<64x8xf32>
    %22 = arith.addf %16, %21 : vector<64x8xf32>
    %23 = vector.extract_strided_slice %8 {offsets = [0, 2], sizes = [64, 1], strides = [1, 1]} : vector<64x4xf32> to vector<64x1xf32>
    %24 = vector.extract_strided_slice %10 {offsets = [2, 0], sizes = [1, 8], strides = [1, 1]} : vector<4x8xf32> to vector<1x8xf32>
    %25 = vector.broadcast %23 : vector<64x1xf32> to vector<64x8xf32>
    %26 = vector.broadcast %24 : vector<1x8xf32> to vector<64x8xf32>
    %27 = arith.mulf %25, %26 : vector<64x8xf32>
    %28 = arith.addf %22, %27 : vector<64x8xf32>
    %29 = vector.extract_strided_slice %8 {offsets = [0, 3], sizes = [64, 1], strides = [1, 1]} : vector<64x4xf32> to vector<64x1xf32>
    %30 = vector.extract_strided_slice %10 {offsets = [3, 0], sizes = [1, 8], strides = [1, 1]} : vector<4x8xf32> to vector<1x8xf32>
    %31 = vector.broadcast %29 : vector<64x1xf32> to vector<64x8xf32>
    %32 = vector.broadcast %30 : vector<1x8xf32> to vector<64x8xf32>
    %33 = arith.mulf %31, %32 : vector<64x8xf32>
    %34 = arith.addf %28, %33 : vector<64x8xf32>
    %c0_15 = arith.constant 0 : index
    %c1_16 = arith.constant 1 : index
    %c0_17 = arith.constant 0 : index
    %35 = vector.load %arg5[%c0_15, %c1_16, %c0_17] : memref<10x10x4xf32, #tpu.memory_space<vmem>>, vector<8x8x4xf32>
    %36 = vector.shape_cast %35 : vector<8x8x4xf32> to vector<64x4xf32>
    %c1_18 = arith.constant 1 : index
    %c0_19 = arith.constant 0 : index
    %c0_20 = arith.constant 0 : index
    %37 = vector.load %arg2[%c1_18, %c0_19, %c0_20] : memref<9x4x8xf32, #tpu.memory_space<vmem>>, vector<1x4x8xf32>
    %38 = vector.shape_cast %37 : vector<1x4x8xf32> to vector<4x8xf32>
    %39 = vector.extract_strided_slice %36 {offsets = [0, 0], sizes = [64, 1], strides = [1, 1]} : vector<64x4xf32> to vector<64x1xf32>
    %40 = vector.extract_strided_slice %38 {offsets = [0, 0], sizes = [1, 8], strides = [1, 1]} : vector<4x8xf32> to vector<1x8xf32>
    %41 = vector.broadcast %39 : vector<64x1xf32> to vector<64x8xf32>
    %42 = vector.broadcast %40 : vector<1x8xf32> to vector<64x8xf32>
    %43 = arith.mulf %41, %42 : vector<64x8xf32>
    %44 = arith.addf %34, %43 : vector<64x8xf32>
    %45 = vector.extract_strided_slice %36 {offsets = [0, 1], sizes = [64, 1], strides = [1, 1]} : vector<64x4xf32> to vector<64x1xf32>
    %46 = vector.extract_strided_slice %38 {offsets = [1, 0], sizes = [1, 8], strides = [1, 1]} : vector<4x8xf32> to vector<1x8xf32>
    %47 = vector.broadcast %45 : vector<64x1xf32> to vector<64x8xf32>
    %48 = vector.broadcast %46 : vector<1x8xf32> to vector<64x8xf32>
    %49 = arith.mulf %47, %48 : vector<64x8xf32>
    %50 = arith.addf %44, %49 : vector<64x8xf32>
    %51 = vector.extract_strided_slice %36 {offsets = [0, 2], sizes = [64, 1], strides = [1, 1]} : vector<64x4xf32> to vector<64x1xf32>
    %52 = vector.extract_strided_slice %38 {offsets = [2, 0], sizes = [1, 8], strides = [1, 1]} : vector<4x8xf32> to vector<1x8xf32>
    %53 = vector.broadcast %51 : vector<64x1xf32> to vector<64x8xf32>
    %54 = vector.broadcast %52 : vector<1x8xf32> to vector<64x8xf32>
    %55 = arith.mulf %53, %54 : vector<64x8xf32>
    %56 = arith.addf %50, %55 : vector<64x8xf32>
    %57 = vector.extract_strided_slice %36 {offsets = [0, 3], sizes = [64, 1], strides = [1, 1]} : vector<64x4xf32> to vector<64x1xf32>
    %58 = vector.extract_strided_slice %38 {offsets = [3, 0], sizes = [1, 8], strides = [1, 1]} : vector<4x8xf32> to vector<1x8xf32>
    %59 = vector.broadcast %57 : vector<64x1xf32> to vector<64x8xf32>
    %60 = vector.broadcast %58 : vector<1x8xf32> to vector<64x8xf32>
    %61 = arith.mulf %59, %60 : vector<64x8xf32>
    %62 = arith.addf %56, %61 : vector<64x8xf32>
    %c0_21 = arith.constant 0 : index
    %c2 = arith.constant 2 : index
    %c0_22 = arith.constant 0 : index
    %63 = vector.load %arg5[%c0_21, %c2, %c0_22] : memref<10x10x4xf32, #tpu.memory_space<vmem>>, vector<8x8x4xf32>
    %64 = vector.shape_cast %63 : vector<8x8x4xf32> to vector<64x4xf32>
    %c2_23 = arith.constant 2 : index
    %c0_24 = arith.constant 0 : index
    %c0_25 = arith.constant 0 : index
    %65 = vector.load %arg2[%c2_23, %c0_24, %c0_25] : memref<9x4x8xf32, #tpu.memory_space<vmem>>, vector<1x4x8xf32>
    %66 = vector.shape_cast %65 : vector<1x4x8xf32> to vector<4x8xf32>
    %67 = vector.extract_strided_slice %64 {offsets = [0, 0], sizes = [64, 1], strides = [1, 1]} : vector<64x4xf32> to vector<64x1xf32>
    %68 = vector.extract_strided_slice %66 {offsets = [0, 0], sizes = [1, 8], strides = [1, 1]} : vector<4x8xf32> to vector<1x8xf32>
    %69 = vector.broadcast %67 : vector<64x1xf32> to vector<64x8xf32>
    %70 = vector.broadcast %68 : vector<1x8xf32> to vector<64x8xf32>
    %71 = arith.mulf %69, %70 : vector<64x8xf32>
    %72 = arith.addf %62, %71 : vector<64x8xf32>
    %73 = vector.extract_strided_slice %64 {offsets = [0, 1], sizes = [64, 1], strides = [1, 1]} : vector<64x4xf32> to vector<64x1xf32>
    %74 = vector.extract_strided_slice %66 {offsets = [1, 0], sizes = [1, 8], strides = [1, 1]} : vector<4x8xf32> to vector<1x8xf32>
    %75 = vector.broadcast %73 : vector<64x1xf32> to vector<64x8xf32>
    %76 = vector.broadcast %74 : vector<1x8xf32> to vector<64x8xf32>
    %77 = arith.mulf %75, %76 : vector<64x8xf32>
    %78 = arith.addf %72, %77 : vector<64x8xf32>
    %79 = vector.extract_strided_slice %64 {offsets = [0, 2], sizes = [64, 1], strides = [1, 1]} : vector<64x4xf32> to vector<64x1xf32>
    %80 = vector.extract_strided_slice %66 {offsets = [2, 0], sizes = [1, 8], strides = [1, 1]} : vector<4x8xf32> to vector<1x8xf32>
    %81 = vector.broadcast %79 : vector<64x1xf32> to vector<64x8xf32>
    %82 = vector.broadcast %80 : vector<1x8xf32> to vector<64x8xf32>
    %83 = arith.mulf %81, %82 : vector<64x8xf32>
    %84 = arith.addf %78, %83 : vector<64x8xf32>
    %85 = vector.extract_strided_slice %64 {offsets = [0, 3], sizes = [64, 1], strides = [1, 1]} : vector<64x4xf32> to vector<64x1xf32>
    %86 = vector.extract_strided_slice %66 {offsets = [3, 0], sizes = [1, 8], strides = [1, 1]} : vector<4x8xf32> to vector<1x8xf32>
    %87 = vector.broadcast %85 : vector<64x1xf32> to vector<64x8xf32>
    %88 = vector.broadcast %86 : vector<1x8xf32> to vector<64x8xf32>
    %89 = arith.mulf %87, %88 : vector<64x8xf32>
    %90 = arith.addf %84, %89 : vector<64x8xf32>
    %c1_26 = arith.constant 1 : index
    %c0_27 = arith.constant 0 : index
    %c0_28 = arith.constant 0 : index
    %91 = vector.load %arg5[%c1_26, %c0_27, %c0_28] : memref<10x10x4xf32, #tpu.memory_space<vmem>>, vector<8x8x4xf32>
    %92 = vector.shape_cast %91 : vector<8x8x4xf32> to vector<64x4xf32>
    %c3 = arith.constant 3 : index
    %c0_29 = arith.constant 0 : index
    %c0_30 = arith.constant 0 : index
    %93 = vector.load %arg2[%c3, %c0_29, %c0_30] : memref<9x4x8xf32, #tpu.memory_space<vmem>>, vector<1x4x8xf32>
    %94 = vector.shape_cast %93 : vector<1x4x8xf32> to vector<4x8xf32>
    %95 = vector.extract_strided_slice %92 {offsets = [0, 0], sizes = [64, 1], strides = [1, 1]} : vector<64x4xf32> to vector<64x1xf32>
    %96 = vector.extract_strided_slice %94 {offsets = [0, 0], sizes = [1, 8], strides = [1, 1]} : vector<4x8xf32> to vector<1x8xf32>
    %97 = vector.broadcast %95 : vector<64x1xf32> to vector<64x8xf32>
    %98 = vector.broadcast %96 : vector<1x8xf32> to vector<64x8xf32>
    %99 = arith.mulf %97, %98 : vector<64x8xf32>
    %100 = arith.addf %90, %99 : vector<64x8xf32>
    %101 = vector.extract_strided_slice %92 {offsets = [0, 1], sizes = [64, 1], strides = [1, 1]} : vector<64x4xf32> to vector<64x1xf32>
    %102 = vector.extract_strided_slice %94 {offsets = [1, 0], sizes = [1, 8], strides = [1, 1]} : vector<4x8xf32> to vector<1x8xf32>
    %103 = vector.broadcast %101 : vector<64x1xf32> to vector<64x8xf32>
    %104 = vector.broadcast %102 : vector<1x8xf32> to vector<64x8xf32>
    %105 = arith.mulf %103, %104 : vector<64x8xf32>
    %106 = arith.addf %100, %105 : vector<64x8xf32>
    %107 = vector.extract_strided_slice %92 {offsets = [0, 2], sizes = [64, 1], strides = [1, 1]} : vector<64x4xf32> to vector<64x1xf32>
    %108 = vector.extract_strided_slice %94 {offsets = [2, 0], sizes = [1, 8], strides = [1, 1]} : vector<4x8xf32> to vector<1x8xf32>
    %109 = vector.broadcast %107 : vector<64x1xf32> to vector<64x8xf32>
    %110 = vector.broadcast %108 : vector<1x8xf32> to vector<64x8xf32>
    %111 = arith.mulf %109, %110 : vector<64x8xf32>
    %112 = arith.addf %106, %111 : vector<64x8xf32>
    %113 = vector.extract_strided_slice %92 {offsets = [0, 3], sizes = [64, 1], strides = [1, 1]} : vector<64x4xf32> to vector<64x1xf32>
    %114 = vector.extract_strided_slice %94 {offsets = [3, 0], sizes = [1, 8], strides = [1, 1]} : vector<4x8xf32> to vector<1x8xf32>
    %115 = vector.broadcast %113 : vector<64x1xf32> to vector<64x8xf32>
    %116 = vector.broadcast %114 : vector<1x8xf32> to vector<64x8xf32>
    %117 = arith.mulf %115, %116 : vector<64x8xf32>
    %118 = arith.addf %112, %117 : vector<64x8xf32>
    %c1_31 = arith.constant 1 : index
    %c1_32 = arith.constant 1 : index
    %c0_33 = arith.constant 0 : index
    %119 = vector.load %arg5[%c1_31, %c1_32, %c0_33] : memref<10x10x4xf32, #tpu.memory_space<vmem>>, vector<8x8x4xf32>
    %120 = vector.shape_cast %119 : vector<8x8x4xf32> to vector<64x4xf32>
    %c4 = arith.constant 4 : index
    %c0_34 = arith.constant 0 : index
    %c0_35 = arith.constant 0 : index
    %121 = vector.load %arg2[%c4, %c0_34, %c0_35] : memref<9x4x8xf32, #tpu.memory_space<vmem>>, vector<1x4x8xf32>
    %122 = vector.shape_cast %121 : vector<1x4x8xf32> to vector<4x8xf32>
    %123 = vector.extract_strided_slice %120 {offsets = [0, 0], sizes = [64, 1], strides = [1, 1]} : vector<64x4xf32> to vector<64x1xf32>
    %124 = vector.extract_strided_slice %122 {offsets = [0, 0], sizes = [1, 8], strides = [1, 1]} : vector<4x8xf32> to vector<1x8xf32>
    %125 = vector.broadcast %123 : vector<64x1xf32> to vector<64x8xf32>
    %126 = vector.broadcast %124 : vector<1x8xf32> to vector<64x8xf32>
    %127 = arith.mulf %125, %126 : vector<64x8xf32>
    %128 = arith.addf %118, %127 : vector<64x8xf32>
    %129 = vector.extract_strided_slice %120 {offsets = [0, 1], sizes = [64, 1], strides = [1, 1]} : vector<64x4xf32> to vector<64x1xf32>
    %130 = vector.extract_strided_slice %122 {offsets = [1, 0], sizes = [1, 8], strides = [1, 1]} : vector<4x8xf32> to vector<1x8xf32>
    %131 = vector.broadcast %129 : vector<64x1xf32> to vector<64x8xf32>
    %132 = vector.broadcast %130 : vector<1x8xf32> to vector<64x8xf32>
    %133 = arith.mulf %131, %132 : vector<64x8xf32>
    %134 = arith.addf %128, %133 : vector<64x8xf32>
    %135 = vector.extract_strided_slice %120 {offsets = [0, 2], sizes = [64, 1], strides = [1, 1]} : vector<64x4xf32> to vector<64x1xf32>
    %136 = vector.extract_strided_slice %122 {offsets = [2, 0], sizes = [1, 8], strides = [1, 1]} : vector<4x8xf32> to vector<1x8xf32>
    %137 = vector.broadcast %135 : vector<64x1xf32> to vector<64x8xf32>
    %138 = vector.broadcast %136 : vector<1x8xf32> to vector<64x8xf32>
    %139 = arith.mulf %137, %138 : vector<64x8xf32>
    %140 = arith.addf %134, %139 : vector<64x8xf32>
    %141 = vector.extract_strided_slice %120 {offsets = [0, 3], sizes = [64, 1], strides = [1, 1]} : vector<64x4xf32> to vector<64x1xf32>
    %142 = vector.extract_strided_slice %122 {offsets = [3, 0], sizes = [1, 8], strides = [1, 1]} : vector<4x8xf32> to vector<1x8xf32>
    %143 = vector.broadcast %141 : vector<64x1xf32> to vector<64x8xf32>
    %144 = vector.broadcast %142 : vector<1x8xf32> to vector<64x8xf32>
    %145 = arith.mulf %143, %144 : vector<64x8xf32>
    %146 = arith.addf %140, %145 : vector<64x8xf32>
    %c1_36 = arith.constant 1 : index
    %c2_37 = arith.constant 2 : index
    %c0_38 = arith.constant 0 : index
    %147 = vector.load %arg5[%c1_36, %c2_37, %c0_38] : memref<10x10x4xf32, #tpu.memory_space<vmem>>, vector<8x8x4xf32>
    %148 = vector.shape_cast %147 : vector<8x8x4xf32> to vector<64x4xf32>
    %c5 = arith.constant 5 : index
    %c0_39 = arith.constant 0 : index
    %c0_40 = arith.constant 0 : index
    %149 = vector.load %arg2[%c5, %c0_39, %c0_40] : memref<9x4x8xf32, #tpu.memory_space<vmem>>, vector<1x4x8xf32>
    %150 = vector.shape_cast %149 : vector<1x4x8xf32> to vector<4x8xf32>
    %151 = vector.extract_strided_slice %148 {offsets = [0, 0], sizes = [64, 1], strides = [1, 1]} : vector<64x4xf32> to vector<64x1xf32>
    %152 = vector.extract_strided_slice %150 {offsets = [0, 0], sizes = [1, 8], strides = [1, 1]} : vector<4x8xf32> to vector<1x8xf32>
    %153 = vector.broadcast %151 : vector<64x1xf32> to vector<64x8xf32>
    %154 = vector.broadcast %152 : vector<1x8xf32> to vector<64x8xf32>
    %155 = arith.mulf %153, %154 : vector<64x8xf32>
    %156 = arith.addf %146, %155 : vector<64x8xf32>
    %157 = vector.extract_strided_slice %148 {offsets = [0, 1], sizes = [64, 1], strides = [1, 1]} : vector<64x4xf32> to vector<64x1xf32>
    %158 = vector.extract_strided_slice %150 {offsets = [1, 0], sizes = [1, 8], strides = [1, 1]} : vector<4x8xf32> to vector<1x8xf32>
    %159 = vector.broadcast %157 : vector<64x1xf32> to vector<64x8xf32>
    %160 = vector.broadcast %158 : vector<1x8xf32> to vector<64x8xf32>
    %161 = arith.mulf %159, %160 : vector<64x8xf32>
    %162 = arith.addf %156, %161 : vector<64x8xf32>
    %163 = vector.extract_strided_slice %148 {offsets = [0, 2], sizes = [64, 1], strides = [1, 1]} : vector<64x4xf32> to vector<64x1xf32>
    %164 = vector.extract_strided_slice %150 {offsets = [2, 0], sizes = [1, 8], strides = [1, 1]} : vector<4x8xf32> to vector<1x8xf32>
    %165 = vector.broadcast %163 : vector<64x1xf32> to vector<64x8xf32>
    %166 = vector.broadcast %164 : vector<1x8xf32> to vector<64x8xf32>
    %167 = arith.mulf %165, %166 : vector<64x8xf32>
    %168 = arith.addf %162, %167 : vector<64x8xf32>
    %169 = vector.extract_strided_slice %148 {offsets = [0, 3], sizes = [64, 1], strides = [1, 1]} : vector<64x4xf32> to vector<64x1xf32>
    %170 = vector.extract_strided_slice %150 {offsets = [3, 0], sizes = [1, 8], strides = [1, 1]} : vector<4x8xf32> to vector<1x8xf32>
    %171 = vector.broadcast %169 : vector<64x1xf32> to vector<64x8xf32>
    %172 = vector.broadcast %170 : vector<1x8xf32> to vector<64x8xf32>
    %173 = arith.mulf %171, %172 : vector<64x8xf32>
    %174 = arith.addf %168, %173 : vector<64x8xf32>
    %c2_41 = arith.constant 2 : index
    %c0_42 = arith.constant 0 : index
    %c0_43 = arith.constant 0 : index
    %175 = vector.load %arg5[%c2_41, %c0_42, %c0_43] : memref<10x10x4xf32, #tpu.memory_space<vmem>>, vector<8x8x4xf32>
    %176 = vector.shape_cast %175 : vector<8x8x4xf32> to vector<64x4xf32>
    %c6 = arith.constant 6 : index
    %c0_44 = arith.constant 0 : index
    %c0_45 = arith.constant 0 : index
    %177 = vector.load %arg2[%c6, %c0_44, %c0_45] : memref<9x4x8xf32, #tpu.memory_space<vmem>>, vector<1x4x8xf32>
    %178 = vector.shape_cast %177 : vector<1x4x8xf32> to vector<4x8xf32>
    %179 = vector.extract_strided_slice %176 {offsets = [0, 0], sizes = [64, 1], strides = [1, 1]} : vector<64x4xf32> to vector<64x1xf32>
    %180 = vector.extract_strided_slice %178 {offsets = [0, 0], sizes = [1, 8], strides = [1, 1]} : vector<4x8xf32> to vector<1x8xf32>
    %181 = vector.broadcast %179 : vector<64x1xf32> to vector<64x8xf32>
    %182 = vector.broadcast %180 : vector<1x8xf32> to vector<64x8xf32>
    %183 = arith.mulf %181, %182 : vector<64x8xf32>
    %184 = arith.addf %174, %183 : vector<64x8xf32>
    %185 = vector.extract_strided_slice %176 {offsets = [0, 1], sizes = [64, 1], strides = [1, 1]} : vector<64x4xf32> to vector<64x1xf32>
    %186 = vector.extract_strided_slice %178 {offsets = [1, 0], sizes = [1, 8], strides = [1, 1]} : vector<4x8xf32> to vector<1x8xf32>
    %187 = vector.broadcast %185 : vector<64x1xf32> to vector<64x8xf32>
    %188 = vector.broadcast %186 : vector<1x8xf32> to vector<64x8xf32>
    %189 = arith.mulf %187, %188 : vector<64x8xf32>
    %190 = arith.addf %184, %189 : vector<64x8xf32>
    %191 = vector.extract_strided_slice %176 {offsets = [0, 2], sizes = [64, 1], strides = [1, 1]} : vector<64x4xf32> to vector<64x1xf32>
    %192 = vector.extract_strided_slice %178 {offsets = [2, 0], sizes = [1, 8], strides = [1, 1]} : vector<4x8xf32> to vector<1x8xf32>
    %193 = vector.broadcast %191 : vector<64x1xf32> to vector<64x8xf32>
    %194 = vector.broadcast %192 : vector<1x8xf32> to vector<64x8xf32>
    %195 = arith.mulf %193, %194 : vector<64x8xf32>
    %196 = arith.addf %190, %195 : vector<64x8xf32>
    %197 = vector.extract_strided_slice %176 {offsets = [0, 3], sizes = [64, 1], strides = [1, 1]} : vector<64x4xf32> to vector<64x1xf32>
    %198 = vector.extract_strided_slice %178 {offsets = [3, 0], sizes = [1, 8], strides = [1, 1]} : vector<4x8xf32> to vector<1x8xf32>
    %199 = vector.broadcast %197 : vector<64x1xf32> to vector<64x8xf32>
    %200 = vector.broadcast %198 : vector<1x8xf32> to vector<64x8xf32>
    %201 = arith.mulf %199, %200 : vector<64x8xf32>
    %202 = arith.addf %196, %201 : vector<64x8xf32>
    %c2_46 = arith.constant 2 : index
    %c1_47 = arith.constant 1 : index
    %c0_48 = arith.constant 0 : index
    %203 = vector.load %arg5[%c2_46, %c1_47, %c0_48] : memref<10x10x4xf32, #tpu.memory_space<vmem>>, vector<8x8x4xf32>
    %204 = vector.shape_cast %203 : vector<8x8x4xf32> to vector<64x4xf32>
    %c7 = arith.constant 7 : index
    %c0_49 = arith.constant 0 : index
    %c0_50 = arith.constant 0 : index
    %205 = vector.load %arg2[%c7, %c0_49, %c0_50] : memref<9x4x8xf32, #tpu.memory_space<vmem>>, vector<1x4x8xf32>
    %206 = vector.shape_cast %205 : vector<1x4x8xf32> to vector<4x8xf32>
    %207 = vector.extract_strided_slice %204 {offsets = [0, 0], sizes = [64, 1], strides = [1, 1]} : vector<64x4xf32> to vector<64x1xf32>
    %208 = vector.extract_strided_slice %206 {offsets = [0, 0], sizes = [1, 8], strides = [1, 1]} : vector<4x8xf32> to vector<1x8xf32>
    %209 = vector.broadcast %207 : vector<64x1xf32> to vector<64x8xf32>
    %210 = vector.broadcast %208 : vector<1x8xf32> to vector<64x8xf32>
    %211 = arith.mulf %209, %210 : vector<64x8xf32>
    %212 = arith.addf %202, %211 : vector<64x8xf32>
    %213 = vector.extract_strided_slice %204 {offsets = [0, 1], sizes = [64, 1], strides = [1, 1]} : vector<64x4xf32> to vector<64x1xf32>
    %214 = vector.extract_strided_slice %206 {offsets = [1, 0], sizes = [1, 8], strides = [1, 1]} : vector<4x8xf32> to vector<1x8xf32>
    %215 = vector.broadcast %213 : vector<64x1xf32> to vector<64x8xf32>
    %216 = vector.broadcast %214 : vector<1x8xf32> to vector<64x8xf32>
    %217 = arith.mulf %215, %216 : vector<64x8xf32>
    %218 = arith.addf %212, %217 : vector<64x8xf32>
    %219 = vector.extract_strided_slice %204 {offsets = [0, 2], sizes = [64, 1], strides = [1, 1]} : vector<64x4xf32> to vector<64x1xf32>
    %220 = vector.extract_strided_slice %206 {offsets = [2, 0], sizes = [1, 8], strides = [1, 1]} : vector<4x8xf32> to vector<1x8xf32>
    %221 = vector.broadcast %219 : vector<64x1xf32> to vector<64x8xf32>
    %222 = vector.broadcast %220 : vector<1x8xf32> to vector<64x8xf32>
    %223 = arith.mulf %221, %222 : vector<64x8xf32>
    %224 = arith.addf %218, %223 : vector<64x8xf32>
    %225 = vector.extract_strided_slice %204 {offsets = [0, 3], sizes = [64, 1], strides = [1, 1]} : vector<64x4xf32> to vector<64x1xf32>
    %226 = vector.extract_strided_slice %206 {offsets = [3, 0], sizes = [1, 8], strides = [1, 1]} : vector<4x8xf32> to vector<1x8xf32>
    %227 = vector.broadcast %225 : vector<64x1xf32> to vector<64x8xf32>
    %228 = vector.broadcast %226 : vector<1x8xf32> to vector<64x8xf32>
    %229 = arith.mulf %227, %228 : vector<64x8xf32>
    %230 = arith.addf %224, %229 : vector<64x8xf32>
    %c2_51 = arith.constant 2 : index
    %c2_52 = arith.constant 2 : index
    %c0_53 = arith.constant 0 : index
    %231 = vector.load %arg5[%c2_51, %c2_52, %c0_53] : memref<10x10x4xf32, #tpu.memory_space<vmem>>, vector<8x8x4xf32>
    %232 = vector.shape_cast %231 : vector<8x8x4xf32> to vector<64x4xf32>
    %c8 = arith.constant 8 : index
    %c0_54 = arith.constant 0 : index
    %c0_55 = arith.constant 0 : index
    %233 = vector.load %arg2[%c8, %c0_54, %c0_55] : memref<9x4x8xf32, #tpu.memory_space<vmem>>, vector<1x4x8xf32>
    %234 = vector.shape_cast %233 : vector<1x4x8xf32> to vector<4x8xf32>
    %235 = vector.extract_strided_slice %232 {offsets = [0, 0], sizes = [64, 1], strides = [1, 1]} : vector<64x4xf32> to vector<64x1xf32>
    %236 = vector.extract_strided_slice %234 {offsets = [0, 0], sizes = [1, 8], strides = [1, 1]} : vector<4x8xf32> to vector<1x8xf32>
    %237 = vector.broadcast %235 : vector<64x1xf32> to vector<64x8xf32>
    %238 = vector.broadcast %236 : vector<1x8xf32> to vector<64x8xf32>
    %239 = arith.mulf %237, %238 : vector<64x8xf32>
    %240 = arith.addf %230, %239 : vector<64x8xf32>
    %241 = vector.extract_strided_slice %232 {offsets = [0, 1], sizes = [64, 1], strides = [1, 1]} : vector<64x4xf32> to vector<64x1xf32>
    %242 = vector.extract_strided_slice %234 {offsets = [1, 0], sizes = [1, 8], strides = [1, 1]} : vector<4x8xf32> to vector<1x8xf32>
    %243 = vector.broadcast %241 : vector<64x1xf32> to vector<64x8xf32>
    %244 = vector.broadcast %242 : vector<1x8xf32> to vector<64x8xf32>
    %245 = arith.mulf %243, %244 : vector<64x8xf32>
    %246 = arith.addf %240, %245 : vector<64x8xf32>
    %247 = vector.extract_strided_slice %232 {offsets = [0, 2], sizes = [64, 1], strides = [1, 1]} : vector<64x4xf32> to vector<64x1xf32>
    %248 = vector.extract_strided_slice %234 {offsets = [2, 0], sizes = [1, 8], strides = [1, 1]} : vector<4x8xf32> to vector<1x8xf32>
    %249 = vector.broadcast %247 : vector<64x1xf32> to vector<64x8xf32>
    %250 = vector.broadcast %248 : vector<1x8xf32> to vector<64x8xf32>
    %251 = arith.mulf %249, %250 : vector<64x8xf32>
    %252 = arith.addf %246, %251 : vector<64x8xf32>
    %253 = vector.extract_strided_slice %232 {offsets = [0, 3], sizes = [64, 1], strides = [1, 1]} : vector<64x4xf32> to vector<64x1xf32>
    %254 = vector.extract_strided_slice %234 {offsets = [3, 0], sizes = [1, 8], strides = [1, 1]} : vector<4x8xf32> to vector<1x8xf32>
    %255 = vector.broadcast %253 : vector<64x1xf32> to vector<64x8xf32>
    %256 = vector.broadcast %254 : vector<1x8xf32> to vector<64x8xf32>
    %257 = arith.mulf %255, %256 : vector<64x8xf32>
    %258 = arith.addf %252, %257 : vector<64x8xf32>
    %259 = arith.truncf %258 : vector<64x8xf32> to vector<64x8xbf16>
    %c0_56 = arith.constant 0 : index
    %c0_57 = arith.constant 0 : index
    %c0_58 = arith.constant 0 : index
    %260 = vector.load %arg3[%c0_56, %c0_57, %c0_58] : memref<1x64x8xbf16, #tpu.memory_space<vmem>>, vector<1x64x8xbf16>
    %261 = vector.shape_cast %260 : vector<1x64x8xbf16> to vector<64x8xbf16>
    %262 = vector.shape_cast %259 : vector<64x8xbf16> to vector<1x64x8xbf16>
    tpu.vector_store %arg3[%c0_56, %c0_57, %c0_58], %262 {strides = array<i32>} : memref<1x64x8xbf16, #tpu.memory_space<vmem>>, vector<1x64x8xbf16>,
    %cst_59 = arith.constant dense<0.000000e+00> : vector<8xf32>
    %263 = vector.multi_reduction <add>, %258, %cst_59 [0] : vector<64x8xf32> to vector<8xf32>
    %264 = vector.shape_cast %263 : vector<8xf32> to vector<1x8xf32>
    %cst_60 = arith.constant 1.562500e-02 : f32
    %265 = vector.broadcast %cst_60 : f32 to vector<1x8xf32>
    %266 = arith.mulf %264, %265 : vector<1x8xf32>
    %267 = vector.broadcast %266 : vector<1x8xf32> to vector<64x8xf32>
    %268 = arith.subf %258, %267 : vector<64x8xf32>
    %269 = arith.mulf %268, %268 : vector<64x8xf32>
    %cst_61 = arith.constant dense<0.000000e+00> : vector<8xf32>
    %270 = vector.multi_reduction <add>, %269, %cst_61 [0] : vector<64x8xf32> to vector<8xf32>
    %271 = vector.shape_cast %270 : vector<8xf32> to vector<1x8xf32>
    %272 = tpu.concatenate %264, %271 in 0 : vector<1x8xf32>, vector<1x8xf32> -> vector<2x8xf32>
    %c0_62 = arith.constant 0 : index
    %c0_63 = arith.constant 0 : index
    %c0_64 = arith.constant 0 : index
    %273 = vector.load %arg4[%c0_62, %c0_63, %c0_64] : memref<1x2x8xf32, #tpu.memory_space<vmem>>, vector<1x2x8xf32>
    %274 = vector.shape_cast %273 : vector<1x2x8xf32> to vector<2x8xf32>
    %275 = vector.shape_cast %272 : vector<2x8xf32> to vector<1x2x8xf32>
    tpu.vector_store %arg4[%c0_62, %c0_63, %c0_64], %275 {strides = array<i32>} : memref<1x2x8xf32, #tpu.memory_space<vmem>>, vector<1x2x8xf32>,
    return
  }
  func.func @transform_0(%arg0: i32) -> (i32, i32, i32, i32) {
    %c0_i32 = arith.constant 0 : i32
    %c0_i32_0 = arith.constant 0 : i32
    %c0_i32_1 = arith.constant 0 : i32
    %c0_i32_2 = arith.constant 0 : i32
    return %arg0, %c0_i32, %c0_i32_0, %c0_i32_1 : i32, i32, i32, i32
  }
  func.func @transform_1(%arg0: i32) -> (i32, i32, i32) {
    %c0_i32 = arith.constant 0 : i32
    %c0_i32_0 = arith.constant 0 : i32
    %c0_i32_1 = arith.constant 0 : i32
    %c0_i32_2 = arith.constant 0 : i32
    return %c0_i32, %c0_i32_0, %c0_i32_1 : i32, i32, i32
  }
  func.func @transform_2(%arg0: i32) -> (i32, i32, i32) {
    %c0_i32 = arith.constant 0 : i32
    %c0_i32_0 = arith.constant 0 : i32
    %c0_i32_1 = arith.constant 0 : i32
    return %arg0, %c0_i32, %c0_i32_0 : i32, i32, i32
  }
  func.func @transform_3(%arg0: i32) -> (i32, i32, i32) {
    %c0_i32 = arith.constant 0 : i32
    %c0_i32_0 = arith.constant 0 : i32
    %c0_i32_1 = arith.constant 0 : i32
    return %arg0, %c0_i32, %c0_i32_0 : i32, i32, i32
  }
}

module attributes {stable_mosaic.version = 11 : i64} {
  func.func @_conv_stats_kernel(%arg0: i32, %arg1: memref<1x8x8x8xbf16, #tpu.memory_space<vmem>>, %arg2: memref<1x8xf32, #tpu.memory_space<vmem>>, %arg3: memref<1x8xf32, #tpu.memory_space<vmem>>, %arg4: memref<9x8x8xf32, #tpu.memory_space<vmem>>, %arg5: memref<1x64x8xbf16, #tpu.memory_space<vmem>>, %arg6: memref<1x2x8xf32, #tpu.memory_space<vmem>>, %arg7: memref<10x10x8xf32, #tpu.memory_space<vmem>>) attributes {dimension_semantics = [#tpu.dimension_semantics<parallel>], iteration_bounds = array<i64: 2>, scalar_prefetch = 0 : i64, scratch_operands = 1 : i64, tpu.core_type = #tpu.core_type<tc>, window_params = [{transform_indices = @transform_0, window_bounds = array<i64: 1, 8, 8, 8>}, {pipeline_mode = #tpu.pipeline_mode<synchronous>, transform_indices = @transform_1, window_bounds = array<i64: 1, 8>}, {pipeline_mode = #tpu.pipeline_mode<synchronous>, transform_indices = @transform_2, window_bounds = array<i64: 1, 8>}, {pipeline_mode = #tpu.pipeline_mode<synchronous>, transform_indices = @transform_3, window_bounds = array<i64: 9, 8, 8>}, {transform_indices = @transform_4, window_bounds = array<i64: 1, 64, 8>}, {transform_indices = @transform_5, window_bounds = array<i64: 1, 2, 8>}]} {
    %c0 = arith.constant 0 : index
    %c0_0 = arith.constant 0 : index
    %c0_1 = arith.constant 0 : index
    %c0_2 = arith.constant 0 : index
    %0 = vector.load %arg1[%c0, %c0_0, %c0_1, %c0_2] : memref<1x8x8x8xbf16, #tpu.memory_space<vmem>>, vector<1x8x8x8xbf16>
    %1 = vector.shape_cast %0 : vector<1x8x8x8xbf16> to vector<8x8x8xbf16>
    %2 = arith.extf %1 : vector<8x8x8xbf16> to vector<8x8x8xf32>
    %c0_3 = arith.constant 0 : index
    %c0_4 = arith.constant 0 : index
    %3 = vector.load %arg2[%c0_3, %c0_4] : memref<1x8xf32, #tpu.memory_space<vmem>>, vector<1x8xf32>
    %4 = vector.shape_cast %3 : vector<1x8xf32> to vector<1x1x8xf32>
    %5 = vector.broadcast %4 : vector<1x1x8xf32> to vector<8x8x8xf32>
    %6 = arith.mulf %2, %5 : vector<8x8x8xf32>
    %c0_5 = arith.constant 0 : index
    %c0_6 = arith.constant 0 : index
    %7 = vector.load %arg3[%c0_5, %c0_6] : memref<1x8xf32, #tpu.memory_space<vmem>>, vector<1x8xf32>
    %8 = vector.shape_cast %7 : vector<1x8xf32> to vector<1x1x8xf32>
    %9 = vector.broadcast %8 : vector<1x1x8xf32> to vector<8x8x8xf32>
    %10 = arith.addf %6, %9 : vector<8x8x8xf32>
    %cst = arith.constant 0.000000e+00 : f32
    %11 = vector.broadcast %cst : f32 to vector<8x8x8xf32>
    %12 = arith.maximumf %10, %11 : vector<8x8x8xf32>
    %cst_7 = arith.constant 0.000000e+00 : f32
    %13 = vector.broadcast %cst_7 : f32 to vector<10x10x8xf32>
    %c0_8 = arith.constant 0 : index
    %c0_9 = arith.constant 0 : index
    %c0_10 = arith.constant 0 : index
    %14 = vector.load %arg7[%c0_8, %c0_9, %c0_10] : memref<10x10x8xf32, #tpu.memory_space<vmem>>, vector<10x10x8xf32>
    tpu.vector_store %arg7[%c0_8, %c0_9, %c0_10], %13 {strides = array<i32>} : memref<10x10x8xf32, #tpu.memory_space<vmem>>, vector<10x10x8xf32>,
    %c1 = arith.constant 1 : index
    %c1_11 = arith.constant 1 : index
    %c0_12 = arith.constant 0 : index
    %15 = vector.load %arg7[%c1, %c1_11, %c0_12] : memref<10x10x8xf32, #tpu.memory_space<vmem>>, vector<8x8x8xf32>
    tpu.vector_store %arg7[%c1, %c1_11, %c0_12], %12 {strides = array<i32>} : memref<10x10x8xf32, #tpu.memory_space<vmem>>, vector<8x8x8xf32>,
    %cst_13 = arith.constant 0.000000e+00 : f32
    %16 = vector.broadcast %cst_13 : f32 to vector<64x8xf32>
    %c0_14 = arith.constant 0 : index
    %c0_15 = arith.constant 0 : index
    %c0_16 = arith.constant 0 : index
    %17 = vector.load %arg7[%c0_14, %c0_15, %c0_16] : memref<10x10x8xf32, #tpu.memory_space<vmem>>, vector<8x8x8xf32>
    %18 = vector.shape_cast %17 : vector<8x8x8xf32> to vector<64x8xf32>
    %c0_17 = arith.constant 0 : index
    %c0_18 = arith.constant 0 : index
    %c0_19 = arith.constant 0 : index
    %19 = vector.load %arg4[%c0_17, %c0_18, %c0_19] : memref<9x8x8xf32, #tpu.memory_space<vmem>>, vector<1x8x8xf32>
    %20 = vector.shape_cast %19 : vector<1x8x8xf32> to vector<8x8xf32>
    %21 = vector.extract_strided_slice %18 {offsets = [0, 0], sizes = [64, 1], strides = [1, 1]} : vector<64x8xf32> to vector<64x1xf32>
    %22 = vector.extract_strided_slice %20 {offsets = [0, 0], sizes = [1, 8], strides = [1, 1]} : vector<8x8xf32> to vector<1x8xf32>
    %23 = vector.broadcast %21 : vector<64x1xf32> to vector<64x8xf32>
    %24 = vector.broadcast %22 : vector<1x8xf32> to vector<64x8xf32>
    %25 = arith.mulf %23, %24 : vector<64x8xf32>
    %26 = arith.addf %16, %25 : vector<64x8xf32>
    %27 = vector.extract_strided_slice %18 {offsets = [0, 1], sizes = [64, 1], strides = [1, 1]} : vector<64x8xf32> to vector<64x1xf32>
    %28 = vector.extract_strided_slice %20 {offsets = [1, 0], sizes = [1, 8], strides = [1, 1]} : vector<8x8xf32> to vector<1x8xf32>
    %29 = vector.broadcast %27 : vector<64x1xf32> to vector<64x8xf32>
    %30 = vector.broadcast %28 : vector<1x8xf32> to vector<64x8xf32>
    %31 = arith.mulf %29, %30 : vector<64x8xf32>
    %32 = arith.addf %26, %31 : vector<64x8xf32>
    %33 = vector.extract_strided_slice %18 {offsets = [0, 2], sizes = [64, 1], strides = [1, 1]} : vector<64x8xf32> to vector<64x1xf32>
    %34 = vector.extract_strided_slice %20 {offsets = [2, 0], sizes = [1, 8], strides = [1, 1]} : vector<8x8xf32> to vector<1x8xf32>
    %35 = vector.broadcast %33 : vector<64x1xf32> to vector<64x8xf32>
    %36 = vector.broadcast %34 : vector<1x8xf32> to vector<64x8xf32>
    %37 = arith.mulf %35, %36 : vector<64x8xf32>
    %38 = arith.addf %32, %37 : vector<64x8xf32>
    %39 = vector.extract_strided_slice %18 {offsets = [0, 3], sizes = [64, 1], strides = [1, 1]} : vector<64x8xf32> to vector<64x1xf32>
    %40 = vector.extract_strided_slice %20 {offsets = [3, 0], sizes = [1, 8], strides = [1, 1]} : vector<8x8xf32> to vector<1x8xf32>
    %41 = vector.broadcast %39 : vector<64x1xf32> to vector<64x8xf32>
    %42 = vector.broadcast %40 : vector<1x8xf32> to vector<64x8xf32>
    %43 = arith.mulf %41, %42 : vector<64x8xf32>
    %44 = arith.addf %38, %43 : vector<64x8xf32>
    %45 = vector.extract_strided_slice %18 {offsets = [0, 4], sizes = [64, 1], strides = [1, 1]} : vector<64x8xf32> to vector<64x1xf32>
    %46 = vector.extract_strided_slice %20 {offsets = [4, 0], sizes = [1, 8], strides = [1, 1]} : vector<8x8xf32> to vector<1x8xf32>
    %47 = vector.broadcast %45 : vector<64x1xf32> to vector<64x8xf32>
    %48 = vector.broadcast %46 : vector<1x8xf32> to vector<64x8xf32>
    %49 = arith.mulf %47, %48 : vector<64x8xf32>
    %50 = arith.addf %44, %49 : vector<64x8xf32>
    %51 = vector.extract_strided_slice %18 {offsets = [0, 5], sizes = [64, 1], strides = [1, 1]} : vector<64x8xf32> to vector<64x1xf32>
    %52 = vector.extract_strided_slice %20 {offsets = [5, 0], sizes = [1, 8], strides = [1, 1]} : vector<8x8xf32> to vector<1x8xf32>
    %53 = vector.broadcast %51 : vector<64x1xf32> to vector<64x8xf32>
    %54 = vector.broadcast %52 : vector<1x8xf32> to vector<64x8xf32>
    %55 = arith.mulf %53, %54 : vector<64x8xf32>
    %56 = arith.addf %50, %55 : vector<64x8xf32>
    %57 = vector.extract_strided_slice %18 {offsets = [0, 6], sizes = [64, 1], strides = [1, 1]} : vector<64x8xf32> to vector<64x1xf32>
    %58 = vector.extract_strided_slice %20 {offsets = [6, 0], sizes = [1, 8], strides = [1, 1]} : vector<8x8xf32> to vector<1x8xf32>
    %59 = vector.broadcast %57 : vector<64x1xf32> to vector<64x8xf32>
    %60 = vector.broadcast %58 : vector<1x8xf32> to vector<64x8xf32>
    %61 = arith.mulf %59, %60 : vector<64x8xf32>
    %62 = arith.addf %56, %61 : vector<64x8xf32>
    %63 = vector.extract_strided_slice %18 {offsets = [0, 7], sizes = [64, 1], strides = [1, 1]} : vector<64x8xf32> to vector<64x1xf32>
    %64 = vector.extract_strided_slice %20 {offsets = [7, 0], sizes = [1, 8], strides = [1, 1]} : vector<8x8xf32> to vector<1x8xf32>
    %65 = vector.broadcast %63 : vector<64x1xf32> to vector<64x8xf32>
    %66 = vector.broadcast %64 : vector<1x8xf32> to vector<64x8xf32>
    %67 = arith.mulf %65, %66 : vector<64x8xf32>
    %68 = arith.addf %62, %67 : vector<64x8xf32>
    %c0_20 = arith.constant 0 : index
    %c1_21 = arith.constant 1 : index
    %c0_22 = arith.constant 0 : index
    %69 = vector.load %arg7[%c0_20, %c1_21, %c0_22] : memref<10x10x8xf32, #tpu.memory_space<vmem>>, vector<8x8x8xf32>
    %70 = vector.shape_cast %69 : vector<8x8x8xf32> to vector<64x8xf32>
    %c1_23 = arith.constant 1 : index
    %c0_24 = arith.constant 0 : index
    %c0_25 = arith.constant 0 : index
    %71 = vector.load %arg4[%c1_23, %c0_24, %c0_25] : memref<9x8x8xf32, #tpu.memory_space<vmem>>, vector<1x8x8xf32>
    %72 = vector.shape_cast %71 : vector<1x8x8xf32> to vector<8x8xf32>
    %73 = vector.extract_strided_slice %70 {offsets = [0, 0], sizes = [64, 1], strides = [1, 1]} : vector<64x8xf32> to vector<64x1xf32>
    %74 = vector.extract_strided_slice %72 {offsets = [0, 0], sizes = [1, 8], strides = [1, 1]} : vector<8x8xf32> to vector<1x8xf32>
    %75 = vector.broadcast %73 : vector<64x1xf32> to vector<64x8xf32>
    %76 = vector.broadcast %74 : vector<1x8xf32> to vector<64x8xf32>
    %77 = arith.mulf %75, %76 : vector<64x8xf32>
    %78 = arith.addf %68, %77 : vector<64x8xf32>
    %79 = vector.extract_strided_slice %70 {offsets = [0, 1], sizes = [64, 1], strides = [1, 1]} : vector<64x8xf32> to vector<64x1xf32>
    %80 = vector.extract_strided_slice %72 {offsets = [1, 0], sizes = [1, 8], strides = [1, 1]} : vector<8x8xf32> to vector<1x8xf32>
    %81 = vector.broadcast %79 : vector<64x1xf32> to vector<64x8xf32>
    %82 = vector.broadcast %80 : vector<1x8xf32> to vector<64x8xf32>
    %83 = arith.mulf %81, %82 : vector<64x8xf32>
    %84 = arith.addf %78, %83 : vector<64x8xf32>
    %85 = vector.extract_strided_slice %70 {offsets = [0, 2], sizes = [64, 1], strides = [1, 1]} : vector<64x8xf32> to vector<64x1xf32>
    %86 = vector.extract_strided_slice %72 {offsets = [2, 0], sizes = [1, 8], strides = [1, 1]} : vector<8x8xf32> to vector<1x8xf32>
    %87 = vector.broadcast %85 : vector<64x1xf32> to vector<64x8xf32>
    %88 = vector.broadcast %86 : vector<1x8xf32> to vector<64x8xf32>
    %89 = arith.mulf %87, %88 : vector<64x8xf32>
    %90 = arith.addf %84, %89 : vector<64x8xf32>
    %91 = vector.extract_strided_slice %70 {offsets = [0, 3], sizes = [64, 1], strides = [1, 1]} : vector<64x8xf32> to vector<64x1xf32>
    %92 = vector.extract_strided_slice %72 {offsets = [3, 0], sizes = [1, 8], strides = [1, 1]} : vector<8x8xf32> to vector<1x8xf32>
    %93 = vector.broadcast %91 : vector<64x1xf32> to vector<64x8xf32>
    %94 = vector.broadcast %92 : vector<1x8xf32> to vector<64x8xf32>
    %95 = arith.mulf %93, %94 : vector<64x8xf32>
    %96 = arith.addf %90, %95 : vector<64x8xf32>
    %97 = vector.extract_strided_slice %70 {offsets = [0, 4], sizes = [64, 1], strides = [1, 1]} : vector<64x8xf32> to vector<64x1xf32>
    %98 = vector.extract_strided_slice %72 {offsets = [4, 0], sizes = [1, 8], strides = [1, 1]} : vector<8x8xf32> to vector<1x8xf32>
    %99 = vector.broadcast %97 : vector<64x1xf32> to vector<64x8xf32>
    %100 = vector.broadcast %98 : vector<1x8xf32> to vector<64x8xf32>
    %101 = arith.mulf %99, %100 : vector<64x8xf32>
    %102 = arith.addf %96, %101 : vector<64x8xf32>
    %103 = vector.extract_strided_slice %70 {offsets = [0, 5], sizes = [64, 1], strides = [1, 1]} : vector<64x8xf32> to vector<64x1xf32>
    %104 = vector.extract_strided_slice %72 {offsets = [5, 0], sizes = [1, 8], strides = [1, 1]} : vector<8x8xf32> to vector<1x8xf32>
    %105 = vector.broadcast %103 : vector<64x1xf32> to vector<64x8xf32>
    %106 = vector.broadcast %104 : vector<1x8xf32> to vector<64x8xf32>
    %107 = arith.mulf %105, %106 : vector<64x8xf32>
    %108 = arith.addf %102, %107 : vector<64x8xf32>
    %109 = vector.extract_strided_slice %70 {offsets = [0, 6], sizes = [64, 1], strides = [1, 1]} : vector<64x8xf32> to vector<64x1xf32>
    %110 = vector.extract_strided_slice %72 {offsets = [6, 0], sizes = [1, 8], strides = [1, 1]} : vector<8x8xf32> to vector<1x8xf32>
    %111 = vector.broadcast %109 : vector<64x1xf32> to vector<64x8xf32>
    %112 = vector.broadcast %110 : vector<1x8xf32> to vector<64x8xf32>
    %113 = arith.mulf %111, %112 : vector<64x8xf32>
    %114 = arith.addf %108, %113 : vector<64x8xf32>
    %115 = vector.extract_strided_slice %70 {offsets = [0, 7], sizes = [64, 1], strides = [1, 1]} : vector<64x8xf32> to vector<64x1xf32>
    %116 = vector.extract_strided_slice %72 {offsets = [7, 0], sizes = [1, 8], strides = [1, 1]} : vector<8x8xf32> to vector<1x8xf32>
    %117 = vector.broadcast %115 : vector<64x1xf32> to vector<64x8xf32>
    %118 = vector.broadcast %116 : vector<1x8xf32> to vector<64x8xf32>
    %119 = arith.mulf %117, %118 : vector<64x8xf32>
    %120 = arith.addf %114, %119 : vector<64x8xf32>
    %c0_26 = arith.constant 0 : index
    %c2 = arith.constant 2 : index
    %c0_27 = arith.constant 0 : index
    %121 = vector.load %arg7[%c0_26, %c2, %c0_27] : memref<10x10x8xf32, #tpu.memory_space<vmem>>, vector<8x8x8xf32>
    %122 = vector.shape_cast %121 : vector<8x8x8xf32> to vector<64x8xf32>
    %c2_28 = arith.constant 2 : index
    %c0_29 = arith.constant 0 : index
    %c0_30 = arith.constant 0 : index
    %123 = vector.load %arg4[%c2_28, %c0_29, %c0_30] : memref<9x8x8xf32, #tpu.memory_space<vmem>>, vector<1x8x8xf32>
    %124 = vector.shape_cast %123 : vector<1x8x8xf32> to vector<8x8xf32>
    %125 = vector.extract_strided_slice %122 {offsets = [0, 0], sizes = [64, 1], strides = [1, 1]} : vector<64x8xf32> to vector<64x1xf32>
    %126 = vector.extract_strided_slice %124 {offsets = [0, 0], sizes = [1, 8], strides = [1, 1]} : vector<8x8xf32> to vector<1x8xf32>
    %127 = vector.broadcast %125 : vector<64x1xf32> to vector<64x8xf32>
    %128 = vector.broadcast %126 : vector<1x8xf32> to vector<64x8xf32>
    %129 = arith.mulf %127, %128 : vector<64x8xf32>
    %130 = arith.addf %120, %129 : vector<64x8xf32>
    %131 = vector.extract_strided_slice %122 {offsets = [0, 1], sizes = [64, 1], strides = [1, 1]} : vector<64x8xf32> to vector<64x1xf32>
    %132 = vector.extract_strided_slice %124 {offsets = [1, 0], sizes = [1, 8], strides = [1, 1]} : vector<8x8xf32> to vector<1x8xf32>
    %133 = vector.broadcast %131 : vector<64x1xf32> to vector<64x8xf32>
    %134 = vector.broadcast %132 : vector<1x8xf32> to vector<64x8xf32>
    %135 = arith.mulf %133, %134 : vector<64x8xf32>
    %136 = arith.addf %130, %135 : vector<64x8xf32>
    %137 = vector.extract_strided_slice %122 {offsets = [0, 2], sizes = [64, 1], strides = [1, 1]} : vector<64x8xf32> to vector<64x1xf32>
    %138 = vector.extract_strided_slice %124 {offsets = [2, 0], sizes = [1, 8], strides = [1, 1]} : vector<8x8xf32> to vector<1x8xf32>
    %139 = vector.broadcast %137 : vector<64x1xf32> to vector<64x8xf32>
    %140 = vector.broadcast %138 : vector<1x8xf32> to vector<64x8xf32>
    %141 = arith.mulf %139, %140 : vector<64x8xf32>
    %142 = arith.addf %136, %141 : vector<64x8xf32>
    %143 = vector.extract_strided_slice %122 {offsets = [0, 3], sizes = [64, 1], strides = [1, 1]} : vector<64x8xf32> to vector<64x1xf32>
    %144 = vector.extract_strided_slice %124 {offsets = [3, 0], sizes = [1, 8], strides = [1, 1]} : vector<8x8xf32> to vector<1x8xf32>
    %145 = vector.broadcast %143 : vector<64x1xf32> to vector<64x8xf32>
    %146 = vector.broadcast %144 : vector<1x8xf32> to vector<64x8xf32>
    %147 = arith.mulf %145, %146 : vector<64x8xf32>
    %148 = arith.addf %142, %147 : vector<64x8xf32>
    %149 = vector.extract_strided_slice %122 {offsets = [0, 4], sizes = [64, 1], strides = [1, 1]} : vector<64x8xf32> to vector<64x1xf32>
    %150 = vector.extract_strided_slice %124 {offsets = [4, 0], sizes = [1, 8], strides = [1, 1]} : vector<8x8xf32> to vector<1x8xf32>
    %151 = vector.broadcast %149 : vector<64x1xf32> to vector<64x8xf32>
    %152 = vector.broadcast %150 : vector<1x8xf32> to vector<64x8xf32>
    %153 = arith.mulf %151, %152 : vector<64x8xf32>
    %154 = arith.addf %148, %153 : vector<64x8xf32>
    %155 = vector.extract_strided_slice %122 {offsets = [0, 5], sizes = [64, 1], strides = [1, 1]} : vector<64x8xf32> to vector<64x1xf32>
    %156 = vector.extract_strided_slice %124 {offsets = [5, 0], sizes = [1, 8], strides = [1, 1]} : vector<8x8xf32> to vector<1x8xf32>
    %157 = vector.broadcast %155 : vector<64x1xf32> to vector<64x8xf32>
    %158 = vector.broadcast %156 : vector<1x8xf32> to vector<64x8xf32>
    %159 = arith.mulf %157, %158 : vector<64x8xf32>
    %160 = arith.addf %154, %159 : vector<64x8xf32>
    %161 = vector.extract_strided_slice %122 {offsets = [0, 6], sizes = [64, 1], strides = [1, 1]} : vector<64x8xf32> to vector<64x1xf32>
    %162 = vector.extract_strided_slice %124 {offsets = [6, 0], sizes = [1, 8], strides = [1, 1]} : vector<8x8xf32> to vector<1x8xf32>
    %163 = vector.broadcast %161 : vector<64x1xf32> to vector<64x8xf32>
    %164 = vector.broadcast %162 : vector<1x8xf32> to vector<64x8xf32>
    %165 = arith.mulf %163, %164 : vector<64x8xf32>
    %166 = arith.addf %160, %165 : vector<64x8xf32>
    %167 = vector.extract_strided_slice %122 {offsets = [0, 7], sizes = [64, 1], strides = [1, 1]} : vector<64x8xf32> to vector<64x1xf32>
    %168 = vector.extract_strided_slice %124 {offsets = [7, 0], sizes = [1, 8], strides = [1, 1]} : vector<8x8xf32> to vector<1x8xf32>
    %169 = vector.broadcast %167 : vector<64x1xf32> to vector<64x8xf32>
    %170 = vector.broadcast %168 : vector<1x8xf32> to vector<64x8xf32>
    %171 = arith.mulf %169, %170 : vector<64x8xf32>
    %172 = arith.addf %166, %171 : vector<64x8xf32>
    %c1_31 = arith.constant 1 : index
    %c0_32 = arith.constant 0 : index
    %c0_33 = arith.constant 0 : index
    %173 = vector.load %arg7[%c1_31, %c0_32, %c0_33] : memref<10x10x8xf32, #tpu.memory_space<vmem>>, vector<8x8x8xf32>
    %174 = vector.shape_cast %173 : vector<8x8x8xf32> to vector<64x8xf32>
    %c3 = arith.constant 3 : index
    %c0_34 = arith.constant 0 : index
    %c0_35 = arith.constant 0 : index
    %175 = vector.load %arg4[%c3, %c0_34, %c0_35] : memref<9x8x8xf32, #tpu.memory_space<vmem>>, vector<1x8x8xf32>
    %176 = vector.shape_cast %175 : vector<1x8x8xf32> to vector<8x8xf32>
    %177 = vector.extract_strided_slice %174 {offsets = [0, 0], sizes = [64, 1], strides = [1, 1]} : vector<64x8xf32> to vector<64x1xf32>
    %178 = vector.extract_strided_slice %176 {offsets = [0, 0], sizes = [1, 8], strides = [1, 1]} : vector<8x8xf32> to vector<1x8xf32>
    %179 = vector.broadcast %177 : vector<64x1xf32> to vector<64x8xf32>
    %180 = vector.broadcast %178 : vector<1x8xf32> to vector<64x8xf32>
    %181 = arith.mulf %179, %180 : vector<64x8xf32>
    %182 = arith.addf %172, %181 : vector<64x8xf32>
    %183 = vector.extract_strided_slice %174 {offsets = [0, 1], sizes = [64, 1], strides = [1, 1]} : vector<64x8xf32> to vector<64x1xf32>
    %184 = vector.extract_strided_slice %176 {offsets = [1, 0], sizes = [1, 8], strides = [1, 1]} : vector<8x8xf32> to vector<1x8xf32>
    %185 = vector.broadcast %183 : vector<64x1xf32> to vector<64x8xf32>
    %186 = vector.broadcast %184 : vector<1x8xf32> to vector<64x8xf32>
    %187 = arith.mulf %185, %186 : vector<64x8xf32>
    %188 = arith.addf %182, %187 : vector<64x8xf32>
    %189 = vector.extract_strided_slice %174 {offsets = [0, 2], sizes = [64, 1], strides = [1, 1]} : vector<64x8xf32> to vector<64x1xf32>
    %190 = vector.extract_strided_slice %176 {offsets = [2, 0], sizes = [1, 8], strides = [1, 1]} : vector<8x8xf32> to vector<1x8xf32>
    %191 = vector.broadcast %189 : vector<64x1xf32> to vector<64x8xf32>
    %192 = vector.broadcast %190 : vector<1x8xf32> to vector<64x8xf32>
    %193 = arith.mulf %191, %192 : vector<64x8xf32>
    %194 = arith.addf %188, %193 : vector<64x8xf32>
    %195 = vector.extract_strided_slice %174 {offsets = [0, 3], sizes = [64, 1], strides = [1, 1]} : vector<64x8xf32> to vector<64x1xf32>
    %196 = vector.extract_strided_slice %176 {offsets = [3, 0], sizes = [1, 8], strides = [1, 1]} : vector<8x8xf32> to vector<1x8xf32>
    %197 = vector.broadcast %195 : vector<64x1xf32> to vector<64x8xf32>
    %198 = vector.broadcast %196 : vector<1x8xf32> to vector<64x8xf32>
    %199 = arith.mulf %197, %198 : vector<64x8xf32>
    %200 = arith.addf %194, %199 : vector<64x8xf32>
    %201 = vector.extract_strided_slice %174 {offsets = [0, 4], sizes = [64, 1], strides = [1, 1]} : vector<64x8xf32> to vector<64x1xf32>
    %202 = vector.extract_strided_slice %176 {offsets = [4, 0], sizes = [1, 8], strides = [1, 1]} : vector<8x8xf32> to vector<1x8xf32>
    %203 = vector.broadcast %201 : vector<64x1xf32> to vector<64x8xf32>
    %204 = vector.broadcast %202 : vector<1x8xf32> to vector<64x8xf32>
    %205 = arith.mulf %203, %204 : vector<64x8xf32>
    %206 = arith.addf %200, %205 : vector<64x8xf32>
    %207 = vector.extract_strided_slice %174 {offsets = [0, 5], sizes = [64, 1], strides = [1, 1]} : vector<64x8xf32> to vector<64x1xf32>
    %208 = vector.extract_strided_slice %176 {offsets = [5, 0], sizes = [1, 8], strides = [1, 1]} : vector<8x8xf32> to vector<1x8xf32>
    %209 = vector.broadcast %207 : vector<64x1xf32> to vector<64x8xf32>
    %210 = vector.broadcast %208 : vector<1x8xf32> to vector<64x8xf32>
    %211 = arith.mulf %209, %210 : vector<64x8xf32>
    %212 = arith.addf %206, %211 : vector<64x8xf32>
    %213 = vector.extract_strided_slice %174 {offsets = [0, 6], sizes = [64, 1], strides = [1, 1]} : vector<64x8xf32> to vector<64x1xf32>
    %214 = vector.extract_strided_slice %176 {offsets = [6, 0], sizes = [1, 8], strides = [1, 1]} : vector<8x8xf32> to vector<1x8xf32>
    %215 = vector.broadcast %213 : vector<64x1xf32> to vector<64x8xf32>
    %216 = vector.broadcast %214 : vector<1x8xf32> to vector<64x8xf32>
    %217 = arith.mulf %215, %216 : vector<64x8xf32>
    %218 = arith.addf %212, %217 : vector<64x8xf32>
    %219 = vector.extract_strided_slice %174 {offsets = [0, 7], sizes = [64, 1], strides = [1, 1]} : vector<64x8xf32> to vector<64x1xf32>
    %220 = vector.extract_strided_slice %176 {offsets = [7, 0], sizes = [1, 8], strides = [1, 1]} : vector<8x8xf32> to vector<1x8xf32>
    %221 = vector.broadcast %219 : vector<64x1xf32> to vector<64x8xf32>
    %222 = vector.broadcast %220 : vector<1x8xf32> to vector<64x8xf32>
    %223 = arith.mulf %221, %222 : vector<64x8xf32>
    %224 = arith.addf %218, %223 : vector<64x8xf32>
    %c1_36 = arith.constant 1 : index
    %c1_37 = arith.constant 1 : index
    %c0_38 = arith.constant 0 : index
    %225 = vector.load %arg7[%c1_36, %c1_37, %c0_38] : memref<10x10x8xf32, #tpu.memory_space<vmem>>, vector<8x8x8xf32>
    %226 = vector.shape_cast %225 : vector<8x8x8xf32> to vector<64x8xf32>
    %c4 = arith.constant 4 : index
    %c0_39 = arith.constant 0 : index
    %c0_40 = arith.constant 0 : index
    %227 = vector.load %arg4[%c4, %c0_39, %c0_40] : memref<9x8x8xf32, #tpu.memory_space<vmem>>, vector<1x8x8xf32>
    %228 = vector.shape_cast %227 : vector<1x8x8xf32> to vector<8x8xf32>
    %229 = vector.extract_strided_slice %226 {offsets = [0, 0], sizes = [64, 1], strides = [1, 1]} : vector<64x8xf32> to vector<64x1xf32>
    %230 = vector.extract_strided_slice %228 {offsets = [0, 0], sizes = [1, 8], strides = [1, 1]} : vector<8x8xf32> to vector<1x8xf32>
    %231 = vector.broadcast %229 : vector<64x1xf32> to vector<64x8xf32>
    %232 = vector.broadcast %230 : vector<1x8xf32> to vector<64x8xf32>
    %233 = arith.mulf %231, %232 : vector<64x8xf32>
    %234 = arith.addf %224, %233 : vector<64x8xf32>
    %235 = vector.extract_strided_slice %226 {offsets = [0, 1], sizes = [64, 1], strides = [1, 1]} : vector<64x8xf32> to vector<64x1xf32>
    %236 = vector.extract_strided_slice %228 {offsets = [1, 0], sizes = [1, 8], strides = [1, 1]} : vector<8x8xf32> to vector<1x8xf32>
    %237 = vector.broadcast %235 : vector<64x1xf32> to vector<64x8xf32>
    %238 = vector.broadcast %236 : vector<1x8xf32> to vector<64x8xf32>
    %239 = arith.mulf %237, %238 : vector<64x8xf32>
    %240 = arith.addf %234, %239 : vector<64x8xf32>
    %241 = vector.extract_strided_slice %226 {offsets = [0, 2], sizes = [64, 1], strides = [1, 1]} : vector<64x8xf32> to vector<64x1xf32>
    %242 = vector.extract_strided_slice %228 {offsets = [2, 0], sizes = [1, 8], strides = [1, 1]} : vector<8x8xf32> to vector<1x8xf32>
    %243 = vector.broadcast %241 : vector<64x1xf32> to vector<64x8xf32>
    %244 = vector.broadcast %242 : vector<1x8xf32> to vector<64x8xf32>
    %245 = arith.mulf %243, %244 : vector<64x8xf32>
    %246 = arith.addf %240, %245 : vector<64x8xf32>
    %247 = vector.extract_strided_slice %226 {offsets = [0, 3], sizes = [64, 1], strides = [1, 1]} : vector<64x8xf32> to vector<64x1xf32>
    %248 = vector.extract_strided_slice %228 {offsets = [3, 0], sizes = [1, 8], strides = [1, 1]} : vector<8x8xf32> to vector<1x8xf32>
    %249 = vector.broadcast %247 : vector<64x1xf32> to vector<64x8xf32>
    %250 = vector.broadcast %248 : vector<1x8xf32> to vector<64x8xf32>
    %251 = arith.mulf %249, %250 : vector<64x8xf32>
    %252 = arith.addf %246, %251 : vector<64x8xf32>
    %253 = vector.extract_strided_slice %226 {offsets = [0, 4], sizes = [64, 1], strides = [1, 1]} : vector<64x8xf32> to vector<64x1xf32>
    %254 = vector.extract_strided_slice %228 {offsets = [4, 0], sizes = [1, 8], strides = [1, 1]} : vector<8x8xf32> to vector<1x8xf32>
    %255 = vector.broadcast %253 : vector<64x1xf32> to vector<64x8xf32>
    %256 = vector.broadcast %254 : vector<1x8xf32> to vector<64x8xf32>
    %257 = arith.mulf %255, %256 : vector<64x8xf32>
    %258 = arith.addf %252, %257 : vector<64x8xf32>
    %259 = vector.extract_strided_slice %226 {offsets = [0, 5], sizes = [64, 1], strides = [1, 1]} : vector<64x8xf32> to vector<64x1xf32>
    %260 = vector.extract_strided_slice %228 {offsets = [5, 0], sizes = [1, 8], strides = [1, 1]} : vector<8x8xf32> to vector<1x8xf32>
    %261 = vector.broadcast %259 : vector<64x1xf32> to vector<64x8xf32>
    %262 = vector.broadcast %260 : vector<1x8xf32> to vector<64x8xf32>
    %263 = arith.mulf %261, %262 : vector<64x8xf32>
    %264 = arith.addf %258, %263 : vector<64x8xf32>
    %265 = vector.extract_strided_slice %226 {offsets = [0, 6], sizes = [64, 1], strides = [1, 1]} : vector<64x8xf32> to vector<64x1xf32>
    %266 = vector.extract_strided_slice %228 {offsets = [6, 0], sizes = [1, 8], strides = [1, 1]} : vector<8x8xf32> to vector<1x8xf32>
    %267 = vector.broadcast %265 : vector<64x1xf32> to vector<64x8xf32>
    %268 = vector.broadcast %266 : vector<1x8xf32> to vector<64x8xf32>
    %269 = arith.mulf %267, %268 : vector<64x8xf32>
    %270 = arith.addf %264, %269 : vector<64x8xf32>
    %271 = vector.extract_strided_slice %226 {offsets = [0, 7], sizes = [64, 1], strides = [1, 1]} : vector<64x8xf32> to vector<64x1xf32>
    %272 = vector.extract_strided_slice %228 {offsets = [7, 0], sizes = [1, 8], strides = [1, 1]} : vector<8x8xf32> to vector<1x8xf32>
    %273 = vector.broadcast %271 : vector<64x1xf32> to vector<64x8xf32>
    %274 = vector.broadcast %272 : vector<1x8xf32> to vector<64x8xf32>
    %275 = arith.mulf %273, %274 : vector<64x8xf32>
    %276 = arith.addf %270, %275 : vector<64x8xf32>
    %c1_41 = arith.constant 1 : index
    %c2_42 = arith.constant 2 : index
    %c0_43 = arith.constant 0 : index
    %277 = vector.load %arg7[%c1_41, %c2_42, %c0_43] : memref<10x10x8xf32, #tpu.memory_space<vmem>>, vector<8x8x8xf32>
    %278 = vector.shape_cast %277 : vector<8x8x8xf32> to vector<64x8xf32>
    %c5 = arith.constant 5 : index
    %c0_44 = arith.constant 0 : index
    %c0_45 = arith.constant 0 : index
    %279 = vector.load %arg4[%c5, %c0_44, %c0_45] : memref<9x8x8xf32, #tpu.memory_space<vmem>>, vector<1x8x8xf32>
    %280 = vector.shape_cast %279 : vector<1x8x8xf32> to vector<8x8xf32>
    %281 = vector.extract_strided_slice %278 {offsets = [0, 0], sizes = [64, 1], strides = [1, 1]} : vector<64x8xf32> to vector<64x1xf32>
    %282 = vector.extract_strided_slice %280 {offsets = [0, 0], sizes = [1, 8], strides = [1, 1]} : vector<8x8xf32> to vector<1x8xf32>
    %283 = vector.broadcast %281 : vector<64x1xf32> to vector<64x8xf32>
    %284 = vector.broadcast %282 : vector<1x8xf32> to vector<64x8xf32>
    %285 = arith.mulf %283, %284 : vector<64x8xf32>
    %286 = arith.addf %276, %285 : vector<64x8xf32>
    %287 = vector.extract_strided_slice %278 {offsets = [0, 1], sizes = [64, 1], strides = [1, 1]} : vector<64x8xf32> to vector<64x1xf32>
    %288 = vector.extract_strided_slice %280 {offsets = [1, 0], sizes = [1, 8], strides = [1, 1]} : vector<8x8xf32> to vector<1x8xf32>
    %289 = vector.broadcast %287 : vector<64x1xf32> to vector<64x8xf32>
    %290 = vector.broadcast %288 : vector<1x8xf32> to vector<64x8xf32>
    %291 = arith.mulf %289, %290 : vector<64x8xf32>
    %292 = arith.addf %286, %291 : vector<64x8xf32>
    %293 = vector.extract_strided_slice %278 {offsets = [0, 2], sizes = [64, 1], strides = [1, 1]} : vector<64x8xf32> to vector<64x1xf32>
    %294 = vector.extract_strided_slice %280 {offsets = [2, 0], sizes = [1, 8], strides = [1, 1]} : vector<8x8xf32> to vector<1x8xf32>
    %295 = vector.broadcast %293 : vector<64x1xf32> to vector<64x8xf32>
    %296 = vector.broadcast %294 : vector<1x8xf32> to vector<64x8xf32>
    %297 = arith.mulf %295, %296 : vector<64x8xf32>
    %298 = arith.addf %292, %297 : vector<64x8xf32>
    %299 = vector.extract_strided_slice %278 {offsets = [0, 3], sizes = [64, 1], strides = [1, 1]} : vector<64x8xf32> to vector<64x1xf32>
    %300 = vector.extract_strided_slice %280 {offsets = [3, 0], sizes = [1, 8], strides = [1, 1]} : vector<8x8xf32> to vector<1x8xf32>
    %301 = vector.broadcast %299 : vector<64x1xf32> to vector<64x8xf32>
    %302 = vector.broadcast %300 : vector<1x8xf32> to vector<64x8xf32>
    %303 = arith.mulf %301, %302 : vector<64x8xf32>
    %304 = arith.addf %298, %303 : vector<64x8xf32>
    %305 = vector.extract_strided_slice %278 {offsets = [0, 4], sizes = [64, 1], strides = [1, 1]} : vector<64x8xf32> to vector<64x1xf32>
    %306 = vector.extract_strided_slice %280 {offsets = [4, 0], sizes = [1, 8], strides = [1, 1]} : vector<8x8xf32> to vector<1x8xf32>
    %307 = vector.broadcast %305 : vector<64x1xf32> to vector<64x8xf32>
    %308 = vector.broadcast %306 : vector<1x8xf32> to vector<64x8xf32>
    %309 = arith.mulf %307, %308 : vector<64x8xf32>
    %310 = arith.addf %304, %309 : vector<64x8xf32>
    %311 = vector.extract_strided_slice %278 {offsets = [0, 5], sizes = [64, 1], strides = [1, 1]} : vector<64x8xf32> to vector<64x1xf32>
    %312 = vector.extract_strided_slice %280 {offsets = [5, 0], sizes = [1, 8], strides = [1, 1]} : vector<8x8xf32> to vector<1x8xf32>
    %313 = vector.broadcast %311 : vector<64x1xf32> to vector<64x8xf32>
    %314 = vector.broadcast %312 : vector<1x8xf32> to vector<64x8xf32>
    %315 = arith.mulf %313, %314 : vector<64x8xf32>
    %316 = arith.addf %310, %315 : vector<64x8xf32>
    %317 = vector.extract_strided_slice %278 {offsets = [0, 6], sizes = [64, 1], strides = [1, 1]} : vector<64x8xf32> to vector<64x1xf32>
    %318 = vector.extract_strided_slice %280 {offsets = [6, 0], sizes = [1, 8], strides = [1, 1]} : vector<8x8xf32> to vector<1x8xf32>
    %319 = vector.broadcast %317 : vector<64x1xf32> to vector<64x8xf32>
    %320 = vector.broadcast %318 : vector<1x8xf32> to vector<64x8xf32>
    %321 = arith.mulf %319, %320 : vector<64x8xf32>
    %322 = arith.addf %316, %321 : vector<64x8xf32>
    %323 = vector.extract_strided_slice %278 {offsets = [0, 7], sizes = [64, 1], strides = [1, 1]} : vector<64x8xf32> to vector<64x1xf32>
    %324 = vector.extract_strided_slice %280 {offsets = [7, 0], sizes = [1, 8], strides = [1, 1]} : vector<8x8xf32> to vector<1x8xf32>
    %325 = vector.broadcast %323 : vector<64x1xf32> to vector<64x8xf32>
    %326 = vector.broadcast %324 : vector<1x8xf32> to vector<64x8xf32>
    %327 = arith.mulf %325, %326 : vector<64x8xf32>
    %328 = arith.addf %322, %327 : vector<64x8xf32>
    %c2_46 = arith.constant 2 : index
    %c0_47 = arith.constant 0 : index
    %c0_48 = arith.constant 0 : index
    %329 = vector.load %arg7[%c2_46, %c0_47, %c0_48] : memref<10x10x8xf32, #tpu.memory_space<vmem>>, vector<8x8x8xf32>
    %330 = vector.shape_cast %329 : vector<8x8x8xf32> to vector<64x8xf32>
    %c6 = arith.constant 6 : index
    %c0_49 = arith.constant 0 : index
    %c0_50 = arith.constant 0 : index
    %331 = vector.load %arg4[%c6, %c0_49, %c0_50] : memref<9x8x8xf32, #tpu.memory_space<vmem>>, vector<1x8x8xf32>
    %332 = vector.shape_cast %331 : vector<1x8x8xf32> to vector<8x8xf32>
    %333 = vector.extract_strided_slice %330 {offsets = [0, 0], sizes = [64, 1], strides = [1, 1]} : vector<64x8xf32> to vector<64x1xf32>
    %334 = vector.extract_strided_slice %332 {offsets = [0, 0], sizes = [1, 8], strides = [1, 1]} : vector<8x8xf32> to vector<1x8xf32>
    %335 = vector.broadcast %333 : vector<64x1xf32> to vector<64x8xf32>
    %336 = vector.broadcast %334 : vector<1x8xf32> to vector<64x8xf32>
    %337 = arith.mulf %335, %336 : vector<64x8xf32>
    %338 = arith.addf %328, %337 : vector<64x8xf32>
    %339 = vector.extract_strided_slice %330 {offsets = [0, 1], sizes = [64, 1], strides = [1, 1]} : vector<64x8xf32> to vector<64x1xf32>
    %340 = vector.extract_strided_slice %332 {offsets = [1, 0], sizes = [1, 8], strides = [1, 1]} : vector<8x8xf32> to vector<1x8xf32>
    %341 = vector.broadcast %339 : vector<64x1xf32> to vector<64x8xf32>
    %342 = vector.broadcast %340 : vector<1x8xf32> to vector<64x8xf32>
    %343 = arith.mulf %341, %342 : vector<64x8xf32>
    %344 = arith.addf %338, %343 : vector<64x8xf32>
    %345 = vector.extract_strided_slice %330 {offsets = [0, 2], sizes = [64, 1], strides = [1, 1]} : vector<64x8xf32> to vector<64x1xf32>
    %346 = vector.extract_strided_slice %332 {offsets = [2, 0], sizes = [1, 8], strides = [1, 1]} : vector<8x8xf32> to vector<1x8xf32>
    %347 = vector.broadcast %345 : vector<64x1xf32> to vector<64x8xf32>
    %348 = vector.broadcast %346 : vector<1x8xf32> to vector<64x8xf32>
    %349 = arith.mulf %347, %348 : vector<64x8xf32>
    %350 = arith.addf %344, %349 : vector<64x8xf32>
    %351 = vector.extract_strided_slice %330 {offsets = [0, 3], sizes = [64, 1], strides = [1, 1]} : vector<64x8xf32> to vector<64x1xf32>
    %352 = vector.extract_strided_slice %332 {offsets = [3, 0], sizes = [1, 8], strides = [1, 1]} : vector<8x8xf32> to vector<1x8xf32>
    %353 = vector.broadcast %351 : vector<64x1xf32> to vector<64x8xf32>
    %354 = vector.broadcast %352 : vector<1x8xf32> to vector<64x8xf32>
    %355 = arith.mulf %353, %354 : vector<64x8xf32>
    %356 = arith.addf %350, %355 : vector<64x8xf32>
    %357 = vector.extract_strided_slice %330 {offsets = [0, 4], sizes = [64, 1], strides = [1, 1]} : vector<64x8xf32> to vector<64x1xf32>
    %358 = vector.extract_strided_slice %332 {offsets = [4, 0], sizes = [1, 8], strides = [1, 1]} : vector<8x8xf32> to vector<1x8xf32>
    %359 = vector.broadcast %357 : vector<64x1xf32> to vector<64x8xf32>
    %360 = vector.broadcast %358 : vector<1x8xf32> to vector<64x8xf32>
    %361 = arith.mulf %359, %360 : vector<64x8xf32>
    %362 = arith.addf %356, %361 : vector<64x8xf32>
    %363 = vector.extract_strided_slice %330 {offsets = [0, 5], sizes = [64, 1], strides = [1, 1]} : vector<64x8xf32> to vector<64x1xf32>
    %364 = vector.extract_strided_slice %332 {offsets = [5, 0], sizes = [1, 8], strides = [1, 1]} : vector<8x8xf32> to vector<1x8xf32>
    %365 = vector.broadcast %363 : vector<64x1xf32> to vector<64x8xf32>
    %366 = vector.broadcast %364 : vector<1x8xf32> to vector<64x8xf32>
    %367 = arith.mulf %365, %366 : vector<64x8xf32>
    %368 = arith.addf %362, %367 : vector<64x8xf32>
    %369 = vector.extract_strided_slice %330 {offsets = [0, 6], sizes = [64, 1], strides = [1, 1]} : vector<64x8xf32> to vector<64x1xf32>
    %370 = vector.extract_strided_slice %332 {offsets = [6, 0], sizes = [1, 8], strides = [1, 1]} : vector<8x8xf32> to vector<1x8xf32>
    %371 = vector.broadcast %369 : vector<64x1xf32> to vector<64x8xf32>
    %372 = vector.broadcast %370 : vector<1x8xf32> to vector<64x8xf32>
    %373 = arith.mulf %371, %372 : vector<64x8xf32>
    %374 = arith.addf %368, %373 : vector<64x8xf32>
    %375 = vector.extract_strided_slice %330 {offsets = [0, 7], sizes = [64, 1], strides = [1, 1]} : vector<64x8xf32> to vector<64x1xf32>
    %376 = vector.extract_strided_slice %332 {offsets = [7, 0], sizes = [1, 8], strides = [1, 1]} : vector<8x8xf32> to vector<1x8xf32>
    %377 = vector.broadcast %375 : vector<64x1xf32> to vector<64x8xf32>
    %378 = vector.broadcast %376 : vector<1x8xf32> to vector<64x8xf32>
    %379 = arith.mulf %377, %378 : vector<64x8xf32>
    %380 = arith.addf %374, %379 : vector<64x8xf32>
    %c2_51 = arith.constant 2 : index
    %c1_52 = arith.constant 1 : index
    %c0_53 = arith.constant 0 : index
    %381 = vector.load %arg7[%c2_51, %c1_52, %c0_53] : memref<10x10x8xf32, #tpu.memory_space<vmem>>, vector<8x8x8xf32>
    %382 = vector.shape_cast %381 : vector<8x8x8xf32> to vector<64x8xf32>
    %c7 = arith.constant 7 : index
    %c0_54 = arith.constant 0 : index
    %c0_55 = arith.constant 0 : index
    %383 = vector.load %arg4[%c7, %c0_54, %c0_55] : memref<9x8x8xf32, #tpu.memory_space<vmem>>, vector<1x8x8xf32>
    %384 = vector.shape_cast %383 : vector<1x8x8xf32> to vector<8x8xf32>
    %385 = vector.extract_strided_slice %382 {offsets = [0, 0], sizes = [64, 1], strides = [1, 1]} : vector<64x8xf32> to vector<64x1xf32>
    %386 = vector.extract_strided_slice %384 {offsets = [0, 0], sizes = [1, 8], strides = [1, 1]} : vector<8x8xf32> to vector<1x8xf32>
    %387 = vector.broadcast %385 : vector<64x1xf32> to vector<64x8xf32>
    %388 = vector.broadcast %386 : vector<1x8xf32> to vector<64x8xf32>
    %389 = arith.mulf %387, %388 : vector<64x8xf32>
    %390 = arith.addf %380, %389 : vector<64x8xf32>
    %391 = vector.extract_strided_slice %382 {offsets = [0, 1], sizes = [64, 1], strides = [1, 1]} : vector<64x8xf32> to vector<64x1xf32>
    %392 = vector.extract_strided_slice %384 {offsets = [1, 0], sizes = [1, 8], strides = [1, 1]} : vector<8x8xf32> to vector<1x8xf32>
    %393 = vector.broadcast %391 : vector<64x1xf32> to vector<64x8xf32>
    %394 = vector.broadcast %392 : vector<1x8xf32> to vector<64x8xf32>
    %395 = arith.mulf %393, %394 : vector<64x8xf32>
    %396 = arith.addf %390, %395 : vector<64x8xf32>
    %397 = vector.extract_strided_slice %382 {offsets = [0, 2], sizes = [64, 1], strides = [1, 1]} : vector<64x8xf32> to vector<64x1xf32>
    %398 = vector.extract_strided_slice %384 {offsets = [2, 0], sizes = [1, 8], strides = [1, 1]} : vector<8x8xf32> to vector<1x8xf32>
    %399 = vector.broadcast %397 : vector<64x1xf32> to vector<64x8xf32>
    %400 = vector.broadcast %398 : vector<1x8xf32> to vector<64x8xf32>
    %401 = arith.mulf %399, %400 : vector<64x8xf32>
    %402 = arith.addf %396, %401 : vector<64x8xf32>
    %403 = vector.extract_strided_slice %382 {offsets = [0, 3], sizes = [64, 1], strides = [1, 1]} : vector<64x8xf32> to vector<64x1xf32>
    %404 = vector.extract_strided_slice %384 {offsets = [3, 0], sizes = [1, 8], strides = [1, 1]} : vector<8x8xf32> to vector<1x8xf32>
    %405 = vector.broadcast %403 : vector<64x1xf32> to vector<64x8xf32>
    %406 = vector.broadcast %404 : vector<1x8xf32> to vector<64x8xf32>
    %407 = arith.mulf %405, %406 : vector<64x8xf32>
    %408 = arith.addf %402, %407 : vector<64x8xf32>
    %409 = vector.extract_strided_slice %382 {offsets = [0, 4], sizes = [64, 1], strides = [1, 1]} : vector<64x8xf32> to vector<64x1xf32>
    %410 = vector.extract_strided_slice %384 {offsets = [4, 0], sizes = [1, 8], strides = [1, 1]} : vector<8x8xf32> to vector<1x8xf32>
    %411 = vector.broadcast %409 : vector<64x1xf32> to vector<64x8xf32>
    %412 = vector.broadcast %410 : vector<1x8xf32> to vector<64x8xf32>
    %413 = arith.mulf %411, %412 : vector<64x8xf32>
    %414 = arith.addf %408, %413 : vector<64x8xf32>
    %415 = vector.extract_strided_slice %382 {offsets = [0, 5], sizes = [64, 1], strides = [1, 1]} : vector<64x8xf32> to vector<64x1xf32>
    %416 = vector.extract_strided_slice %384 {offsets = [5, 0], sizes = [1, 8], strides = [1, 1]} : vector<8x8xf32> to vector<1x8xf32>
    %417 = vector.broadcast %415 : vector<64x1xf32> to vector<64x8xf32>
    %418 = vector.broadcast %416 : vector<1x8xf32> to vector<64x8xf32>
    %419 = arith.mulf %417, %418 : vector<64x8xf32>
    %420 = arith.addf %414, %419 : vector<64x8xf32>
    %421 = vector.extract_strided_slice %382 {offsets = [0, 6], sizes = [64, 1], strides = [1, 1]} : vector<64x8xf32> to vector<64x1xf32>
    %422 = vector.extract_strided_slice %384 {offsets = [6, 0], sizes = [1, 8], strides = [1, 1]} : vector<8x8xf32> to vector<1x8xf32>
    %423 = vector.broadcast %421 : vector<64x1xf32> to vector<64x8xf32>
    %424 = vector.broadcast %422 : vector<1x8xf32> to vector<64x8xf32>
    %425 = arith.mulf %423, %424 : vector<64x8xf32>
    %426 = arith.addf %420, %425 : vector<64x8xf32>
    %427 = vector.extract_strided_slice %382 {offsets = [0, 7], sizes = [64, 1], strides = [1, 1]} : vector<64x8xf32> to vector<64x1xf32>
    %428 = vector.extract_strided_slice %384 {offsets = [7, 0], sizes = [1, 8], strides = [1, 1]} : vector<8x8xf32> to vector<1x8xf32>
    %429 = vector.broadcast %427 : vector<64x1xf32> to vector<64x8xf32>
    %430 = vector.broadcast %428 : vector<1x8xf32> to vector<64x8xf32>
    %431 = arith.mulf %429, %430 : vector<64x8xf32>
    %432 = arith.addf %426, %431 : vector<64x8xf32>
    %c2_56 = arith.constant 2 : index
    %c2_57 = arith.constant 2 : index
    %c0_58 = arith.constant 0 : index
    %433 = vector.load %arg7[%c2_56, %c2_57, %c0_58] : memref<10x10x8xf32, #tpu.memory_space<vmem>>, vector<8x8x8xf32>
    %434 = vector.shape_cast %433 : vector<8x8x8xf32> to vector<64x8xf32>
    %c8 = arith.constant 8 : index
    %c0_59 = arith.constant 0 : index
    %c0_60 = arith.constant 0 : index
    %435 = vector.load %arg4[%c8, %c0_59, %c0_60] : memref<9x8x8xf32, #tpu.memory_space<vmem>>, vector<1x8x8xf32>
    %436 = vector.shape_cast %435 : vector<1x8x8xf32> to vector<8x8xf32>
    %437 = vector.extract_strided_slice %434 {offsets = [0, 0], sizes = [64, 1], strides = [1, 1]} : vector<64x8xf32> to vector<64x1xf32>
    %438 = vector.extract_strided_slice %436 {offsets = [0, 0], sizes = [1, 8], strides = [1, 1]} : vector<8x8xf32> to vector<1x8xf32>
    %439 = vector.broadcast %437 : vector<64x1xf32> to vector<64x8xf32>
    %440 = vector.broadcast %438 : vector<1x8xf32> to vector<64x8xf32>
    %441 = arith.mulf %439, %440 : vector<64x8xf32>
    %442 = arith.addf %432, %441 : vector<64x8xf32>
    %443 = vector.extract_strided_slice %434 {offsets = [0, 1], sizes = [64, 1], strides = [1, 1]} : vector<64x8xf32> to vector<64x1xf32>
    %444 = vector.extract_strided_slice %436 {offsets = [1, 0], sizes = [1, 8], strides = [1, 1]} : vector<8x8xf32> to vector<1x8xf32>
    %445 = vector.broadcast %443 : vector<64x1xf32> to vector<64x8xf32>
    %446 = vector.broadcast %444 : vector<1x8xf32> to vector<64x8xf32>
    %447 = arith.mulf %445, %446 : vector<64x8xf32>
    %448 = arith.addf %442, %447 : vector<64x8xf32>
    %449 = vector.extract_strided_slice %434 {offsets = [0, 2], sizes = [64, 1], strides = [1, 1]} : vector<64x8xf32> to vector<64x1xf32>
    %450 = vector.extract_strided_slice %436 {offsets = [2, 0], sizes = [1, 8], strides = [1, 1]} : vector<8x8xf32> to vector<1x8xf32>
    %451 = vector.broadcast %449 : vector<64x1xf32> to vector<64x8xf32>
    %452 = vector.broadcast %450 : vector<1x8xf32> to vector<64x8xf32>
    %453 = arith.mulf %451, %452 : vector<64x8xf32>
    %454 = arith.addf %448, %453 : vector<64x8xf32>
    %455 = vector.extract_strided_slice %434 {offsets = [0, 3], sizes = [64, 1], strides = [1, 1]} : vector<64x8xf32> to vector<64x1xf32>
    %456 = vector.extract_strided_slice %436 {offsets = [3, 0], sizes = [1, 8], strides = [1, 1]} : vector<8x8xf32> to vector<1x8xf32>
    %457 = vector.broadcast %455 : vector<64x1xf32> to vector<64x8xf32>
    %458 = vector.broadcast %456 : vector<1x8xf32> to vector<64x8xf32>
    %459 = arith.mulf %457, %458 : vector<64x8xf32>
    %460 = arith.addf %454, %459 : vector<64x8xf32>
    %461 = vector.extract_strided_slice %434 {offsets = [0, 4], sizes = [64, 1], strides = [1, 1]} : vector<64x8xf32> to vector<64x1xf32>
    %462 = vector.extract_strided_slice %436 {offsets = [4, 0], sizes = [1, 8], strides = [1, 1]} : vector<8x8xf32> to vector<1x8xf32>
    %463 = vector.broadcast %461 : vector<64x1xf32> to vector<64x8xf32>
    %464 = vector.broadcast %462 : vector<1x8xf32> to vector<64x8xf32>
    %465 = arith.mulf %463, %464 : vector<64x8xf32>
    %466 = arith.addf %460, %465 : vector<64x8xf32>
    %467 = vector.extract_strided_slice %434 {offsets = [0, 5], sizes = [64, 1], strides = [1, 1]} : vector<64x8xf32> to vector<64x1xf32>
    %468 = vector.extract_strided_slice %436 {offsets = [5, 0], sizes = [1, 8], strides = [1, 1]} : vector<8x8xf32> to vector<1x8xf32>
    %469 = vector.broadcast %467 : vector<64x1xf32> to vector<64x8xf32>
    %470 = vector.broadcast %468 : vector<1x8xf32> to vector<64x8xf32>
    %471 = arith.mulf %469, %470 : vector<64x8xf32>
    %472 = arith.addf %466, %471 : vector<64x8xf32>
    %473 = vector.extract_strided_slice %434 {offsets = [0, 6], sizes = [64, 1], strides = [1, 1]} : vector<64x8xf32> to vector<64x1xf32>
    %474 = vector.extract_strided_slice %436 {offsets = [6, 0], sizes = [1, 8], strides = [1, 1]} : vector<8x8xf32> to vector<1x8xf32>
    %475 = vector.broadcast %473 : vector<64x1xf32> to vector<64x8xf32>
    %476 = vector.broadcast %474 : vector<1x8xf32> to vector<64x8xf32>
    %477 = arith.mulf %475, %476 : vector<64x8xf32>
    %478 = arith.addf %472, %477 : vector<64x8xf32>
    %479 = vector.extract_strided_slice %434 {offsets = [0, 7], sizes = [64, 1], strides = [1, 1]} : vector<64x8xf32> to vector<64x1xf32>
    %480 = vector.extract_strided_slice %436 {offsets = [7, 0], sizes = [1, 8], strides = [1, 1]} : vector<8x8xf32> to vector<1x8xf32>
    %481 = vector.broadcast %479 : vector<64x1xf32> to vector<64x8xf32>
    %482 = vector.broadcast %480 : vector<1x8xf32> to vector<64x8xf32>
    %483 = arith.mulf %481, %482 : vector<64x8xf32>
    %484 = arith.addf %478, %483 : vector<64x8xf32>
    %485 = arith.truncf %484 : vector<64x8xf32> to vector<64x8xbf16>
    %c0_61 = arith.constant 0 : index
    %c0_62 = arith.constant 0 : index
    %c0_63 = arith.constant 0 : index
    %486 = vector.load %arg5[%c0_61, %c0_62, %c0_63] : memref<1x64x8xbf16, #tpu.memory_space<vmem>>, vector<1x64x8xbf16>
    %487 = vector.shape_cast %486 : vector<1x64x8xbf16> to vector<64x8xbf16>
    %488 = vector.shape_cast %485 : vector<64x8xbf16> to vector<1x64x8xbf16>
    tpu.vector_store %arg5[%c0_61, %c0_62, %c0_63], %488 {strides = array<i32>} : memref<1x64x8xbf16, #tpu.memory_space<vmem>>, vector<1x64x8xbf16>,
    %cst_64 = arith.constant dense<0.000000e+00> : vector<8xf32>
    %489 = vector.multi_reduction <add>, %484, %cst_64 [0] : vector<64x8xf32> to vector<8xf32>
    %490 = vector.shape_cast %489 : vector<8xf32> to vector<1x8xf32>
    %cst_65 = arith.constant 1.562500e-02 : f32
    %491 = vector.broadcast %cst_65 : f32 to vector<1x8xf32>
    %492 = arith.mulf %490, %491 : vector<1x8xf32>
    %493 = vector.broadcast %492 : vector<1x8xf32> to vector<64x8xf32>
    %494 = arith.subf %484, %493 : vector<64x8xf32>
    %495 = arith.mulf %494, %494 : vector<64x8xf32>
    %cst_66 = arith.constant dense<0.000000e+00> : vector<8xf32>
    %496 = vector.multi_reduction <add>, %495, %cst_66 [0] : vector<64x8xf32> to vector<8xf32>
    %497 = vector.shape_cast %496 : vector<8xf32> to vector<1x8xf32>
    %498 = tpu.concatenate %490, %497 in 0 : vector<1x8xf32>, vector<1x8xf32> -> vector<2x8xf32>
    %c0_67 = arith.constant 0 : index
    %c0_68 = arith.constant 0 : index
    %c0_69 = arith.constant 0 : index
    %499 = vector.load %arg6[%c0_67, %c0_68, %c0_69] : memref<1x2x8xf32, #tpu.memory_space<vmem>>, vector<1x2x8xf32>
    %500 = vector.shape_cast %499 : vector<1x2x8xf32> to vector<2x8xf32>
    %501 = vector.shape_cast %498 : vector<2x8xf32> to vector<1x2x8xf32>
    tpu.vector_store %arg6[%c0_67, %c0_68, %c0_69], %501 {strides = array<i32>} : memref<1x2x8xf32, #tpu.memory_space<vmem>>, vector<1x2x8xf32>,
    return
  }
  func.func @transform_0(%arg0: i32) -> (i32, i32, i32, i32) {
    %c0_i32 = arith.constant 0 : i32
    %c0_i32_0 = arith.constant 0 : i32
    %c0_i32_1 = arith.constant 0 : i32
    %c0_i32_2 = arith.constant 0 : i32
    return %arg0, %c0_i32, %c0_i32_0, %c0_i32_1 : i32, i32, i32, i32
  }
  func.func @transform_1(%arg0: i32) -> (i32, i32) {
    %c0_i32 = arith.constant 0 : i32
    %c0_i32_0 = arith.constant 0 : i32
    %c0_i32_1 = arith.constant 0 : i32
    return %c0_i32, %c0_i32_0 : i32, i32
  }
  func.func @transform_2(%arg0: i32) -> (i32, i32) {
    %c0_i32 = arith.constant 0 : i32
    %c0_i32_0 = arith.constant 0 : i32
    %c0_i32_1 = arith.constant 0 : i32
    return %c0_i32, %c0_i32_0 : i32, i32
  }
  func.func @transform_3(%arg0: i32) -> (i32, i32, i32) {
    %c0_i32 = arith.constant 0 : i32
    %c0_i32_0 = arith.constant 0 : i32
    %c0_i32_1 = arith.constant 0 : i32
    %c0_i32_2 = arith.constant 0 : i32
    return %c0_i32, %c0_i32_0, %c0_i32_1 : i32, i32, i32
  }
  func.func @transform_4(%arg0: i32) -> (i32, i32, i32) {
    %c0_i32 = arith.constant 0 : i32
    %c0_i32_0 = arith.constant 0 : i32
    %c0_i32_1 = arith.constant 0 : i32
    return %arg0, %c0_i32, %c0_i32_0 : i32, i32, i32
  }
  func.func @transform_5(%arg0: i32) -> (i32, i32, i32) {
    %c0_i32 = arith.constant 0 : i32
    %c0_i32_0 = arith.constant 0 : i32
    %c0_i32_1 = arith.constant 0 : i32
    return %arg0, %c0_i32, %c0_i32_0 : i32, i32, i32
  }
}

module attributes {stable_mosaic.version = 11 : i64} {
  func.func @_bn_relu_kernel(%arg0: i32, %arg1: memref<1x64x8xbf16, #tpu.memory_space<vmem>>, %arg2: memref<1x8xf32, #tpu.memory_space<vmem>>, %arg3: memref<1x8xf32, #tpu.memory_space<vmem>>, %arg4: memref<1x64x8xf32, #tpu.memory_space<vmem>>) attributes {dimension_semantics = [#tpu.dimension_semantics<parallel>], iteration_bounds = array<i64: 2>, scalar_prefetch = 0 : i64, scratch_operands = 0 : i64, tpu.core_type = #tpu.core_type<tc>, window_params = [{transform_indices = @transform_0, window_bounds = array<i64: 1, 64, 8>}, {pipeline_mode = #tpu.pipeline_mode<synchronous>, transform_indices = @transform_1, window_bounds = array<i64: 1, 8>}, {pipeline_mode = #tpu.pipeline_mode<synchronous>, transform_indices = @transform_2, window_bounds = array<i64: 1, 8>}, {transform_indices = @transform_3, window_bounds = array<i64: 1, 64, 8>}]} {
    %c0 = arith.constant 0 : index
    %c0_0 = arith.constant 0 : index
    %c0_1 = arith.constant 0 : index
    %0 = vector.load %arg1[%c0, %c0_0, %c0_1] : memref<1x64x8xbf16, #tpu.memory_space<vmem>>, vector<1x64x8xbf16>
    %1 = vector.shape_cast %0 : vector<1x64x8xbf16> to vector<64x8xbf16>
    %2 = arith.extf %1 : vector<64x8xbf16> to vector<64x8xf32>
    %c0_2 = arith.constant 0 : index
    %c0_3 = arith.constant 0 : index
    %3 = vector.load %arg2[%c0_2, %c0_3] : memref<1x8xf32, #tpu.memory_space<vmem>>, vector<1x8xf32>
    %4 = vector.broadcast %3 : vector<1x8xf32> to vector<64x8xf32>
    %5 = arith.mulf %2, %4 : vector<64x8xf32>
    %c0_4 = arith.constant 0 : index
    %c0_5 = arith.constant 0 : index
    %6 = vector.load %arg3[%c0_4, %c0_5] : memref<1x8xf32, #tpu.memory_space<vmem>>, vector<1x8xf32>
    %7 = vector.broadcast %6 : vector<1x8xf32> to vector<64x8xf32>
    %8 = arith.addf %5, %7 : vector<64x8xf32>
    %cst = arith.constant 0.000000e+00 : f32
    %9 = vector.broadcast %cst : f32 to vector<64x8xf32>
    %10 = arith.maximumf %8, %9 : vector<64x8xf32>
    %c0_6 = arith.constant 0 : index
    %c0_7 = arith.constant 0 : index
    %c0_8 = arith.constant 0 : index
    %11 = vector.load %arg4[%c0_6, %c0_7, %c0_8] : memref<1x64x8xf32, #tpu.memory_space<vmem>>, vector<1x64x8xf32>
    %12 = vector.shape_cast %11 : vector<1x64x8xf32> to vector<64x8xf32>
    %13 = vector.shape_cast %10 : vector<64x8xf32> to vector<1x64x8xf32>
    tpu.vector_store %arg4[%c0_6, %c0_7, %c0_8], %13 {strides = array<i32>} : memref<1x64x8xf32, #tpu.memory_space<vmem>>, vector<1x64x8xf32>,
    return
  }
  func.func @transform_0(%arg0: i32) -> (i32, i32, i32) {
    %c0_i32 = arith.constant 0 : i32
    %c0_i32_0 = arith.constant 0 : i32
    %c0_i32_1 = arith.constant 0 : i32
    return %arg0, %c0_i32, %c0_i32_0 : i32, i32, i32
  }
  func.func @transform_1(%arg0: i32) -> (i32, i32) {
    %c0_i32 = arith.constant 0 : i32
    %c0_i32_0 = arith.constant 0 : i32
    %c0_i32_1 = arith.constant 0 : i32
    return %c0_i32, %c0_i32_0 : i32, i32
  }
  func.func @transform_2(%arg0: i32) -> (i32, i32) {
    %c0_i32 = arith.constant 0 : i32
    %c0_i32_0 = arith.constant 0 : i32
    %c0_i32_1 = arith.constant 0 : i32
    return %c0_i32, %c0_i32_0 : i32, i32
  }
  func.func @transform_3(%arg0: i32) -> (i32, i32, i32) {
    %c0_i32 = arith.constant 0 : i32
    %c0_i32_0 = arith.constant 0 : i32
    %c0_i32_1 = arith.constant 0 : i32
    return %arg0, %c0_i32, %c0_i32_0 : i32, i32, i32
  }
}

</mosaic_0001>

<llo_original>
// kernel: downscale_forward.5
$region0: #{downscale_forward.5}
  #allocation0 [shape = 'u32[]', space=smem, size = 0x4, offset = 0x4, fixed_abs, tag = 'smem constant byte address 0x4 - core index']
  #allocation1 [shape = 'u32[144,128]{1,0:T(1,128)}', space=vmem, size = 0x12000, scoped, tag = 'internal scratch']
  %s0 = inlined_call_operand.vmem [shape: bf16[2,64,8], index: 0, kind: input, shape index: {}]
  %s1 = inlined_call_operand.vmem [shape: f32[1,8], index: 1, kind: input, shape index: {}]
  %s2 = inlined_call_operand.vmem [shape: f32[1,8], index: 2, kind: input, shape index: {}]
  %s3 = inlined_call_operand.vmem [shape: f32[2,64,8], index: 3, kind: output, shape index: {}]
  %s4 = sld [smem:[#allocation0]]
  $region45: #{downscale_forward.5} parent=0
    _
  %s6 = ssub.s32 1, %s4
  %s7 = scalar_select 0, %s6, %s4
  loop: start=0, step=1, limit=4
  $region2: #{downscale_forward.5} parent=0 // loop_pre_header
    _
  $region3: #{downscale_forward.5} parent=0 // loop_header
    %s9 = sphi 0, %s13
    %p10 = scmp.ge.s32.totalorder %s9, 4
    %s19 = sphi 0, %s21
    %s22 = sphi 0, %s19
    %s23 = sphi 0, %s22
    %s39 = sphi 0, %s23
    %s43 = sphi 0, %s43
    %s45 = sphi 0, %s43
    %s46 = sphi 0, %s45
    %s60 = sphi 0, %s46
    %s64 = sphi 0, %s64
    %s66 = sphi 0, %s64
    %s67 = sphi 0, %s66
    %s81 = sphi 0, %s67
    %s87 = sphi 0, %s89
    %s90 = sphi 0, %s87
    %s91 = sphi 0, %s90
    %s107 = sphi 0, %s91
  $region4: #{downscale_forward.5} parent=0 // loop_header_branch
    %12 = sbr.rel (%p10) target = $region8
  $region5: #{downscale_forward.5} parent=0 // loop_body
    %s14 = ssub.s32 %s9, 1
    %s15 = ssub.s32 %s9, 2
    %s16 = sadd.s32 %s9, 1
    %s17 = ssub.s32 %s9, %s16
    %p18 = scmp.eq.s32.totalorder %s17, 0
    %s20 = sadd.s32 %s19, 1
    %s21 = scalar_select %p18, %s19, %s20
    %p24 = pneg %p18
    %p25 = scmp.eq.s32.totalorder %s9, 1
    %p26 = por %p24, %p25
    %p27 = scmp.ne.s32.totalorder %s19, %s22
    %p28 = scmp.eq.s32.totalorder %s9, 0
    %p29 = por %p27, %p28
    %p30 = scmp.ne.s32.totalorder %s19, %s22
    %p31 = scmp.eq.s32.totalorder %s14, 1
    %p32 = por %p30, %p31
    %p33 = scmp.ne.s32.totalorder %s22, %s23
    %p34 = scmp.eq.s32.totalorder %s14, 0
    %p35 = por %p33, %p34
    %p36 = scmp.ne.s32.totalorder %s22, %s23
    %p37 = scmp.eq.s32.totalorder %s15, 1
    %p38 = por %p36, %p37
    %p40 = scmp.ne.s32.totalorder %s23, %s39
    %p41 = scmp.eq.s32.totalorder %s15, 0
    %p42 = por %p40, %p41
    %s44 = sadd.s32 %s43, 1
    %p47 = scmp.eq.s32.totalorder %s9, 1
    %p48 = scmp.ne.s32.totalorder %s43, %s45
    %p49 = scmp.eq.s32.totalorder %s9, 0
    %p50 = por %p48, %p49
    %p51 = scmp.ne.s32.totalorder %s43, %s45
    %p52 = scmp.eq.s32.totalorder %s14, 1
    %p53 = por %p51, %p52
    %p54 = scmp.ne.s32.totalorder %s45, %s46
    %p55 = scmp.eq.s32.totalorder %s14, 0
    %p56 = por %p54, %p55
    %p57 = scmp.ne.s32.totalorder %s45, %s46
    %p58 = scmp.eq.s32.totalorder %s15, 1
    %p59 = por %p57, %p58
    %p61 = scmp.ne.s32.totalorder %s46, %s60
    %p62 = scmp.eq.s32.totalorder %s15, 0
    %p63 = por %p61, %p62
    %s65 = sadd.s32 %s64, 1
    %p68 = scmp.eq.s32.totalorder %s9, 1
    %p69 = scmp.ne.s32.totalorder %s64, %s66
    %p70 = scmp.eq.s32.totalorder %s9, 0
    %p71 = por %p69, %p70
    %p72 = scmp.ne.s32.totalorder %s64, %s66
    %p73 = scmp.eq.s32.totalorder %s14, 1
    %p74 = por %p72, %p73
    %p75 = scmp.ne.s32.totalorder %s66, %s67
    %p76 = scmp.eq.s32.totalorder %s14, 0
    %p77 = por %p75, %p76
    %p78 = scmp.ne.s32.totalorder %s66, %s67
    %p79 = scmp.eq.s32.totalorder %s15, 1
    %p80 = por %p78, %p79
    %p82 = scmp.ne.s32.totalorder %s67, %s81
    %p83 = scmp.eq.s32.totalorder %s15, 0
    %p84 = por %p82, %p83
    %s85 = ssub.s32 %s9, %s16
    %p86 = scmp.eq.s32.totalorder %s85, 0
    %s88 = sadd.s32 %s87, 1
    %s89 = scalar_select %p86, %s87, %s88
    %p92 = pneg %p86
    %p93 = scmp.eq.s32.totalorder %s9, 1
    %p94 = por %p92, %p93
    %p95 = scmp.ne.s32.totalorder %s87, %s90
    %p96 = scmp.eq.s32.totalorder %s9, 0
    %p97 = por %p95, %p96
    %p98 = scmp.ne.s32.totalorder %s87, %s90
    %p99 = scmp.eq.s32.totalorder %s14, 1
    %p100 = por %p98, %p99
    %p101 = scmp.ne.s32.totalorder %s90, %s91
    %p102 = scmp.eq.s32.totalorder %s14, 0
    %p103 = por %p101, %p102
    %p104 = scmp.ne.s32.totalorder %s90, %s91
    %p105 = scmp.eq.s32.totalorder %s15, 1
    %p106 = por %p104, %p105
    %p108 = scmp.ne.s32.totalorder %s91, %s107
    %p109 = scmp.eq.s32.totalorder %s15, 0
    %p110 = por %p108, %p109
    %p111 = scmp.le.s32.totalorder 1, %s9
    %p112 = scmp.lt.s32.totalorder %s9, 3
    %p113 = pnand %p111, %p112
    %p114 = pneg %p113
    // Predicated region
    $region9: #{downscale_forward.5} parent=5 // pred_check
      _
    $region10: #{downscale_forward.5} parent=5 // pred_check_branch
      %116 = sbr.rel (%p113) target = $region12
    $region11: #{downscale_forward.5} parent=5 // pred_region
      %s117 = ssub.s32 %s9, 1
      // Predicated region
      $region13: #{downscale_forward.5} parent=11 // pred_check
        %p118 = pneg %p56
      $region14: #{downscale_forward.5} parent=11 // pred_check_branch
        %120 = sbr.rel (%p118) target = $region16
      $region15: #{downscale_forward.5} parent=11 // pred_region
        _
      $region16: #{downscale_forward.5} parent=11 // pred_fallthru
        _
      // Predicated region
      $region17: #{downscale_forward.5} parent=11 // pred_check
        %p121 = pneg %p77
      $region18: #{downscale_forward.5} parent=11 // pred_check_branch
        %123 = sbr.rel (%p121) target = $region20
      $region19: #{downscale_forward.5} parent=11 // pred_region
        _
      $region20: #{downscale_forward.5} parent=11 // pred_fallthru
        _
    $region12: #{downscale_forward.5} parent=5 // pred_fallthru
      _
    %p124 = scmp.lt.s32.totalorder %s9, 2
    // Predicated region
    $region21: #{downscale_forward.5} parent=5 // pred_check
      %p125 = pneg %p124
    $region22: #{downscale_forward.5} parent=5 // pred_check_branch
      %127 = sbr.rel (%p125) target = $region24
    $region23: #{downscale_forward.5} parent=5 // pred_region
      // Predicated region
      $region25: #{downscale_forward.5} parent=23 // pred_check
        %p128 = pneg %p29
      $region26: #{downscale_forward.5} parent=23 // pred_check_branch
        %130 = sbr.rel (%p128) target = $region28
      $region27: #{downscale_forward.5} parent=23 // pred_region
        %p131 = scmp.lt.s32.totalorder %s9, 1
        %s132 = scalar_select %p131, %s9, 1
        %s133 = smul.addr %s132, 8
        %s134 = smul.addr %s133, 4
        %s135 = scalar_lea.vmem %s0, %s134
      $region28: #{downscale_forward.5} parent=23 // pred_fallthru
        _
    $region24: #{downscale_forward.5} parent=5 // pred_fallthru
      _
    %p136 = scmp.le.s32.totalorder 1, %s9
    %p137 = scmp.lt.s32.totalorder %s9, 3
    %p138 = pnand %p136, %p137
    %p139 = pneg %p138
    // Predicated region
    $region29: #{downscale_forward.5} parent=5 // pred_check
      _
    $region30: #{downscale_forward.5} parent=5 // pred_check_branch
      %141 = sbr.rel (%p138) target = $region32
    $region31: #{downscale_forward.5} parent=5 // pred_region
      %s142 = ssub.s32 %s9, 1
      %p143 = scmp.lt.s32.totalorder %s14, 1
      %s144 = scalar_select %p143, %s14, 1
      %s145 = smul.addr %s144, 8
      %s146 = smul.addr %s145, 4
      %s147 = scalar_lea.vmem %s0, %s146
      %p148 = pneg %p35
      %p149 = pneg %p32
      %p150 = pneg %p56
      %p151 = pneg %p53
      %p152 = pneg %p77
      %p153 = pneg %p74
      %p154 = pneg %p103
      %p155 = pneg %p100
      %p156 = scmp.lt.s32.totalorder %s14, 1
      %s157 = scalar_select %p156, %s14, 1
      %s158 = smul.addr %s157, 8
      %s159 = smul.addr %s158, 8
      %s160 = scalar_lea.vmem %s3, %s159
      %p161 = scmp.lt.s32.totalorder %s14, 1
      %s162 = scalar_select %p161, %s14, 1
      %s163 = smul.addr %s162, 8
      %s164 = smul.addr %s163, 4
      %s165 = scalar_lea.vmem %s0, %s164
      %p166 = scmp.lt.s32.totalorder %s14, 1
      %s167 = scalar_select %p166, %s14, 1
      %s168 = smul.addr %s167, 8
      %s169 = smul.addr %s168, 8
      %s170 = scalar_lea.vmem %s3, %s169
      %v171 = vld [vmem:[%s165] sm:$0xf]
      %v172 = vld [vmem:[%s165 + $0x4] sm:$0xf]
      %v173 = vld [vmem:[%s165 + $0x8] sm:$0xf]
      %v174 = vld [vmem:[%s165 + $0xc] sm:$0xf]
      %v175 = vld [vmem:[%s165 + $0x10] sm:$0xf]
      %v176 = vld [vmem:[%s165 + $0x14] sm:$0xf]
      %v177 = vld [vmem:[%s165 + $0x18] sm:$0xf]
      %v178 = vld [vmem:[%s165 + $0x1c] sm:$0xf]
      %v179 = vunpack.c.l.bf16 %v171
      %v180 = vunpack.c.l.bf16 %v172
      %v181 = vunpack.c.l.bf16 %v173
      %v182 = vunpack.c.l.bf16 %v174
      %v183 = vunpack.c.l.bf16 %v175
      %v184 = vunpack.c.l.bf16 %v176
      %v185 = vunpack.c.l.bf16 %v177
      %v186 = vunpack.c.l.bf16 %v178
      %v187 = vld [vmem:[%s1] sm:$0x1]
      %v189 = vlaneseq
      %v190 = vshrl.u32 %v189, 7
      %v191 = vsub.s32 0, %v190
      %v192 = vrot.slane %v187, %v191
      %v194 = vmul.f32 %v179, %v192
      %v195 = vmul.f32 %v180, %v192
      %v196 = vmul.f32 %v181, %v192
      %v197 = vmul.f32 %v182, %v192
      %v198 = vmul.f32 %v183, %v192
      %v199 = vmul.f32 %v184, %v192
      %v200 = vmul.f32 %v185, %v192
      %v201 = vmul.f32 %v186, %v192
      %v202 = vld [vmem:[%s2] sm:$0x1]
      %v204 = vlaneseq
      %v205 = vshrl.u32 %v204, 7
      %v206 = vsub.s32 0, %v205
      %v207 = vrot.slane %v202, %v206
      %v209 = vadd.f32 %v194, %v207
      %v210 = vadd.f32 %v195, %v207
      %v211 = vadd.f32 %v196, %v207
      %v212 = vadd.f32 %v197, %v207
      %v213 = vadd.f32 %v198, %v207
      %v214 = vadd.f32 %v199, %v207
      %v215 = vadd.f32 %v200, %v207
      %v216 = vadd.f32 %v201, %v207
      %v217 = vmax.f32 %v209, 0.0
      %v218 = vmax.f32 %v210, 0.0
      %v219 = vmax.f32 %v211, 0.0
      %v220 = vmax.f32 %v212, 0.0
      %v221 = vmax.f32 %v213, 0.0
      %v222 = vmax.f32 %v214, 0.0
      %v223 = vmax.f32 %v215, 0.0
      %v224 = vmax.f32 %v216, 0.0
      %vm225 = vcmask 64512
      %226 = vst.msk [vmem:[%s170] sm:$0xff] %vm225, %v217
      %227 = vst.msk [vmem:[%s170 + $0x8] sm:$0xff] %vm225, %v218
      %228 = vst.msk [vmem:[%s170 + $0x10] sm:$0xff] %vm225, %v219
      %229 = vst.msk [vmem:[%s170 + $0x18] sm:$0xff] %vm225, %v220
      %230 = vst.msk [vmem:[%s170 + $0x20] sm:$0xff] %vm225, %v221
      %231 = vst.msk [vmem:[%s170 + $0x28] sm:$0xff] %vm225, %v222
      %232 = vst.msk [vmem:[%s170 + $0x30] sm:$0xff] %vm225, %v223
      %233 = vst.msk [vmem:[%s170 + $0x38] sm:$0xff] %vm225, %v224
      %p234 = scmp.lt.s32.totalorder %s14, 1
      %s235 = scalar_select %p234, %s14, 1
      %s236 = smul.addr %s235, 8
      %s237 = smul.addr %s236, 8
      %s238 = scalar_lea.vmem %s3, %s237
      // Predicated region
      $region33: #{downscale_forward.5} parent=31 // pred_check
        %p239 = pneg %p100
      $region34: #{downscale_forward.5} parent=31 // pred_check_branch
        %241 = sbr.rel (%p239) target = $region36
      $region35: #{downscale_forward.5} parent=31 // pred_region
        _
      $region36: #{downscale_forward.5} parent=31 // pred_fallthru
        _
    $region32: #{downscale_forward.5} parent=5 // pred_fallthru
      _
    %p242 = scmp.le.s32.totalorder 2, %s9
    // Predicated region
    $region37: #{downscale_forward.5} parent=5 // pred_check
      %p243 = pneg %p242
    $region38: #{downscale_forward.5} parent=5 // pred_check_branch
      %245 = sbr.rel (%p243) target = $region40
    $region39: #{downscale_forward.5} parent=5 // pred_region
      %s246 = ssub.s32 %s9, 2
      // Predicated region
      $region41: #{downscale_forward.5} parent=39 // pred_check
        %p247 = pneg %p106
      $region42: #{downscale_forward.5} parent=39 // pred_check_branch
        %249 = sbr.rel (%p247) target = $region44
      $region43: #{downscale_forward.5} parent=39 // pred_region
        %p250 = scmp.lt.s32.totalorder %s15, 1
        %s251 = scalar_select %p250, %s15, 1
        %s252 = smul.addr %s251, 8
        %s253 = smul.addr %s252, 8
        %s254 = scalar_lea.vmem %s3, %s253
      $region44: #{downscale_forward.5} parent=39 // pred_fallthru
        _
    $region40: #{downscale_forward.5} parent=5 // pred_fallthru
      _
  $region6: #{downscale_forward.5} parent=0 // loop_footer
    %s13 = sadd.s32 1, %s9
  $region7: #{downscale_forward.5} parent=0 // loop_footer_branch
    %8 = sbr.rel target = $region3
  $region8: #{downscale_forward.5} parent=0 // loop_exit
    _

// kernel: downscale_forward.3
$region0: #{downscale_forward.3}
  #allocation0 [shape = 'u32[]', space=smem, size = 0x4, offset = 0x4, fixed_abs, tag = 'smem constant byte address 0x4 - core index']
  #allocation1 [shape = 'u32[144,128]{1,0:T(1,128)}', space=vmem, size = 0x12000, scoped, tag = 'internal scratch']
  #allocation2 [shape = 'f32[10,10,4]{2,1,0:T(8,128)}', space=vmem, size = 0x14000, scoped, tag = 'scratch operand']
  %s0 = inlined_call_operand.vmem [shape: bf16[2,8,8,4], index: 0, kind: input, shape index: {}]
  %s1 = inlined_call_operand.vmem [shape: f32[9,4,8], index: 1, kind: input, shape index: {}]
  %s2 = inlined_call_operand.vmem [shape: bf16[2,64,8], index: 2, kind: output, shape index: {0}]
  %s3 = inlined_call_operand.vmem [shape: f32[2,2,8], index: 3, kind: output, shape index: {1}]
  %4 = xla_tuple %s2, %s3
  %s5 = sld [smem:[#allocation0]]
  $region49: #{downscale_forward.3} parent=0
    _
  %s7 = ssub.s32 1, %s5
  %s8 = scalar_select 0, %s7, %s5
  loop: start=0, step=1, limit=4
  $region2: #{downscale_forward.3} parent=0 // loop_pre_header
    _
  $region3: #{downscale_forward.3} parent=0 // loop_header
    %s10 = sphi 0, %s14
    %p11 = scmp.ge.s32.totalorder %s10, 4
    %s20 = sphi 0, %s22
    %s23 = sphi 0, %s20
    %s24 = sphi 0, %s23
    %s40 = sphi 0, %s24
    %s44 = sphi 0, %s44
    %s46 = sphi 0, %s44
    %s47 = sphi 0, %s46
    %s61 = sphi 0, %s47
    %s67 = sphi 0, %s69
    %s70 = sphi 0, %s67
    %s71 = sphi 0, %s70
    %s87 = sphi 0, %s71
    %s93 = sphi 0, %s95
    %s96 = sphi 0, %s93
    %s97 = sphi 0, %s96
    %s113 = sphi 0, %s97
  $region4: #{downscale_forward.3} parent=0 // loop_header_branch
    %13 = sbr.rel (%p11) target = $region8
  $region5: #{downscale_forward.3} parent=0 // loop_body
    %s15 = ssub.s32 %s10, 1
    %s16 = ssub.s32 %s10, 2
    %s17 = sadd.s32 %s10, 1
    %s18 = ssub.s32 %s10, %s17
    %p19 = scmp.eq.s32.totalorder %s18, 0
    %s21 = sadd.s32 %s20, 1
    %s22 = scalar_select %p19, %s20, %s21
    %p25 = pneg %p19
    %p26 = scmp.eq.s32.totalorder %s10, 1
    %p27 = por %p25, %p26
    %p28 = scmp.ne.s32.totalorder %s20, %s23
    %p29 = scmp.eq.s32.totalorder %s10, 0
    %p30 = por %p28, %p29
    %p31 = scmp.ne.s32.totalorder %s20, %s23
    %p32 = scmp.eq.s32.totalorder %s15, 1
    %p33 = por %p31, %p32
    %p34 = scmp.ne.s32.totalorder %s23, %s24
    %p35 = scmp.eq.s32.totalorder %s15, 0
    %p36 = por %p34, %p35
    %p37 = scmp.ne.s32.totalorder %s23, %s24
    %p38 = scmp.eq.s32.totalorder %s16, 1
    %p39 = por %p37, %p38
    %p41 = scmp.ne.s32.totalorder %s24, %s40
    %p42 = scmp.eq.s32.totalorder %s16, 0
    %p43 = por %p41, %p42
    %s45 = sadd.s32 %s44, 1
    %p48 = scmp.eq.s32.totalorder %s10, 1
    %p49 = scmp.ne.s32.totalorder %s44, %s46
    %p50 = scmp.eq.s32.totalorder %s10, 0
    %p51 = por %p49, %p50
    %p52 = scmp.ne.s32.totalorder %s44, %s46
    %p53 = scmp.eq.s32.totalorder %s15, 1
    %p54 = por %p52, %p53
    %p55 = scmp.ne.s32.totalorder %s46, %s47
    %p56 = scmp.eq.s32.totalorder %s15, 0
    %p57 = por %p55, %p56
    %p58 = scmp.ne.s32.totalorder %s46, %s47
    %p59 = scmp.eq.s32.totalorder %s16, 1
    %p60 = por %p58, %p59
    %p62 = scmp.ne.s32.totalorder %s47, %s61
    %p63 = scmp.eq.s32.totalorder %s16, 0
    %p64 = por %p62, %p63
    %s65 = ssub.s32 %s10, %s17
    %p66 = scmp.eq.s32.totalorder %s65, 0
    %s68 = sadd.s32 %s67, 1
    %s69 = scalar_select %p66, %s67, %s68
    %p72 = pneg %p66
    %p73 = scmp.eq.s32.totalorder %s10, 1
    %p74 = por %p72, %p73
    %p75 = scmp.ne.s32.totalorder %s67, %s70
    %p76 = scmp.eq.s32.totalorder %s10, 0
    %p77 = por %p75, %p76
    %p78 = scmp.ne.s32.totalorder %s67, %s70
    %p79 = scmp.eq.s32.totalorder %s15, 1
    %p80 = por %p78, %p79
    %p81 = scmp.ne.s32.totalorder %s70, %s71
    %p82 = scmp.eq.s32.totalorder %s15, 0
    %p83 = por %p81, %p82
    %p84 = scmp.ne.s32.totalorder %s70, %s71
    %p85 = scmp.eq.s32.totalorder %s16, 1
    %p86 = por %p84, %p85
    %p88 = scmp.ne.s32.totalorder %s71, %s87
    %p89 = scmp.eq.s32.totalorder %s16, 0
    %p90 = por %p88, %p89
    %s91 = ssub.s32 %s10, %s17
    %p92 = scmp.eq.s32.totalorder %s91, 0
    %s94 = sadd.s32 %s93, 1
    %s95 = scalar_select %p92, %s93, %s94
    %p98 = pneg %p92
    %p99 = scmp.eq.s32.totalorder %s10, 1
    %p100 = por %p98, %p99
    %p101 = scmp.ne.s32.totalorder %s93, %s96
    %p102 = scmp.eq.s32.totalorder %s10, 0
    %p103 = por %p101, %p102
    %p104 = scmp.ne.s32.totalorder %s93, %s96
    %p105 = scmp.eq.s32.totalorder %s15, 1
    %p106 = por %p104, %p105
    %p107 = scmp.ne.s32.totalorder %s96, %s97
    %p108 = scmp.eq.s32.totalorder %s15, 0
    %p109 = por %p107, %p108
    %p110 = scmp.ne.s32.totalorder %s96, %s97
    %p111 = scmp.eq.s32.totalorder %s16, 1
    %p112 = por %p110, %p111
    %p114 = scmp.ne.s32.totalorder %s97, %s113
    %p115 = scmp.eq.s32.totalorder %s16, 0
    %p116 = por %p114, %p115
    %p117 = scmp.le.s32.totalorder 1, %s10
    %p118 = scmp.lt.s32.totalorder %s10, 3
    %p119 = pnand %p117, %p118
    %p120 = pneg %p119
    // Predicated region
    $region9: #{downscale_forward.3} parent=5 // pred_check
      _
    $region10: #{downscale_forward.3} parent=5 // pred_check_branch
      %122 = sbr.rel (%p119) target = $region12
    $region11: #{downscale_forward.3} parent=5 // pred_region
      %s123 = ssub.s32 %s10, 1
      // Predicated region
      $region13: #{downscale_forward.3} parent=11 // pred_check
        %p124 = pneg %p57
      $region14: #{downscale_forward.3} parent=11 // pred_check_branch
        %126 = sbr.rel (%p124) target = $region16
      $region15: #{downscale_forward.3} parent=11 // pred_region
        _
      $region16: #{downscale_forward.3} parent=11 // pred_fallthru
        _
    $region12: #{downscale_forward.3} parent=5 // pred_fallthru
      _
    %p127 = scmp.lt.s32.totalorder %s10, 2
    // Predicated region
    $region17: #{downscale_forward.3} parent=5 // pred_check
      %p128 = pneg %p127
    $region18: #{downscale_forward.3} parent=5 // pred_check_branch
      %130 = sbr.rel (%p128) target = $region20
    $region19: #{downscale_forward.3} parent=5 // pred_region
      // Predicated region
      $region21: #{downscale_forward.3} parent=19 // pred_check
        %p131 = pneg %p30
      $region22: #{downscale_forward.3} parent=19 // pred_check_branch
        %133 = sbr.rel (%p131) target = $region24
      $region23: #{downscale_forward.3} parent=19 // pred_region
        %p134 = scmp.lt.s32.totalorder %s10, 1
        %s135 = scalar_select %p134, %s10, 1
        %s136 = smul.addr %s135, 8
        %s137 = smul.addr %s136, 4
        %s138 = scalar_lea.vmem %s0, %s137
      $region24: #{downscale_forward.3} parent=19 // pred_fallthru
        _
    $region20: #{downscale_forward.3} parent=5 // pred_fallthru
      _
    %p139 = scmp.le.s32.totalorder 1, %s10
    %p140 = scmp.lt.s32.totalorder %s10, 3
    %p141 = pnand %p139, %p140
    %p142 = pneg %p141
    // Predicated region
    $region25: #{downscale_forward.3} parent=5 // pred_check
      _
    $region26: #{downscale_forward.3} parent=5 // pred_check_branch
      %144 = sbr.rel (%p141) target = $region28
    $region27: #{downscale_forward.3} parent=5 // pred_region
      %s145 = ssub.s32 %s10, 1
      %p146 = scmp.lt.s32.totalorder %s15, 1
      %s147 = scalar_select %p146, %s15, 1
      %s148 = smul.addr %s147, 8
      %s149 = smul.addr %s148, 4
      %s150 = scalar_lea.vmem %s0, %s149
      %p151 = pneg %p36
      %p152 = pneg %p33
      %p153 = pneg %p57
      %p154 = pneg %p54
      %p155 = pneg %p83
      %p156 = pneg %p80
      %p157 = scmp.lt.s32.totalorder %s15, 1
      %s158 = scalar_select %p157, %s15, 1
      %s159 = smul.addr %s158, 8
      %s160 = smul.addr %s159, 4
      %s161 = scalar_lea.vmem %s2, %s160
      %p162 = pneg %p109
      %p163 = pneg %p106
      %p164 = scmp.lt.s32.totalorder %s15, 1
      %s165 = scalar_select %p164, %s15, 1
      %s166 = smul.addr %s165, 2
      %s167 = scalar_lea.vmem %s3, %s166
      %p168 = scmp.lt.s32.totalorder %s15, 1
      %s169 = scalar_select %p168, %s15, 1
      %s170 = smul.addr %s169, 8
      %s171 = smul.addr %s170, 4
      %s172 = scalar_lea.vmem %s0, %s171
      %p173 = scmp.lt.s32.totalorder %s15, 1
      %s174 = scalar_select %p173, %s15, 1
      %s175 = smul.addr %s174, 8
      %s176 = smul.addr %s175, 4
      %s177 = scalar_lea.vmem %s2, %s176
      %p178 = scmp.lt.s32.totalorder %s15, 1
      %s179 = scalar_select %p178, %s15, 1
      %s180 = smul.addr %s179, 2
      %s181 = scalar_lea.vmem %s3, %s180
      %v182 = vld [vmem:[%s172] sm:$0xf]
      %v183 = vld [vmem:[%s172 + $0x4] sm:$0xf]
      %v184 = vld [vmem:[%s172 + $0x8] sm:$0xf]
      %v185 = vld [vmem:[%s172 + $0xc] sm:$0xf]
      %v186 = vld [vmem:[%s172 + $0x10] sm:$0xf]
      %v187 = vld [vmem:[%s172 + $0x14] sm:$0xf]
      %v188 = vld [vmem:[%s172 + $0x18] sm:$0xf]
      %v189 = vld [vmem:[%s172 + $0x1c] sm:$0xf]
      %v190 = vunpack.c.l.bf16 %v182
      %v191 = vunpack.c.l.bf16 %v183
      %v192 = vunpack.c.l.bf16 %v184
      %v193 = vunpack.c.l.bf16 %v185
      %v194 = vunpack.c.l.bf16 %v186
      %v195 = vunpack.c.l.bf16 %v187
      %v196 = vunpack.c.l.bf16 %v188
      %v197 = vunpack.c.l.bf16 %v189
      %vm198 = vcmask 31744
      %199 = vst.msk [vmem:[#allocation2] sm:$0xff] %vm198, 0.0
      %vm200 = vcmask 25600
      %201 = vst.msk [vmem:[#allocation2 + $0x8] sm:$0x3] %vm200, 0.0
      %202 = vst.msk [vmem:[#allocation2 + $0x10] sm:$0xff] %vm198, 0.0
      %203 = vst.msk [vmem:[#allocation2 + $0x18] sm:$0x3] %vm200, 0.0
      %204 = vst.msk [vmem:[#allocation2 + $0x20] sm:$0xff] %vm198, 0.0
      %205 = vst.msk [vmem:[#allocation2 + $0x28] sm:$0x3] %vm200, 0.0
      %206 = vst.msk [vmem:[#allocation2 + $0x30] sm:$0xff] %vm198, 0.0
      %207 = vst.msk [vmem:[#allocation2 + $0x38] sm:$0x3] %vm200, 0.0
      %208 = vst.msk [vmem:[#allocation2 + $0x40] sm:$0xff] %vm198, 0.0
      %209 = vst.msk [vmem:[#allocation2 + $0x48] sm:$0x3] %vm200, 0.0
      %210 = vst.msk [vmem:[#allocation2 + $0x50] sm:$0xff] %vm198, 0.0
      %211 = vst.msk [vmem:[#allocation2 + $0x58] sm:$0x3] %vm200, 0.0
      %212 = vst.msk [vmem:[#allocation2 + $0x60] sm:$0xff] %vm198, 0.0
      %213 = vst.msk [vmem:[#allocation2 + $0x68] sm:$0x3] %vm200, 0.0
      %214 = vst.msk [vmem:[#allocation2 + $0x70] sm:$0xff] %vm198, 0.0
      %215 = vst.msk [vmem:[#allocation2 + $0x78] sm:$0x3] %vm200, 0.0
      %216 = vst.msk [vmem:[#allocation2 + $0x80] sm:$0xff] %vm198, 0.0
      %217 = vst.msk [vmem:[#allocation2 + $0x88] sm:$0x3] %vm200, 0.0
      %218 = vst.msk [vmem:[#allocation2 + $0x90] sm:$0xff] %vm198, 0.0
      %219 = vst.msk [vmem:[#allocation2 + $0x98] sm:$0x3] %vm200, 0.0
      %s220 = scalar_lea.vmem [#allocation2], 16
      %221 = vst.msk [vmem:[%s220 + $0x1] sm:$0xff] %vm198, %v190
      %222 = vst.msk [vmem:[%s220 + $0x11] sm:$0xff] %vm198, %v191
      %223 = vst.msk [vmem:[%s220 + $0x21] sm:$0xff] %vm198, %v192
      %224 = vst.msk [vmem:[%s220 + $0x31] sm:$0xff] %vm198, %v193
      %225 = vst.msk [vmem:[%s220 + $0x41] sm:$0xff] %vm198, %v194
      %226 = vst.msk [vmem:[%s220 + $0x51] sm:$0xff] %vm198, %v195
      %227 = vst.msk [vmem:[%s220 + $0x61] sm:$0xff] %vm198, %v196
      %228 = vst.msk [vmem:[%s220 + $0x71] sm:$0xff] %vm198, %v197
      %v229 = vld [vmem:[#allocation2] sm:$0xff]
      %v230 = vld [vmem:[#allocation2 + $0x10] sm:$0xff]
      %v231 = vld [vmem:[#allocation2 + $0x20] sm:$0xff]
      %v232 = vld [vmem:[#allocation2 + $0x30] sm:$0xff]
      %v233 = vld [vmem:[#allocation2 + $0x40] sm:$0xff]
      %v234 = vld [vmem:[#allocation2 + $0x50] sm:$0xff]
      %v235 = vld [vmem:[#allocation2 + $0x60] sm:$0xff]
      %v236 = vld [vmem:[#allocation2 + $0x70] sm:$0xff]
      %v237 = vld [vmem:[%s1] sm:$0xf]
      %239 = vset.pattern.permute.xlu0 0
      %240 = vperm.xlu0 %239, %v229
      %v241 = vpop.permute.xlu0 %240
      %244 = vset.pattern.permute.xlu0 0
      %245 = vperm.xlu0 %244, %v230
      %v246 = vpop.permute.xlu0 %245
      %249 = vset.pattern.permute.xlu0 0
      %250 = vperm.xlu0 %249, %v231
      %v251 = vpop.permute.xlu0 %250
      %254 = vset.pattern.permute.xlu0 0
      %255 = vperm.xlu0 %254, %v232
      %v256 = vpop.permute.xlu0 %255
      %259 = vset.pattern.permute.xlu0 0
      %260 = vperm.xlu0 %259, %v233
      %v261 = vpop.permute.xlu0 %260
      %264 = vset.pattern.permute.xlu0 0
      %265 = vperm.xlu0 %264, %v234
      %v266 = vpop.permute.xlu0 %265
      %269 = vset.pattern.permute.xlu0 0
      %270 = vperm.xlu0 %269, %v235
      %v271 = vpop.permute.xlu0 %270
      %274 = vset.pattern.permute.xlu0 0
      %275 = vperm.xlu0 %274, %v236
      %v276 = vpop.permute.xlu0 %275
      %v278 = vlaneseq
      %v279 = vshrl.u32 %v278, 7
      %v280 = vsub.s32 0, %v279
      %v281 = vrot.slane %v237, %v280
      %v282 = vmul.f32 %v241, %v281
      %v283 = vmul.f32 %v246, %v281
      %v284 = vmul.f32 %v251, %v281
      %v285 = vmul.f32 %v256, %v281
      %v286 = vmul.f32 %v261, %v281
      %v287 = vmul.f32 %v266, %v281
      %v288 = vmul.f32 %v271, %v281
      %v289 = vmul.f32 %v276, %v281
      %v290 = vadd.f32 %v282, 0.0
      %v291 = vadd.f32 %v283, 0.0
      %v292 = vadd.f32 %v284, 0.0
      %v293 = vadd.f32 %v285, 0.0
      %v294 = vadd.f32 %v286, 0.0
      %v295 = vadd.f32 %v287, 0.0
      %v296 = vadd.f32 %v288, 0.0
      %v297 = vadd.f32 %v289, 0.0
      %298 = vset.pattern.permute.xlu0 1
      %299 = vperm.xlu0 %298, %v229
      %v300 = vpop.permute.xlu0 %299
      %302 = vset.pattern.permute.xlu0 1
      %303 = vperm.xlu0 %302, %v230
      %v304 = vpop.permute.xlu0 %303
      %306 = vset.pattern.permute.xlu0 1
      %307 = vperm.xlu0 %306, %v231
      %v308 = vpop.permute.xlu0 %307
      %310 = vset.pattern.permute.xlu0 1
      %311 = vperm.xlu0 %310, %v232
      %v312 = vpop.permute.xlu0 %311
      %314 = vset.pattern.permute.xlu0 1
      %315 = vperm.xlu0 %314, %v233
      %v316 = vpop.permute.xlu0 %315
      %318 = vset.pattern.permute.xlu0 1
      %319 = vperm.xlu0 %318, %v234
      %v320 = vpop.permute.xlu0 %319
      %322 = vset.pattern.permute.xlu0 1
      %323 = vperm.xlu0 %322, %v235
      %v324 = vpop.permute.xlu0 %323
      %326 = vset.pattern.permute.xlu0 1
      %327 = vperm.xlu0 %326, %v236
      %v328 = vpop.permute.xlu0 %327
      %v330 = vlaneseq
      %v331 = vshrl.u32 %v330, 7
      %v332 = vsub.s32 1, %v331
      %v333 = vrot.slane %v237, %v332
      %v334 = vmul.f32 %v300, %v333
      %v335 = vmul.f32 %v304, %v333
      %v336 = vmul.f32 %v308, %v333
      %v337 = vmul.f32 %v312, %v333
      %v338 = vmul.f32 %v316, %v333
      %v339 = vmul.f32 %v320, %v333
      %v340 = vmul.f32 %v324, %v333
      %v341 = vmul.f32 %v328, %v333
      %v342 = vadd.f32 %v290, %v334
      %v343 = vadd.f32 %v291, %v335
      %v344 = vadd.f32 %v292, %v336
      %v345 = vadd.f32 %v293, %v337
      %v346 = vadd.f32 %v294, %v338
      %v347 = vadd.f32 %v295, %v339
      %v348 = vadd.f32 %v296, %v340
      %v349 = vadd.f32 %v297, %v341
      %350 = vset.pattern.permute.xlu0 2
      %351 = vperm.xlu0 %350, %v229
      %v352 = vpop.permute.xlu0 %351
      %354 = vset.pattern.permute.xlu0 2
      %355 = vperm.xlu0 %354, %v230
      %v356 = vpop.permute.xlu0 %355
      %358 = vset.pattern.permute.xlu0 2
      %359 = vperm.xlu0 %358, %v231
      %v360 = vpop.permute.xlu0 %359
      %362 = vset.pattern.permute.xlu0 2
      %363 = vperm.xlu0 %362, %v232
      %v364 = vpop.permute.xlu0 %363
      %366 = vset.pattern.permute.xlu0 2
      %367 = vperm.xlu0 %366, %v233
      %v368 = vpop.permute.xlu0 %367
      %370 = vset.pattern.permute.xlu0 2
      %371 = vperm.xlu0 %370, %v234
      %v372 = vpop.permute.xlu0 %371
      %374 = vset.pattern.permute.xlu0 2
      %375 = vperm.xlu0 %374, %v235
      %v376 = vpop.permute.xlu0 %375
      %378 = vset.pattern.permute.xlu0 2
      %379 = vperm.xlu0 %378, %v236
      %v380 = vpop.permute.xlu0 %379
      %v382 = vlaneseq
      %v383 = vshrl.u32 %v382, 7
      %v384 = vsub.s32 2, %v383
      %v385 = vrot.slane %v237, %v384
      %v386 = vmul.f32 %v352, %v385
      %v387 = vmul.f32 %v356, %v385
      %v388 = vmul.f32 %v360, %v385
      %v389 = vmul.f32 %v364, %v385
      %v390 = vmul.f32 %v368, %v385
      %v391 = vmul.f32 %v372, %v385
      %v392 = vmul.f32 %v376, %v385
      %v393 = vmul.f32 %v380, %v385
      %v394 = vadd.f32 %v342, %v386
      %v395 = vadd.f32 %v343, %v387
      %v396 = vadd.f32 %v344, %v388
      %v397 = vadd.f32 %v345, %v389
      %v398 = vadd.f32 %v346, %v390
      %v399 = vadd.f32 %v347, %v391
      %v400 = vadd.f32 %v348, %v392
      %v401 = vadd.f32 %v349, %v393
      %402 = vset.pattern.permute.xlu0 3
      %403 = vperm.xlu0 %402, %v229
      %v404 = vpop.permute.xlu0 %403
      %406 = vset.pattern.permute.xlu0 3
      %407 = vperm.xlu0 %406, %v230
      %v408 = vpop.permute.xlu0 %407
      %410 = vset.pattern.permute.xlu0 3
      %411 = vperm.xlu0 %410, %v231
      %v412 = vpop.permute.xlu0 %411
      %414 = vset.pattern.permute.xlu0 3
      %415 = vperm.xlu0 %414, %v232
      %v416 = vpop.permute.xlu0 %415
      %418 = vset.pattern.permute.xlu0 3
      %419 = vperm.xlu0 %418, %v233
      %v420 = vpop.permute.xlu0 %419
      %422 = vset.pattern.permute.xlu0 3
      %423 = vperm.xlu0 %422, %v234
      %v424 = vpop.permute.xlu0 %423
      %426 = vset.pattern.permute.xlu0 3
      %427 = vperm.xlu0 %426, %v235
      %v428 = vpop.permute.xlu0 %427
      %430 = vset.pattern.permute.xlu0 3
      %431 = vperm.xlu0 %430, %v236
      %v432 = vpop.permute.xlu0 %431
      %v434 = vlaneseq
      %v435 = vshrl.u32 %v434, 7
      %v436 = vsub.s32 3, %v435
      %v437 = vrot.slane %v237, %v436
      %v438 = vmul.f32 %v404, %v437
      %v439 = vmul.f32 %v408, %v437
      %v440 = vmul.f32 %v412, %v437
      %v441 = vmul.f32 %v416, %v437
      %v442 = vmul.f32 %v420, %v437
      %v443 = vmul.f32 %v424, %v437
      %v444 = vmul.f32 %v428, %v437
      %v445 = vmul.f32 %v432, %v437
      %v446 = vadd.f32 %v394, %v438
      %v447 = vadd.f32 %v395, %v439
      %v448 = vadd.f32 %v396, %v440
      %v449 = vadd.f32 %v397, %v441
      %v450 = vadd.f32 %v398, %v442
      %v451 = vadd.f32 %v399, %v443
      %v452 = vadd.f32 %v400, %v444
      %v453 = vadd.f32 %v401, %v445
      %v454 = vld [vmem:[#allocation2 + $0x1] sm:$0xff]
      %v455 = vld [vmem:[#allocation2 + $0x11] sm:$0xff]
      %v456 = vld [vmem:[#allocation2 + $0x21] sm:$0xff]
      %v457 = vld [vmem:[#allocation2 + $0x31] sm:$0xff]
      %v458 = vld [vmem:[#allocation2 + $0x41] sm:$0xff]
      %v459 = vld [vmem:[#allocation2 + $0x51] sm:$0xff]
      %v460 = vld [vmem:[#allocation2 + $0x61] sm:$0xff]
      %v461 = vld [vmem:[#allocation2 + $0x71] sm:$0xff]
      %s462 = scalar_lea.vmem %s1, 4
      %v463 = vld [vmem:[%s462] sm:$0xf]
      %465 = vset.pattern.permute.xlu0 0
      %466 = vperm.xlu0 %465, %v454
      %v467 = vpop.permute.xlu0 %466
      %470 = vset.pattern.permute.xlu0 0
      %471 = vperm.xlu0 %470, %v455
      %v472 = vpop.permute.xlu0 %471
      %475 = vset.pattern.permute.xlu0 0
      %476 = vperm.xlu0 %475, %v456
      %v477 = vpop.permute.xlu0 %476
      %480 = vset.pattern.permute.xlu0 0
      %481 = vperm.xlu0 %480, %v457
      %v482 = vpop.permute.xlu0 %481
      %485 = vset.pattern.permute.xlu0 0
      %486 = vperm.xlu0 %485, %v458
      %v487 = vpop.permute.xlu0 %486
      %490 = vset.pattern.permute.xlu0 0
      %491 = vperm.xlu0 %490, %v459
      %v492 = vpop.permute.xlu0 %491
      %495 = vset.pattern.permute.xlu0 0
      %496 = vperm.xlu0 %495, %v460
      %v497 = vpop.permute.xlu0 %496
      %500 = vset.pattern.permute.xlu0 0
      %501 = vperm.xlu0 %500, %v461
      %v502 = vpop.permute.xlu0 %501
      %v504 = vlaneseq
      %v505 = vshrl.u32 %v504, 7
      %v506 = vsub.s32 0, %v505
      %v507 = vrot.slane %v463, %v506
      %v508 = vmul.f32 %v467, %v507
      %v509 = vmul.f32 %v472, %v507
      %v510 = vmul.f32 %v477, %v507
      %v511 = vmul.f32 %v482, %v507
      %v512 = vmul.f32 %v487, %v507
      %v513 = vmul.f32 %v492, %v507
      %v514 = vmul.f32 %v497, %v507
      %v515 = vmul.f32 %v502, %v507
      %v516 = vadd.f32 %v446, %v508
      %v517 = vadd.f32 %v447, %v509
      %v518 = vadd.f32 %v448, %v510
      %v519 = vadd.f32 %v449, %v511
      %v520 = vadd.f32 %v450, %v512
      %v521 = vadd.f32 %v451, %v513
      %v522 = vadd.f32 %v452, %v514
      %v523 = vadd.f32 %v453, %v515
      %524 = vset.pattern.permute.xlu0 1
      %525 = vperm.xlu0 %524, %v454
      %v526 = vpop.permute.xlu0 %525
      %528 = vset.pattern.permute.xlu0 1
      %529 = vperm.xlu0 %528, %v455
      %v530 = vpop.permute.xlu0 %529
      %532 = vset.pattern.permute.xlu0 1
      %533 = vperm.xlu0 %532, %v456
      %v534 = vpop.permute.xlu0 %533
      %536 = vset.pattern.permute.xlu0 1
      %537 = vperm.xlu0 %536, %v457
      %v538 = vpop.permute.xlu0 %537
      %540 = vset.pattern.permute.xlu0 1
      %541 = vperm.xlu0 %540, %v458
      %v542 = vpop.permute.xlu0 %541
      %544 = vset.pattern.permute.xlu0 1
      %545 = vperm.xlu0 %544, %v459
      %v546 = vpop.permute.xlu0 %545
      %548 = vset.pattern.permute.xlu0 1
      %549 = vperm.xlu0 %548, %v460
      %v550 = vpop.permute.xlu0 %549
      %552 = vset.pattern.permute.xlu0 1
      %553 = vperm.xlu0 %552, %v461
      %v554 = vpop.permute.xlu0 %553
      %v556 = vlaneseq
      %v557 = vshrl.u32 %v556, 7
      %v558 = vsub.s32 1, %v557
      %v559 = vrot.slane %v463, %v558
      %v560 = vmul.f32 %v526, %v559
      %v561 = vmul.f32 %v530, %v559
      %v562 = vmul.f32 %v534, %v559
      %v563 = vmul.f32 %v538, %v559
      %v564 = vmul.f32 %v542, %v559
      %v565 = vmul.f32 %v546, %v559
      %v566 = vmul.f32 %v550, %v559
      %v567 = vmul.f32 %v554, %v559
      %v568 = vadd.f32 %v516, %v560
      %v569 = vadd.f32 %v517, %v561
      %v570 = vadd.f32 %v518, %v562
      %v571 = vadd.f32 %v519, %v563
      %v572 = vadd.f32 %v520, %v564
      %v573 = vadd.f32 %v521, %v565
      %v574 = vadd.f32 %v522, %v566
      %v575 = vadd.f32 %v523, %v567
      %576 = vset.pattern.permute.xlu0 2
      %577 = vperm.xlu0 %576, %v454
      %v578 = vpop.permute.xlu0 %577
      %580 = vset.pattern.permute.xlu0 2
      %581 = vperm.xlu0 %580, %v455
      %v582 = vpop.permute.xlu0 %581
      %584 = vset.pattern.permute.xlu0 2
      %585 = vperm.xlu0 %584, %v456
      %v586 = vpop.permute.xlu0 %585
      %588 = vset.pattern.permute.xlu0 2
      %589 = vperm.xlu0 %588, %v457
      %v590 = vpop.permute.xlu0 %589
      %592 = vset.pattern.permute.xlu0 2
      %593 = vperm.xlu0 %592, %v458
      %v594 = vpop.permute.xlu0 %593
      %596 = vset.pattern.permute.xlu0 2
      %597 = vperm.xlu0 %596, %v459
      %v598 = vpop.permute.xlu0 %597
      %600 = vset.pattern.permute.xlu0 2
      %601 = vperm.xlu0 %600, %v460
      %v602 = vpop.permute.xlu0 %601
      %604 = vset.pattern.permute.xlu0 2
      %605 = vperm.xlu0 %604, %v461
      %v606 = vpop.permute.xlu0 %605
      %v608 = vlaneseq
      %v609 = vshrl.u32 %v608, 7
      %v610 = vsub.s32 2, %v609
      %v611 = vrot.slane %v463, %v610
      %v612 = vmul.f32 %v578, %v611
      %v613 = vmul.f32 %v582, %v611
      %v614 = vmul.f32 %v586, %v611
      %v615 = vmul.f32 %v590, %v611
      %v616 = vmul.f32 %v594, %v611
      %v617 = vmul.f32 %v598, %v611
      %v618 = vmul.f32 %v602, %v611
      %v619 = vmul.f32 %v606, %v611
      %v620 = vadd.f32 %v568, %v612
      %v621 = vadd.f32 %v569, %v613
      %v622 = vadd.f32 %v570, %v614
      %v623 = vadd.f32 %v571, %v615
      %v624 = vadd.f32 %v572, %v616
      %v625 = vadd.f32 %v573, %v617
      %v626 = vadd.f32 %v574, %v618
      %v627 = vadd.f32 %v575, %v619
      %628 = vset.pattern.permute.xlu0 3
      %629 = vperm.xlu0 %628, %v454
      %v630 = vpop.permute.xlu0 %629
      %632 = vset.pattern.permute.xlu0 3
      %633 = vperm.xlu0 %632, %v455
      %v634 = vpop.permute.xlu0 %633
      %636 = vset.pattern.permute.xlu0 3
      %637 = vperm.xlu0 %636, %v456
      %v638 = vpop.permute.xlu0 %637
      %640 = vset.pattern.permute.xlu0 3
      %641 = vperm.xlu0 %640, %v457
      %v642 = vpop.permute.xlu0 %641
      %644 = vset.pattern.permute.xlu0 3
      %645 = vperm.xlu0 %644, %v458
      %v646 = vpop.permute.xlu0 %645
      %648 = vset.pattern.permute.xlu0 3
      %649 = vperm.xlu0 %648, %v459
      %v650 = vpop.permute.xlu0 %649
      %652 = vset.pattern.permute.xlu0 3
      %653 = vperm.xlu0 %652, %v460
      %v654 = vpop.permute.xlu0 %653
      %656 = vset.pattern.permute.xlu0 3
      %657 = vperm.xlu0 %656, %v461
      %v658 = vpop.permute.xlu0 %657
      %v660 = vlaneseq
      %v661 = vshrl.u32 %v660, 7
      %v662 = vsub.s32 3, %v661
      %v663 = vrot.slane %v463, %v662
      %v664 = vmul.f32 %v630, %v663
      %v665 = vmul.f32 %v634, %v663
      %v666 = vmul.f32 %v638, %v663
      %v667 = vmul.f32 %v642, %v663
      %v668 = vmul.f32 %v646, %v663
      %v669 = vmul.f32 %v650, %v663
      %v670 = vmul.f32 %v654, %v663
      %v671 = vmul.f32 %v658, %v663
      %v672 = vadd.f32 %v620, %v664
      %v673 = vadd.f32 %v621, %v665
      %v674 = vadd.f32 %v622, %v666
      %v675 = vadd.f32 %v623, %v667
      %v676 = vadd.f32 %v624, %v668
      %v677 = vadd.f32 %v625, %v669
      %v678 = vadd.f32 %v626, %v670
      %v679 = vadd.f32 %v627, %v671
      %v680 = vld [vmem:[#allocation2 + $0x2] sm:$0xff]
      %v681 = vld [vmem:[#allocation2 + $0x12] sm:$0xff]
      %v682 = vld [vmem:[#allocation2 + $0x22] sm:$0xff]
      %v683 = vld [vmem:[#allocation2 + $0x32] sm:$0xff]
      %v684 = vld [vmem:[#allocation2 + $0x42] sm:$0xff]
      %v685 = vld [vmem:[#allocation2 + $0x52] sm:$0xff]
      %v686 = vld [vmem:[#allocation2 + $0x62] sm:$0xff]
      %v687 = vld [vmem:[#allocation2 + $0x72] sm:$0xff]
      %s688 = scalar_lea.vmem %s1, 8
      %v689 = vld [vmem:[%s688] sm:$0xf]
      %691 = vset.pattern.permute.xlu0 0
      %692 = vperm.xlu0 %691, %v680
      %v693 = vpop.permute.xlu0 %692
      %696 = vset.pattern.permute.xlu0 0
      %697 = vperm.xlu0 %696, %v681
      %v698 = vpop.permute.xlu0 %697
      %701 = vset.pattern.permute.xlu0 0
      %702 = vperm.xlu0 %701, %v682
      %v703 = vpop.permute.xlu0 %702
      %706 = vset.pattern.permute.xlu0 0
      %707 = vperm.xlu0 %706, %v683
      %v708 = vpop.permute.xlu0 %707
      %711 = vset.pattern.permute.xlu0 0
      %712 = vperm.xlu0 %711, %v684
      %v713 = vpop.permute.xlu0 %712
      %716 = vset.pattern.permute.xlu0 0
      %717 = vperm.xlu0 %716, %v685
      %v718 = vpop.permute.xlu0 %717
      %721 = vset.pattern.permute.xlu0 0
      %722 = vperm.xlu0 %721, %v686
      %v723 = vpop.permute.xlu0 %722
      %726 = vset.pattern.permute.xlu0 0
      %727 = vperm.xlu0 %726, %v687
      %v728 = vpop.permute.xlu0 %727
      %v730 = vlaneseq
      %v731 = vshrl.u32 %v730, 7
      %v732 = vsub.s32 0, %v731
      %v733 = vrot.slane %v689, %v732
      %v734 = vmul.f32 %v693, %v733
      %v735 = vmul.f32 %v698, %v733
      %v736 = vmul.f32 %v703, %v733
      %v737 = vmul.f32 %v708, %v733
      %v738 = vmul.f32 %v713, %v733
      %v739 = vmul.f32 %v718, %v733
      %v740 = vmul.f32 %v723, %v733
      %v741 = vmul.f32 %v728, %v733
      %v742 = vadd.f32 %v672, %v734
      %v743 = vadd.f32 %v673, %v735
      %v744 = vadd.f32 %v674, %v736
      %v745 = vadd.f32 %v675, %v737
      %v746 = vadd.f32 %v676, %v738
      %v747 = vadd.f32 %v677, %v739
      %v748 = vadd.f32 %v678, %v740
      %v749 = vadd.f32 %v679, %v741
      %750 = vset.pattern.permute.xlu0 1
      %751 = vperm.xlu0 %750, %v680
      %v752 = vpop.permute.xlu0 %751
      %754 = vset.pattern.permute.xlu0 1
      %755 = vperm.xlu0 %754, %v681
      %v756 = vpop.permute.xlu0 %755
      %758 = vset.pattern.permute.xlu0 1
      %759 = vperm.xlu0 %758, %v682
      %v760 = vpop.permute.xlu0 %759
      %762 = vset.pattern.permute.xlu0 1
      %763 = vperm.xlu0 %762, %v683
      %v764 = vpop.permute.xlu0 %763
      %766 = vset.pattern.permute.xlu0 1
      %767 = vperm.xlu0 %766, %v684
      %v768 = vpop.permute.xlu0 %767
      %770 = vset.pattern.permute.xlu0 1
      %771 = vperm.xlu0 %770, %v685
      %v772 = vpop.permute.xlu0 %771
      %774 = vset.pattern.permute.xlu0 1
      %775 = vperm.xlu0 %774, %v686
      %v776 = vpop.permute.xlu0 %775
      %778 = vset.pattern.permute.xlu0 1
      %779 = vperm.xlu0 %778, %v687
      %v780 = vpop.permute.xlu0 %779
      %v782 = vlaneseq
      %v783 = vshrl.u32 %v782, 7
      %v784 = vsub.s32 1, %v783
      %v785 = vrot.slane %v689, %v784
      %v786 = vmul.f32 %v752, %v785
      %v787 = vmul.f32 %v756, %v785
      %v788 = vmul.f32 %v760, %v785
      %v789 = vmul.f32 %v764, %v785
      %v790 = vmul.f32 %v768, %v785
      %v791 = vmul.f32 %v772, %v785
      %v792 = vmul.f32 %v776, %v785
      %v793 = vmul.f32 %v780, %v785
      %v794 = vadd.f32 %v742, %v786
      %v795 = vadd.f32 %v743, %v787
      %v796 = vadd.f32 %v744, %v788
      %v797 = vadd.f32 %v745, %v789
      %v798 = vadd.f32 %v746, %v790
      %v799 = vadd.f32 %v747, %v791
      %v800 = vadd.f32 %v748, %v792
      %v801 = vadd.f32 %v749, %v793
      %802 = vset.pattern.permute.xlu0 2
      %803 = vperm.xlu0 %802, %v680
      %v804 = vpop.permute.xlu0 %803
      %806 = vset.pattern.permute.xlu0 2
      %807 = vperm.xlu0 %806, %v681
      %v808 = vpop.permute.xlu0 %807
      %810 = vset.pattern.permute.xlu0 2
      %811 = vperm.xlu0 %810, %v682
      %v812 = vpop.permute.xlu0 %811
      %814 = vset.pattern.permute.xlu0 2
      %815 = vperm.xlu0 %814, %v683
      %v816 = vpop.permute.xlu0 %815
      %818 = vset.pattern.permute.xlu0 2
      %819 = vperm.xlu0 %818, %v684
      %v820 = vpop.permute.xlu0 %819
      %822 = vset.pattern.permute.xlu0 2
      %823 = vperm.xlu0 %822, %v685
      %v824 = vpop.permute.xlu0 %823
      %826 = vset.pattern.permute.xlu0 2
      %827 = vperm.xlu0 %826, %v686
      %v828 = vpop.permute.xlu0 %827
      %830 = vset.pattern.permute.xlu0 2
      %831 = vperm.xlu0 %830, %v687
      %v832 = vpop.permute.xlu0 %831
      %v834 = vlaneseq
      %v835 = vshrl.u32 %v834, 7
      %v836 = vsub.s32 2, %v835
      %v837 = vrot.slane %v689, %v836
      %v838 = vmul.f32 %v804, %v837
      %v839 = vmul.f32 %v808, %v837
      %v840 = vmul.f32 %v812, %v837
      %v841 = vmul.f32 %v816, %v837
      %v842 = vmul.f32 %v820, %v837
      %v843 = vmul.f32 %v824, %v837
      %v844 = vmul.f32 %v828, %v837
      %v845 = vmul.f32 %v832, %v837
      %v846 = vadd.f32 %v794, %v838
      %v847 = vadd.f32 %v795, %v839
      %v848 = vadd.f32 %v796, %v840
      %v849 = vadd.f32 %v797, %v841
      %v850 = vadd.f32 %v798, %v842
      %v851 = vadd.f32 %v799, %v843
      %v852 = vadd.f32 %v800, %v844
      %v853 = vadd.f32 %v801, %v845
      %854 = vset.pattern.permute.xlu0 3
      %855 = vperm.xlu0 %854, %v680
      %v856 = vpop.permute.xlu0 %855
      %858 = vset.pattern.permute.xlu0 3
      %859 = vperm.xlu0 %858, %v681
      %v860 = vpop.permute.xlu0 %859
      %862 = vset.pattern.permute.xlu0 3
      %863 = vperm.xlu0 %862, %v682
      %v864 = vpop.permute.xlu0 %863
      %866 = vset.pattern.permute.xlu0 3
      %867 = vperm.xlu0 %866, %v683
      %v868 = vpop.permute.xlu0 %867
      %870 = vset.pattern.permute.xlu0 3
      %871 = vperm.xlu0 %870, %v684
      %v872 = vpop.permute.xlu0 %871
      %874 = vset.pattern.permute.xlu0 3
      %875 = vperm.xlu0 %874, %v685
      %v876 = vpop.permute.xlu0 %875
      %878 = vset.pattern.permute.xlu0 3
      %879 = vperm.xlu0 %878, %v686
      %v880 = vpop.permute.xlu0 %879
      %882 = vset.pattern.permute.xlu0 3
      %883 = vperm.xlu0 %882, %v687
      %v884 = vpop.permute.xlu0 %883
      %v886 = vlaneseq
      %v887 = vshrl.u32 %v886, 7
      %v888 = vsub.s32 3, %v887
      %v889 = vrot.slane %v689, %v888
      %v890 = vmul.f32 %v856, %v889
      %v891 = vmul.f32 %v860, %v889
      %v892 = vmul.f32 %v864, %v889
      %v893 = vmul.f32 %v868, %v889
      %v894 = vmul.f32 %v872, %v889
      %v895 = vmul.f32 %v876, %v889
      %v896 = vmul.f32 %v880, %v889
      %v897 = vmul.f32 %v884, %v889
      %v898 = vadd.f32 %v846, %v890
      %v899 = vadd.f32 %v847, %v891
      %v900 = vadd.f32 %v848, %v892
      %v901 = vadd.f32 %v849, %v893
      %v902 = vadd.f32 %v850, %v894
      %v903 = vadd.f32 %v851, %v895
      %v904 = vadd.f32 %v852, %v896
      %v905 = vadd.f32 %v853, %v897
      %v906 = vld [vmem:[%s220] sm:$0xff]
      %v907 = vld [vmem:[%s220 + $0x10] sm:$0xff]
      %v908 = vld [vmem:[%s220 + $0x20] sm:$0xff]
      %v909 = vld [vmem:[%s220 + $0x30] sm:$0xff]
      %v910 = vld [vmem:[%s220 + $0x40] sm:$0xff]
      %v911 = vld [vmem:[%s220 + $0x50] sm:$0xff]
      %v912 = vld [vmem:[%s220 + $0x60] sm:$0xff]
      %v913 = vld [vmem:[%s220 + $0x70] sm:$0xff]
      %s914 = scalar_lea.vmem %s1, 12
      %v915 = vld [vmem:[%s914] sm:$0xf]
      %917 = vset.pattern.permute.xlu0 0
      %918 = vperm.xlu0 %917, %v906
      %v919 = vpop.permute.xlu0 %918
      %922 = vset.pattern.permute.xlu0 0
      %923 = vperm.xlu0 %922, %v907
      %v924 = vpop.permute.xlu0 %923
      %927 = vset.pattern.permute.xlu0 0
      %928 = vperm.xlu0 %927, %v908
      %v929 = vpop.permute.xlu0 %928
      %932 = vset.pattern.permute.xlu0 0
      %933 = vperm.xlu0 %932, %v909
      %v934 = vpop.permute.xlu0 %933
      %937 = vset.pattern.permute.xlu0 0
      %938 = vperm.xlu0 %937, %v910
      %v939 = vpop.permute.xlu0 %938
      %942 = vset.pattern.permute.xlu0 0
      %943 = vperm.xlu0 %942, %v911
      %v944 = vpop.permute.xlu0 %943
      %947 = vset.pattern.permute.xlu0 0
      %948 = vperm.xlu0 %947, %v912
      %v949 = vpop.permute.xlu0 %948
      %952 = vset.pattern.permute.xlu0 0
      %953 = vperm.xlu0 %952, %v913
      %v954 = vpop.permute.xlu0 %953
      %v956 = vlaneseq
      %v957 = vshrl.u32 %v956, 7
      %v958 = vsub.s32 0, %v957
      %v959 = vrot.slane %v915, %v958
      %v960 = vmul.f32 %v919, %v959
      %v961 = vmul.f32 %v924, %v959
      %v962 = vmul.f32 %v929, %v959
      %v963 = vmul.f32 %v934, %v959
      %v964 = vmul.f32 %v939, %v959
      %v965 = vmul.f32 %v944, %v959
      %v966 = vmul.f32 %v949, %v959
      %v967 = vmul.f32 %v954, %v959
      %v968 = vadd.f32 %v898, %v960
      %v969 = vadd.f32 %v899, %v961
      %v970 = vadd.f32 %v900, %v962
      %v971 = vadd.f32 %v901, %v963
      %v972 = vadd.f32 %v902, %v964
      %v973 = vadd.f32 %v903, %v965
      %v974 = vadd.f32 %v904, %v966
      %v975 = vadd.f32 %v905, %v967
      %976 = vset.pattern.permute.xlu0 1
      %977 = vperm.xlu0 %976, %v906
      %v978 = vpop.permute.xlu0 %977
      %980 = vset.pattern.permute.xlu0 1
      %981 = vperm.xlu0 %980, %v907
      %v982 = vpop.permute.xlu0 %981
      %984 = vset.pattern.permute.xlu0 1
      %985 = vperm.xlu0 %984, %v908
      %v986 = vpop.permute.xlu0 %985
      %988 = vset.pattern.permute.xlu0 1
      %989 = vperm.xlu0 %988, %v909
      %v990 = vpop.permute.xlu0 %989
      %992 = vset.pattern.permute.xlu0 1
      %993 = vperm.xlu0 %992, %v910
      %v994 = vpop.permute.xlu0 %993
      %996 = vset.pattern.permute.xlu0 1
      %997 = vperm.xlu0 %996, %v911
      %v998 = vpop.permute.xlu0 %997
      %1000 = vset.pattern.permute.xlu0 1
      %1001 = vperm.xlu0 %1000, %v912
      %v1002 = vpop.permute.xlu0 %1001
      %1004 = vset.pattern.permute.xlu0 1
      %1005 = vperm.xlu0 %1004, %v913
      %v1006 = vpop.permute.xlu0 %1005
      %v1008 = vlaneseq
      %v1009 = vshrl.u32 %v1008, 7
      %v1010 = vsub.s32 1, %v1009
      %v1011 = vrot.slane %v915, %v1010
      %v1012 = vmul.f32 %v978, %v1011
      %v1013 = vmul.f32 %v982, %v1011
      %v1014 = vmul.f32 %v986, %v1011
      %v1015 = vmul.f32 %v990, %v1011
      %v1016 = vmul.f32 %v994, %v1011
      %v1017 = vmul.f32 %v998, %v1011
      %v1018 = vmul.f32 %v1002, %v1011
      %v1019 = vmul.f32 %v1006, %v1011
      %v1020 = vadd.f32 %v968, %v1012
      %v1021 = vadd.f32 %v969, %v1013
      %v1022 = vadd.f32 %v970, %v1014
      %v1023 = vadd.f32 %v971, %v1015
      %v1024 = vadd.f32 %v972, %v1016
      %v1025 = vadd.f32 %v973, %v1017
      %v1026 = vadd.f32 %v974, %v1018
      %v1027 = vadd.f32 %v975, %v1019
      %1028 = vset.pattern.permute.xlu0 2
      %1029 = vperm.xlu0 %1028, %v906
      %v1030 = vpop.permute.xlu0 %1029
      %1032 = vset.pattern.permute.xlu0 2
      %1033 = vperm.xlu0 %1032, %v907
      %v1034 = vpop.permute.xlu0 %1033
      %1036 = vset.pattern.permute.xlu0 2
      %1037 = vperm.xlu0 %1036, %v908
      %v1038 = vpop.permute.xlu0 %1037
      %1040 = vset.pattern.permute.xlu0 2
      %1041 = vperm.xlu0 %1040, %v909
      %v1042 = vpop.permute.xlu0 %1041
      %1044 = vset.pattern.permute.xlu0 2
      %1045 = vperm.xlu0 %1044, %v910
      %v1046 = vpop.permute.xlu0 %1045
      %1048 = vset.pattern.permute.xlu0 2
      %1049 = vperm.xlu0 %1048, %v911
      %v1050 = vpop.permute.xlu0 %1049
      %1052 = vset.pattern.permute.xlu0 2
      %1053 = vperm.xlu0 %1052, %v912
      %v1054 = vpop.permute.xlu0 %1053
      %1056 = vset.pattern.permute.xlu0 2
      %1057 = vperm.xlu0 %1056, %v913
      %v1058 = vpop.permute.xlu0 %1057
      %v1060 = vlaneseq
      %v1061 = vshrl.u32 %v1060, 7
      %v1062 = vsub.s32 2, %v1061
      %v1063 = vrot.slane %v915, %v1062
      %v1064 = vmul.f32 %v1030, %v1063
      %v1065 = vmul.f32 %v1034, %v1063
      %v1066 = vmul.f32 %v1038, %v1063
      %v1067 = vmul.f32 %v1042, %v1063
      %v1068 = vmul.f32 %v1046, %v1063
      %v1069 = vmul.f32 %v1050, %v1063
      %v1070 = vmul.f32 %v1054, %v1063
      %v1071 = vmul.f32 %v1058, %v1063
      %v1072 = vadd.f32 %v1020, %v1064
      %v1073 = vadd.f32 %v1021, %v1065
      %v1074 = vadd.f32 %v1022, %v1066
      %v1075 = vadd.f32 %v1023, %v1067
      %v1076 = vadd.f32 %v1024, %v1068
      %v1077 = vadd.f32 %v1025, %v1069
      %v1078 = vadd.f32 %v1026, %v1070
      %v1079 = vadd.f32 %v1027, %v1071
      %1080 = vset.pattern.permute.xlu0 3
      %1081 = vperm.xlu0 %1080, %v906
      %v1082 = vpop.permute.xlu0 %1081
      %1084 = vset.pattern.permute.xlu0 3
      %1085 = vperm.xlu0 %1084, %v907
      %v1086 = vpop.permute.xlu0 %1085
      %1088 = vset.pattern.permute.xlu0 3
      %1089 = vperm.xlu0 %1088, %v908
      %v1090 = vpop.permute.xlu0 %1089
      %1092 = vset.pattern.permute.xlu0 3
      %1093 = vperm.xlu0 %1092, %v909
      %v1094 = vpop.permute.xlu0 %1093
      %1096 = vset.pattern.permute.xlu0 3
      %1097 = vperm.xlu0 %1096, %v910
      %v1098 = vpop.permute.xlu0 %1097
      %1100 = vset.pattern.permute.xlu0 3
      %1101 = vperm.xlu0 %1100, %v911
      %v1102 = vpop.permute.xlu0 %1101
      %1104 = vset.pattern.permute.xlu0 3
      %1105 = vperm.xlu0 %1104, %v912
      %v1106 = vpop.permute.xlu0 %1105
      %1108 = vset.pattern.permute.xlu0 3
      %1109 = vperm.xlu0 %1108, %v913
      %v1110 = vpop.permute.xlu0 %1109
      %v1112 = vlaneseq
      %v1113 = vshrl.u32 %v1112, 7
      %v1114 = vsub.s32 3, %v1113
      %v1115 = vrot.slane %v915, %v1114
      %v1116 = vmul.f32 %v1082, %v1115
      %v1117 = vmul.f32 %v1086, %v1115
      %v1118 = vmul.f32 %v1090, %v1115
      %v1119 = vmul.f32 %v1094, %v1115
      %v1120 = vmul.f32 %v1098, %v1115
      %v1121 = vmul.f32 %v1102, %v1115
      %v1122 = vmul.f32 %v1106, %v1115
      %v1123 = vmul.f32 %v1110, %v1115
      %v1124 = vadd.f32 %v1072, %v1116
      %v1125 = vadd.f32 %v1073, %v1117
      %v1126 = vadd.f32 %v1074, %v1118
      %v1127 = vadd.f32 %v1075, %v1119
      %v1128 = vadd.f32 %v1076, %v1120
      %v1129 = vadd.f32 %v1077, %v1121
      %v1130 = vadd.f32 %v1078, %v1122
      %v1131 = vadd.f32 %v1079, %v1123
      %v1132 = vld [vmem:[%s220 + $0x1] sm:$0xff]
      %v1133 = vld [vmem:[%s220 + $0x11] sm:$0xff]
      %v1134 = vld [vmem:[%s220 + $0x21] sm:$0xff]
      %v1135 = vld [vmem:[%s220 + $0x31] sm:$0xff]
      %v1136 = vld [vmem:[%s220 + $0x41] sm:$0xff]
      %v1137 = vld [vmem:[%s220 + $0x51] sm:$0xff]
      %v1138 = vld [vmem:[%s220 + $0x61] sm:$0xff]
      %v1139 = vld [vmem:[%s220 + $0x71] sm:$0xff]
      %s1140 = scalar_lea.vmem %s1, 16
      %v1141 = vld [vmem:[%s1140] sm:$0xf]
      %1143 = vset.pattern.permute.xlu0 0
      %1144 = vperm.xlu0 %1143, %v1132
      %v1145 = vpop.permute.xlu0 %1144
      %1148 = vset.pattern.permute.xlu0 0
      %1149 = vperm.xlu0 %1148, %v1133
      %v1150 = vpop.permute.xlu0 %1149
      %1153 = vset.pattern.permute.xlu0 0
      %1154 = vperm.xlu0 %1153, %v1134
      %v1155 = vpop.permute.xlu0 %1154
      %1158 = vset.pattern.permute.xlu0 0
      %1159 = vperm.xlu0 %1158, %v1135
      %v1160 = vpop.permute.xlu0 %1159
      %1163 = vset.pattern.permute.xlu0 0
      %1164 = vperm.xlu0 %1163, %v1136
      %v1165 = vpop.permute.xlu0 %1164
      %1168 = vset.pattern.permute.xlu0 0
      %1169 = vperm.xlu0 %1168, %v1137
      %v1170 = vpop.permute.xlu0 %1169
      %1173 = vset.pattern.permute.xlu0 0
      %1174 = vperm.xlu0 %1173, %v1138
      %v1175 = vpop.permute.xlu0 %1174
      %1178 = vset.pattern.permute.xlu0 0
      %1179 = vperm.xlu0 %1178, %v1139
      %v1180 = vpop.permute.xlu0 %1179
      %v1182 = vlaneseq
      %v1183 = vshrl.u32 %v1182, 7
      %v1184 = vsub.s32 0, %v1183
      %v1185 = vrot.slane %v1141, %v1184
      %v1186 = vmul.f32 %v1145, %v1185
      %v1187 = vmul.f32 %v1150, %v1185
      %v1188 = vmul.f32 %v1155, %v1185
      %v1189 = vmul.f32 %v1160, %v1185
      %v1190 = vmul.f32 %v1165, %v1185
      %v1191 = vmul.f32 %v1170, %v1185
      %v1192 = vmul.f32 %v1175, %v1185
      %v1193 = vmul.f32 %v1180, %v1185
      %v1194 = vadd.f32 %v1124, %v1186
      %v1195 = vadd.f32 %v1125, %v1187
      %v1196 = vadd.f32 %v1126, %v1188
      %v1197 = vadd.f32 %v1127, %v1189
      %v1198 = vadd.f32 %v1128, %v1190
      %v1199 = vadd.f32 %v1129, %v1191
      %v1200 = vadd.f32 %v1130, %v1192
      %v1201 = vadd.f32 %v1131, %v1193
      %1202 = vset.pattern.permute.xlu0 1
      %1203 = vperm.xlu0 %1202, %v1132
      %v1204 = vpop.permute.xlu0 %1203
      %1206 = vset.pattern.permute.xlu0 1
      %1207 = vperm.xlu0 %1206, %v1133
      %v1208 = vpop.permute.xlu0 %1207
      %1210 = vset.pattern.permute.xlu0 1
      %1211 = vperm.xlu0 %1210, %v1134
      %v1212 = vpop.permute.xlu0 %1211
      %1214 = vset.pattern.permute.xlu0 1
      %1215 = vperm.xlu0 %1214, %v1135
      %v1216 = vpop.permute.xlu0 %1215
      %1218 = vset.pattern.permute.xlu0 1
      %1219 = vperm.xlu0 %1218, %v1136
      %v1220 = vpop.permute.xlu0 %1219
      %1222 = vset.pattern.permute.xlu0 1
      %1223 = vperm.xlu0 %1222, %v1137
      %v1224 = vpop.permute.xlu0 %1223
      %1226 = vset.pattern.permute.xlu0 1
      %1227 = vperm.xlu0 %1226, %v1138
      %v1228 = vpop.permute.xlu0 %1227
      %1230 = vset.pattern.permute.xlu0 1
      %1231 = vperm.xlu0 %1230, %v1139
      %v1232 = vpop.permute.xlu0 %1231
      %v1234 = vlaneseq
      %v1235 = vshrl.u32 %v1234, 7
      %v1236 = vsub.s32 1, %v1235
      %v1237 = vrot.slane %v1141, %v1236
      %v1238 = vmul.f32 %v1204, %v1237
      %v1239 = vmul.f32 %v1208, %v1237
      %v1240 = vmul.f32 %v1212, %v1237
      %v1241 = vmul.f32 %v1216, %v1237
      %v1242 = vmul.f32 %v1220, %v1237
      %v1243 = vmul.f32 %v1224, %v1237
      %v1244 = vmul.f32 %v1228, %v1237
      %v1245 = vmul.f32 %v1232, %v1237
      %v1246 = vadd.f32 %v1194, %v1238
      %v1247 = vadd.f32 %v1195, %v1239
      %v1248 = vadd.f32 %v1196, %v1240
      %v1249 = vadd.f32 %v1197, %v1241
      %v1250 = vadd.f32 %v1198, %v1242
      %v1251 = vadd.f32 %v1199, %v1243
      %v1252 = vadd.f32 %v1200, %v1244
      %v1253 = vadd.f32 %v1201, %v1245
      %1254 = vset.pattern.permute.xlu0 2
      %1255 = vperm.xlu0 %1254, %v1132
      %v1256 = vpop.permute.xlu0 %1255
      %1258 = vset.pattern.permute.xlu0 2
      %1259 = vperm.xlu0 %1258, %v1133
      %v1260 = vpop.permute.xlu0 %1259
      %1262 = vset.pattern.permute.xlu0 2
      %1263 = vperm.xlu0 %1262, %v1134
      %v1264 = vpop.permute.xlu0 %1263
      %1266 = vset.pattern.permute.xlu0 2
      %1267 = vperm.xlu0 %1266, %v1135
      %v1268 = vpop.permute.xlu0 %1267
      %1270 = vset.pattern.permute.xlu0 2
      %1271 = vperm.xlu0 %1270, %v1136
      %v1272 = vpop.permute.xlu0 %1271
      %1274 = vset.pattern.permute.xlu0 2
      %1275 = vperm.xlu0 %1274, %v1137
      %v1276 = vpop.permute.xlu0 %1275
      %1278 = vset.pattern.permute.xlu0 2
      %1279 = vperm.xlu0 %1278, %v1138
      %v1280 = vpop.permute.xlu0 %1279
      %1282 = vset.pattern.permute.xlu0 2
      %1283 = vperm.xlu0 %1282, %v1139
      %v1284 = vpop.permute.xlu0 %1283
      %v1286 = vlaneseq
      %v1287 = vshrl.u32 %v1286, 7
      %v1288 = vsub.s32 2, %v1287
      %v1289 = vrot.slane %v1141, %v1288
      %v1290 = vmul.f32 %v1256, %v1289
      %v1291 = vmul.f32 %v1260, %v1289
      %v1292 = vmul.f32 %v1264, %v1289
      %v1293 = vmul.f32 %v1268, %v1289
      %v1294 = vmul.f32 %v1272, %v1289
      %v1295 = vmul.f32 %v1276, %v1289
      %v1296 = vmul.f32 %v1280, %v1289
      %v1297 = vmul.f32 %v1284, %v1289
      %v1298 = vadd.f32 %v1246, %v1290
      %v1299 = vadd.f32 %v1247, %v1291
      %v1300 = vadd.f32 %v1248, %v1292
      %v1301 = vadd.f32 %v1249, %v1293
      %v1302 = vadd.f32 %v1250, %v1294
      %v1303 = vadd.f32 %v1251, %v1295
      %v1304 = vadd.f32 %v1252, %v1296
      %v1305 = vadd.f32 %v1253, %v1297
      %1306 = vset.pattern.permute.xlu0 3
      %1307 = vperm.xlu0 %1306, %v1132
      %v1308 = vpop.permute.xlu0 %1307
      %1310 = vset.pattern.permute.xlu0 3
      %1311 = vperm.xlu0 %1310, %v1133
      %v1312 = vpop.permute.xlu0 %1311
      %1314 = vset.pattern.permute.xlu0 3
      %1315 = vperm.xlu0 %1314, %v1134
      %v1316 = vpop.permute.xlu0 %1315
      %1318 = vset.pattern.permute.xlu0 3
      %1319 = vperm.xlu0 %1318, %v1135
      %v1320 = vpop.permute.xlu0 %1319
      %1322 = vset.pattern.permute.xlu0 3
      %1323 = vperm.xlu0 %1322, %v1136
      %v1324 = vpop.permute.xlu0 %1323
      %1326 = vset.pattern.permute.xlu0 3
      %1327 = vperm.xlu0 %1326, %v1137
      %v1328 = vpop.permute.xlu0 %1327
      %1330 = vset.pattern.permute.xlu0 3
      %1331 = vperm.xlu0 %1330, %v1138
      %v1332 = vpop.permute.xlu0 %1331
      %1334 = vset.pattern.permute.xlu0 3
      %1335 = vperm.xlu0 %1334, %v1139
      %v1336 = vpop.permute.xlu0 %1335
      %v1338 = vlaneseq
      %v1339 = vshrl.u32 %v1338, 7
      %v1340 = vsub.s32 3, %v1339
      %v1341 = vrot.slane %v1141, %v1340
      %v1342 = vmul.f32 %v1308, %v1341
      %v1343 = vmul.f32 %v1312, %v1341
      %v1344 = vmul.f32 %v1316, %v1341
      %v1345 = vmul.f32 %v1320, %v1341
      %v1346 = vmul.f32 %v1324, %v1341
      %v1347 = vmul.f32 %v1328, %v1341
      %v1348 = vmul.f32 %v1332, %v1341
      %v1349 = vmul.f32 %v1336, %v1341
      %v1350 = vadd.f32 %v1298, %v1342
      %v1351 = vadd.f32 %v1299, %v1343
      %v1352 = vadd.f32 %v1300, %v1344
      %v1353 = vadd.f32 %v1301, %v1345
      %v1354 = vadd.f32 %v1302, %v1346
      %v1355 = vadd.f32 %v1303, %v1347
      %v1356 = vadd.f32 %v1304, %v1348
      %v1357 = vadd.f32 %v1305, %v1349
      %v1358 = vld [vmem:[%s220 + $0x2] sm:$0xff]
      %v1359 = vld [vmem:[%s220 + $0x12] sm:$0xff]
      %v1360 = vld [vmem:[%s220 + $0x22] sm:$0xff]
      %v1361 = vld [vmem:[%s220 + $0x32] sm:$0xff]
      %v1362 = vld [vmem:[%s220 + $0x42] sm:$0xff]
      %v1363 = vld [vmem:[%s220 + $0x52] sm:$0xff]
      %v1364 = vld [vmem:[%s220 + $0x62] sm:$0xff]
      %v1365 = vld [vmem:[%s220 + $0x72] sm:$0xff]
      %s1366 = scalar_lea.vmem %s1, 20
      %v1367 = vld [vmem:[%s1366] sm:$0xf]
      %1369 = vset.pattern.permute.xlu0 0
      %1370 = vperm.xlu0 %1369, %v1358
      %v1371 = vpop.permute.xlu0 %1370
      %1374 = vset.pattern.permute.xlu0 0
      %1375 = vperm.xlu0 %1374, %v1359
      %v1376 = vpop.permute.xlu0 %1375
      %1379 = vset.pattern.permute.xlu0 0
      %1380 = vperm.xlu0 %1379, %v1360
      %v1381 = vpop.permute.xlu0 %1380
      %1384 = vset.pattern.permute.xlu0 0
      %1385 = vperm.xlu0 %1384, %v1361
      %v1386 = vpop.permute.xlu0 %1385
      %1389 = vset.pattern.permute.xlu0 0
      %1390 = vperm.xlu0 %1389, %v1362
      %v1391 = vpop.permute.xlu0 %1390
      %1394 = vset.pattern.permute.xlu0 0
      %1395 = vperm.xlu0 %1394, %v1363
      %v1396 = vpop.permute.xlu0 %1395
      %1399 = vset.pattern.permute.xlu0 0
      %1400 = vperm.xlu0 %1399, %v1364
      %v1401 = vpop.permute.xlu0 %1400
      %1404 = vset.pattern.permute.xlu0 0
      %1405 = vperm.xlu0 %1404, %v1365
      %v1406 = vpop.permute.xlu0 %1405
      %v1408 = vlaneseq
      %v1409 = vshrl.u32 %v1408, 7
      %v1410 = vsub.s32 0, %v1409
      %v1411 = vrot.slane %v1367, %v1410
      %v1412 = vmul.f32 %v1371, %v1411
      %v1413 = vmul.f32 %v1376, %v1411
      %v1414 = vmul.f32 %v1381, %v1411
      %v1415 = vmul.f32 %v1386, %v1411
      %v1416 = vmul.f32 %v1391, %v1411
      %v1417 = vmul.f32 %v1396, %v1411
      %v1418 = vmul.f32 %v1401, %v1411
      %v1419 = vmul.f32 %v1406, %v1411
      %v1420 = vadd.f32 %v1350, %v1412
      %v1421 = vadd.f32 %v1351, %v1413
      %v1422 = vadd.f32 %v1352, %v1414
      %v1423 = vadd.f32 %v1353, %v1415
      %v1424 = vadd.f32 %v1354, %v1416
      %v1425 = vadd.f32 %v1355, %v1417
      %v1426 = vadd.f32 %v1356, %v1418
      %v1427 = vadd.f32 %v1357, %v1419
      %1428 = vset.pattern.permute.xlu0 1
      %1429 = vperm.xlu0 %1428, %v1358
      %v1430 = vpop.permute.xlu0 %1429
      %1432 = vset.pattern.permute.xlu0 1
      %1433 = vperm.xlu0 %1432, %v1359
      %v1434 = vpop.permute.xlu0 %1433
      %1436 = vset.pattern.permute.xlu0 1
      %1437 = vperm.xlu0 %1436, %v1360
      %v1438 = vpop.permute.xlu0 %1437
      %1440 = vset.pattern.permute.xlu0 1
      %1441 = vperm.xlu0 %1440, %v1361
      %v1442 = vpop.permute.xlu0 %1441
      %1444 = vset.pattern.permute.xlu0 1
      %1445 = vperm.xlu0 %1444, %v1362
      %v1446 = vpop.permute.xlu0 %1445
      %1448 = vset.pattern.permute.xlu0 1
      %1449 = vperm.xlu0 %1448, %v1363
      %v1450 = vpop.permute.xlu0 %1449
      %1452 = vset.pattern.permute.xlu0 1
      %1453 = vperm.xlu0 %1452, %v1364
      %v1454 = vpop.permute.xlu0 %1453
      %1456 = vset.pattern.permute.xlu0 1
      %1457 = vperm.xlu0 %1456, %v1365
      %v1458 = vpop.permute.xlu0 %1457
      %v1460 = vlaneseq
      %v1461 = vshrl.u32 %v1460, 7
      %v1462 = vsub.s32 1, %v1461
      %v1463 = vrot.slane %v1367, %v1462
      %v1464 = vmul.f32 %v1430, %v1463
      %v1465 = vmul.f32 %v1434, %v1463
      %v1466 = vmul.f32 %v1438, %v1463
      %v1467 = vmul.f32 %v1442, %v1463
      %v1468 = vmul.f32 %v1446, %v1463
      %v1469 = vmul.f32 %v1450, %v1463
      %v1470 = vmul.f32 %v1454, %v1463
      %v1471 = vmul.f32 %v1458, %v1463
      %v1472 = vadd.f32 %v1420, %v1464
      %v1473 = vadd.f32 %v1421, %v1465
      %v1474 = vadd.f32 %v1422, %v1466
      %v1475 = vadd.f32 %v1423, %v1467
      %v1476 = vadd.f32 %v1424, %v1468
      %v1477 = vadd.f32 %v1425, %v1469
      %v1478 = vadd.f32 %v1426, %v1470
      %v1479 = vadd.f32 %v1427, %v1471
      %1480 = vset.pattern.permute.xlu0 2
      %1481 = vperm.xlu0 %1480, %v1358
      %v1482 = vpop.permute.xlu0 %1481
      %1484 = vset.pattern.permute.xlu0 2
      %1485 = vperm.xlu0 %1484, %v1359
      %v1486 = vpop.permute.xlu0 %1485
      %1488 = vset.pattern.permute.xlu0 2
      %1489 = vperm.xlu0 %1488, %v1360
      %v1490 = vpop.permute.xlu0 %1489
      %1492 = vset.pattern.permute.xlu0 2
      %1493 = vperm.xlu0 %1492, %v1361
      %v1494 = vpop.permute.xlu0 %1493
      %1496 = vset.pattern.permute.xlu0 2
      %1497 = vperm.xlu0 %1496, %v1362
      %v1498 = vpop.permute.xlu0 %1497
      %1500 = vset.pattern.permute.xlu0 2
      %1501 = vperm.xlu0 %1500, %v1363
      %v1502 = vpop.permute.xlu0 %1501
      %1504 = vset.pattern.permute.xlu0 2
      %1505 = vperm.xlu0 %1504, %v1364
      %v1506 = vpop.permute.xlu0 %1505
      %1508 = vset.pattern.permute.xlu0 2
      %1509 = vperm.xlu0 %1508, %v1365
      %v1510 = vpop.permute.xlu0 %1509
      %v1512 = vlaneseq
      %v1513 = vshrl.u32 %v1512, 7
      %v1514 = vsub.s32 2, %v1513
      %v1515 = vrot.slane %v1367, %v1514
      %v1516 = vmul.f32 %v1482, %v1515
      %v1517 = vmul.f32 %v1486, %v1515
      %v1518 = vmul.f32 %v1490, %v1515
      %v1519 = vmul.f32 %v1494, %v1515
      %v1520 = vmul.f32 %v1498, %v1515
      %v1521 = vmul.f32 %v1502, %v1515
      %v1522 = vmul.f32 %v1506, %v1515
      %v1523 = vmul.f32 %v1510, %v1515
      %v1524 = vadd.f32 %v1472, %v1516
      %v1525 = vadd.f32 %v1473, %v1517
      %v1526 = vadd.f32 %v1474, %v1518
      %v1527 = vadd.f32 %v1475, %v1519
      %v1528 = vadd.f32 %v1476, %v1520
      %v1529 = vadd.f32 %v1477, %v1521
      %v1530 = vadd.f32 %v1478, %v1522
      %v1531 = vadd.f32 %v1479, %v1523
      %1532 = vset.pattern.permute.xlu0 3
      %1533 = vperm.xlu0 %1532, %v1358
      %v1534 = vpop.permute.xlu0 %1533
      %1536 = vset.pattern.permute.xlu0 3
      %1537 = vperm.xlu0 %1536, %v1359
      %v1538 = vpop.permute.xlu0 %1537
      %1540 = vset.pattern.permute.xlu0 3
      %1541 = vperm.xlu0 %1540, %v1360
      %v1542 = vpop.permute.xlu0 %1541
      %1544 = vset.pattern.permute.xlu0 3
      %1545 = vperm.xlu0 %1544, %v1361
      %v1546 = vpop.permute.xlu0 %1545
      %1548 = vset.pattern.permute.xlu0 3
      %1549 = vperm.xlu0 %1548, %v1362
      %v1550 = vpop.permute.xlu0 %1549
      %1552 = vset.pattern.permute.xlu0 3
      %1553 = vperm.xlu0 %1552, %v1363
      %v1554 = vpop.permute.xlu0 %1553
      %1556 = vset.pattern.permute.xlu0 3
      %1557 = vperm.xlu0 %1556, %v1364
      %v1558 = vpop.permute.xlu0 %1557
      %1560 = vset.pattern.permute.xlu0 3
      %1561 = vperm.xlu0 %1560, %v1365
      %v1562 = vpop.permute.xlu0 %1561
      %v1564 = vlaneseq
      %v1565 = vshrl.u32 %v1564, 7
      %v1566 = vsub.s32 3, %v1565
      %v1567 = vrot.slane %v1367, %v1566
      %v1568 = vmul.f32 %v1534, %v1567
      %v1569 = vmul.f32 %v1538, %v1567
      %v1570 = vmul.f32 %v1542, %v1567
      %v1571 = vmul.f32 %v1546, %v1567
      %v1572 = vmul.f32 %v1550, %v1567
      %v1573 = vmul.f32 %v1554, %v1567
      %v1574 = vmul.f32 %v1558, %v1567
      %v1575 = vmul.f32 %v1562, %v1567
      %v1576 = vadd.f32 %v1524, %v1568
      %v1577 = vadd.f32 %v1525, %v1569
      %v1578 = vadd.f32 %v1526, %v1570
      %v1579 = vadd.f32 %v1527, %v1571
      %v1580 = vadd.f32 %v1528, %v1572
      %v1581 = vadd.f32 %v1529, %v1573
      %v1582 = vadd.f32 %v1530, %v1574
      %v1583 = vadd.f32 %v1531, %v1575
      %s1584 = scalar_lea.vmem [#allocation2], 32
      %v1585 = vld [vmem:[%s1584] sm:$0xff]
      %v1586 = vld [vmem:[%s1584 + $0x10] sm:$0xff]
      %v1587 = vld [vmem:[%s1584 + $0x20] sm:$0xff]
      %v1588 = vld [vmem:[%s1584 + $0x30] sm:$0xff]
      %v1589 = vld [vmem:[%s1584 + $0x40] sm:$0xff]
      %v1590 = vld [vmem:[%s1584 + $0x50] sm:$0xff]
      %v1591 = vld [vmem:[%s1584 + $0x60] sm:$0xff]
      %v1592 = vld [vmem:[%s1584 + $0x70] sm:$0xff]
      %s1593 = scalar_lea.vmem %s1, 24
      %v1594 = vld [vmem:[%s1593] sm:$0xf]
      %1596 = vset.pattern.permute.xlu0 0
      %1597 = vperm.xlu0 %1596, %v1585
      %v1598 = vpop.permute.xlu0 %1597
      %1601 = vset.pattern.permute.xlu0 0
      %1602 = vperm.xlu0 %1601, %v1586
      %v1603 = vpop.permute.xlu0 %1602
      %1606 = vset.pattern.permute.xlu0 0
      %1607 = vperm.xlu0 %1606, %v1587
      %v1608 = vpop.permute.xlu0 %1607
      %1611 = vset.pattern.permute.xlu0 0
      %1612 = vperm.xlu0 %1611, %v1588
      %v1613 = vpop.permute.xlu0 %1612
      %1616 = vset.pattern.permute.xlu0 0
      %1617 = vperm.xlu0 %1616, %v1589
      %v1618 = vpop.permute.xlu0 %1617
      %1621 = vset.pattern.permute.xlu0 0
      %1622 = vperm.xlu0 %1621, %v1590
      %v1623 = vpop.permute.xlu0 %1622
      %1626 = vset.pattern.permute.xlu0 0
      %1627 = vperm.xlu0 %1626, %v1591
      %v1628 = vpop.permute.xlu0 %1627
      %1631 = vset.pattern.permute.xlu0 0
      %1632 = vperm.xlu0 %1631, %v1592
      %v1633 = vpop.permute.xlu0 %1632
      %v1635 = vlaneseq
      %v1636 = vshrl.u32 %v1635, 7
      %v1637 = vsub.s32 0, %v1636
      %v1638 = vrot.slane %v1594, %v1637
      %v1639 = vmul.f32 %v1598, %v1638
      %v1640 = vmul.f32 %v1603, %v1638
      %v1641 = vmul.f32 %v1608, %v1638
      %v1642 = vmul.f32 %v1613, %v1638
      %v1643 = vmul.f32 %v1618, %v1638
      %v1644 = vmul.f32 %v1623, %v1638
      %v1645 = vmul.f32 %v1628, %v1638
      %v1646 = vmul.f32 %v1633, %v1638
      %v1647 = vadd.f32 %v1576, %v1639
      %v1648 = vadd.f32 %v1577, %v1640
      %v1649 = vadd.f32 %v1578, %v1641
      %v1650 = vadd.f32 %v1579, %v1642
      %v1651 = vadd.f32 %v1580, %v1643
      %v1652 = vadd.f32 %v1581, %v1644
      %v1653 = vadd.f32 %v1582, %v1645
      %v1654 = vadd.f32 %v1583, %v1646
      %1655 = vset.pattern.permute.xlu0 1
      %1656 = vperm.xlu0 %1655, %v1585
      %v1657 = vpop.permute.xlu0 %1656
      %1659 = vset.pattern.permute.xlu0 1
      %1660 = vperm.xlu0 %1659, %v1586
      %v1661 = vpop.permute.xlu0 %1660
      %1663 = vset.pattern.permute.xlu0 1
      %1664 = vperm.xlu0 %1663, %v1587
      %v1665 = vpop.permute.xlu0 %1664
      %1667 = vset.pattern.permute.xlu0 1
      %1668 = vperm.xlu0 %1667, %v1588
      %v1669 = vpop.permute.xlu0 %1668
      %1671 = vset.pattern.permute.xlu0 1
      %1672 = vperm.xlu0 %1671, %v1589
      %v1673 = vpop.permute.xlu0 %1672
      %1675 = vset.pattern.permute.xlu0 1
      %1676 = vperm.xlu0 %1675, %v1590
      %v1677 = vpop.permute.xlu0 %1676
      %1679 = vset.pattern.permute.xlu0 1
      %1680 = vperm.xlu0 %1679, %v1591
      %v1681 = vpop.permute.xlu0 %1680
      %1683 = vset.pattern.permute.xlu0 1
      %1684 = vperm.xlu0 %1683, %v1592
      %v1685 = vpop.permute.xlu0 %1684
      %v1687 = vlaneseq
      %v1688 = vshrl.u32 %v1687, 7
      %v1689 = vsub.s32 1, %v1688
      %v1690 = vrot.slane %v1594, %v1689
      %v1691 = vmul.f32 %v1657, %v1690
      %v1692 = vmul.f32 %v1661, %v1690
      %v1693 = vmul.f32 %v1665, %v1690
      %v1694 = vmul.f32 %v1669, %v1690
      %v1695 = vmul.f32 %v1673, %v1690
      %v1696 = vmul.f32 %v1677, %v1690
      %v1697 = vmul.f32 %v1681, %v1690
      %v1698 = vmul.f32 %v1685, %v1690
      %v1699 = vadd.f32 %v1647, %v1691
      %v1700 = vadd.f32 %v1648, %v1692
      %v1701 = vadd.f32 %v1649, %v1693
      %v1702 = vadd.f32 %v1650, %v1694
      %v1703 = vadd.f32 %v1651, %v1695
      %v1704 = vadd.f32 %v1652, %v1696
      %v1705 = vadd.f32 %v1653, %v1697
      %v1706 = vadd.f32 %v1654, %v1698
      %1707 = vset.pattern.permute.xlu0 2
      %1708 = vperm.xlu0 %1707, %v1585
      %v1709 = vpop.permute.xlu0 %1708
      %1711 = vset.pattern.permute.xlu0 2
      %1712 = vperm.xlu0 %1711, %v1586
      %v1713 = vpop.permute.xlu0 %1712
      %1715 = vset.pattern.permute.xlu0 2
      %1716 = vperm.xlu0 %1715, %v1587
      %v1717 = vpop.permute.xlu0 %1716
      %1719 = vset.pattern.permute.xlu0 2
      %1720 = vperm.xlu0 %1719, %v1588
      %v1721 = vpop.permute.xlu0 %1720
      %1723 = vset.pattern.permute.xlu0 2
      %1724 = vperm.xlu0 %1723, %v1589
      %v1725 = vpop.permute.xlu0 %1724
      %1727 = vset.pattern.permute.xlu0 2
      %1728 = vperm.xlu0 %1727, %v1590
      %v1729 = vpop.permute.xlu0 %1728
      %1731 = vset.pattern.permute.xlu0 2
      %1732 = vperm.xlu0 %1731, %v1591
      %v1733 = vpop.permute.xlu0 %1732
      %1735 = vset.pattern.permute.xlu0 2
      %1736 = vperm.xlu0 %1735, %v1592
      %v1737 = vpop.permute.xlu0 %1736
      %v1739 = vlaneseq
      %v1740 = vshrl.u32 %v1739, 7
      %v1741 = vsub.s32 2, %v1740
      %v1742 = vrot.slane %v1594, %v1741
      %v1743 = vmul.f32 %v1709, %v1742
      %v1744 = vmul.f32 %v1713, %v1742
      %v1745 = vmul.f32 %v1717, %v1742
      %v1746 = vmul.f32 %v1721, %v1742
      %v1747 = vmul.f32 %v1725, %v1742
      %v1748 = vmul.f32 %v1729, %v1742
      %v1749 = vmul.f32 %v1733, %v1742
      %v1750 = vmul.f32 %v1737, %v1742
      %v1751 = vadd.f32 %v1699, %v1743
      %v1752 = vadd.f32 %v1700, %v1744
      %v1753 = vadd.f32 %v1701, %v1745
      %v1754 = vadd.f32 %v1702, %v1746
      %v1755 = vadd.f32 %v1703, %v1747
      %v1756 = vadd.f32 %v1704, %v1748
      %v1757 = vadd.f32 %v1705, %v1749
      %v1758 = vadd.f32 %v1706, %v1750
      %1759 = vset.pattern.permute.xlu0 3
      %1760 = vperm.xlu0 %1759, %v1585
      %v1761 = vpop.permute.xlu0 %1760
      %1763 = vset.pattern.permute.xlu0 3
      %1764 = vperm.xlu0 %1763, %v1586
      %v1765 = vpop.permute.xlu0 %1764
      %1767 = vset.pattern.permute.xlu0 3
      %1768 = vperm.xlu0 %1767, %v1587
      %v1769 = vpop.permute.xlu0 %1768
      %1771 = vset.pattern.permute.xlu0 3
      %1772 = vperm.xlu0 %1771, %v1588
      %v1773 = vpop.permute.xlu0 %1772
      %1775 = vset.pattern.permute.xlu0 3
      %1776 = vperm.xlu0 %1775, %v1589
      %v1777 = vpop.permute.xlu0 %1776
      %1779 = vset.pattern.permute.xlu0 3
      %1780 = vperm.xlu0 %1779, %v1590
      %v1781 = vpop.permute.xlu0 %1780
      %1783 = vset.pattern.permute.xlu0 3
      %1784 = vperm.xlu0 %1783, %v1591
      %v1785 = vpop.permute.xlu0 %1784
      %1787 = vset.pattern.permute.xlu0 3
      %1788 = vperm.xlu0 %1787, %v1592
      %v1789 = vpop.permute.xlu0 %1788
      %v1791 = vlaneseq
      %v1792 = vshrl.u32 %v1791, 7
      %v1793 = vsub.s32 3, %v1792
      %v1794 = vrot.slane %v1594, %v1793
      %v1795 = vmul.f32 %v1761, %v1794
      %v1796 = vmul.f32 %v1765, %v1794
      %v1797 = vmul.f32 %v1769, %v1794
      %v1798 = vmul.f32 %v1773, %v1794
      %v1799 = vmul.f32 %v1777, %v1794
      %v1800 = vmul.f32 %v1781, %v1794
      %v1801 = vmul.f32 %v1785, %v1794
      %v1802 = vmul.f32 %v1789, %v1794
      %v1803 = vadd.f32 %v1751, %v1795
      %v1804 = vadd.f32 %v1752, %v1796
      %v1805 = vadd.f32 %v1753, %v1797
      %v1806 = vadd.f32 %v1754, %v1798
      %v1807 = vadd.f32 %v1755, %v1799
      %v1808 = vadd.f32 %v1756, %v1800
      %v1809 = vadd.f32 %v1757, %v1801
      %v1810 = vadd.f32 %v1758, %v1802
      %v1811 = vld [vmem:[%s1584 + $0x1] sm:$0xff]
      %v1812 = vld [vmem:[%s1584 + $0x11] sm:$0xff]
      %v1813 = vld [vmem:[%s1584 + $0x21] sm:$0xff]
      %v1814 = vld [vmem:[%s1584 + $0x31] sm:$0xff]
      %v1815 = vld [vmem:[%s1584 + $0x41] sm:$0xff]
      %v1816 = vld [vmem:[%s1584 + $0x51] sm:$0xff]
      %v1817 = vld [vmem:[%s1584 + $0x61] sm:$0xff]
      %v1818 = vld [vmem:[%s1584 + $0x71] sm:$0xff]
      %s1819 = scalar_lea.vmem %s1, 28
      %v1820 = vld [vmem:[%s1819] sm:$0xf]
      %1822 = vset.pattern.permute.xlu0 0
      %1823 = vperm.xlu0 %1822, %v1811
      %v1824 = vpop.permute.xlu0 %1823
      %1827 = vset.pattern.permute.xlu0 0
      %1828 = vperm.xlu0 %1827, %v1812
      %v1829 = vpop.permute.xlu0 %1828
      %1832 = vset.pattern.permute.xlu0 0
      %1833 = vperm.xlu0 %1832, %v1813
      %v1834 = vpop.permute.xlu0 %1833
      %1837 = vset.pattern.permute.xlu0 0
      %1838 = vperm.xlu0 %1837, %v1814
      %v1839 = vpop.permute.xlu0 %1838
      %1842 = vset.pattern.permute.xlu0 0
      %1843 = vperm.xlu0 %1842, %v1815
      %v1844 = vpop.permute.xlu0 %1843
      %1847 = vset.pattern.permute.xlu0 0
      %1848 = vperm.xlu0 %1847, %v1816
      %v1849 = vpop.permute.xlu0 %1848
      %1852 = vset.pattern.permute.xlu0 0
      %1853 = vperm.xlu0 %1852, %v1817
      %v1854 = vpop.permute.xlu0 %1853
      %1857 = vset.pattern.permute.xlu0 0
      %1858 = vperm.xlu0 %1857, %v1818
      %v1859 = vpop.permute.xlu0 %1858
      %v1861 = vlaneseq
      %v1862 = vshrl.u32 %v1861, 7
      %v1863 = vsub.s32 0, %v1862
      %v1864 = vrot.slane %v1820, %v1863
      %v1865 = vmul.f32 %v1824, %v1864
      %v1866 = vmul.f32 %v1829, %v1864
      %v1867 = vmul.f32 %v1834, %v1864
      %v1868 = vmul.f32 %v1839, %v1864
      %v1869 = vmul.f32 %v1844, %v1864
      %v1870 = vmul.f32 %v1849, %v1864
      %v1871 = vmul.f32 %v1854, %v1864
      %v1872 = vmul.f32 %v1859, %v1864
      %v1873 = vadd.f32 %v1803, %v1865
      %v1874 = vadd.f32 %v1804, %v1866
      %v1875 = vadd.f32 %v1805, %v1867
      %v1876 = vadd.f32 %v1806, %v1868
      %v1877 = vadd.f32 %v1807, %v1869
      %v1878 = vadd.f32 %v1808, %v1870
      %v1879 = vadd.f32 %v1809, %v1871
      %v1880 = vadd.f32 %v1810, %v1872
      %1881 = vset.pattern.permute.xlu0 1
      %1882 = vperm.xlu0 %1881, %v1811
      %v1883 = vpop.permute.xlu0 %1882
      %1885 = vset.pattern.permute.xlu0 1
      %1886 = vperm.xlu0 %1885, %v1812
      %v1887 = vpop.permute.xlu0 %1886
      %1889 = vset.pattern.permute.xlu0 1
      %1890 = vperm.xlu0 %1889, %v1813
      %v1891 = vpop.permute.xlu0 %1890
      %1893 = vset.pattern.permute.xlu0 1
      %1894 = vperm.xlu0 %1893, %v1814
      %v1895 = vpop.permute.xlu0 %1894
      %1897 = vset.pattern.permute.xlu0 1
      %1898 = vperm.xlu0 %1897, %v1815
      %v1899 = vpop.permute.xlu0 %1898
      %1901 = vset.pattern.permute.xlu0 1
      %1902 = vperm.xlu0 %1901, %v1816
      %v1903 = vpop.permute.xlu0 %1902
      %1905 = vset.pattern.permute.xlu0 1
      %1906 = vperm.xlu0 %1905, %v1817
      %v1907 = vpop.permute.xlu0 %1906
      %1909 = vset.pattern.permute.xlu0 1
      %1910 = vperm.xlu0 %1909, %v1818
      %v1911 = vpop.permute.xlu0 %1910
      %v1913 = vlaneseq
      %v1914 = vshrl.u32 %v1913, 7
      %v1915 = vsub.s32 1, %v1914
      %v1916 = vrot.slane %v1820, %v1915
      %v1917 = vmul.f32 %v1883, %v1916
      %v1918 = vmul.f32 %v1887, %v1916
      %v1919 = vmul.f32 %v1891, %v1916
      %v1920 = vmul.f32 %v1895, %v1916
      %v1921 = vmul.f32 %v1899, %v1916
      %v1922 = vmul.f32 %v1903, %v1916
      %v1923 = vmul.f32 %v1907, %v1916
      %v1924 = vmul.f32 %v1911, %v1916
      %v1925 = vadd.f32 %v1873, %v1917
      %v1926 = vadd.f32 %v1874, %v1918
      %v1927 = vadd.f32 %v1875, %v1919
      %v1928 = vadd.f32 %v1876, %v1920
      %v1929 = vadd.f32 %v1877, %v1921
      %v1930 = vadd.f32 %v1878, %v1922
      %v1931 = vadd.f32 %v1879, %v1923
      %v1932 = vadd.f32 %v1880, %v1924
      %1933 = vset.pattern.permute.xlu0 2
      %1934 = vperm.xlu0 %1933, %v1811
      %v1935 = vpop.permute.xlu0 %1934
      %1937 = vset.pattern.permute.xlu0 2
      %1938 = vperm.xlu0 %1937, %v1812
      %v1939 = vpop.permute.xlu0 %1938
      %1941 = vset.pattern.permute.xlu0 2
      %1942 = vperm.xlu0 %1941, %v1813
      %v1943 = vpop.permute.xlu0 %1942
      %1945 = vset.pattern.permute.xlu0 2
      %1946 = vperm.xlu0 %1945, %v1814
      %v1947 = vpop.permute.xlu0 %1946
      %1949 = vset.pattern.permute.xlu0 2
      %1950 = vperm.xlu0 %1949, %v1815
      %v1951 = vpop.permute.xlu0 %1950
      %1953 = vset.pattern.permute.xlu0 2
      %1954 = vperm.xlu0 %1953, %v1816
      %v1955 = vpop.permute.xlu0 %1954
      %1957 = vset.pattern.permute.xlu0 2
      %1958 = vperm.xlu0 %1957, %v1817
      %v1959 = vpop.permute.xlu0 %1958
      %1961 = vset.pattern.permute.xlu0 2
      %1962 = vperm.xlu0 %1961, %v1818
      %v1963 = vpop.permute.xlu0 %1962
      %v1965 = vlaneseq
      %v1966 = vshrl.u32 %v1965, 7
      %v1967 = vsub.s32 2, %v1966
      %v1968 = vrot.slane %v1820, %v1967
      %v1969 = vmul.f32 %v1935, %v1968
      %v1970 = vmul.f32 %v1939, %v1968
      %v1971 = vmul.f32 %v1943, %v1968
      %v1972 = vmul.f32 %v1947, %v1968
      %v1973 = vmul.f32 %v1951, %v1968
      %v1974 = vmul.f32 %v1955, %v1968
      %v1975 = vmul.f32 %v1959, %v1968
      %v1976 = vmul.f32 %v1963, %v1968
      %v1977 = vadd.f32 %v1925, %v1969
      %v1978 = vadd.f32 %v1926, %v1970
      %v1979 = vadd.f32 %v1927, %v1971
      %v1980 = vadd.f32 %v1928, %v1972
      %v1981 = vadd.f32 %v1929, %v1973
      %v1982 = vadd.f32 %v1930, %v1974
      %v1983 = vadd.f32 %v1931, %v1975
      %v1984 = vadd.f32 %v1932, %v1976
      %1985 = vset.pattern.permute.xlu0 3
      %1986 = vperm.xlu0 %1985, %v1811
      %v1987 = vpop.permute.xlu0 %1986
      %1989 = vset.pattern.permute.xlu0 3
      %1990 = vperm.xlu0 %1989, %v1812
      %v1991 = vpop.permute.xlu0 %1990
      %1993 = vset.pattern.permute.xlu0 3
      %1994 = vperm.xlu0 %1993, %v1813
      %v1995 = vpop.permute.xlu0 %1994
      %1997 = vset.pattern.permute.xlu0 3
      %1998 = vperm.xlu0 %1997, %v1814
      %v1999 = vpop.permute.xlu0 %1998
      %2001 = vset.pattern.permute.xlu0 3
      %2002 = vperm.xlu0 %2001, %v1815
      %v2003 = vpop.permute.xlu0 %2002
      %2005 = vset.pattern.permute.xlu0 3
      %2006 = vperm.xlu0 %2005, %v1816
      %v2007 = vpop.permute.xlu0 %2006
      %2009 = vset.pattern.permute.xlu0 3
      %2010 = vperm.xlu0 %2009, %v1817
      %v2011 = vpop.permute.xlu0 %2010
      %2013 = vset.pattern.permute.xlu0 3
      %2014 = vperm.xlu0 %2013, %v1818
      %v2015 = vpop.permute.xlu0 %2014
      %v2017 = vlaneseq
      %v2018 = vshrl.u32 %v2017, 7
      %v2019 = vsub.s32 3, %v2018
      %v2020 = vrot.slane %v1820, %v2019
      %v2021 = vmul.f32 %v1987, %v2020
      %v2022 = vmul.f32 %v1991, %v2020
      %v2023 = vmul.f32 %v1995, %v2020
      %v2024 = vmul.f32 %v1999, %v2020
      %v2025 = vmul.f32 %v2003, %v2020
      %v2026 = vmul.f32 %v2007, %v2020
      %v2027 = vmul.f32 %v2011, %v2020
      %v2028 = vmul.f32 %v2015, %v2020
      %v2029 = vadd.f32 %v1977, %v2021
      %v2030 = vadd.f32 %v1978, %v2022
      %v2031 = vadd.f32 %v1979, %v2023
      %v2032 = vadd.f32 %v1980, %v2024
      %v2033 = vadd.f32 %v1981, %v2025
      %v2034 = vadd.f32 %v1982, %v2026
      %v2035 = vadd.f32 %v1983, %v2027
      %v2036 = vadd.f32 %v1984, %v2028
      %v2037 = vld [vmem:[%s1584 + $0x2] sm:$0xff]
      %v2038 = vld [vmem:[%s1584 + $0x12] sm:$0xff]
      %v2039 = vld [vmem:[%s1584 + $0x22] sm:$0xff]
      %v2040 = vld [vmem:[%s1584 + $0x32] sm:$0xff]
      %v2041 = vld [vmem:[%s1584 + $0x42] sm:$0xff]
      %v2042 = vld [vmem:[%s1584 + $0x52] sm:$0xff]
      %v2043 = vld [vmem:[%s1584 + $0x62] sm:$0xff]
      %v2044 = vld [vmem:[%s1584 + $0x72] sm:$0xff]
      %s2045 = scalar_lea.vmem %s1, 32
      %v2046 = vld [vmem:[%s2045] sm:$0xf]
      %2048 = vset.pattern.permute.xlu0 0
      %2049 = vperm.xlu0 %2048, %v2037
      %v2050 = vpop.permute.xlu0 %2049
      %2053 = vset.pattern.permute.xlu0 0
      %2054 = vperm.xlu0 %2053, %v2038
      %v2055 = vpop.permute.xlu0 %2054
      %2058 = vset.pattern.permute.xlu0 0
      %2059 = vperm.xlu0 %2058, %v2039
      %v2060 = vpop.permute.xlu0 %2059
      %2063 = vset.pattern.permute.xlu0 0
      %2064 = vperm.xlu0 %2063, %v2040
      %v2065 = vpop.permute.xlu0 %2064
      %2068 = vset.pattern.permute.xlu0 0
      %2069 = vperm.xlu0 %2068, %v2041
      %v2070 = vpop.permute.xlu0 %2069
      %2073 = vset.pattern.permute.xlu0 0
      %2074 = vperm.xlu0 %2073, %v2042
      %v2075 = vpop.permute.xlu0 %2074
      %2078 = vset.pattern.permute.xlu0 0
      %2079 = vperm.xlu0 %2078, %v2043
      %v2080 = vpop.permute.xlu0 %2079
      %2083 = vset.pattern.permute.xlu0 0
      %2084 = vperm.xlu0 %2083, %v2044
      %v2085 = vpop.permute.xlu0 %2084
      %v2087 = vlaneseq
      %v2088 = vshrl.u32 %v2087, 7
      %v2089 = vsub.s32 0, %v2088
      %v2090 = vrot.slane %v2046, %v2089
      %v2091 = vmul.f32 %v2050, %v2090
      %v2092 = vmul.f32 %v2055, %v2090
      %v2093 = vmul.f32 %v2060, %v2090
      %v2094 = vmul.f32 %v2065, %v2090
      %v2095 = vmul.f32 %v2070, %v2090
      %v2096 = vmul.f32 %v2075, %v2090
      %v2097 = vmul.f32 %v2080, %v2090
      %v2098 = vmul.f32 %v2085, %v2090
      %v2099 = vadd.f32 %v2029, %v2091
      %v2100 = vadd.f32 %v2030, %v2092
      %v2101 = vadd.f32 %v2031, %v2093
      %v2102 = vadd.f32 %v2032, %v2094
      %v2103 = vadd.f32 %v2033, %v2095
      %v2104 = vadd.f32 %v2034, %v2096
      %v2105 = vadd.f32 %v2035, %v2097
      %v2106 = vadd.f32 %v2036, %v2098
      %2107 = vset.pattern.permute.xlu0 1
      %2108 = vperm.xlu0 %2107, %v2037
      %v2109 = vpop.permute.xlu0 %2108
      %2111 = vset.pattern.permute.xlu0 1
      %2112 = vperm.xlu0 %2111, %v2038
      %v2113 = vpop.permute.xlu0 %2112
      %2115 = vset.pattern.permute.xlu0 1
      %2116 = vperm.xlu0 %2115, %v2039
      %v2117 = vpop.permute.xlu0 %2116
      %2119 = vset.pattern.permute.xlu0 1
      %2120 = vperm.xlu0 %2119, %v2040
      %v2121 = vpop.permute.xlu0 %2120
      %2123 = vset.pattern.permute.xlu0 1
      %2124 = vperm.xlu0 %2123, %v2041
      %v2125 = vpop.permute.xlu0 %2124
      %2127 = vset.pattern.permute.xlu0 1
      %2128 = vperm.xlu0 %2127, %v2042
      %v2129 = vpop.permute.xlu0 %2128
      %2131 = vset.pattern.permute.xlu0 1
      %2132 = vperm.xlu0 %2131, %v2043
      %v2133 = vpop.permute.xlu0 %2132
      %2135 = vset.pattern.permute.xlu0 1
      %2136 = vperm.xlu0 %2135, %v2044
      %v2137 = vpop.permute.xlu0 %2136
      %v2139 = vlaneseq
      %v2140 = vshrl.u32 %v2139, 7
      %v2141 = vsub.s32 1, %v2140
      %v2142 = vrot.slane %v2046, %v2141
      %v2143 = vmul.f32 %v2109, %v2142
      %v2144 = vmul.f32 %v2113, %v2142
      %v2145 = vmul.f32 %v2117, %v2142
      %v2146 = vmul.f32 %v2121, %v2142
      %v2147 = vmul.f32 %v2125, %v2142
      %v2148 = vmul.f32 %v2129, %v2142
      %v2149 = vmul.f32 %v2133, %v2142
      %v2150 = vmul.f32 %v2137, %v2142
      %v2151 = vadd.f32 %v2099, %v2143
      %v2152 = vadd.f32 %v2100, %v2144
      %v2153 = vadd.f32 %v2101, %v2145
      %v2154 = vadd.f32 %v2102, %v2146
      %v2155 = vadd.f32 %v2103, %v2147
      %v2156 = vadd.f32 %v2104, %v2148
      %v2157 = vadd.f32 %v2105, %v2149
      %v2158 = vadd.f32 %v2106, %v2150
      %2159 = vset.pattern.permute.xlu0 2
      %2160 = vperm.xlu0 %2159, %v2037
      %v2161 = vpop.permute.xlu0 %2160
      %2163 = vset.pattern.permute.xlu0 2
      %2164 = vperm.xlu0 %2163, %v2038
      %v2165 = vpop.permute.xlu0 %2164
      %2167 = vset.pattern.permute.xlu0 2
      %2168 = vperm.xlu0 %2167, %v2039
      %v2169 = vpop.permute.xlu0 %2168
      %2171 = vset.pattern.permute.xlu0 2
      %2172 = vperm.xlu0 %2171, %v2040
      %v2173 = vpop.permute.xlu0 %2172
      %2175 = vset.pattern.permute.xlu0 2
      %2176 = vperm.xlu0 %2175, %v2041
      %v2177 = vpop.permute.xlu0 %2176
      %2179 = vset.pattern.permute.xlu0 2
      %2180 = vperm.xlu0 %2179, %v2042
      %v2181 = vpop.permute.xlu0 %2180
      %2183 = vset.pattern.permute.xlu0 2
      %2184 = vperm.xlu0 %2183, %v2043
      %v2185 = vpop.permute.xlu0 %2184
      %2187 = vset.pattern.permute.xlu0 2
      %2188 = vperm.xlu0 %2187, %v2044
      %v2189 = vpop.permute.xlu0 %2188
      %v2191 = vlaneseq
      %v2192 = vshrl.u32 %v2191, 7
      %v2193 = vsub.s32 2, %v2192
      %v2194 = vrot.slane %v2046, %v2193
      %v2195 = vmul.f32 %v2161, %v2194
      %v2196 = vmul.f32 %v2165, %v2194
      %v2197 = vmul.f32 %v2169, %v2194
      %v2198 = vmul.f32 %v2173, %v2194
      %v2199 = vmul.f32 %v2177, %v2194
      %v2200 = vmul.f32 %v2181, %v2194
      %v2201 = vmul.f32 %v2185, %v2194
      %v2202 = vmul.f32 %v2189, %v2194
      %v2203 = vadd.f32 %v2151, %v2195
      %v2204 = vadd.f32 %v2152, %v2196
      %v2205 = vadd.f32 %v2153, %v2197
      %v2206 = vadd.f32 %v2154, %v2198
      %v2207 = vadd.f32 %v2155, %v2199
      %v2208 = vadd.f32 %v2156, %v2200
      %v2209 = vadd.f32 %v2157, %v2201
      %v2210 = vadd.f32 %v2158, %v2202
      %2211 = vset.pattern.permute.xlu0 3
      %2212 = vperm.xlu0 %2211, %v2037
      %v2213 = vpop.permute.xlu0 %2212
      %2215 = vset.pattern.permute.xlu0 3
      %2216 = vperm.xlu0 %2215, %v2038
      %v2217 = vpop.permute.xlu0 %2216
      %2219 = vset.pattern.permute.xlu0 3
      %2220 = vperm.xlu0 %2219, %v2039
      %v2221 = vpop.permute.xlu0 %2220
      %2223 = vset.pattern.permute.xlu0 3
      %2224 = vperm.xlu0 %2223, %v2040
      %v2225 = vpop.permute.xlu0 %2224
      %2227 = vset.pattern.permute.xlu0 3
      %2228 = vperm.xlu0 %2227, %v2041
      %v2229 = vpop.permute.xlu0 %2228
      %2231 = vset.pattern.permute.xlu0 3
      %2232 = vperm.xlu0 %2231, %v2042
      %v2233 = vpop.permute.xlu0 %2232
      %2235 = vset.pattern.permute.xlu0 3
      %2236 = vperm.xlu0 %2235, %v2043
      %v2237 = vpop.permute.xlu0 %2236
      %2239 = vset.pattern.permute.xlu0 3
      %2240 = vperm.xlu0 %2239, %v2044
      %v2241 = vpop.permute.xlu0 %2240
      %v2243 = vlaneseq
      %v2244 = vshrl.u32 %v2243, 7
      %v2245 = vsub.s32 3, %v2244
      %v2246 = vrot.slane %v2046, %v2245
      %v2247 = vmul.f32 %v2213, %v2246
      %v2248 = vmul.f32 %v2217, %v2246
      %v2249 = vmul.f32 %v2221, %v2246
      %v2250 = vmul.f32 %v2225, %v2246
      %v2251 = vmul.f32 %v2229, %v2246
      %v2252 = vmul.f32 %v2233, %v2246
      %v2253 = vmul.f32 %v2237, %v2246
      %v2254 = vmul.f32 %v2241, %v2246
      %v2255 = vadd.f32 %v2203, %v2247
      %v2256 = vadd.f32 %v2204, %v2248
      %v2257 = vadd.f32 %v2205, %v2249
      %v2258 = vadd.f32 %v2206, %v2250
      %v2259 = vadd.f32 %v2207, %v2251
      %v2260 = vadd.f32 %v2208, %v2252
      %v2261 = vadd.f32 %v2209, %v2253
      %v2262 = vadd.f32 %v2210, %v2254
      %v2263 = vpack.c.bf16 %v2256, %v2255
      %v2264 = vpack.c.bf16 %v2258, %v2257
      %v2265 = vpack.c.bf16 %v2260, %v2259
      %v2266 = vpack.c.bf16 %v2262, %v2261
      %v2271 = vunpack.c.l.b16 %v2263
      %v2272 = vunpack.c.h.b16 %v2263
      %v2273 = vunpack.c.l.b16 %v2264
      %v2274 = vunpack.c.h.b16 %v2264
      %v2275 = vunpack.c.l.b16 %v2265
      %v2276 = vunpack.c.h.b16 %v2265
      %v2277 = vunpack.c.l.b16 %v2266
      %v2278 = vunpack.c.h.b16 %v2266
      %v2279 = vpack.c.b16 %v2271, %v2271
      %v2280 = vpack.c.b16 %v2272, %v2272
      %v2281 = vpack.c.b16 %v2273, %v2273
      %v2282 = vpack.c.b16 %v2274, %v2274
      %v2283 = vpack.c.b16 %v2275, %v2275
      %v2284 = vpack.c.b16 %v2276, %v2276
      %v2285 = vpack.c.b16 %v2277, %v2277
      %v2286 = vpack.c.b16 %v2278, %v2278
      %vm2295 = vcmask 60416
      %2296 = vst.msk [vmem:[%s177] sm:$0xf] %vm2295, %v2279
      %2297 = vst.msk [vmem:[%s177 + $0x4] sm:$0xf] %vm2295, %v2280
      %2298 = vst.msk [vmem:[%s177 + $0x8] sm:$0xf] %vm2295, %v2281
      %2299 = vst.msk [vmem:[%s177 + $0xc] sm:$0xf] %vm2295, %v2282
      %2300 = vst.msk [vmem:[%s177 + $0x10] sm:$0xf] %vm2295, %v2283
      %2301 = vst.msk [vmem:[%s177 + $0x14] sm:$0xf] %vm2295, %v2284
      %2302 = vst.msk [vmem:[%s177 + $0x18] sm:$0xf] %vm2295, %v2285
      %2303 = vst.msk [vmem:[%s177 + $0x1c] sm:$0xf] %vm2295, %v2286
      %vm2304 = vcmask 64512
      %v2305 = vsel %vm2304, %v2255, 0.0
      %v2306 = vsel %vm2304, %v2256, 0.0
      %v2307 = vadd.f32 %v2305, %v2306
      %v2308 = vsel %vm2304, %v2257, 0.0
      %v2309 = vadd.f32 %v2307, %v2308
      %v2310 = vsel %vm2304, %v2258, 0.0
      %v2311 = vadd.f32 %v2309, %v2310
      %v2312 = vsel %vm2304, %v2259, 0.0
      %v2313 = vadd.f32 %v2311, %v2312
      %v2314 = vsel %vm2304, %v2260, 0.0
      %v2315 = vadd.f32 %v2313, %v2314
      %v2316 = vsel %vm2304, %v2261, 0.0
      %v2317 = vadd.f32 %v2315, %v2316
      %v2318 = vsel %vm2304, %v2262, 0.0
      %v2319 = vadd.f32 %v2317, %v2318
      %v2320 = vrot.slane %v2319, 4
      %v2321 = vadd.f32 %v2319, %v2320
      %v2322 = vrot.slane %v2321, 2
      %v2323 = vadd.f32 %v2321, %v2322
      %v2324 = vrot.slane %v2323, 1
      %v2325 = vadd.f32 %v2323, %v2324
      %v2326 = vmul.f32 %v2325, 0.015625
      %v2327 = vsub.f32 %v2255, %v2326
      %v2328 = vsub.f32 %v2256, %v2326
      %v2329 = vsub.f32 %v2257, %v2326
      %v2330 = vsub.f32 %v2258, %v2326
      %v2331 = vsub.f32 %v2259, %v2326
      %v2332 = vsub.f32 %v2260, %v2326
      %v2333 = vsub.f32 %v2261, %v2326
      %v2334 = vsub.f32 %v2262, %v2326
      %v2335 = vmul.f32 %v2327, %v2327
      %v2336 = vmul.f32 %v2328, %v2328
      %v2337 = vmul.f32 %v2329, %v2329
      %v2338 = vmul.f32 %v2330, %v2330
      %v2339 = vmul.f32 %v2331, %v2331
      %v2340 = vmul.f32 %v2332, %v2332
      %v2341 = vmul.f32 %v2333, %v2333
      %v2342 = vmul.f32 %v2334, %v2334
      %v2343 = vsel %vm2304, %v2335, 0.0
      %v2344 = vsel %vm2304, %v2336, 0.0
      %v2345 = vadd.f32 %v2343, %v2344
      %v2346 = vsel %vm2304, %v2337, 0.0
      %v2347 = vadd.f32 %v2345, %v2346
      %v2348 = vsel %vm2304, %v2338, 0.0
      %v2349 = vadd.f32 %v2347, %v2348
      %v2350 = vsel %vm2304, %v2339, 0.0
      %v2351 = vadd.f32 %v2349, %v2350
      %v2352 = vsel %vm2304, %v2340, 0.0
      %v2353 = vadd.f32 %v2351, %v2352
      %v2354 = vsel %vm2304, %v2341, 0.0
      %v2355 = vadd.f32 %v2353, %v2354
      %v2356 = vsel %vm2304, %v2342, 0.0
      %v2357 = vadd.f32 %v2355, %v2356
      %v2358 = vrot.slane %v2357, 4
      %v2359 = vadd.f32 %v2357, %v2358
      %v2360 = vrot.slane %v2359, 2
      %v2361 = vadd.f32 %v2359, %v2360
      %v2362 = vrot.slane %v2361, 1
      %v2363 = vadd.f32 %v2361, %v2362
      %vm2364 = vcmask 1040384
      %v2365 = vsel %vm2364, %v2325, %v2363
      %vm2366 = vcmask 58368
      %2367 = vst.msk [vmem:[%s181] sm:$0x3] %vm2366, %v2365
      %p2368 = scmp.lt.s32.totalorder %s15, 1
      %s2369 = scalar_select %p2368, %s15, 1
      %s2370 = smul.addr %s2369, 8
      %s2371 = smul.addr %s2370, 4
      %s2372 = scalar_lea.vmem %s2, %s2371
      %p2373 = scmp.lt.s32.totalorder %s15, 1
      %s2374 = scalar_select %p2373, %s15, 1
      %s2375 = smul.addr %s2374, 2
      %s2376 = scalar_lea.vmem %s3, %s2375
      // Predicated region
      $region29: #{downscale_forward.3} parent=27 // pred_check
        %p2377 = pneg %p80
      $region30: #{downscale_forward.3} parent=27 // pred_check_branch
        %2379 = sbr.rel (%p2377) target = $region32
      $region31: #{downscale_forward.3} parent=27 // pred_region
        _
      $region32: #{downscale_forward.3} parent=27 // pred_fallthru
        _
      // Predicated region
      $region33: #{downscale_forward.3} parent=27 // pred_check
        %p2380 = pneg %p106
      $region34: #{downscale_forward.3} parent=27 // pred_check_branch
        %2382 = sbr.rel (%p2380) target = $region36
      $region35: #{downscale_forward.3} parent=27 // pred_region
        _
      $region36: #{downscale_forward.3} parent=27 // pred_fallthru
        _
    $region28: #{downscale_forward.3} parent=5 // pred_fallthru
      _
    %p2383 = scmp.le.s32.totalorder 2, %s10
    // Predicated region
    $region37: #{downscale_forward.3} parent=5 // pred_check
      %p2384 = pneg %p2383
    $region38: #{downscale_forward.3} parent=5 // pred_check_branch
      %2386 = sbr.rel (%p2384) target = $region40
    $region39: #{downscale_forward.3} parent=5 // pred_region
      %s2387 = ssub.s32 %s10, 2
      // Predicated region
      $region41: #{downscale_forward.3} parent=39 // pred_check
        %p2388 = pneg %p86
      $region42: #{downscale_forward.3} parent=39 // pred_check_branch
        %2390 = sbr.rel (%p2388) target = $region44
      $region43: #{downscale_forward.3} parent=39 // pred_region
        %p2391 = scmp.lt.s32.totalorder %s16, 1
        %s2392 = scalar_select %p2391, %s16, 1
        %s2393 = smul.addr %s2392, 8
        %s2394 = smul.addr %s2393, 4
        %s2395 = scalar_lea.vmem %s2, %s2394
      $region44: #{downscale_forward.3} parent=39 // pred_fallthru
        _
      // Predicated region
      $region45: #{downscale_forward.3} parent=39 // pred_check
        %p2396 = pneg %p112
      $region46: #{downscale_forward.3} parent=39 // pred_check_branch
        %2398 = sbr.rel (%p2396) target = $region48
      $region47: #{downscale_forward.3} parent=39 // pred_region
        %p2399 = scmp.lt.s32.totalorder %s16, 1
        %s2400 = scalar_select %p2399, %s16, 1
        %s2401 = smul.addr %s2400, 2
        %s2402 = scalar_lea.vmem %s3, %s2401
      $region48: #{downscale_forward.3} parent=39 // pred_fallthru
        _
    $region40: #{downscale_forward.3} parent=5 // pred_fallthru
      _
  $region6: #{downscale_forward.3} parent=0 // loop_footer
    %s14 = sadd.s32 1, %s10
  $region7: #{downscale_forward.3} parent=0 // loop_footer_branch
    %9 = sbr.rel target = $region3
  $region8: #{downscale_forward.3} parent=0 // loop_exit
    _

// kernel: downscale_forward.4
$region0: #{downscale_forward.4}
  #allocation0 [shape = 'u32[]', space=smem, size = 0x4, offset = 0x4, fixed_abs, tag = 'smem constant byte address 0x4 - core index']
  #allocation1 [shape = 'u32[144,128]{1,0:T(1,128)}', space=vmem, size = 0x12000, scoped, tag = 'internal scratch']
  #allocation2 [shape = 'f32[10,10,8]{2,1,0:T(8,128)}', space=vmem, size = 0x14000, scoped, tag = 'scratch operand']
  %s0 = inlined_call_operand.vmem [shape: bf16[2,8,8,8], index: 0, kind: input, shape index: {}]
  %s1 = inlined_call_operand.vmem [shape: f32[1,8], index: 1, kind: input, shape index: {}]
  %s2 = inlined_call_operand.vmem [shape: f32[1,8], index: 2, kind: input, shape index: {}]
  %s3 = inlined_call_operand.vmem [shape: f32[9,8,8], index: 3, kind: input, shape index: {}]
  %s4 = inlined_call_operand.vmem [shape: bf16[2,64,8], index: 4, kind: output, shape index: {0}]
  %s5 = inlined_call_operand.vmem [shape: f32[2,2,8], index: 5, kind: output, shape index: {1}]
  %6 = xla_tuple %s4, %s5
  %s7 = sld [smem:[#allocation0]]
  $region57: #{downscale_forward.4} parent=0
    _
  %s9 = ssub.s32 1, %s7
  %s10 = scalar_select 0, %s9, %s7
  loop: start=0, step=1, limit=4
  $region2: #{downscale_forward.4} parent=0 // loop_pre_header
    _
  $region3: #{downscale_forward.4} parent=0 // loop_header
    %s12 = sphi 0, %s16
    %p13 = scmp.ge.s32.totalorder %s12, 4
    %s22 = sphi 0, %s24
    %s25 = sphi 0, %s22
    %s26 = sphi 0, %s25
    %s42 = sphi 0, %s26
    %s46 = sphi 0, %s46
    %s48 = sphi 0, %s46
    %s49 = sphi 0, %s48
    %s63 = sphi 0, %s49
    %s67 = sphi 0, %s67
    %s69 = sphi 0, %s67
    %s70 = sphi 0, %s69
    %s84 = sphi 0, %s70
    %s88 = sphi 0, %s88
    %s90 = sphi 0, %s88
    %s91 = sphi 0, %s90
    %s105 = sphi 0, %s91
    %s111 = sphi 0, %s113
    %s114 = sphi 0, %s111
    %s115 = sphi 0, %s114
    %s131 = sphi 0, %s115
    %s137 = sphi 0, %s139
    %s140 = sphi 0, %s137
    %s141 = sphi 0, %s140
    %s157 = sphi 0, %s141
  $region4: #{downscale_forward.4} parent=0 // loop_header_branch
    %15 = sbr.rel (%p13) target = $region8
  $region5: #{downscale_forward.4} parent=0 // loop_body
    %s17 = ssub.s32 %s12, 1
    %s18 = ssub.s32 %s12, 2
    %s19 = sadd.s32 %s12, 1
    %s20 = ssub.s32 %s12, %s19
    %p21 = scmp.eq.s32.totalorder %s20, 0
    %s23 = sadd.s32 %s22, 1
    %s24 = scalar_select %p21, %s22, %s23
    %p27 = pneg %p21
    %p28 = scmp.eq.s32.totalorder %s12, 1
    %p29 = por %p27, %p28
    %p30 = scmp.ne.s32.totalorder %s22, %s25
    %p31 = scmp.eq.s32.totalorder %s12, 0
    %p32 = por %p30, %p31
    %p33 = scmp.ne.s32.totalorder %s22, %s25
    %p34 = scmp.eq.s32.totalorder %s17, 1
    %p35 = por %p33, %p34
    %p36 = scmp.ne.s32.totalorder %s25, %s26
    %p37 = scmp.eq.s32.totalorder %s17, 0
    %p38 = por %p36, %p37
    %p39 = scmp.ne.s32.totalorder %s25, %s26
    %p40 = scmp.eq.s32.totalorder %s18, 1
    %p41 = por %p39, %p40
    %p43 = scmp.ne.s32.totalorder %s26, %s42
    %p44 = scmp.eq.s32.totalorder %s18, 0
    %p45 = por %p43, %p44
    %s47 = sadd.s32 %s46, 1
    %p50 = scmp.eq.s32.totalorder %s12, 1
    %p51 = scmp.ne.s32.totalorder %s46, %s48
    %p52 = scmp.eq.s32.totalorder %s12, 0
    %p53 = por %p51, %p52
    %p54 = scmp.ne.s32.totalorder %s46, %s48
    %p55 = scmp.eq.s32.totalorder %s17, 1
    %p56 = por %p54, %p55
    %p57 = scmp.ne.s32.totalorder %s48, %s49
    %p58 = scmp.eq.s32.totalorder %s17, 0
    %p59 = por %p57, %p58
    %p60 = scmp.ne.s32.totalorder %s48, %s49
    %p61 = scmp.eq.s32.totalorder %s18, 1
    %p62 = por %p60, %p61
    %p64 = scmp.ne.s32.totalorder %s49, %s63
    %p65 = scmp.eq.s32.totalorder %s18, 0
    %p66 = por %p64, %p65
    %s68 = sadd.s32 %s67, 1
    %p71 = scmp.eq.s32.totalorder %s12, 1
    %p72 = scmp.ne.s32.totalorder %s67, %s69
    %p73 = scmp.eq.s32.totalorder %s12, 0
    %p74 = por %p72, %p73
    %p75 = scmp.ne.s32.totalorder %s67, %s69
    %p76 = scmp.eq.s32.totalorder %s17, 1
    %p77 = por %p75, %p76
    %p78 = scmp.ne.s32.totalorder %s69, %s70
    %p79 = scmp.eq.s32.totalorder %s17, 0
    %p80 = por %p78, %p79
    %p81 = scmp.ne.s32.totalorder %s69, %s70
    %p82 = scmp.eq.s32.totalorder %s18, 1
    %p83 = por %p81, %p82
    %p85 = scmp.ne.s32.totalorder %s70, %s84
    %p86 = scmp.eq.s32.totalorder %s18, 0
    %p87 = por %p85, %p86
    %s89 = sadd.s32 %s88, 1
    %p92 = scmp.eq.s32.totalorder %s12, 1
    %p93 = scmp.ne.s32.totalorder %s88, %s90
    %p94 = scmp.eq.s32.totalorder %s12, 0
    %p95 = por %p93, %p94
    %p96 = scmp.ne.s32.totalorder %s88, %s90
    %p97 = scmp.eq.s32.totalorder %s17, 1
    %p98 = por %p96, %p97
    %p99 = scmp.ne.s32.totalorder %s90, %s91
    %p100 = scmp.eq.s32.totalorder %s17, 0
    %p101 = por %p99, %p100
    %p102 = scmp.ne.s32.totalorder %s90, %s91
    %p103 = scmp.eq.s32.totalorder %s18, 1
    %p104 = por %p102, %p103
    %p106 = scmp.ne.s32.totalorder %s91, %s105
    %p107 = scmp.eq.s32.totalorder %s18, 0
    %p108 = por %p106, %p107
    %s109 = ssub.s32 %s12, %s19
    %p110 = scmp.eq.s32.totalorder %s109, 0
    %s112 = sadd.s32 %s111, 1
    %s113 = scalar_select %p110, %s111, %s112
    %p116 = pneg %p110
    %p117 = scmp.eq.s32.totalorder %s12, 1
    %p118 = por %p116, %p117
    %p119 = scmp.ne.s32.totalorder %s111, %s114
    %p120 = scmp.eq.s32.totalorder %s12, 0
    %p121 = por %p119, %p120
    %p122 = scmp.ne.s32.totalorder %s111, %s114
    %p123 = scmp.eq.s32.totalorder %s17, 1
    %p124 = por %p122, %p123
    %p125 = scmp.ne.s32.totalorder %s114, %s115
    %p126 = scmp.eq.s32.totalorder %s17, 0
    %p127 = por %p125, %p126
    %p128 = scmp.ne.s32.totalorder %s114, %s115
    %p129 = scmp.eq.s32.totalorder %s18, 1
    %p130 = por %p128, %p129
    %p132 = scmp.ne.s32.totalorder %s115, %s131
    %p133 = scmp.eq.s32.totalorder %s18, 0
    %p134 = por %p132, %p133
    %s135 = ssub.s32 %s12, %s19
    %p136 = scmp.eq.s32.totalorder %s135, 0
    %s138 = sadd.s32 %s137, 1
    %s139 = scalar_select %p136, %s137, %s138
    %p142 = pneg %p136
    %p143 = scmp.eq.s32.totalorder %s12, 1
    %p144 = por %p142, %p143
    %p145 = scmp.ne.s32.totalorder %s137, %s140
    %p146 = scmp.eq.s32.totalorder %s12, 0
    %p147 = por %p145, %p146
    %p148 = scmp.ne.s32.totalorder %s137, %s140
    %p149 = scmp.eq.s32.totalorder %s17, 1
    %p150 = por %p148, %p149
    %p151 = scmp.ne.s32.totalorder %s140, %s141
    %p152 = scmp.eq.s32.totalorder %s17, 0
    %p153 = por %p151, %p152
    %p154 = scmp.ne.s32.totalorder %s140, %s141
    %p155 = scmp.eq.s32.totalorder %s18, 1
    %p156 = por %p154, %p155
    %p158 = scmp.ne.s32.totalorder %s141, %s157
    %p159 = scmp.eq.s32.totalorder %s18, 0
    %p160 = por %p158, %p159
    %p161 = scmp.le.s32.totalorder 1, %s12
    %p162 = scmp.lt.s32.totalorder %s12, 3
    %p163 = pnand %p161, %p162
    %p164 = pneg %p163
    // Predicated region
    $region9: #{downscale_forward.4} parent=5 // pred_check
      _
    $region10: #{downscale_forward.4} parent=5 // pred_check_branch
      %166 = sbr.rel (%p163) target = $region12
    $region11: #{downscale_forward.4} parent=5 // pred_region
      %s167 = ssub.s32 %s12, 1
      // Predicated region
      $region13: #{downscale_forward.4} parent=11 // pred_check
        %p168 = pneg %p59
      $region14: #{downscale_forward.4} parent=11 // pred_check_branch
        %170 = sbr.rel (%p168) target = $region16
      $region15: #{downscale_forward.4} parent=11 // pred_region
        _
      $region16: #{downscale_forward.4} parent=11 // pred_fallthru
        _
      // Predicated region
      $region17: #{downscale_forward.4} parent=11 // pred_check
        %p171 = pneg %p80
      $region18: #{downscale_forward.4} parent=11 // pred_check_branch
        %173 = sbr.rel (%p171) target = $region20
      $region19: #{downscale_forward.4} parent=11 // pred_region
        _
      $region20: #{downscale_forward.4} parent=11 // pred_fallthru
        _
      // Predicated region
      $region21: #{downscale_forward.4} parent=11 // pred_check
        %p174 = pneg %p101
      $region22: #{downscale_forward.4} parent=11 // pred_check_branch
        %176 = sbr.rel (%p174) target = $region24
      $region23: #{downscale_forward.4} parent=11 // pred_region
        _
      $region24: #{downscale_forward.4} parent=11 // pred_fallthru
        _
    $region12: #{downscale_forward.4} parent=5 // pred_fallthru
      _
    %p177 = scmp.lt.s32.totalorder %s12, 2
    // Predicated region
    $region25: #{downscale_forward.4} parent=5 // pred_check
      %p178 = pneg %p177
    $region26: #{downscale_forward.4} parent=5 // pred_check_branch
      %180 = sbr.rel (%p178) target = $region28
    $region27: #{downscale_forward.4} parent=5 // pred_region
      // Predicated region
      $region29: #{downscale_forward.4} parent=27 // pred_check
        %p181 = pneg %p32
      $region30: #{downscale_forward.4} parent=27 // pred_check_branch
        %183 = sbr.rel (%p181) target = $region32
      $region31: #{downscale_forward.4} parent=27 // pred_region
        %p184 = scmp.lt.s32.totalorder %s12, 1
        %s185 = scalar_select %p184, %s12, 1
        %s186 = smul.addr %s185, 8
        %s187 = smul.addr %s186, 4
        %s188 = scalar_lea.vmem %s0, %s187
      $region32: #{downscale_forward.4} parent=27 // pred_fallthru
        _
    $region28: #{downscale_forward.4} parent=5 // pred_fallthru
      _
    %p189 = scmp.le.s32.totalorder 1, %s12
    %p190 = scmp.lt.s32.totalorder %s12, 3
    %p191 = pnand %p189, %p190
    %p192 = pneg %p191
    // Predicated region
    $region33: #{downscale_forward.4} parent=5 // pred_check
      _
    $region34: #{downscale_forward.4} parent=5 // pred_check_branch
      %194 = sbr.rel (%p191) target = $region36
    $region35: #{downscale_forward.4} parent=5 // pred_region
      %s195 = ssub.s32 %s12, 1
      %p196 = scmp.lt.s32.totalorder %s17, 1
      %s197 = scalar_select %p196, %s17, 1
      %s198 = smul.addr %s197, 8
      %s199 = smul.addr %s198, 4
      %s200 = scalar_lea.vmem %s0, %s199
      %p201 = pneg %p38
      %p202 = pneg %p35
      %p203 = pneg %p59
      %p204 = pneg %p56
      %p205 = pneg %p80
      %p206 = pneg %p77
      %p207 = pneg %p101
      %p208 = pneg %p98
      %p209 = pneg %p127
      %p210 = pneg %p124
      %p211 = scmp.lt.s32.totalorder %s17, 1
      %s212 = scalar_select %p211, %s17, 1
      %s213 = smul.addr %s212, 8
      %s214 = smul.addr %s213, 4
      %s215 = scalar_lea.vmem %s4, %s214
      %p216 = pneg %p153
      %p217 = pneg %p150
      %p218 = scmp.lt.s32.totalorder %s17, 1
      %s219 = scalar_select %p218, %s17, 1
      %s220 = smul.addr %s219, 2
      %s221 = scalar_lea.vmem %s5, %s220
      %p222 = scmp.lt.s32.totalorder %s17, 1
      %s223 = scalar_select %p222, %s17, 1
      %s224 = smul.addr %s223, 8
      %s225 = smul.addr %s224, 4
      %s226 = scalar_lea.vmem %s0, %s225
      %p227 = scmp.lt.s32.totalorder %s17, 1
      %s228 = scalar_select %p227, %s17, 1
      %s229 = smul.addr %s228, 8
      %s230 = smul.addr %s229, 4
      %s231 = scalar_lea.vmem %s4, %s230
      %p232 = scmp.lt.s32.totalorder %s17, 1
      %s233 = scalar_select %p232, %s17, 1
      %s234 = smul.addr %s233, 2
      %s235 = scalar_lea.vmem %s5, %s234
      %v236 = vld [vmem:[%s226] sm:$0xf]
      %v237 = vld [vmem:[%s226 + $0x4] sm:$0xf]
      %v238 = vld [vmem:[%s226 + $0x8] sm:$0xf]
      %v239 = vld [vmem:[%s226 + $0xc] sm:$0xf]
      %v240 = vld [vmem:[%s226 + $0x10] sm:$0xf]
      %v241 = vld [vmem:[%s226 + $0x14] sm:$0xf]
      %v242 = vld [vmem:[%s226 + $0x18] sm:$0xf]
      %v243 = vld [vmem:[%s226 + $0x1c] sm:$0xf]
      %v244 = vunpack.c.l.bf16 %v236
      %v245 = vunpack.c.l.bf16 %v237
      %v246 = vunpack.c.l.bf16 %v238
      %v247 = vunpack.c.l.bf16 %v239
      %v248 = vunpack.c.l.bf16 %v240
      %v249 = vunpack.c.l.bf16 %v241
      %v250 = vunpack.c.l.bf16 %v242
      %v251 = vunpack.c.l.bf16 %v243
      %v252 = vld [vmem:[%s1] sm:$0x1]
      %v254 = vlaneseq
      %v255 = vshrl.u32 %v254, 7
      %v256 = vsub.s32 0, %v255
      %v257 = vrot.slane %v252, %v256
      %v259 = vmul.f32 %v244, %v257
      %v260 = vmul.f32 %v245, %v257
      %v261 = vmul.f32 %v246, %v257
      %v262 = vmul.f32 %v247, %v257
      %v263 = vmul.f32 %v248, %v257
      %v264 = vmul.f32 %v249, %v257
      %v265 = vmul.f32 %v250, %v257
      %v266 = vmul.f32 %v251, %v257
      %v267 = vld [vmem:[%s2] sm:$0x1]
      %v269 = vlaneseq
      %v270 = vshrl.u32 %v269, 7
      %v271 = vsub.s32 0, %v270
      %v272 = vrot.slane %v267, %v271
      %v274 = vadd.f32 %v259, %v272
      %v275 = vadd.f32 %v260, %v272
      %v276 = vadd.f32 %v261, %v272
      %v277 = vadd.f32 %v262, %v272
      %v278 = vadd.f32 %v263, %v272
      %v279 = vadd.f32 %v264, %v272
      %v280 = vadd.f32 %v265, %v272
      %v281 = vadd.f32 %v266, %v272
      %v282 = vmax.f32 %v274, 0.0
      %v283 = vmax.f32 %v275, 0.0
      %v284 = vmax.f32 %v276, 0.0
      %v285 = vmax.f32 %v277, 0.0
      %v286 = vmax.f32 %v278, 0.0
      %v287 = vmax.f32 %v279, 0.0
      %v288 = vmax.f32 %v280, 0.0
      %v289 = vmax.f32 %v281, 0.0
      %vm290 = vcmask 64512
      %291 = vst.msk [vmem:[#allocation2] sm:$0xff] %vm290, 0.0
      %vm292 = vcmask 58368
      %293 = vst.msk [vmem:[#allocation2 + $0x8] sm:$0x3] %vm292, 0.0
      %294 = vst.msk [vmem:[#allocation2 + $0x10] sm:$0xff] %vm290, 0.0
      %295 = vst.msk [vmem:[#allocation2 + $0x18] sm:$0x3] %vm292, 0.0
      %296 = vst.msk [vmem:[#allocation2 + $0x20] sm:$0xff] %vm290, 0.0
      %297 = vst.msk [vmem:[#allocation2 + $0x28] sm:$0x3] %vm292, 0.0
      %298 = vst.msk [vmem:[#allocation2 + $0x30] sm:$0xff] %vm290, 0.0
      %299 = vst.msk [vmem:[#allocation2 + $0x38] sm:$0x3] %vm292, 0.0
      %300 = vst.msk [vmem:[#allocation2 + $0x40] sm:$0xff] %vm290, 0.0
      %301 = vst.msk [vmem:[#allocation2 + $0x48] sm:$0x3] %vm292, 0.0
      %302 = vst.msk [vmem:[#allocation2 + $0x50] sm:$0xff] %vm290, 0.0
      %303 = vst.msk [vmem:[#allocation2 + $0x58] sm:$0x3] %vm292, 0.0
      %304 = vst.msk [vmem:[#allocation2 + $0x60] sm:$0xff] %vm290, 0.0
      %305 = vst.msk [vmem:[#allocation2 + $0x68] sm:$0x3] %vm292, 0.0
      %306 = vst.msk [vmem:[#allocation2 + $0x70] sm:$0xff] %vm290, 0.0
      %307 = vst.msk [vmem:[#allocation2 + $0x78] sm:$0x3] %vm292, 0.0
      %308 = vst.msk [vmem:[#allocation2 + $0x80] sm:$0xff] %vm290, 0.0
      %309 = vst.msk [vmem:[#allocation2 + $0x88] sm:$0x3] %vm292, 0.0
      %310 = vst.msk [vmem:[#allocation2 + $0x90] sm:$0xff] %vm290, 0.0
      %311 = vst.msk [vmem:[#allocation2 + $0x98] sm:$0x3] %vm292, 0.0
      %s312 = scalar_lea.vmem [#allocation2], 16
      %313 = vst.msk [vmem:[%s312 + $0x1] sm:$0xff] %vm290, %v282
      %314 = vst.msk [vmem:[%s312 + $0x11] sm:$0xff] %vm290, %v283
      %315 = vst.msk [vmem:[%s312 + $0x21] sm:$0xff] %vm290, %v284
      %316 = vst.msk [vmem:[%s312 + $0x31] sm:$0xff] %vm290, %v285
      %317 = vst.msk [vmem:[%s312 + $0x41] sm:$0xff] %vm290, %v286
      %318 = vst.msk [vmem:[%s312 + $0x51] sm:$0xff] %vm290, %v287
      %319 = vst.msk [vmem:[%s312 + $0x61] sm:$0xff] %vm290, %v288
      %320 = vst.msk [vmem:[%s312 + $0x71] sm:$0xff] %vm290, %v289
      %v321 = vld [vmem:[#allocation2] sm:$0xff]
      %v322 = vld [vmem:[#allocation2 + $0x10] sm:$0xff]
      %v323 = vld [vmem:[#allocation2 + $0x20] sm:$0xff]
      %v324 = vld [vmem:[#allocation2 + $0x30] sm:$0xff]
      %v325 = vld [vmem:[#allocation2 + $0x40] sm:$0xff]
      %v326 = vld [vmem:[#allocation2 + $0x50] sm:$0xff]
      %v327 = vld [vmem:[#allocation2 + $0x60] sm:$0xff]
      %v328 = vld [vmem:[#allocation2 + $0x70] sm:$0xff]
      %v329 = vld [vmem:[%s3] sm:$0xff]
      %331 = vset.pattern.permute.xlu0 0
      %332 = vperm.xlu0 %331, %v321
      %v333 = vpop.permute.xlu0 %332
      %336 = vset.pattern.permute.xlu0 0
      %337 = vperm.xlu0 %336, %v322
      %v338 = vpop.permute.xlu0 %337
      %341 = vset.pattern.permute.xlu0 0
      %342 = vperm.xlu0 %341, %v323
      %v343 = vpop.permute.xlu0 %342
      %346 = vset.pattern.permute.xlu0 0
      %347 = vperm.xlu0 %346, %v324
      %v348 = vpop.permute.xlu0 %347
      %351 = vset.pattern.permute.xlu0 0
      %352 = vperm.xlu0 %351, %v325
      %v353 = vpop.permute.xlu0 %352
      %356 = vset.pattern.permute.xlu0 0
      %357 = vperm.xlu0 %356, %v326
      %v358 = vpop.permute.xlu0 %357
      %361 = vset.pattern.permute.xlu0 0
      %362 = vperm.xlu0 %361, %v327
      %v363 = vpop.permute.xlu0 %362
      %366 = vset.pattern.permute.xlu0 0
      %367 = vperm.xlu0 %366, %v328
      %v368 = vpop.permute.xlu0 %367
      %v370 = vlaneseq
      %v371 = vshrl.u32 %v370, 7
      %v372 = vsub.s32 0, %v371
      %v373 = vrot.slane %v329, %v372
      %v374 = vmul.f32 %v333, %v373
      %v375 = vmul.f32 %v338, %v373
      %v376 = vmul.f32 %v343, %v373
      %v377 = vmul.f32 %v348, %v373
      %v378 = vmul.f32 %v353, %v373
      %v379 = vmul.f32 %v358, %v373
      %v380 = vmul.f32 %v363, %v373
      %v381 = vmul.f32 %v368, %v373
      %v382 = vadd.f32 %v374, 0.0
      %v383 = vadd.f32 %v375, 0.0
      %v384 = vadd.f32 %v376, 0.0
      %v385 = vadd.f32 %v377, 0.0
      %v386 = vadd.f32 %v378, 0.0
      %v387 = vadd.f32 %v379, 0.0
      %v388 = vadd.f32 %v380, 0.0
      %v389 = vadd.f32 %v381, 0.0
      %390 = vset.pattern.permute.xlu0 1
      %391 = vperm.xlu0 %390, %v321
      %v392 = vpop.permute.xlu0 %391
      %394 = vset.pattern.permute.xlu0 1
      %395 = vperm.xlu0 %394, %v322
      %v396 = vpop.permute.xlu0 %395
      %398 = vset.pattern.permute.xlu0 1
      %399 = vperm.xlu0 %398, %v323
      %v400 = vpop.permute.xlu0 %399
      %402 = vset.pattern.permute.xlu0 1
      %403 = vperm.xlu0 %402, %v324
      %v404 = vpop.permute.xlu0 %403
      %406 = vset.pattern.permute.xlu0 1
      %407 = vperm.xlu0 %406, %v325
      %v408 = vpop.permute.xlu0 %407
      %410 = vset.pattern.permute.xlu0 1
      %411 = vperm.xlu0 %410, %v326
      %v412 = vpop.permute.xlu0 %411
      %414 = vset.pattern.permute.xlu0 1
      %415 = vperm.xlu0 %414, %v327
      %v416 = vpop.permute.xlu0 %415
      %418 = vset.pattern.permute.xlu0 1
      %419 = vperm.xlu0 %418, %v328
      %v420 = vpop.permute.xlu0 %419
      %v422 = vlaneseq
      %v423 = vshrl.u32 %v422, 7
      %v424 = vsub.s32 1, %v423
      %v425 = vrot.slane %v329, %v424
      %v426 = vmul.f32 %v392, %v425
      %v427 = vmul.f32 %v396, %v425
      %v428 = vmul.f32 %v400, %v425
      %v429 = vmul.f32 %v404, %v425
      %v430 = vmul.f32 %v408, %v425
      %v431 = vmul.f32 %v412, %v425
      %v432 = vmul.f32 %v416, %v425
      %v433 = vmul.f32 %v420, %v425
      %v434 = vadd.f32 %v382, %v426
      %v435 = vadd.f32 %v383, %v427
      %v436 = vadd.f32 %v384, %v428
      %v437 = vadd.f32 %v385, %v429
      %v438 = vadd.f32 %v386, %v430
      %v439 = vadd.f32 %v387, %v431
      %v440 = vadd.f32 %v388, %v432
      %v441 = vadd.f32 %v389, %v433
      %442 = vset.pattern.permute.xlu0 2
      %443 = vperm.xlu0 %442, %v321
      %v444 = vpop.permute.xlu0 %443
      %446 = vset.pattern.permute.xlu0 2
      %447 = vperm.xlu0 %446, %v322
      %v448 = vpop.permute.xlu0 %447
      %450 = vset.pattern.permute.xlu0 2
      %451 = vperm.xlu0 %450, %v323
      %v452 = vpop.permute.xlu0 %451
      %454 = vset.pattern.permute.xlu0 2
      %455 = vperm.xlu0 %454, %v324
      %v456 = vpop.permute.xlu0 %455
      %458 = vset.pattern.permute.xlu0 2
      %459 = vperm.xlu0 %458, %v325
      %v460 = vpop.permute.xlu0 %459
      %462 = vset.pattern.permute.xlu0 2
      %463 = vperm.xlu0 %462, %v326
      %v464 = vpop.permute.xlu0 %463
      %466 = vset.pattern.permute.xlu0 2
      %467 = vperm.xlu0 %466, %v327
      %v468 = vpop.permute.xlu0 %467
      %470 = vset.pattern.permute.xlu0 2
      %471 = vperm.xlu0 %470, %v328
      %v472 = vpop.permute.xlu0 %471
      %v474 = vlaneseq
      %v475 = vshrl.u32 %v474, 7
      %v476 = vsub.s32 2, %v475
      %v477 = vrot.slane %v329, %v476
      %v478 = vmul.f32 %v444, %v477
      %v479 = vmul.f32 %v448, %v477
      %v480 = vmul.f32 %v452, %v477
      %v481 = vmul.f32 %v456, %v477
      %v482 = vmul.f32 %v460, %v477
      %v483 = vmul.f32 %v464, %v477
      %v484 = vmul.f32 %v468, %v477
      %v485 = vmul.f32 %v472, %v477
      %v486 = vadd.f32 %v434, %v478
      %v487 = vadd.f32 %v435, %v479
      %v488 = vadd.f32 %v436, %v480
      %v489 = vadd.f32 %v437, %v481
      %v490 = vadd.f32 %v438, %v482
      %v491 = vadd.f32 %v439, %v483
      %v492 = vadd.f32 %v440, %v484
      %v493 = vadd.f32 %v441, %v485
      %494 = vset.pattern.permute.xlu0 3
      %495 = vperm.xlu0 %494, %v321
      %v496 = vpop.permute.xlu0 %495
      %498 = vset.pattern.permute.xlu0 3
      %499 = vperm.xlu0 %498, %v322
      %v500 = vpop.permute.xlu0 %499
      %502 = vset.pattern.permute.xlu0 3
      %503 = vperm.xlu0 %502, %v323
      %v504 = vpop.permute.xlu0 %503
      %506 = vset.pattern.permute.xlu0 3
      %507 = vperm.xlu0 %506, %v324
      %v508 = vpop.permute.xlu0 %507
      %510 = vset.pattern.permute.xlu0 3
      %511 = vperm.xlu0 %510, %v325
      %v512 = vpop.permute.xlu0 %511
      %514 = vset.pattern.permute.xlu0 3
      %515 = vperm.xlu0 %514, %v326
      %v516 = vpop.permute.xlu0 %515
      %518 = vset.pattern.permute.xlu0 3
      %519 = vperm.xlu0 %518, %v327
      %v520 = vpop.permute.xlu0 %519
      %522 = vset.pattern.permute.xlu0 3
      %523 = vperm.xlu0 %522, %v328
      %v524 = vpop.permute.xlu0 %523
      %v526 = vlaneseq
      %v527 = vshrl.u32 %v526, 7
      %v528 = vsub.s32 3, %v527
      %v529 = vrot.slane %v329, %v528
      %v530 = vmul.f32 %v496, %v529
      %v531 = vmul.f32 %v500, %v529
      %v532 = vmul.f32 %v504, %v529
      %v533 = vmul.f32 %v508, %v529
      %v534 = vmul.f32 %v512, %v529
      %v535 = vmul.f32 %v516, %v529
      %v536 = vmul.f32 %v520, %v529
      %v537 = vmul.f32 %v524, %v529
      %v538 = vadd.f32 %v486, %v530
      %v539 = vadd.f32 %v487, %v531
      %v540 = vadd.f32 %v488, %v532
      %v541 = vadd.f32 %v489, %v533
      %v542 = vadd.f32 %v490, %v534
      %v543 = vadd.f32 %v491, %v535
      %v544 = vadd.f32 %v492, %v536
      %v545 = vadd.f32 %v493, %v537
      %546 = vset.pattern.permute.xlu0 4
      %547 = vperm.xlu0 %546, %v321
      %v548 = vpop.permute.xlu0 %547
      %550 = vset.pattern.permute.xlu0 4
      %551 = vperm.xlu0 %550, %v322
      %v552 = vpop.permute.xlu0 %551
      %554 = vset.pattern.permute.xlu0 4
      %555 = vperm.xlu0 %554, %v323
      %v556 = vpop.permute.xlu0 %555
      %558 = vset.pattern.permute.xlu0 4
      %559 = vperm.xlu0 %558, %v324
      %v560 = vpop.permute.xlu0 %559
      %562 = vset.pattern.permute.xlu0 4
      %563 = vperm.xlu0 %562, %v325
      %v564 = vpop.permute.xlu0 %563
      %566 = vset.pattern.permute.xlu0 4
      %567 = vperm.xlu0 %566, %v326
      %v568 = vpop.permute.xlu0 %567
      %570 = vset.pattern.permute.xlu0 4
      %571 = vperm.xlu0 %570, %v327
      %v572 = vpop.permute.xlu0 %571
      %574 = vset.pattern.permute.xlu0 4
      %575 = vperm.xlu0 %574, %v328
      %v576 = vpop.permute.xlu0 %575
      %v578 = vlaneseq
      %v579 = vshrl.u32 %v578, 7
      %v580 = vsub.s32 4, %v579
      %v581 = vrot.slane %v329, %v580
      %v582 = vmul.f32 %v548, %v581
      %v583 = vmul.f32 %v552, %v581
      %v584 = vmul.f32 %v556, %v581
      %v585 = vmul.f32 %v560, %v581
      %v586 = vmul.f32 %v564, %v581
      %v587 = vmul.f32 %v568, %v581
      %v588 = vmul.f32 %v572, %v581
      %v589 = vmul.f32 %v576, %v581
      %v590 = vadd.f32 %v538, %v582
      %v591 = vadd.f32 %v539, %v583
      %v592 = vadd.f32 %v540, %v584
      %v593 = vadd.f32 %v541, %v585
      %v594 = vadd.f32 %v542, %v586
      %v595 = vadd.f32 %v543, %v587
      %v596 = vadd.f32 %v544, %v588
      %v597 = vadd.f32 %v545, %v589
      %598 = vset.pattern.permute.xlu0 5
      %599 = vperm.xlu0 %598, %v321
      %v600 = vpop.permute.xlu0 %599
      %602 = vset.pattern.permute.xlu0 5
      %603 = vperm.xlu0 %602, %v322
      %v604 = vpop.permute.xlu0 %603
      %606 = vset.pattern.permute.xlu0 5
      %607 = vperm.xlu0 %606, %v323
      %v608 = vpop.permute.xlu0 %607
      %610 = vset.pattern.permute.xlu0 5
      %611 = vperm.xlu0 %610, %v324
      %v612 = vpop.permute.xlu0 %611
      %614 = vset.pattern.permute.xlu0 5
      %615 = vperm.xlu0 %614, %v325
      %v616 = vpop.permute.xlu0 %615
      %618 = vset.pattern.permute.xlu0 5
      %619 = vperm.xlu0 %618, %v326
      %v620 = vpop.permute.xlu0 %619
      %622 = vset.pattern.permute.xlu0 5
      %623 = vperm.xlu0 %622, %v327
      %v624 = vpop.permute.xlu0 %623
      %626 = vset.pattern.permute.xlu0 5
      %627 = vperm.xlu0 %626, %v328
      %v628 = vpop.permute.xlu0 %627
      %v630 = vlaneseq
      %v631 = vshrl.u32 %v630, 7
      %v632 = vsub.s32 5, %v631
      %v633 = vrot.slane %v329, %v632
      %v634 = vmul.f32 %v600, %v633
      %v635 = vmul.f32 %v604, %v633
      %v636 = vmul.f32 %v608, %v633
      %v637 = vmul.f32 %v612, %v633
      %v638 = vmul.f32 %v616, %v633
      %v639 = vmul.f32 %v620, %v633
      %v640 = vmul.f32 %v624, %v633
      %v641 = vmul.f32 %v628, %v633
      %v642 = vadd.f32 %v590, %v634
      %v643 = vadd.f32 %v591, %v635
      %v644 = vadd.f32 %v592, %v636
      %v645 = vadd.f32 %v593, %v637
      %v646 = vadd.f32 %v594, %v638
      %v647 = vadd.f32 %v595, %v639
      %v648 = vadd.f32 %v596, %v640
      %v649 = vadd.f32 %v597, %v641
      %650 = vset.pattern.permute.xlu0 6
      %651 = vperm.xlu0 %650, %v321
      %v652 = vpop.permute.xlu0 %651
      %654 = vset.pattern.permute.xlu0 6
      %655 = vperm.xlu0 %654, %v322
      %v656 = vpop.permute.xlu0 %655
      %658 = vset.pattern.permute.xlu0 6
      %659 = vperm.xlu0 %658, %v323
      %v660 = vpop.permute.xlu0 %659
      %662 = vset.pattern.permute.xlu0 6
      %663 = vperm.xlu0 %662, %v324
      %v664 = vpop.permute.xlu0 %663
      %666 = vset.pattern.permute.xlu0 6
      %667 = vperm.xlu0 %666, %v325
      %v668 = vpop.permute.xlu0 %667
      %670 = vset.pattern.permute.xlu0 6
      %671 = vperm.xlu0 %670, %v326
      %v672 = vpop.permute.xlu0 %671
      %674 = vset.pattern.permute.xlu0 6
      %675 = vperm.xlu0 %674, %v327
      %v676 = vpop.permute.xlu0 %675
      %678 = vset.pattern.permute.xlu0 6
      %679 = vperm.xlu0 %678, %v328
      %v680 = vpop.permute.xlu0 %679
      %v682 = vlaneseq
      %v683 = vshrl.u32 %v682, 7
      %v684 = vsub.s32 6, %v683
      %v685 = vrot.slane %v329, %v684
      %v686 = vmul.f32 %v652, %v685
      %v687 = vmul.f32 %v656, %v685
      %v688 = vmul.f32 %v660, %v685
      %v689 = vmul.f32 %v664, %v685
      %v690 = vmul.f32 %v668, %v685
      %v691 = vmul.f32 %v672, %v685
      %v692 = vmul.f32 %v676, %v685
      %v693 = vmul.f32 %v680, %v685
      %v694 = vadd.f32 %v642, %v686
      %v695 = vadd.f32 %v643, %v687
      %v696 = vadd.f32 %v644, %v688
      %v697 = vadd.f32 %v645, %v689
      %v698 = vadd.f32 %v646, %v690
      %v699 = vadd.f32 %v647, %v691
      %v700 = vadd.f32 %v648, %v692
      %v701 = vadd.f32 %v649, %v693
      %702 = vset.pattern.permute.xlu0 7
      %703 = vperm.xlu0 %702, %v321
      %v704 = vpop.permute.xlu0 %703
      %706 = vset.pattern.permute.xlu0 7
      %707 = vperm.xlu0 %706, %v322
      %v708 = vpop.permute.xlu0 %707
      %710 = vset.pattern.permute.xlu0 7
      %711 = vperm.xlu0 %710, %v323
      %v712 = vpop.permute.xlu0 %711
      %714 = vset.pattern.permute.xlu0 7
      %715 = vperm.xlu0 %714, %v324
      %v716 = vpop.permute.xlu0 %715
      %718 = vset.pattern.permute.xlu0 7
      %719 = vperm.xlu0 %718, %v325
      %v720 = vpop.permute.xlu0 %719
      %722 = vset.pattern.permute.xlu0 7
      %723 = vperm.xlu0 %722, %v326
      %v724 = vpop.permute.xlu0 %723
      %726 = vset.pattern.permute.xlu0 7
      %727 = vperm.xlu0 %726, %v327
      %v728 = vpop.permute.xlu0 %727
      %730 = vset.pattern.permute.xlu0 7
      %731 = vperm.xlu0 %730, %v328
      %v732 = vpop.permute.xlu0 %731
      %v734 = vlaneseq
      %v735 = vshrl.u32 %v734, 7
      %v736 = vsub.s32 7, %v735
      %v737 = vrot.slane %v329, %v736
      %v738 = vmul.f32 %v704, %v737
      %v739 = vmul.f32 %v708, %v737
      %v740 = vmul.f32 %v712, %v737
      %v741 = vmul.f32 %v716, %v737
      %v742 = vmul.f32 %v720, %v737
      %v743 = vmul.f32 %v724, %v737
      %v744 = vmul.f32 %v728, %v737
      %v745 = vmul.f32 %v732, %v737
      %v746 = vadd.f32 %v694, %v738
      %v747 = vadd.f32 %v695, %v739
      %v748 = vadd.f32 %v696, %v740
      %v749 = vadd.f32 %v697, %v741
      %v750 = vadd.f32 %v698, %v742
      %v751 = vadd.f32 %v699, %v743
      %v752 = vadd.f32 %v700, %v744
      %v753 = vadd.f32 %v701, %v745
      %v754 = vld [vmem:[#allocation2 + $0x1] sm:$0xff]
      %v755 = vld [vmem:[#allocation2 + $0x11] sm:$0xff]
      %v756 = vld [vmem:[#allocation2 + $0x21] sm:$0xff]
      %v757 = vld [vmem:[#allocation2 + $0x31] sm:$0xff]
      %v758 = vld [vmem:[#allocation2 + $0x41] sm:$0xff]
      %v759 = vld [vmem:[#allocation2 + $0x51] sm:$0xff]
      %v760 = vld [vmem:[#allocation2 + $0x61] sm:$0xff]
      %v761 = vld [vmem:[#allocation2 + $0x71] sm:$0xff]
      %s762 = scalar_lea.vmem %s3, 8
      %v763 = vld [vmem:[%s762] sm:$0xff]
      %765 = vset.pattern.permute.xlu0 0
      %766 = vperm.xlu0 %765, %v754
      %v767 = vpop.permute.xlu0 %766
      %770 = vset.pattern.permute.xlu0 0
      %771 = vperm.xlu0 %770, %v755
      %v772 = vpop.permute.xlu0 %771
      %775 = vset.pattern.permute.xlu0 0
      %776 = vperm.xlu0 %775, %v756
      %v777 = vpop.permute.xlu0 %776
      %780 = vset.pattern.permute.xlu0 0
      %781 = vperm.xlu0 %780, %v757
      %v782 = vpop.permute.xlu0 %781
      %785 = vset.pattern.permute.xlu0 0
      %786 = vperm.xlu0 %785, %v758
      %v787 = vpop.permute.xlu0 %786
      %790 = vset.pattern.permute.xlu0 0
      %791 = vperm.xlu0 %790, %v759
      %v792 = vpop.permute.xlu0 %791
      %795 = vset.pattern.permute.xlu0 0
      %796 = vperm.xlu0 %795, %v760
      %v797 = vpop.permute.xlu0 %796
      %800 = vset.pattern.permute.xlu0 0
      %801 = vperm.xlu0 %800, %v761
      %v802 = vpop.permute.xlu0 %801
      %v804 = vlaneseq
      %v805 = vshrl.u32 %v804, 7
      %v806 = vsub.s32 0, %v805
      %v807 = vrot.slane %v763, %v806
      %v808 = vmul.f32 %v767, %v807
      %v809 = vmul.f32 %v772, %v807
      %v810 = vmul.f32 %v777, %v807
      %v811 = vmul.f32 %v782, %v807
      %v812 = vmul.f32 %v787, %v807
      %v813 = vmul.f32 %v792, %v807
      %v814 = vmul.f32 %v797, %v807
      %v815 = vmul.f32 %v802, %v807
      %v816 = vadd.f32 %v746, %v808
      %v817 = vadd.f32 %v747, %v809
      %v818 = vadd.f32 %v748, %v810
      %v819 = vadd.f32 %v749, %v811
      %v820 = vadd.f32 %v750, %v812
      %v821 = vadd.f32 %v751, %v813
      %v822 = vadd.f32 %v752, %v814
      %v823 = vadd.f32 %v753, %v815
      %824 = vset.pattern.permute.xlu0 1
      %825 = vperm.xlu0 %824, %v754
      %v826 = vpop.permute.xlu0 %825
      %828 = vset.pattern.permute.xlu0 1
      %829 = vperm.xlu0 %828, %v755
      %v830 = vpop.permute.xlu0 %829
      %832 = vset.pattern.permute.xlu0 1
      %833 = vperm.xlu0 %832, %v756
      %v834 = vpop.permute.xlu0 %833
      %836 = vset.pattern.permute.xlu0 1
      %837 = vperm.xlu0 %836, %v757
      %v838 = vpop.permute.xlu0 %837
      %840 = vset.pattern.permute.xlu0 1
      %841 = vperm.xlu0 %840, %v758
      %v842 = vpop.permute.xlu0 %841
      %844 = vset.pattern.permute.xlu0 1
      %845 = vperm.xlu0 %844, %v759
      %v846 = vpop.permute.xlu0 %845
      %848 = vset.pattern.permute.xlu0 1
      %849 = vperm.xlu0 %848, %v760
      %v850 = vpop.permute.xlu0 %849
      %852 = vset.pattern.permute.xlu0 1
      %853 = vperm.xlu0 %852, %v761
      %v854 = vpop.permute.xlu0 %853
      %v856 = vlaneseq
      %v857 = vshrl.u32 %v856, 7
      %v858 = vsub.s32 1, %v857
      %v859 = vrot.slane %v763, %v858
      %v860 = vmul.f32 %v826, %v859
      %v861 = vmul.f32 %v830, %v859
      %v862 = vmul.f32 %v834, %v859
      %v863 = vmul.f32 %v838, %v859
      %v864 = vmul.f32 %v842, %v859
      %v865 = vmul.f32 %v846, %v859
      %v866 = vmul.f32 %v850, %v859
      %v867 = vmul.f32 %v854, %v859
      %v868 = vadd.f32 %v816, %v860
      %v869 = vadd.f32 %v817, %v861
      %v870 = vadd.f32 %v818, %v862
      %v871 = vadd.f32 %v819, %v863
      %v872 = vadd.f32 %v820, %v864
      %v873 = vadd.f32 %v821, %v865
      %v874 = vadd.f32 %v822, %v866
      %v875 = vadd.f32 %v823, %v867
      %876 = vset.pattern.permute.xlu0 2
      %877 = vperm.xlu0 %876, %v754
      %v878 = vpop.permute.xlu0 %877
      %880 = vset.pattern.permute.xlu0 2
      %881 = vperm.xlu0 %880, %v755
      %v882 = vpop.permute.xlu0 %881
      %884 = vset.pattern.permute.xlu0 2
      %885 = vperm.xlu0 %884, %v756
      %v886 = vpop.permute.xlu0 %885
      %888 = vset.pattern.permute.xlu0 2
      %889 = vperm.xlu0 %888, %v757
      %v890 = vpop.permute.xlu0 %889
      %892 = vset.pattern.permute.xlu0 2
      %893 = vperm.xlu0 %892, %v758
      %v894 = vpop.permute.xlu0 %893
      %896 = vset.pattern.permute.xlu0 2
      %897 = vperm.xlu0 %896, %v759
      %v898 = vpop.permute.xlu0 %897
      %900 = vset.pattern.permute.xlu0 2
      %901 = vperm.xlu0 %900, %v760
      %v902 = vpop.permute.xlu0 %901
      %904 = vset.pattern.permute.xlu0 2
      %905 = vperm.xlu0 %904, %v761
      %v906 = vpop.permute.xlu0 %905
      %v908 = vlaneseq
      %v909 = vshrl.u32 %v908, 7
      %v910 = vsub.s32 2, %v909
      %v911 = vrot.slane %v763, %v910
      %v912 = vmul.f32 %v878, %v911
      %v913 = vmul.f32 %v882, %v911
      %v914 = vmul.f32 %v886, %v911
      %v915 = vmul.f32 %v890, %v911
      %v916 = vmul.f32 %v894, %v911
      %v917 = vmul.f32 %v898, %v911
      %v918 = vmul.f32 %v902, %v911
      %v919 = vmul.f32 %v906, %v911
      %v920 = vadd.f32 %v868, %v912
      %v921 = vadd.f32 %v869, %v913
      %v922 = vadd.f32 %v870, %v914
      %v923 = vadd.f32 %v871, %v915
      %v924 = vadd.f32 %v872, %v916
      %v925 = vadd.f32 %v873, %v917
      %v926 = vadd.f32 %v874, %v918
      %v927 = vadd.f32 %v875, %v919
      %928 = vset.pattern.permute.xlu0 3
      %929 = vperm.xlu0 %928, %v754
      %v930 = vpop.permute.xlu0 %929
      %932 = vset.pattern.permute.xlu0 3
      %933 = vperm.xlu0 %932, %v755
      %v934 = vpop.permute.xlu0 %933
      %936 = vset.pattern.permute.xlu0 3
      %937 = vperm.xlu0 %936, %v756
      %v938 = vpop.permute.xlu0 %937
      %940 = vset.pattern.permute.xlu0 3
      %941 = vperm.xlu0 %940, %v757
      %v942 = vpop.permute.xlu0 %941
      %944 = vset.pattern.permute.xlu0 3
      %945 = vperm.xlu0 %944, %v758
      %v946 = vpop.permute.xlu0 %945
      %948 = vset.pattern.permute.xlu0 3
      %949 = vperm.xlu0 %948, %v759
      %v950 = vpop.permute.xlu0 %949
      %952 = vset.pattern.permute.xlu0 3
      %953 = vperm.xlu0 %952, %v760
      %v954 = vpop.permute.xlu0 %953
      %956 = vset.pattern.permute.xlu0 3
      %957 = vperm.xlu0 %956, %v761
      %v958 = vpop.permute.xlu0 %957
      %v960 = vlaneseq
      %v961 = vshrl.u32 %v960, 7
      %v962 = vsub.s32 3, %v961
      %v963 = vrot.slane %v763, %v962
      %v964 = vmul.f32 %v930, %v963
      %v965 = vmul.f32 %v934, %v963
      %v966 = vmul.f32 %v938, %v963
      %v967 = vmul.f32 %v942, %v963
      %v968 = vmul.f32 %v946, %v963
      %v969 = vmul.f32 %v950, %v963
      %v970 = vmul.f32 %v954, %v963
      %v971 = vmul.f32 %v958, %v963
      %v972 = vadd.f32 %v920, %v964
      %v973 = vadd.f32 %v921, %v965
      %v974 = vadd.f32 %v922, %v966
      %v975 = vadd.f32 %v923, %v967
      %v976 = vadd.f32 %v924, %v968
      %v977 = vadd.f32 %v925, %v969
      %v978 = vadd.f32 %v926, %v970
      %v979 = vadd.f32 %v927, %v971
      %980 = vset.pattern.permute.xlu0 4
      %981 = vperm.xlu0 %980, %v754
      %v982 = vpop.permute.xlu0 %981
      %984 = vset.pattern.permute.xlu0 4
      %985 = vperm.xlu0 %984, %v755
      %v986 = vpop.permute.xlu0 %985
      %988 = vset.pattern.permute.xlu0 4
      %989 = vperm.xlu0 %988, %v756
      %v990 = vpop.permute.xlu0 %989
      %992 = vset.pattern.permute.xlu0 4
      %993 = vperm.xlu0 %992, %v757
      %v994 = vpop.permute.xlu0 %993
      %996 = vset.pattern.permute.xlu0 4
      %997 = vperm.xlu0 %996, %v758
      %v998 = vpop.permute.xlu0 %997
      %1000 = vset.pattern.permute.xlu0 4
      %1001 = vperm.xlu0 %1000, %v759
      %v1002 = vpop.permute.xlu0 %1001
      %1004 = vset.pattern.permute.xlu0 4
      %1005 = vperm.xlu0 %1004, %v760
      %v1006 = vpop.permute.xlu0 %1005
      %1008 = vset.pattern.permute.xlu0 4
      %1009 = vperm.xlu0 %1008, %v761
      %v1010 = vpop.permute.xlu0 %1009
      %v1012 = vlaneseq
      %v1013 = vshrl.u32 %v1012, 7
      %v1014 = vsub.s32 4, %v1013
      %v1015 = vrot.slane %v763, %v1014
      %v1016 = vmul.f32 %v982, %v1015
      %v1017 = vmul.f32 %v986, %v1015
      %v1018 = vmul.f32 %v990, %v1015
      %v1019 = vmul.f32 %v994, %v1015
      %v1020 = vmul.f32 %v998, %v1015
      %v1021 = vmul.f32 %v1002, %v1015
      %v1022 = vmul.f32 %v1006, %v1015
      %v1023 = vmul.f32 %v1010, %v1015
      %v1024 = vadd.f32 %v972, %v1016
      %v1025 = vadd.f32 %v973, %v1017
      %v1026 = vadd.f32 %v974, %v1018
      %v1027 = vadd.f32 %v975, %v1019
      %v1028 = vadd.f32 %v976, %v1020
      %v1029 = vadd.f32 %v977, %v1021
      %v1030 = vadd.f32 %v978, %v1022
      %v1031 = vadd.f32 %v979, %v1023
      %1032 = vset.pattern.permute.xlu0 5
      %1033 = vperm.xlu0 %1032, %v754
      %v1034 = vpop.permute.xlu0 %1033
      %1036 = vset.pattern.permute.xlu0 5
      %1037 = vperm.xlu0 %1036, %v755
      %v1038 = vpop.permute.xlu0 %1037
      %1040 = vset.pattern.permute.xlu0 5
      %1041 = vperm.xlu0 %1040, %v756
      %v1042 = vpop.permute.xlu0 %1041
      %1044 = vset.pattern.permute.xlu0 5
      %1045 = vperm.xlu0 %1044, %v757
      %v1046 = vpop.permute.xlu0 %1045
      %1048 = vset.pattern.permute.xlu0 5
      %1049 = vperm.xlu0 %1048, %v758
      %v1050 = vpop.permute.xlu0 %1049
      %1052 = vset.pattern.permute.xlu0 5
      %1053 = vperm.xlu0 %1052, %v759
      %v1054 = vpop.permute.xlu0 %1053
      %1056 = vset.pattern.permute.xlu0 5
      %1057 = vperm.xlu0 %1056, %v760
      %v1058 = vpop.permute.xlu0 %1057
      %1060 = vset.pattern.permute.xlu0 5
      %1061 = vperm.xlu0 %1060, %v761
      %v1062 = vpop.permute.xlu0 %1061
      %v1064 = vlaneseq
      %v1065 = vshrl.u32 %v1064, 7
      %v1066 = vsub.s32 5, %v1065
      %v1067 = vrot.slane %v763, %v1066
      %v1068 = vmul.f32 %v1034, %v1067
      %v1069 = vmul.f32 %v1038, %v1067
      %v1070 = vmul.f32 %v1042, %v1067
      %v1071 = vmul.f32 %v1046, %v1067
      %v1072 = vmul.f32 %v1050, %v1067
      %v1073 = vmul.f32 %v1054, %v1067
      %v1074 = vmul.f32 %v1058, %v1067
      %v1075 = vmul.f32 %v1062, %v1067
      %v1076 = vadd.f32 %v1024, %v1068
      %v1077 = vadd.f32 %v1025, %v1069
      %v1078 = vadd.f32 %v1026, %v1070
      %v1079 = vadd.f32 %v1027, %v1071
      %v1080 = vadd.f32 %v1028, %v1072
      %v1081 = vadd.f32 %v1029, %v1073
      %v1082 = vadd.f32 %v1030, %v1074
      %v1083 = vadd.f32 %v1031, %v1075
      %1084 = vset.pattern.permute.xlu0 6
      %1085 = vperm.xlu0 %1084, %v754
      %v1086 = vpop.permute.xlu0 %1085
      %1088 = vset.pattern.permute.xlu0 6
      %1089 = vperm.xlu0 %1088, %v755
      %v1090 = vpop.permute.xlu0 %1089
      %1092 = vset.pattern.permute.xlu0 6
      %1093 = vperm.xlu0 %1092, %v756
      %v1094 = vpop.permute.xlu0 %1093
      %1096 = vset.pattern.permute.xlu0 6
      %1097 = vperm.xlu0 %1096, %v757
      %v1098 = vpop.permute.xlu0 %1097
      %1100 = vset.pattern.permute.xlu0 6
      %1101 = vperm.xlu0 %1100, %v758
      %v1102 = vpop.permute.xlu0 %1101
      %1104 = vset.pattern.permute.xlu0 6
      %1105 = vperm.xlu0 %1104, %v759
      %v1106 = vpop.permute.xlu0 %1105
      %1108 = vset.pattern.permute.xlu0 6
      %1109 = vperm.xlu0 %1108, %v760
      %v1110 = vpop.permute.xlu0 %1109
      %1112 = vset.pattern.permute.xlu0 6
      %1113 = vperm.xlu0 %1112, %v761
      %v1114 = vpop.permute.xlu0 %1113
      %v1116 = vlaneseq
      %v1117 = vshrl.u32 %v1116, 7
      %v1118 = vsub.s32 6, %v1117
      %v1119 = vrot.slane %v763, %v1118
      %v1120 = vmul.f32 %v1086, %v1119
      %v1121 = vmul.f32 %v1090, %v1119
      %v1122 = vmul.f32 %v1094, %v1119
      %v1123 = vmul.f32 %v1098, %v1119
      %v1124 = vmul.f32 %v1102, %v1119
      %v1125 = vmul.f32 %v1106, %v1119
      %v1126 = vmul.f32 %v1110, %v1119
      %v1127 = vmul.f32 %v1114, %v1119
      %v1128 = vadd.f32 %v1076, %v1120
      %v1129 = vadd.f32 %v1077, %v1121
      %v1130 = vadd.f32 %v1078, %v1122
      %v1131 = vadd.f32 %v1079, %v1123
      %v1132 = vadd.f32 %v1080, %v1124
      %v1133 = vadd.f32 %v1081, %v1125
      %v1134 = vadd.f32 %v1082, %v1126
      %v1135 = vadd.f32 %v1083, %v1127
      %1136 = vset.pattern.permute.xlu0 7
      %1137 = vperm.xlu0 %1136, %v754
      %v1138 = vpop.permute.xlu0 %1137
      %1140 = vset.pattern.permute.xlu0 7
      %1141 = vperm.xlu0 %1140, %v755
      %v1142 = vpop.permute.xlu0 %1141
      %1144 = vset.pattern.permute.xlu0 7
      %1145 = vperm.xlu0 %1144, %v756
      %v1146 = vpop.permute.xlu0 %1145
      %1148 = vset.pattern.permute.xlu0 7
      %1149 = vperm.xlu0 %1148, %v757
      %v1150 = vpop.permute.xlu0 %1149
      %1152 = vset.pattern.permute.xlu0 7
      %1153 = vperm.xlu0 %1152, %v758
      %v1154 = vpop.permute.xlu0 %1153
      %1156 = vset.pattern.permute.xlu0 7
      %1157 = vperm.xlu0 %1156, %v759
      %v1158 = vpop.permute.xlu0 %1157
      %1160 = vset.pattern.permute.xlu0 7
      %1161 = vperm.xlu0 %1160, %v760
      %v1162 = vpop.permute.xlu0 %1161
      %1164 = vset.pattern.permute.xlu0 7
      %1165 = vperm.xlu0 %1164, %v761
      %v1166 = vpop.permute.xlu0 %1165
      %v1168 = vlaneseq
      %v1169 = vshrl.u32 %v1168, 7
      %v1170 = vsub.s32 7, %v1169
      %v1171 = vrot.slane %v763, %v1170
      %v1172 = vmul.f32 %v1138, %v1171
      %v1173 = vmul.f32 %v1142, %v1171
      %v1174 = vmul.f32 %v1146, %v1171
      %v1175 = vmul.f32 %v1150, %v1171
      %v1176 = vmul.f32 %v1154, %v1171
      %v1177 = vmul.f32 %v1158, %v1171
      %v1178 = vmul.f32 %v1162, %v1171
      %v1179 = vmul.f32 %v1166, %v1171
      %v1180 = vadd.f32 %v1128, %v1172
      %v1181 = vadd.f32 %v1129, %v1173
      %v1182 = vadd.f32 %v1130, %v1174
      %v1183 = vadd.f32 %v1131, %v1175
      %v1184 = vadd.f32 %v1132, %v1176
      %v1185 = vadd.f32 %v1133, %v1177
      %v1186 = vadd.f32 %v1134, %v1178
      %v1187 = vadd.f32 %v1135, %v1179
      %v1188 = vld [vmem:[#allocation2 + $0x2] sm:$0xff]
      %v1189 = vld [vmem:[#allocation2 + $0x12] sm:$0xff]
      %v1190 = vld [vmem:[#allocation2 + $0x22] sm:$0xff]
      %v1191 = vld [vmem:[#allocation2 + $0x32] sm:$0xff]
      %v1192 = vld [vmem:[#allocation2 + $0x42] sm:$0xff]
      %v1193 = vld [vmem:[#allocation2 + $0x52] sm:$0xff]
      %v1194 = vld [vmem:[#allocation2 + $0x62] sm:$0xff]
      %v1195 = vld [vmem:[#allocation2 + $0x72] sm:$0xff]
      %s1196 = scalar_lea.vmem %s3, 16
      %v1197 = vld [vmem:[%s1196] sm:$0xff]
      %1199 = vset.pattern.permute.xlu0 0
      %1200 = vperm.xlu0 %1199, %v1188
      %v1201 = vpop.permute.xlu0 %1200
      %1204 = vset.pattern.permute.xlu0 0
      %1205 = vperm.xlu0 %1204, %v1189
      %v1206 = vpop.permute.xlu0 %1205
      %1209 = vset.pattern.permute.xlu0 0
      %1210 = vperm.xlu0 %1209, %v1190
      %v1211 = vpop.permute.xlu0 %1210
      %1214 = vset.pattern.permute.xlu0 0
      %1215 = vperm.xlu0 %1214, %v1191
      %v1216 = vpop.permute.xlu0 %1215
      %1219 = vset.pattern.permute.xlu0 0
      %1220 = vperm.xlu0 %1219, %v1192
      %v1221 = vpop.permute.xlu0 %1220
      %1224 = vset.pattern.permute.xlu0 0
      %1225 = vperm.xlu0 %1224, %v1193
      %v1226 = vpop.permute.xlu0 %1225
      %1229 = vset.pattern.permute.xlu0 0
      %1230 = vperm.xlu0 %1229, %v1194
      %v1231 = vpop.permute.xlu0 %1230
      %1234 = vset.pattern.permute.xlu0 0
      %1235 = vperm.xlu0 %1234, %v1195
      %v1236 = vpop.permute.xlu0 %1235
      %v1238 = vlaneseq
      %v1239 = vshrl.u32 %v1238, 7
      %v1240 = vsub.s32 0, %v1239
      %v1241 = vrot.slane %v1197, %v1240
      %v1242 = vmul.f32 %v1201, %v1241
      %v1243 = vmul.f32 %v1206, %v1241
      %v1244 = vmul.f32 %v1211, %v1241
      %v1245 = vmul.f32 %v1216, %v1241
      %v1246 = vmul.f32 %v1221, %v1241
      %v1247 = vmul.f32 %v1226, %v1241
      %v1248 = vmul.f32 %v1231, %v1241
      %v1249 = vmul.f32 %v1236, %v1241
      %v1250 = vadd.f32 %v1180, %v1242
      %v1251 = vadd.f32 %v1181, %v1243
      %v1252 = vadd.f32 %v1182, %v1244
      %v1253 = vadd.f32 %v1183, %v1245
      %v1254 = vadd.f32 %v1184, %v1246
      %v1255 = vadd.f32 %v1185, %v1247
      %v1256 = vadd.f32 %v1186, %v1248
      %v1257 = vadd.f32 %v1187, %v1249
      %1258 = vset.pattern.permute.xlu0 1
      %1259 = vperm.xlu0 %1258, %v1188
      %v1260 = vpop.permute.xlu0 %1259
      %1262 = vset.pattern.permute.xlu0 1
      %1263 = vperm.xlu0 %1262, %v1189
      %v1264 = vpop.permute.xlu0 %1263
      %1266 = vset.pattern.permute.xlu0 1
      %1267 = vperm.xlu0 %1266, %v1190
      %v1268 = vpop.permute.xlu0 %1267
      %1270 = vset.pattern.permute.xlu0 1
      %1271 = vperm.xlu0 %1270, %v1191
      %v1272 = vpop.permute.xlu0 %1271
      %1274 = vset.pattern.permute.xlu0 1
      %1275 = vperm.xlu0 %1274, %v1192
      %v1276 = vpop.permute.xlu0 %1275
      %1278 = vset.pattern.permute.xlu0 1
      %1279 = vperm.xlu0 %1278, %v1193
      %v1280 = vpop.permute.xlu0 %1279
      %1282 = vset.pattern.permute.xlu0 1
      %1283 = vperm.xlu0 %1282, %v1194
      %v1284 = vpop.permute.xlu0 %1283
      %1286 = vset.pattern.permute.xlu0 1
      %1287 = vperm.xlu0 %1286, %v1195
      %v1288 = vpop.permute.xlu0 %1287
      %v1290 = vlaneseq
      %v1291 = vshrl.u32 %v1290, 7
      %v1292 = vsub.s32 1, %v1291
      %v1293 = vrot.slane %v1197, %v1292
      %v1294 = vmul.f32 %v1260, %v1293
      %v1295 = vmul.f32 %v1264, %v1293
      %v1296 = vmul.f32 %v1268, %v1293
      %v1297 = vmul.f32 %v1272, %v1293
      %v1298 = vmul.f32 %v1276, %v1293
      %v1299 = vmul.f32 %v1280, %v1293
      %v1300 = vmul.f32 %v1284, %v1293
      %v1301 = vmul.f32 %v1288, %v1293
      %v1302 = vadd.f32 %v1250, %v1294
      %v1303 = vadd.f32 %v1251, %v1295
      %v1304 = vadd.f32 %v1252, %v1296
      %v1305 = vadd.f32 %v1253, %v1297
      %v1306 = vadd.f32 %v1254, %v1298
      %v1307 = vadd.f32 %v1255, %v1299
      %v1308 = vadd.f32 %v1256, %v1300
      %v1309 = vadd.f32 %v1257, %v1301
      %1310 = vset.pattern.permute.xlu0 2
      %1311 = vperm.xlu0 %1310, %v1188
      %v1312 = vpop.permute.xlu0 %1311
      %1314 = vset.pattern.permute.xlu0 2
      %1315 = vperm.xlu0 %1314, %v1189
      %v1316 = vpop.permute.xlu0 %1315
      %1318 = vset.pattern.permute.xlu0 2
      %1319 = vperm.xlu0 %1318, %v1190
      %v1320 = vpop.permute.xlu0 %1319
      %1322 = vset.pattern.permute.xlu0 2
      %1323 = vperm.xlu0 %1322, %v1191
      %v1324 = vpop.permute.xlu0 %1323
      %1326 = vset.pattern.permute.xlu0 2
      %1327 = vperm.xlu0 %1326, %v1192
      %v1328 = vpop.permute.xlu0 %1327
      %1330 = vset.pattern.permute.xlu0 2
      %1331 = vperm.xlu0 %1330, %v1193
      %v1332 = vpop.permute.xlu0 %1331
      %1334 = vset.pattern.permute.xlu0 2
      %1335 = vperm.xlu0 %1334, %v1194
      %v1336 = vpop.permute.xlu0 %1335
      %1338 = vset.pattern.permute.xlu0 2
      %1339 = vperm.xlu0 %1338, %v1195
      %v1340 = vpop.permute.xlu0 %1339
      %v1342 = vlaneseq
      %v1343 = vshrl.u32 %v1342, 7
      %v1344 = vsub.s32 2, %v1343
      %v1345 = vrot.slane %v1197, %v1344
      %v1346 = vmul.f32 %v1312, %v1345
      %v1347 = vmul.f32 %v1316, %v1345
      %v1348 = vmul.f32 %v1320, %v1345
      %v1349 = vmul.f32 %v1324, %v1345
      %v1350 = vmul.f32 %v1328, %v1345
      %v1351 = vmul.f32 %v1332, %v1345
      %v1352 = vmul.f32 %v1336, %v1345
      %v1353 = vmul.f32 %v1340, %v1345
      %v1354 = vadd.f32 %v1302, %v1346
      %v1355 = vadd.f32 %v1303, %v1347
      %v1356 = vadd.f32 %v1304, %v1348
      %v1357 = vadd.f32 %v1305, %v1349
      %v1358 = vadd.f32 %v1306, %v1350
      %v1359 = vadd.f32 %v1307, %v1351
      %v1360 = vadd.f32 %v1308, %v1352
      %v1361 = vadd.f32 %v1309, %v1353
      %1362 = vset.pattern.permute.xlu0 3
      %1363 = vperm.xlu0 %1362, %v1188
      %v1364 = vpop.permute.xlu0 %1363
      %1366 = vset.pattern.permute.xlu0 3
      %1367 = vperm.xlu0 %1366, %v1189
      %v1368 = vpop.permute.xlu0 %1367
      %1370 = vset.pattern.permute.xlu0 3
      %1371 = vperm.xlu0 %1370, %v1190
      %v1372 = vpop.permute.xlu0 %1371
      %1374 = vset.pattern.permute.xlu0 3
      %1375 = vperm.xlu0 %1374, %v1191
      %v1376 = vpop.permute.xlu0 %1375
      %1378 = vset.pattern.permute.xlu0 3
      %1379 = vperm.xlu0 %1378, %v1192
      %v1380 = vpop.permute.xlu0 %1379
      %1382 = vset.pattern.permute.xlu0 3
      %1383 = vperm.xlu0 %1382, %v1193
      %v1384 = vpop.permute.xlu0 %1383
      %1386 = vset.pattern.permute.xlu0 3
      %1387 = vperm.xlu0 %1386, %v1194
      %v1388 = vpop.permute.xlu0 %1387
      %1390 = vset.pattern.permute.xlu0 3
      %1391 = vperm.xlu0 %1390, %v1195
      %v1392 = vpop.permute.xlu0 %1391
      %v1394 = vlaneseq
      %v1395 = vshrl.u32 %v1394, 7
      %v1396 = vsub.s32 3, %v1395
      %v1397 = vrot.slane %v1197, %v1396
      %v1398 = vmul.f32 %v1364, %v1397
      %v1399 = vmul.f32 %v1368, %v1397
      %v1400 = vmul.f32 %v1372, %v1397
      %v1401 = vmul.f32 %v1376, %v1397
      %v1402 = vmul.f32 %v1380, %v1397
      %v1403 = vmul.f32 %v1384, %v1397
      %v1404 = vmul.f32 %v1388, %v1397
      %v1405 = vmul.f32 %v1392, %v1397
      %v1406 = vadd.f32 %v1354, %v1398
      %v1407 = vadd.f32 %v1355, %v1399
      %v1408 = vadd.f32 %v1356, %v1400
      %v1409 = vadd.f32 %v1357, %v1401
      %v1410 = vadd.f32 %v1358, %v1402
      %v1411 = vadd.f32 %v1359, %v1403
      %v1412 = vadd.f32 %v1360, %v1404
      %v1413 = vadd.f32 %v1361, %v1405
      %1414 = vset.pattern.permute.xlu0 4
      %1415 = vperm.xlu0 %1414, %v1188
      %v1416 = vpop.permute.xlu0 %1415
      %1418 = vset.pattern.permute.xlu0 4
      %1419 = vperm.xlu0 %1418, %v1189
      %v1420 = vpop.permute.xlu0 %1419
      %1422 = vset.pattern.permute.xlu0 4
      %1423 = vperm.xlu0 %1422, %v1190
      %v1424 = vpop.permute.xlu0 %1423
      %1426 = vset.pattern.permute.xlu0 4
      %1427 = vperm.xlu0 %1426, %v1191
      %v1428 = vpop.permute.xlu0 %1427
      %1430 = vset.pattern.permute.xlu0 4
      %1431 = vperm.xlu0 %1430, %v1192
      %v1432 = vpop.permute.xlu0 %1431
      %1434 = vset.pattern.permute.xlu0 4
      %1435 = vperm.xlu0 %1434, %v1193
      %v1436 = vpop.permute.xlu0 %1435
      %1438 = vset.pattern.permute.xlu0 4
      %1439 = vperm.xlu0 %1438, %v1194
      %v1440 = vpop.permute.xlu0 %1439
      %1442 = vset.pattern.permute.xlu0 4
      %1443 = vperm.xlu0 %1442, %v1195
      %v1444 = vpop.permute.xlu0 %1443
      %v1446 = vlaneseq
      %v1447 = vshrl.u32 %v1446, 7
      %v1448 = vsub.s32 4, %v1447
      %v1449 = vrot.slane %v1197, %v1448
      %v1450 = vmul.f32 %v1416, %v1449
      %v1451 = vmul.f32 %v1420, %v1449
      %v1452 = vmul.f32 %v1424, %v1449
      %v1453 = vmul.f32 %v1428, %v1449
      %v1454 = vmul.f32 %v1432, %v1449
      %v1455 = vmul.f32 %v1436, %v1449
      %v1456 = vmul.f32 %v1440, %v1449
      %v1457 = vmul.f32 %v1444, %v1449
      %v1458 = vadd.f32 %v1406, %v1450
      %v1459 = vadd.f32 %v1407, %v1451
      %v1460 = vadd.f32 %v1408, %v1452
      %v1461 = vadd.f32 %v1409, %v1453
      %v1462 = vadd.f32 %v1410, %v1454
      %v1463 = vadd.f32 %v1411, %v1455
      %v1464 = vadd.f32 %v1412, %v1456
      %v1465 = vadd.f32 %v1413, %v1457
      %1466 = vset.pattern.permute.xlu0 5
      %1467 = vperm.xlu0 %1466, %v1188
      %v1468 = vpop.permute.xlu0 %1467
      %1470 = vset.pattern.permute.xlu0 5
      %1471 = vperm.xlu0 %1470, %v1189
      %v1472 = vpop.permute.xlu0 %1471
      %1474 = vset.pattern.permute.xlu0 5
      %1475 = vperm.xlu0 %1474, %v1190
      %v1476 = vpop.permute.xlu0 %1475
      %1478 = vset.pattern.permute.xlu0 5
      %1479 = vperm.xlu0 %1478, %v1191
      %v1480 = vpop.permute.xlu0 %1479
      %1482 = vset.pattern.permute.xlu0 5
      %1483 = vperm.xlu0 %1482, %v1192
      %v1484 = vpop.permute.xlu0 %1483
      %1486 = vset.pattern.permute.xlu0 5
      %1487 = vperm.xlu0 %1486, %v1193
      %v1488 = vpop.permute.xlu0 %1487
      %1490 = vset.pattern.permute.xlu0 5
      %1491 = vperm.xlu0 %1490, %v1194
      %v1492 = vpop.permute.xlu0 %1491
      %1494 = vset.pattern.permute.xlu0 5
      %1495 = vperm.xlu0 %1494, %v1195
      %v1496 = vpop.permute.xlu0 %1495
      %v1498 = vlaneseq
      %v1499 = vshrl.u32 %v1498, 7
      %v1500 = vsub.s32 5, %v1499
      %v1501 = vrot.slane %v1197, %v1500
      %v1502 = vmul.f32 %v1468, %v1501
      %v1503 = vmul.f32 %v1472, %v1501
      %v1504 = vmul.f32 %v1476, %v1501
      %v1505 = vmul.f32 %v1480, %v1501
      %v1506 = vmul.f32 %v1484, %v1501
      %v1507 = vmul.f32 %v1488, %v1501
      %v1508 = vmul.f32 %v1492, %v1501
      %v1509 = vmul.f32 %v1496, %v1501
      %v1510 = vadd.f32 %v1458, %v1502
      %v1511 = vadd.f32 %v1459, %v1503
      %v1512 = vadd.f32 %v1460, %v1504
      %v1513 = vadd.f32 %v1461, %v1505
      %v1514 = vadd.f32 %v1462, %v1506
      %v1515 = vadd.f32 %v1463, %v1507
      %v1516 = vadd.f32 %v1464, %v1508
      %v1517 = vadd.f32 %v1465, %v1509
      %1518 = vset.pattern.permute.xlu0 6
      %1519 = vperm.xlu0 %1518, %v1188
      %v1520 = vpop.permute.xlu0 %1519
      %1522 = vset.pattern.permute.xlu0 6
      %1523 = vperm.xlu0 %1522, %v1189
      %v1524 = vpop.permute.xlu0 %1523
      %1526 = vset.pattern.permute.xlu0 6
      %1527 = vperm.xlu0 %1526, %v1190
      %v1528 = vpop.permute.xlu0 %1527
      %1530 = vset.pattern.permute.xlu0 6
      %1531 = vperm.xlu0 %1530, %v1191
      %v1532 = vpop.permute.xlu0 %1531
      %1534 = vset.pattern.permute.xlu0 6
      %1535 = vperm.xlu0 %1534, %v1192
      %v1536 = vpop.permute.xlu0 %1535
      %1538 = vset.pattern.permute.xlu0 6
      %1539 = vperm.xlu0 %1538, %v1193
      %v1540 = vpop.permute.xlu0 %1539
      %1542 = vset.pattern.permute.xlu0 6
      %1543 = vperm.xlu0 %1542, %v1194
      %v1544 = vpop.permute.xlu0 %1543
      %1546 = vset.pattern.permute.xlu0 6
      %1547 = vperm.xlu0 %1546, %v1195
      %v1548 = vpop.permute.xlu0 %1547
      %v1550 = vlaneseq
      %v1551 = vshrl.u32 %v1550, 7
      %v1552 = vsub.s32 6, %v1551
      %v1553 = vrot.slane %v1197, %v1552
      %v1554 = vmul.f32 %v1520, %v1553
      %v1555 = vmul.f32 %v1524, %v1553
      %v1556 = vmul.f32 %v1528, %v1553
      %v1557 = vmul.f32 %v1532, %v1553
      %v1558 = vmul.f32 %v1536, %v1553
      %v1559 = vmul.f32 %v1540, %v1553
      %v1560 = vmul.f32 %v1544, %v1553
      %v1561 = vmul.f32 %v1548, %v1553
      %v1562 = vadd.f32 %v1510, %v1554
      %v1563 = vadd.f32 %v1511, %v1555
      %v1564 = vadd.f32 %v1512, %v1556
      %v1565 = vadd.f32 %v1513, %v1557
      %v1566 = vadd.f32 %v1514, %v1558
      %v1567 = vadd.f32 %v1515, %v1559
      %v1568 = vadd.f32 %v1516, %v1560
      %v1569 = vadd.f32 %v1517, %v1561
      %1570 = vset.pattern.permute.xlu0 7
      %1571 = vperm.xlu0 %1570, %v1188
      %v1572 = vpop.permute.xlu0 %1571
      %1574 = vset.pattern.permute.xlu0 7
      %1575 = vperm.xlu0 %1574, %v1189
      %v1576 = vpop.permute.xlu0 %1575
      %1578 = vset.pattern.permute.xlu0 7
      %1579 = vperm.xlu0 %1578, %v1190
      %v1580 = vpop.permute.xlu0 %1579
      %1582 = vset.pattern.permute.xlu0 7
      %1583 = vperm.xlu0 %1582, %v1191
      %v1584 = vpop.permute.xlu0 %1583
      %1586 = vset.pattern.permute.xlu0 7
      %1587 = vperm.xlu0 %1586, %v1192
      %v1588 = vpop.permute.xlu0 %1587
      %1590 = vset.pattern.permute.xlu0 7
      %1591 = vperm.xlu0 %1590, %v1193
      %v1592 = vpop.permute.xlu0 %1591
      %1594 = vset.pattern.permute.xlu0 7
      %1595 = vperm.xlu0 %1594, %v1194
      %v1596 = vpop.permute.xlu0 %1595
      %1598 = vset.pattern.permute.xlu0 7
      %1599 = vperm.xlu0 %1598, %v1195
      %v1600 = vpop.permute.xlu0 %1599
      %v1602 = vlaneseq
      %v1603 = vshrl.u32 %v1602, 7
      %v1604 = vsub.s32 7, %v1603
      %v1605 = vrot.slane %v1197, %v1604
      %v1606 = vmul.f32 %v1572, %v1605
      %v1607 = vmul.f32 %v1576, %v1605
      %v1608 = vmul.f32 %v1580, %v1605
      %v1609 = vmul.f32 %v1584, %v1605
      %v1610 = vmul.f32 %v1588, %v1605
      %v1611 = vmul.f32 %v1592, %v1605
      %v1612 = vmul.f32 %v1596, %v1605
      %v1613 = vmul.f32 %v1600, %v1605
      %v1614 = vadd.f32 %v1562, %v1606
      %v1615 = vadd.f32 %v1563, %v1607
      %v1616 = vadd.f32 %v1564, %v1608
      %v1617 = vadd.f32 %v1565, %v1609
      %v1618 = vadd.f32 %v1566, %v1610
      %v1619 = vadd.f32 %v1567, %v1611
      %v1620 = vadd.f32 %v1568, %v1612
      %v1621 = vadd.f32 %v1569, %v1613
      %v1622 = vld [vmem:[%s312] sm:$0xff]
      %v1623 = vld [vmem:[%s312 + $0x10] sm:$0xff]
      %v1624 = vld [vmem:[%s312 + $0x20] sm:$0xff]
      %v1625 = vld [vmem:[%s312 + $0x30] sm:$0xff]
      %v1626 = vld [vmem:[%s312 + $0x40] sm:$0xff]
      %v1627 = vld [vmem:[%s312 + $0x50] sm:$0xff]
      %v1628 = vld [vmem:[%s312 + $0x60] sm:$0xff]
      %v1629 = vld [vmem:[%s312 + $0x70] sm:$0xff]
      %s1630 = scalar_lea.vmem %s3, 24
      %v1631 = vld [vmem:[%s1630] sm:$0xff]
      %1633 = vset.pattern.permute.xlu0 0
      %1634 = vperm.xlu0 %1633, %v1622
      %v1635 = vpop.permute.xlu0 %1634
      %1638 = vset.pattern.permute.xlu0 0
      %1639 = vperm.xlu0 %1638, %v1623
      %v1640 = vpop.permute.xlu0 %1639
      %1643 = vset.pattern.permute.xlu0 0
      %1644 = vperm.xlu0 %1643, %v1624
      %v1645 = vpop.permute.xlu0 %1644
      %1648 = vset.pattern.permute.xlu0 0
      %1649 = vperm.xlu0 %1648, %v1625
      %v1650 = vpop.permute.xlu0 %1649
      %1653 = vset.pattern.permute.xlu0 0
      %1654 = vperm.xlu0 %1653, %v1626
      %v1655 = vpop.permute.xlu0 %1654
      %1658 = vset.pattern.permute.xlu0 0
      %1659 = vperm.xlu0 %1658, %v1627
      %v1660 = vpop.permute.xlu0 %1659
      %1663 = vset.pattern.permute.xlu0 0
      %1664 = vperm.xlu0 %1663, %v1628
      %v1665 = vpop.permute.xlu0 %1664
      %1668 = vset.pattern.permute.xlu0 0
      %1669 = vperm.xlu0 %1668, %v1629
      %v1670 = vpop.permute.xlu0 %1669
      %v1672 = vlaneseq
      %v1673 = vshrl.u32 %v1672, 7
      %v1674 = vsub.s32 0, %v1673
      %v1675 = vrot.slane %v1631, %v1674
      %v1676 = vmul.f32 %v1635, %v1675
      %v1677 = vmul.f32 %v1640, %v1675
      %v1678 = vmul.f32 %v1645, %v1675
      %v1679 = vmul.f32 %v1650, %v1675
      %v1680 = vmul.f32 %v1655, %v1675
      %v1681 = vmul.f32 %v1660, %v1675
      %v1682 = vmul.f32 %v1665, %v1675
      %v1683 = vmul.f32 %v1670, %v1675
      %v1684 = vadd.f32 %v1614, %v1676
      %v1685 = vadd.f32 %v1615, %v1677
      %v1686 = vadd.f32 %v1616, %v1678
      %v1687 = vadd.f32 %v1617, %v1679
      %v1688 = vadd.f32 %v1618, %v1680
      %v1689 = vadd.f32 %v1619, %v1681
      %v1690 = vadd.f32 %v1620, %v1682
      %v1691 = vadd.f32 %v1621, %v1683
      %1692 = vset.pattern.permute.xlu0 1
      %1693 = vperm.xlu0 %1692, %v1622
      %v1694 = vpop.permute.xlu0 %1693
      %1696 = vset.pattern.permute.xlu0 1
      %1697 = vperm.xlu0 %1696, %v1623
      %v1698 = vpop.permute.xlu0 %1697
      %1700 = vset.pattern.permute.xlu0 1
      %1701 = vperm.xlu0 %1700, %v1624
      %v1702 = vpop.permute.xlu0 %1701
      %1704 = vset.pattern.permute.xlu0 1
      %1705 = vperm.xlu0 %1704, %v1625
      %v1706 = vpop.permute.xlu0 %1705
      %1708 = vset.pattern.permute.xlu0 1
      %1709 = vperm.xlu0 %1708, %v1626
      %v1710 = vpop.permute.xlu0 %1709
      %1712 = vset.pattern.permute.xlu0 1
      %1713 = vperm.xlu0 %1712, %v1627
      %v1714 = vpop.permute.xlu0 %1713
      %1716 = vset.pattern.permute.xlu0 1
      %1717 = vperm.xlu0 %1716, %v1628
      %v1718 = vpop.permute.xlu0 %1717
      %1720 = vset.pattern.permute.xlu0 1
      %1721 = vperm.xlu0 %1720, %v1629
      %v1722 = vpop.permute.xlu0 %1721
      %v1724 = vlaneseq
      %v1725 = vshrl.u32 %v1724, 7
      %v1726 = vsub.s32 1, %v1725
      %v1727 = vrot.slane %v1631, %v1726
      %v1728 = vmul.f32 %v1694, %v1727
      %v1729 = vmul.f32 %v1698, %v1727
      %v1730 = vmul.f32 %v1702, %v1727
      %v1731 = vmul.f32 %v1706, %v1727
      %v1732 = vmul.f32 %v1710, %v1727
      %v1733 = vmul.f32 %v1714, %v1727
      %v1734 = vmul.f32 %v1718, %v1727
      %v1735 = vmul.f32 %v1722, %v1727
      %v1736 = vadd.f32 %v1684, %v1728
      %v1737 = vadd.f32 %v1685, %v1729
      %v1738 = vadd.f32 %v1686, %v1730
      %v1739 = vadd.f32 %v1687, %v1731
      %v1740 = vadd.f32 %v1688, %v1732
      %v1741 = vadd.f32 %v1689, %v1733
      %v1742 = vadd.f32 %v1690, %v1734
      %v1743 = vadd.f32 %v1691, %v1735
      %1744 = vset.pattern.permute.xlu0 2
      %1745 = vperm.xlu0 %1744, %v1622
      %v1746 = vpop.permute.xlu0 %1745
      %1748 = vset.pattern.permute.xlu0 2
      %1749 = vperm.xlu0 %1748, %v1623
      %v1750 = vpop.permute.xlu0 %1749
      %1752 = vset.pattern.permute.xlu0 2
      %1753 = vperm.xlu0 %1752, %v1624
      %v1754 = vpop.permute.xlu0 %1753
      %1756 = vset.pattern.permute.xlu0 2
      %1757 = vperm.xlu0 %1756, %v1625
      %v1758 = vpop.permute.xlu0 %1757
      %1760 = vset.pattern.permute.xlu0 2
      %1761 = vperm.xlu0 %1760, %v1626
      %v1762 = vpop.permute.xlu0 %1761
      %1764 = vset.pattern.permute.xlu0 2
      %1765 = vperm.xlu0 %1764, %v1627
      %v1766 = vpop.permute.xlu0 %1765
      %1768 = vset.pattern.permute.xlu0 2
      %1769 = vperm.xlu0 %1768, %v1628
      %v1770 = vpop.permute.xlu0 %1769
      %1772 = vset.pattern.permute.xlu0 2
      %1773 = vperm.xlu0 %1772, %v1629
      %v1774 = vpop.permute.xlu0 %1773
      %v1776 = vlaneseq
      %v1777 = vshrl.u32 %v1776, 7
      %v1778 = vsub.s32 2, %v1777
      %v1779 = vrot.slane %v1631, %v1778
      %v1780 = vmul.f32 %v1746, %v1779
      %v1781 = vmul.f32 %v1750, %v1779
      %v1782 = vmul.f32 %v1754, %v1779
      %v1783 = vmul.f32 %v1758, %v1779
      %v1784 = vmul.f32 %v1762, %v1779
      %v1785 = vmul.f32 %v1766, %v1779
      %v1786 = vmul.f32 %v1770, %v1779
      %v1787 = vmul.f32 %v1774, %v1779
      %v1788 = vadd.f32 %v1736, %v1780
      %v1789 = vadd.f32 %v1737, %v1781
      %v1790 = vadd.f32 %v1738, %v1782
      %v1791 = vadd.f32 %v1739, %v1783
      %v1792 = vadd.f32 %v1740, %v1784
      %v1793 = vadd.f32 %v1741, %v1785
      %v1794 = vadd.f32 %v1742, %v1786
      %v1795 = vadd.f32 %v1743, %v1787
      %1796 = vset.pattern.permute.xlu0 3
      %1797 = vperm.xlu0 %1796, %v1622
      %v1798 = vpop.permute.xlu0 %1797
      %1800 = vset.pattern.permute.xlu0 3
      %1801 = vperm.xlu0 %1800, %v1623
      %v1802 = vpop.permute.xlu0 %1801
      %1804 = vset.pattern.permute.xlu0 3
      %1805 = vperm.xlu0 %1804, %v1624
      %v1806 = vpop.permute.xlu0 %1805
      %1808 = vset.pattern.permute.xlu0 3
      %1809 = vperm.xlu0 %1808, %v1625
      %v1810 = vpop.permute.xlu0 %1809
      %1812 = vset.pattern.permute.xlu0 3
      %1813 = vperm.xlu0 %1812, %v1626
      %v1814 = vpop.permute.xlu0 %1813
      %1816 = vset.pattern.permute.xlu0 3
      %1817 = vperm.xlu0 %1816, %v1627
      %v1818 = vpop.permute.xlu0 %1817
      %1820 = vset.pattern.permute.xlu0 3
      %1821 = vperm.xlu0 %1820, %v1628
      %v1822 = vpop.permute.xlu0 %1821
      %1824 = vset.pattern.permute.xlu0 3
      %1825 = vperm.xlu0 %1824, %v1629
      %v1826 = vpop.permute.xlu0 %1825
      %v1828 = vlaneseq
      %v1829 = vshrl.u32 %v1828, 7
      %v1830 = vsub.s32 3, %v1829
      %v1831 = vrot.slane %v1631, %v1830
      %v1832 = vmul.f32 %v1798, %v1831
      %v1833 = vmul.f32 %v1802, %v1831
      %v1834 = vmul.f32 %v1806, %v1831
      %v1835 = vmul.f32 %v1810, %v1831
      %v1836 = vmul.f32 %v1814, %v1831
      %v1837 = vmul.f32 %v1818, %v1831
      %v1838 = vmul.f32 %v1822, %v1831
      %v1839 = vmul.f32 %v1826, %v1831
      %v1840 = vadd.f32 %v1788, %v1832
      %v1841 = vadd.f32 %v1789, %v1833
      %v1842 = vadd.f32 %v1790, %v1834
      %v1843 = vadd.f32 %v1791, %v1835
      %v1844 = vadd.f32 %v1792, %v1836
      %v1845 = vadd.f32 %v1793, %v1837
      %v1846 = vadd.f32 %v1794, %v1838
      %v1847 = vadd.f32 %v1795, %v1839
      %1848 = vset.pattern.permute.xlu0 4
      %1849 = vperm.xlu0 %1848, %v1622
      %v1850 = vpop.permute.xlu0 %1849
      %1852 = vset.pattern.permute.xlu0 4
      %1853 = vperm.xlu0 %1852, %v1623
      %v1854 = vpop.permute.xlu0 %1853
      %1856 = vset.pattern.permute.xlu0 4
      %1857 = vperm.xlu0 %1856, %v1624
      %v1858 = vpop.permute.xlu0 %1857
      %1860 = vset.pattern.permute.xlu0 4
      %1861 = vperm.xlu0 %1860, %v1625
      %v1862 = vpop.permute.xlu0 %1861
      %1864 = vset.pattern.permute.xlu0 4
      %1865 = vperm.xlu0 %1864, %v1626
      %v1866 = vpop.permute.xlu0 %1865
      %1868 = vset.pattern.permute.xlu0 4
      %1869 = vperm.xlu0 %1868, %v1627
      %v1870 = vpop.permute.xlu0 %1869
      %1872 = vset.pattern.permute.xlu0 4
      %1873 = vperm.xlu0 %1872, %v1628
      %v1874 = vpop.permute.xlu0 %1873
      %1876 = vset.pattern.permute.xlu0 4
      %1877 = vperm.xlu0 %1876, %v1629
      %v1878 = vpop.permute.xlu0 %1877
      %v1880 = vlaneseq
      %v1881 = vshrl.u32 %v1880, 7
      %v1882 = vsub.s32 4, %v1881
      %v1883 = vrot.slane %v1631, %v1882
      %v1884 = vmul.f32 %v1850, %v1883
      %v1885 = vmul.f32 %v1854, %v1883
      %v1886 = vmul.f32 %v1858, %v1883
      %v1887 = vmul.f32 %v1862, %v1883
      %v1888 = vmul.f32 %v1866, %v1883
      %v1889 = vmul.f32 %v1870, %v1883
      %v1890 = vmul.f32 %v1874, %v1883
      %v1891 = vmul.f32 %v1878, %v1883
      %v1892 = vadd.f32 %v1840, %v1884
      %v1893 = vadd.f32 %v1841, %v1885
      %v1894 = vadd.f32 %v1842, %v1886
      %v1895 = vadd.f32 %v1843, %v1887
      %v1896 = vadd.f32 %v1844, %v1888
      %v1897 = vadd.f32 %v1845, %v1889
      %v1898 = vadd.f32 %v1846, %v1890
      %v1899 = vadd.f32 %v1847, %v1891
      %1900 = vset.pattern.permute.xlu0 5
      %1901 = vperm.xlu0 %1900, %v1622
      %v1902 = vpop.permute.xlu0 %1901
      %1904 = vset.pattern.permute.xlu0 5
      %1905 = vperm.xlu0 %1904, %v1623
      %v1906 = vpop.permute.xlu0 %1905
      %1908 = vset.pattern.permute.xlu0 5
      %1909 = vperm.xlu0 %1908, %v1624
      %v1910 = vpop.permute.xlu0 %1909
      %1912 = vset.pattern.permute.xlu0 5
      %1913 = vperm.xlu0 %1912, %v1625
      %v1914 = vpop.permute.xlu0 %1913
      %1916 = vset.pattern.permute.xlu0 5
      %1917 = vperm.xlu0 %1916, %v1626
      %v1918 = vpop.permute.xlu0 %1917
      %1920 = vset.pattern.permute.xlu0 5
      %1921 = vperm.xlu0 %1920, %v1627
      %v1922 = vpop.permute.xlu0 %1921
      %1924 = vset.pattern.permute.xlu0 5
      %1925 = vperm.xlu0 %1924, %v1628
      %v1926 = vpop.permute.xlu0 %1925
      %1928 = vset.pattern.permute.xlu0 5
      %1929 = vperm.xlu0 %1928, %v1629
      %v1930 = vpop.permute.xlu0 %1929
      %v1932 = vlaneseq
      %v1933 = vshrl.u32 %v1932, 7
      %v1934 = vsub.s32 5, %v1933
      %v1935 = vrot.slane %v1631, %v1934
      %v1936 = vmul.f32 %v1902, %v1935
      %v1937 = vmul.f32 %v1906, %v1935
      %v1938 = vmul.f32 %v1910, %v1935
      %v1939 = vmul.f32 %v1914, %v1935
      %v1940 = vmul.f32 %v1918, %v1935
      %v1941 = vmul.f32 %v1922, %v1935
      %v1942 = vmul.f32 %v1926, %v1935
      %v1943 = vmul.f32 %v1930, %v1935
      %v1944 = vadd.f32 %v1892, %v1936
      %v1945 = vadd.f32 %v1893, %v1937
      %v1946 = vadd.f32 %v1894, %v1938
      %v1947 = vadd.f32 %v1895, %v1939
      %v1948 = vadd.f32 %v1896, %v1940
      %v1949 = vadd.f32 %v1897, %v1941
      %v1950 = vadd.f32 %v1898, %v1942
      %v1951 = vadd.f32 %v1899, %v1943
      %1952 = vset.pattern.permute.xlu0 6
      %1953 = vperm.xlu0 %1952, %v1622
      %v1954 = vpop.permute.xlu0 %1953
      %1956 = vset.pattern.permute.xlu0 6
      %1957 = vperm.xlu0 %1956, %v1623
      %v1958 = vpop.permute.xlu0 %1957
      %1960 = vset.pattern.permute.xlu0 6
      %1961 = vperm.xlu0 %1960, %v1624
      %v1962 = vpop.permute.xlu0 %1961
      %1964 = vset.pattern.permute.xlu0 6
      %1965 = vperm.xlu0 %1964, %v1625
      %v1966 = vpop.permute.xlu0 %1965
      %1968 = vset.pattern.permute.xlu0 6
      %1969 = vperm.xlu0 %1968, %v1626
      %v1970 = vpop.permute.xlu0 %1969
      %1972 = vset.pattern.permute.xlu0 6
      %1973 = vperm.xlu0 %1972, %v1627
      %v1974 = vpop.permute.xlu0 %1973
      %1976 = vset.pattern.permute.xlu0 6
      %1977 = vperm.xlu0 %1976, %v1628
      %v1978 = vpop.permute.xlu0 %1977
      %1980 = vset.pattern.permute.xlu0 6
      %1981 = vperm.xlu0 %1980, %v1629
      %v1982 = vpop.permute.xlu0 %1981
      %v1984 = vlaneseq
      %v1985 = vshrl.u32 %v1984, 7
      %v1986 = vsub.s32 6, %v1985
      %v1987 = vrot.slane %v1631, %v1986
      %v1988 = vmul.f32 %v1954, %v1987
      %v1989 = vmul.f32 %v1958, %v1987
      %v1990 = vmul.f32 %v1962, %v1987
      %v1991 = vmul.f32 %v1966, %v1987
      %v1992 = vmul.f32 %v1970, %v1987
      %v1993 = vmul.f32 %v1974, %v1987
      %v1994 = vmul.f32 %v1978, %v1987
      %v1995 = vmul.f32 %v1982, %v1987
      %v1996 = vadd.f32 %v1944, %v1988
      %v1997 = vadd.f32 %v1945, %v1989
      %v1998 = vadd.f32 %v1946, %v1990
      %v1999 = vadd.f32 %v1947, %v1991
      %v2000 = vadd.f32 %v1948, %v1992
      %v2001 = vadd.f32 %v1949, %v1993
      %v2002 = vadd.f32 %v1950, %v1994
      %v2003 = vadd.f32 %v1951, %v1995
      %2004 = vset.pattern.permute.xlu0 7
      %2005 = vperm.xlu0 %2004, %v1622
      %v2006 = vpop.permute.xlu0 %2005
      %2008 = vset.pattern.permute.xlu0 7
      %2009 = vperm.xlu0 %2008, %v1623
      %v2010 = vpop.permute.xlu0 %2009
      %2012 = vset.pattern.permute.xlu0 7
      %2013 = vperm.xlu0 %2012, %v1624
      %v2014 = vpop.permute.xlu0 %2013
      %2016 = vset.pattern.permute.xlu0 7
      %2017 = vperm.xlu0 %2016, %v1625
      %v2018 = vpop.permute.xlu0 %2017
      %2020 = vset.pattern.permute.xlu0 7
      %2021 = vperm.xlu0 %2020, %v1626
      %v2022 = vpop.permute.xlu0 %2021
      %2024 = vset.pattern.permute.xlu0 7
      %2025 = vperm.xlu0 %2024, %v1627
      %v2026 = vpop.permute.xlu0 %2025
      %2028 = vset.pattern.permute.xlu0 7
      %2029 = vperm.xlu0 %2028, %v1628
      %v2030 = vpop.permute.xlu0 %2029
      %2032 = vset.pattern.permute.xlu0 7
      %2033 = vperm.xlu0 %2032, %v1629
      %v2034 = vpop.permute.xlu0 %2033
      %v2036 = vlaneseq
      %v2037 = vshrl.u32 %v2036, 7
      %v2038 = vsub.s32 7, %v2037
      %v2039 = vrot.slane %v1631, %v2038
      %v2040 = vmul.f32 %v2006, %v2039
      %v2041 = vmul.f32 %v2010, %v2039
      %v2042 = vmul.f32 %v2014, %v2039
      %v2043 = vmul.f32 %v2018, %v2039
      %v2044 = vmul.f32 %v2022, %v2039
      %v2045 = vmul.f32 %v2026, %v2039
      %v2046 = vmul.f32 %v2030, %v2039
      %v2047 = vmul.f32 %v2034, %v2039
      %v2048 = vadd.f32 %v1996, %v2040
      %v2049 = vadd.f32 %v1997, %v2041
      %v2050 = vadd.f32 %v1998, %v2042
      %v2051 = vadd.f32 %v1999, %v2043
      %v2052 = vadd.f32 %v2000, %v2044
      %v2053 = vadd.f32 %v2001, %v2045
      %v2054 = vadd.f32 %v2002, %v2046
      %v2055 = vadd.f32 %v2003, %v2047
      %v2056 = vld [vmem:[%s312 + $0x1] sm:$0xff]
      %v2057 = vld [vmem:[%s312 + $0x11] sm:$0xff]
      %v2058 = vld [vmem:[%s312 + $0x21] sm:$0xff]
      %v2059 = vld [vmem:[%s312 + $0x31] sm:$0xff]
      %v2060 = vld [vmem:[%s312 + $0x41] sm:$0xff]
      %v2061 = vld [vmem:[%s312 + $0x51] sm:$0xff]
      %v2062 = vld [vmem:[%s312 + $0x61] sm:$0xff]
      %v2063 = vld [vmem:[%s312 + $0x71] sm:$0xff]
      %s2064 = scalar_lea.vmem %s3, 32
      %v2065 = vld [vmem:[%s2064] sm:$0xff]
      %2067 = vset.pattern.permute.xlu0 0
      %2068 = vperm.xlu0 %2067, %v2056
      %v2069 = vpop.permute.xlu0 %2068
      %2072 = vset.pattern.permute.xlu0 0
      %2073 = vperm.xlu0 %2072, %v2057
      %v2074 = vpop.permute.xlu0 %2073
      %2077 = vset.pattern.permute.xlu0 0
      %2078 = vperm.xlu0 %2077, %v2058
      %v2079 = vpop.permute.xlu0 %2078
      %2082 = vset.pattern.permute.xlu0 0
      %2083 = vperm.xlu0 %2082, %v2059
      %v2084 = vpop.permute.xlu0 %2083
      %2087 = vset.pattern.permute.xlu0 0
      %2088 = vperm.xlu0 %2087, %v2060
      %v2089 = vpop.permute.xlu0 %2088
      %2092 = vset.pattern.permute.xlu0 0
      %2093 = vperm.xlu0 %2092, %v2061
      %v2094 = vpop.permute.xlu0 %2093
      %2097 = vset.pattern.permute.xlu0 0
      %2098 = vperm.xlu0 %2097, %v2062
      %v2099 = vpop.permute.xlu0 %2098
      %2102 = vset.pattern.permute.xlu0 0
      %2103 = vperm.xlu0 %2102, %v2063
      %v2104 = vpop.permute.xlu0 %2103
      %v2106 = vlaneseq
      %v2107 = vshrl.u32 %v2106, 7
      %v2108 = vsub.s32 0, %v2107
      %v2109 = vrot.slane %v2065, %v2108
      %v2110 = vmul.f32 %v2069, %v2109
      %v2111 = vmul.f32 %v2074, %v2109
      %v2112 = vmul.f32 %v2079, %v2109
      %v2113 = vmul.f32 %v2084, %v2109
      %v2114 = vmul.f32 %v2089, %v2109
      %v2115 = vmul.f32 %v2094, %v2109
      %v2116 = vmul.f32 %v2099, %v2109
      %v2117 = vmul.f32 %v2104, %v2109
      %v2118 = vadd.f32 %v2048, %v2110
      %v2119 = vadd.f32 %v2049, %v2111
      %v2120 = vadd.f32 %v2050, %v2112
      %v2121 = vadd.f32 %v2051, %v2113
      %v2122 = vadd.f32 %v2052, %v2114
      %v2123 = vadd.f32 %v2053, %v2115
      %v2124 = vadd.f32 %v2054, %v2116
      %v2125 = vadd.f32 %v2055, %v2117
      %2126 = vset.pattern.permute.xlu0 1
      %2127 = vperm.xlu0 %2126, %v2056
      %v2128 = vpop.permute.xlu0 %2127
      %2130 = vset.pattern.permute.xlu0 1
      %2131 = vperm.xlu0 %2130, %v2057
      %v2132 = vpop.permute.xlu0 %2131
      %2134 = vset.pattern.permute.xlu0 1
      %2135 = vperm.xlu0 %2134, %v2058
      %v2136 = vpop.permute.xlu0 %2135
      %2138 = vset.pattern.permute.xlu0 1
      %2139 = vperm.xlu0 %2138, %v2059
      %v2140 = vpop.permute.xlu0 %2139
      %2142 = vset.pattern.permute.xlu0 1
      %2143 = vperm.xlu0 %2142, %v2060
      %v2144 = vpop.permute.xlu0 %2143
      %2146 = vset.pattern.permute.xlu0 1
      %2147 = vperm.xlu0 %2146, %v2061
      %v2148 = vpop.permute.xlu0 %2147
      %2150 = vset.pattern.permute.xlu0 1
      %2151 = vperm.xlu0 %2150, %v2062
      %v2152 = vpop.permute.xlu0 %2151
      %2154 = vset.pattern.permute.xlu0 1
      %2155 = vperm.xlu0 %2154, %v2063
      %v2156 = vpop.permute.xlu0 %2155
      %v2158 = vlaneseq
      %v2159 = vshrl.u32 %v2158, 7
      %v2160 = vsub.s32 1, %v2159
      %v2161 = vrot.slane %v2065, %v2160
      %v2162 = vmul.f32 %v2128, %v2161
      %v2163 = vmul.f32 %v2132, %v2161
      %v2164 = vmul.f32 %v2136, %v2161
      %v2165 = vmul.f32 %v2140, %v2161
      %v2166 = vmul.f32 %v2144, %v2161
      %v2167 = vmul.f32 %v2148, %v2161
      %v2168 = vmul.f32 %v2152, %v2161
      %v2169 = vmul.f32 %v2156, %v2161
      %v2170 = vadd.f32 %v2118, %v2162
      %v2171 = vadd.f32 %v2119, %v2163
      %v2172 = vadd.f32 %v2120, %v2164
      %v2173 = vadd.f32 %v2121, %v2165
      %v2174 = vadd.f32 %v2122, %v2166
      %v2175 = vadd.f32 %v2123, %v2167
      %v2176 = vadd.f32 %v2124, %v2168
      %v2177 = vadd.f32 %v2125, %v2169
      %2178 = vset.pattern.permute.xlu0 2
      %2179 = vperm.xlu0 %2178, %v2056
      %v2180 = vpop.permute.xlu0 %2179
      %2182 = vset.pattern.permute.xlu0 2
      %2183 = vperm.xlu0 %2182, %v2057
      %v2184 = vpop.permute.xlu0 %2183
      %2186 = vset.pattern.permute.xlu0 2
      %2187 = vperm.xlu0 %2186, %v2058
      %v2188 = vpop.permute.xlu0 %2187
      %2190 = vset.pattern.permute.xlu0 2
      %2191 = vperm.xlu0 %2190, %v2059
      %v2192 = vpop.permute.xlu0 %2191
      %2194 = vset.pattern.permute.xlu0 2
      %2195 = vperm.xlu0 %2194, %v2060
      %v2196 = vpop.permute.xlu0 %2195
      %2198 = vset.pattern.permute.xlu0 2
      %2199 = vperm.xlu0 %2198, %v2061
      %v2200 = vpop.permute.xlu0 %2199
      %2202 = vset.pattern.permute.xlu0 2
      %2203 = vperm.xlu0 %2202, %v2062
      %v2204 = vpop.permute.xlu0 %2203
      %2206 = vset.pattern.permute.xlu0 2
      %2207 = vperm.xlu0 %2206, %v2063
      %v2208 = vpop.permute.xlu0 %2207
      %v2210 = vlaneseq
      %v2211 = vshrl.u32 %v2210, 7
      %v2212 = vsub.s32 2, %v2211
      %v2213 = vrot.slane %v2065, %v2212
      %v2214 = vmul.f32 %v2180, %v2213
      %v2215 = vmul.f32 %v2184, %v2213
      %v2216 = vmul.f32 %v2188, %v2213
      %v2217 = vmul.f32 %v2192, %v2213
      %v2218 = vmul.f32 %v2196, %v2213
      %v2219 = vmul.f32 %v2200, %v2213
      %v2220 = vmul.f32 %v2204, %v2213
      %v2221 = vmul.f32 %v2208, %v2213
      %v2222 = vadd.f32 %v2170, %v2214
      %v2223 = vadd.f32 %v2171, %v2215
      %v2224 = vadd.f32 %v2172, %v2216
      %v2225 = vadd.f32 %v2173, %v2217
      %v2226 = vadd.f32 %v2174, %v2218
      %v2227 = vadd.f32 %v2175, %v2219
      %v2228 = vadd.f32 %v2176, %v2220
      %v2229 = vadd.f32 %v2177, %v2221
      %2230 = vset.pattern.permute.xlu0 3
      %2231 = vperm.xlu0 %2230, %v2056
      %v2232 = vpop.permute.xlu0 %2231
      %2234 = vset.pattern.permute.xlu0 3
      %2235 = vperm.xlu0 %2234, %v2057
      %v2236 = vpop.permute.xlu0 %2235
      %2238 = vset.pattern.permute.xlu0 3
      %2239 = vperm.xlu0 %2238, %v2058
      %v2240 = vpop.permute.xlu0 %2239
      %2242 = vset.pattern.permute.xlu0 3
      %2243 = vperm.xlu0 %2242, %v2059
      %v2244 = vpop.permute.xlu0 %2243
      %2246 = vset.pattern.permute.xlu0 3
      %2247 = vperm.xlu0 %2246, %v2060
      %v2248 = vpop.permute.xlu0 %2247
      %2250 = vset.pattern.permute.xlu0 3
      %2251 = vperm.xlu0 %2250, %v2061
      %v2252 = vpop.permute.xlu0 %2251
      %2254 = vset.pattern.permute.xlu0 3
      %2255 = vperm.xlu0 %2254, %v2062
      %v2256 = vpop.permute.xlu0 %2255
      %2258 = vset.pattern.permute.xlu0 3
      %2259 = vperm.xlu0 %2258, %v2063
      %v2260 = vpop.permute.xlu0 %2259
      %v2262 = vlaneseq
      %v2263 = vshrl.u32 %v2262, 7
      %v2264 = vsub.s32 3, %v2263
      %v2265 = vrot.slane %v2065, %v2264
      %v2266 = vmul.f32 %v2232, %v2265
      %v2267 = vmul.f32 %v2236, %v2265
      %v2268 = vmul.f32 %v2240, %v2265
      %v2269 = vmul.f32 %v2244, %v2265
      %v2270 = vmul.f32 %v2248, %v2265
      %v2271 = vmul.f32 %v2252, %v2265
      %v2272 = vmul.f32 %v2256, %v2265
      %v2273 = vmul.f32 %v2260, %v2265
      %v2274 = vadd.f32 %v2222, %v2266
      %v2275 = vadd.f32 %v2223, %v2267
      %v2276 = vadd.f32 %v2224, %v2268
      %v2277 = vadd.f32 %v2225, %v2269
      %v2278 = vadd.f32 %v2226, %v2270
      %v2279 = vadd.f32 %v2227, %v2271
      %v2280 = vadd.f32 %v2228, %v2272
      %v2281 = vadd.f32 %v2229, %v2273
      %2282 = vset.pattern.permute.xlu0 4
      %2283 = vperm.xlu0 %2282, %v2056
      %v2284 = vpop.permute.xlu0 %2283
      %2286 = vset.pattern.permute.xlu0 4
      %2287 = vperm.xlu0 %2286, %v2057
      %v2288 = vpop.permute.xlu0 %2287
      %2290 = vset.pattern.permute.xlu0 4
      %2291 = vperm.xlu0 %2290, %v2058
      %v2292 = vpop.permute.xlu0 %2291
      %2294 = vset.pattern.permute.xlu0 4
      %2295 = vperm.xlu0 %2294, %v2059
      %v2296 = vpop.permute.xlu0 %2295
      %2298 = vset.pattern.permute.xlu0 4
      %2299 = vperm.xlu0 %2298, %v2060
      %v2300 = vpop.permute.xlu0 %2299
      %2302 = vset.pattern.permute.xlu0 4
      %2303 = vperm.xlu0 %2302, %v2061
      %v2304 = vpop.permute.xlu0 %2303
      %2306 = vset.pattern.permute.xlu0 4
      %2307 = vperm.xlu0 %2306, %v2062
      %v2308 = vpop.permute.xlu0 %2307
      %2310 = vset.pattern.permute.xlu0 4
      %2311 = vperm.xlu0 %2310, %v2063
      %v2312 = vpop.permute.xlu0 %2311
      %v2314 = vlaneseq
      %v2315 = vshrl.u32 %v2314, 7
      %v2316 = vsub.s32 4, %v2315
      %v2317 = vrot.slane %v2065, %v2316
      %v2318 = vmul.f32 %v2284, %v2317
      %v2319 = vmul.f32 %v2288, %v2317
      %v2320 = vmul.f32 %v2292, %v2317
      %v2321 = vmul.f32 %v2296, %v2317
      %v2322 = vmul.f32 %v2300, %v2317
      %v2323 = vmul.f32 %v2304, %v2317
      %v2324 = vmul.f32 %v2308, %v2317
      %v2325 = vmul.f32 %v2312, %v2317
      %v2326 = vadd.f32 %v2274, %v2318
      %v2327 = vadd.f32 %v2275, %v2319
      %v2328 = vadd.f32 %v2276, %v2320
      %v2329 = vadd.f32 %v2277, %v2321
      %v2330 = vadd.f32 %v2278, %v2322
      %v2331 = vadd.f32 %v2279, %v2323
      %v2332 = vadd.f32 %v2280, %v2324
      %v2333 = vadd.f32 %v2281, %v2325
      %2334 = vset.pattern.permute.xlu0 5
      %2335 = vperm.xlu0 %2334, %v2056
      %v2336 = vpop.permute.xlu0 %2335
      %2338 = vset.pattern.permute.xlu0 5
      %2339 = vperm.xlu0 %2338, %v2057
      %v2340 = vpop.permute.xlu0 %2339
      %2342 = vset.pattern.permute.xlu0 5
      %2343 = vperm.xlu0 %2342, %v2058
      %v2344 = vpop.permute.xlu0 %2343
      %2346 = vset.pattern.permute.xlu0 5
      %2347 = vperm.xlu0 %2346, %v2059
      %v2348 = vpop.permute.xlu0 %2347
      %2350 = vset.pattern.permute.xlu0 5
      %2351 = vperm.xlu0 %2350, %v2060
      %v2352 = vpop.permute.xlu0 %2351
      %2354 = vset.pattern.permute.xlu0 5
      %2355 = vperm.xlu0 %2354, %v2061
      %v2356 = vpop.permute.xlu0 %2355
      %2358 = vset.pattern.permute.xlu0 5
      %2359 = vperm.xlu0 %2358, %v2062
      %v2360 = vpop.permute.xlu0 %2359
      %2362 = vset.pattern.permute.xlu0 5
      %2363 = vperm.xlu0 %2362, %v2063
      %v2364 = vpop.permute.xlu0 %2363
      %v2366 = vlaneseq
      %v2367 = vshrl.u32 %v2366, 7
      %v2368 = vsub.s32 5, %v2367
      %v2369 = vrot.slane %v2065, %v2368
      %v2370 = vmul.f32 %v2336, %v2369
      %v2371 = vmul.f32 %v2340, %v2369
      %v2372 = vmul.f32 %v2344, %v2369
      %v2373 = vmul.f32 %v2348, %v2369
      %v2374 = vmul.f32 %v2352, %v2369
      %v2375 = vmul.f32 %v2356, %v2369
      %v2376 = vmul.f32 %v2360, %v2369
      %v2377 = vmul.f32 %v2364, %v2369
      %v2378 = vadd.f32 %v2326, %v2370
      %v2379 = vadd.f32 %v2327, %v2371
      %v2380 = vadd.f32 %v2328, %v2372
      %v2381 = vadd.f32 %v2329, %v2373
      %v2382 = vadd.f32 %v2330, %v2374
      %v2383 = vadd.f32 %v2331, %v2375
      %v2384 = vadd.f32 %v2332, %v2376
      %v2385 = vadd.f32 %v2333, %v2377
      %2386 = vset.pattern.permute.xlu0 6
      %2387 = vperm.xlu0 %2386, %v2056
      %v2388 = vpop.permute.xlu0 %2387
      %2390 = vset.pattern.permute.xlu0 6
      %2391 = vperm.xlu0 %2390, %v2057
      %v2392 = vpop.permute.xlu0 %2391
      %2394 = vset.pattern.permute.xlu0 6
      %2395 = vperm.xlu0 %2394, %v2058
      %v2396 = vpop.permute.xlu0 %2395
      %2398 = vset.pattern.permute.xlu0 6
      %2399 = vperm.xlu0 %2398, %v2059
      %v2400 = vpop.permute.xlu0 %2399
      %2402 = vset.pattern.permute.xlu0 6
      %2403 = vperm.xlu0 %2402, %v2060
      %v2404 = vpop.permute.xlu0 %2403
      %2406 = vset.pattern.permute.xlu0 6
      %2407 = vperm.xlu0 %2406, %v2061
      %v2408 = vpop.permute.xlu0 %2407
      %2410 = vset.pattern.permute.xlu0 6
      %2411 = vperm.xlu0 %2410, %v2062
      %v2412 = vpop.permute.xlu0 %2411
      %2414 = vset.pattern.permute.xlu0 6
      %2415 = vperm.xlu0 %2414, %v2063
      %v2416 = vpop.permute.xlu0 %2415
      %v2418 = vlaneseq
      %v2419 = vshrl.u32 %v2418, 7
      %v2420 = vsub.s32 6, %v2419
      %v2421 = vrot.slane %v2065, %v2420
      %v2422 = vmul.f32 %v2388, %v2421
      %v2423 = vmul.f32 %v2392, %v2421
      %v2424 = vmul.f32 %v2396, %v2421
      %v2425 = vmul.f32 %v2400, %v2421
      %v2426 = vmul.f32 %v2404, %v2421
      %v2427 = vmul.f32 %v2408, %v2421
      %v2428 = vmul.f32 %v2412, %v2421
      %v2429 = vmul.f32 %v2416, %v2421
      %v2430 = vadd.f32 %v2378, %v2422
      %v2431 = vadd.f32 %v2379, %v2423
      %v2432 = vadd.f32 %v2380, %v2424
      %v2433 = vadd.f32 %v2381, %v2425
      %v2434 = vadd.f32 %v2382, %v2426
      %v2435 = vadd.f32 %v2383, %v2427
      %v2436 = vadd.f32 %v2384, %v2428
      %v2437 = vadd.f32 %v2385, %v2429
      %2438 = vset.pattern.permute.xlu0 7
      %2439 = vperm.xlu0 %2438, %v2056
      %v2440 = vpop.permute.xlu0 %2439
      %2442 = vset.pattern.permute.xlu0 7
      %2443 = vperm.xlu0 %2442, %v2057
      %v2444 = vpop.permute.xlu0 %2443
      %2446 = vset.pattern.permute.xlu0 7
      %2447 = vperm.xlu0 %2446, %v2058
      %v2448 = vpop.permute.xlu0 %2447
      %2450 = vset.pattern.permute.xlu0 7
      %2451 = vperm.xlu0 %2450, %v2059
      %v2452 = vpop.permute.xlu0 %2451
      %2454 = vset.pattern.permute.xlu0 7
      %2455 = vperm.xlu0 %2454, %v2060
      %v2456 = vpop.permute.xlu0 %2455
      %2458 = vset.pattern.permute.xlu0 7
      %2459 = vperm.xlu0 %2458, %v2061
      %v2460 = vpop.permute.xlu0 %2459
      %2462 = vset.pattern.permute.xlu0 7
      %2463 = vperm.xlu0 %2462, %v2062
      %v2464 = vpop.permute.xlu0 %2463
      %2466 = vset.pattern.permute.xlu0 7
      %2467 = vperm.xlu0 %2466, %v2063
      %v2468 = vpop.permute.xlu0 %2467
      %v2470 = vlaneseq
      %v2471 = vshrl.u32 %v2470, 7
      %v2472 = vsub.s32 7, %v2471
      %v2473 = vrot.slane %v2065, %v2472
      %v2474 = vmul.f32 %v2440, %v2473
      %v2475 = vmul.f32 %v2444, %v2473
      %v2476 = vmul.f32 %v2448, %v2473
      %v2477 = vmul.f32 %v2452, %v2473
      %v2478 = vmul.f32 %v2456, %v2473
      %v2479 = vmul.f32 %v2460, %v2473
      %v2480 = vmul.f32 %v2464, %v2473
      %v2481 = vmul.f32 %v2468, %v2473
      %v2482 = vadd.f32 %v2430, %v2474
      %v2483 = vadd.f32 %v2431, %v2475
      %v2484 = vadd.f32 %v2432, %v2476
      %v2485 = vadd.f32 %v2433, %v2477
      %v2486 = vadd.f32 %v2434, %v2478
      %v2487 = vadd.f32 %v2435, %v2479
      %v2488 = vadd.f32 %v2436, %v2480
      %v2489 = vadd.f32 %v2437, %v2481
      %v2490 = vld [vmem:[%s312 + $0x2] sm:$0xff]
      %v2491 = vld [vmem:[%s312 + $0x12] sm:$0xff]
      %v2492 = vld [vmem:[%s312 + $0x22] sm:$0xff]
      %v2493 = vld [vmem:[%s312 + $0x32] sm:$0xff]
      %v2494 = vld [vmem:[%s312 + $0x42] sm:$0xff]
      %v2495 = vld [vmem:[%s312 + $0x52] sm:$0xff]
      %v2496 = vld [vmem:[%s312 + $0x62] sm:$0xff]
      %v2497 = vld [vmem:[%s312 + $0x72] sm:$0xff]
      %s2498 = scalar_lea.vmem %s3, 40
      %v2499 = vld [vmem:[%s2498] sm:$0xff]
      %2501 = vset.pattern.permute.xlu0 0
      %2502 = vperm.xlu0 %2501, %v2490
      %v2503 = vpop.permute.xlu0 %2502
      %2506 = vset.pattern.permute.xlu0 0
      %2507 = vperm.xlu0 %2506, %v2491
      %v2508 = vpop.permute.xlu0 %2507
      %2511 = vset.pattern.permute.xlu0 0
      %2512 = vperm.xlu0 %2511, %v2492
      %v2513 = vpop.permute.xlu0 %2512
      %2516 = vset.pattern.permute.xlu0 0
      %2517 = vperm.xlu0 %2516, %v2493
      %v2518 = vpop.permute.xlu0 %2517
      %2521 = vset.pattern.permute.xlu0 0
      %2522 = vperm.xlu0 %2521, %v2494
      %v2523 = vpop.permute.xlu0 %2522
      %2526 = vset.pattern.permute.xlu0 0
      %2527 = vperm.xlu0 %2526, %v2495
      %v2528 = vpop.permute.xlu0 %2527
      %2531 = vset.pattern.permute.xlu0 0
      %2532 = vperm.xlu0 %2531, %v2496
      %v2533 = vpop.permute.xlu0 %2532
      %2536 = vset.pattern.permute.xlu0 0
      %2537 = vperm.xlu0 %2536, %v2497
      %v2538 = vpop.permute.xlu0 %2537
      %v2540 = vlaneseq
      %v2541 = vshrl.u32 %v2540, 7
      %v2542 = vsub.s32 0, %v2541
      %v2543 = vrot.slane %v2499, %v2542
      %v2544 = vmul.f32 %v2503, %v2543
      %v2545 = vmul.f32 %v2508, %v2543
      %v2546 = vmul.f32 %v2513, %v2543
      %v2547 = vmul.f32 %v2518, %v2543
      %v2548 = vmul.f32 %v2523, %v2543
      %v2549 = vmul.f32 %v2528, %v2543
      %v2550 = vmul.f32 %v2533, %v2543
      %v2551 = vmul.f32 %v2538, %v2543
      %v2552 = vadd.f32 %v2482, %v2544
      %v2553 = vadd.f32 %v2483, %v2545
      %v2554 = vadd.f32 %v2484, %v2546
      %v2555 = vadd.f32 %v2485, %v2547
      %v2556 = vadd.f32 %v2486, %v2548
      %v2557 = vadd.f32 %v2487, %v2549
      %v2558 = vadd.f32 %v2488, %v2550
      %v2559 = vadd.f32 %v2489, %v2551
      %2560 = vset.pattern.permute.xlu0 1
      %2561 = vperm.xlu0 %2560, %v2490
      %v2562 = vpop.permute.xlu0 %2561
      %2564 = vset.pattern.permute.xlu0 1
      %2565 = vperm.xlu0 %2564, %v2491
      %v2566 = vpop.permute.xlu0 %2565
      %2568 = vset.pattern.permute.xlu0 1
      %2569 = vperm.xlu0 %2568, %v2492
      %v2570 = vpop.permute.xlu0 %2569
      %2572 = vset.pattern.permute.xlu0 1
      %2573 = vperm.xlu0 %2572, %v2493
      %v2574 = vpop.permute.xlu0 %2573
      %2576 = vset.pattern.permute.xlu0 1
      %2577 = vperm.xlu0 %2576, %v2494
      %v2578 = vpop.permute.xlu0 %2577
      %2580 = vset.pattern.permute.xlu0 1
      %2581 = vperm.xlu0 %2580, %v2495
      %v2582 = vpop.permute.xlu0 %2581
      %2584 = vset.pattern.permute.xlu0 1
      %2585 = vperm.xlu0 %2584, %v2496
      %v2586 = vpop.permute.xlu0 %2585
      %2588 = vset.pattern.permute.xlu0 1
      %2589 = vperm.xlu0 %2588, %v2497
      %v2590 = vpop.permute.xlu0 %2589
      %v2592 = vlaneseq
      %v2593 = vshrl.u32 %v2592, 7
      %v2594 = vsub.s32 1, %v2593
      %v2595 = vrot.slane %v2499, %v2594
      %v2596 = vmul.f32 %v2562, %v2595
      %v2597 = vmul.f32 %v2566, %v2595
      %v2598 = vmul.f32 %v2570, %v2595
      %v2599 = vmul.f32 %v2574, %v2595
      %v2600 = vmul.f32 %v2578, %v2595
      %v2601 = vmul.f32 %v2582, %v2595
      %v2602 = vmul.f32 %v2586, %v2595
      %v2603 = vmul.f32 %v2590, %v2595
      %v2604 = vadd.f32 %v2552, %v2596
      %v2605 = vadd.f32 %v2553, %v2597
      %v2606 = vadd.f32 %v2554, %v2598
      %v2607 = vadd.f32 %v2555, %v2599
      %v2608 = vadd.f32 %v2556, %v2600
      %v2609 = vadd.f32 %v2557, %v2601
      %v2610 = vadd.f32 %v2558, %v2602
      %v2611 = vadd.f32 %v2559, %v2603
      %2612 = vset.pattern.permute.xlu0 2
      %2613 = vperm.xlu0 %2612, %v2490
      %v2614 = vpop.permute.xlu0 %2613
      %2616 = vset.pattern.permute.xlu0 2
      %2617 = vperm.xlu0 %2616, %v2491
      %v2618 = vpop.permute.xlu0 %2617
      %2620 = vset.pattern.permute.xlu0 2
      %2621 = vperm.xlu0 %2620, %v2492
      %v2622 = vpop.permute.xlu0 %2621
      %2624 = vset.pattern.permute.xlu0 2
      %2625 = vperm.xlu0 %2624, %v2493
      %v2626 = vpop.permute.xlu0 %2625
      %2628 = vset.pattern.permute.xlu0 2
      %2629 = vperm.xlu0 %2628, %v2494
      %v2630 = vpop.permute.xlu0 %2629
      %2632 = vset.pattern.permute.xlu0 2
      %2633 = vperm.xlu0 %2632, %v2495
      %v2634 = vpop.permute.xlu0 %2633
      %2636 = vset.pattern.permute.xlu0 2
      %2637 = vperm.xlu0 %2636, %v2496
      %v2638 = vpop.permute.xlu0 %2637
      %2640 = vset.pattern.permute.xlu0 2
      %2641 = vperm.xlu0 %2640, %v2497
      %v2642 = vpop.permute.xlu0 %2641
      %v2644 = vlaneseq
      %v2645 = vshrl.u32 %v2644, 7
      %v2646 = vsub.s32 2, %v2645
      %v2647 = vrot.slane %v2499, %v2646
      %v2648 = vmul.f32 %v2614, %v2647
      %v2649 = vmul.f32 %v2618, %v2647
      %v2650 = vmul.f32 %v2622, %v2647
      %v2651 = vmul.f32 %v2626, %v2647
      %v2652 = vmul.f32 %v2630, %v2647
      %v2653 = vmul.f32 %v2634, %v2647
      %v2654 = vmul.f32 %v2638, %v2647
      %v2655 = vmul.f32 %v2642, %v2647
      %v2656 = vadd.f32 %v2604, %v2648
      %v2657 = vadd.f32 %v2605, %v2649
      %v2658 = vadd.f32 %v2606, %v2650
      %v2659 = vadd.f32 %v2607, %v2651
      %v2660 = vadd.f32 %v2608, %v2652
      %v2661 = vadd.f32 %v2609, %v2653
      %v2662 = vadd.f32 %v2610, %v2654
      %v2663 = vadd.f32 %v2611, %v2655
      %2664 = vset.pattern.permute.xlu0 3
      %2665 = vperm.xlu0 %2664, %v2490
      %v2666 = vpop.permute.xlu0 %2665
      %2668 = vset.pattern.permute.xlu0 3
      %2669 = vperm.xlu0 %2668, %v2491
      %v2670 = vpop.permute.xlu0 %2669
      %2672 = vset.pattern.permute.xlu0 3
      %2673 = vperm.xlu0 %2672, %v2492
      %v2674 = vpop.permute.xlu0 %2673
      %2676 = vset.pattern.permute.xlu0 3
      %2677 = vperm.xlu0 %2676, %v2493
      %v2678 = vpop.permute.xlu0 %2677
      %2680 = vset.pattern.permute.xlu0 3
      %2681 = vperm.xlu0 %2680, %v2494
      %v2682 = vpop.permute.xlu0 %2681
      %2684 = vset.pattern.permute.xlu0 3
      %2685 = vperm.xlu0 %2684, %v2495
      %v2686 = vpop.permute.xlu0 %2685
      %2688 = vset.pattern.permute.xlu0 3
      %2689 = vperm.xlu0 %2688, %v2496
      %v2690 = vpop.permute.xlu0 %2689
      %2692 = vset.pattern.permute.xlu0 3
      %2693 = vperm.xlu0 %2692, %v2497
      %v2694 = vpop.permute.xlu0 %2693
      %v2696 = vlaneseq
      %v2697 = vshrl.u32 %v2696, 7
      %v2698 = vsub.s32 3, %v2697
      %v2699 = vrot.slane %v2499, %v2698
      %v2700 = vmul.f32 %v2666, %v2699
      %v2701 = vmul.f32 %v2670, %v2699
      %v2702 = vmul.f32 %v2674, %v2699
      %v2703 = vmul.f32 %v2678, %v2699
      %v2704 = vmul.f32 %v2682, %v2699
      %v2705 = vmul.f32 %v2686, %v2699
      %v2706 = vmul.f32 %v2690, %v2699
      %v2707 = vmul.f32 %v2694, %v2699
      %v2708 = vadd.f32 %v2656, %v2700
      %v2709 = vadd.f32 %v2657, %v2701
      %v2710 = vadd.f32 %v2658, %v2702
      %v2711 = vadd.f32 %v2659, %v2703
      %v2712 = vadd.f32 %v2660, %v2704
      %v2713 = vadd.f32 %v2661, %v2705
      %v2714 = vadd.f32 %v2662, %v2706
      %v2715 = vadd.f32 %v2663, %v2707
      %2716 = vset.pattern.permute.xlu0 4
      %2717 = vperm.xlu0 %2716, %v2490
      %v2718 = vpop.permute.xlu0 %2717
      %2720 = vset.pattern.permute.xlu0 4
      %2721 = vperm.xlu0 %2720, %v2491
      %v2722 = vpop.permute.xlu0 %2721
      %2724 = vset.pattern.permute.xlu0 4
      %2725 = vperm.xlu0 %2724, %v2492
      %v2726 = vpop.permute.xlu0 %2725
      %2728 = vset.pattern.permute.xlu0 4
      %2729 = vperm.xlu0 %2728, %v2493
      %v2730 = vpop.permute.xlu0 %2729
      %2732 = vset.pattern.permute.xlu0 4
      %2733 = vperm.xlu0 %2732, %v2494
      %v2734 = vpop.permute.xlu0 %2733
      %2736 = vset.pattern.permute.xlu0 4
      %2737 = vperm.xlu0 %2736, %v2495
      %v2738 = vpop.permute.xlu0 %2737
      %2740 = vset.pattern.permute.xlu0 4
      %2741 = vperm.xlu0 %2740, %v2496
      %v2742 = vpop.permute.xlu0 %2741
      %2744 = vset.pattern.permute.xlu0 4
      %2745 = vperm.xlu0 %2744, %v2497
      %v2746 = vpop.permute.xlu0 %2745
      %v2748 = vlaneseq
      %v2749 = vshrl.u32 %v2748, 7
      %v2750 = vsub.s32 4, %v2749
      %v2751 = vrot.slane %v2499, %v2750
      %v2752 = vmul.f32 %v2718, %v2751
      %v2753 = vmul.f32 %v2722, %v2751
      %v2754 = vmul.f32 %v2726, %v2751
      %v2755 = vmul.f32 %v2730, %v2751
      %v2756 = vmul.f32 %v2734, %v2751
      %v2757 = vmul.f32 %v2738, %v2751
      %v2758 = vmul.f32 %v2742, %v2751
      %v2759 = vmul.f32 %v2746, %v2751
      %v2760 = vadd.f32 %v2708, %v2752
      %v2761 = vadd.f32 %v2709, %v2753
      %v2762 = vadd.f32 %v2710, %v2754
      %v2763 = vadd.f32 %v2711, %v2755
      %v2764 = vadd.f32 %v2712, %v2756
      %v2765 = vadd.f32 %v2713, %v2757
      %v2766 = vadd.f32 %v2714, %v2758
      %v2767 = vadd.f32 %v2715, %v2759
      %2768 = vset.pattern.permute.xlu0 5
      %2769 = vperm.xlu0 %2768, %v2490
      %v2770 = vpop.permute.xlu0 %2769
      %2772 = vset.pattern.permute.xlu0 5
      %2773 = vperm.xlu0 %2772, %v2491
      %v2774 = vpop.permute.xlu0 %2773
      %2776 = vset.pattern.permute.xlu0 5
      %2777 = vperm.xlu0 %2776, %v2492
      %v2778 = vpop.permute.xlu0 %2777
      %2780 = vset.pattern.permute.xlu0 5
      %2781 = vperm.xlu0 %2780, %v2493
      %v2782 = vpop.permute.xlu0 %2781
      %2784 = vset.pattern.permute.xlu0 5
      %2785 = vperm.xlu0 %2784, %v2494
      %v2786 = vpop.permute.xlu0 %2785
      %2788 = vset.pattern.permute.xlu0 5
      %2789 = vperm.xlu0 %2788, %v2495
      %v2790 = vpop.permute.xlu0 %2789
      %2792 = vset.pattern.permute.xlu0 5
      %2793 = vperm.xlu0 %2792, %v2496
      %v2794 = vpop.permute.xlu0 %2793
      %2796 = vset.pattern.permute.xlu0 5
      %2797 = vperm.xlu0 %2796, %v2497
      %v2798 = vpop.permute.xlu0 %2797
      %v2800 = vlaneseq
      %v2801 = vshrl.u32 %v2800, 7
      %v2802 = vsub.s32 5, %v2801
      %v2803 = vrot.slane %v2499, %v2802
      %v2804 = vmul.f32 %v2770, %v2803
      %v2805 = vmul.f32 %v2774, %v2803
      %v2806 = vmul.f32 %v2778, %v2803
      %v2807 = vmul.f32 %v2782, %v2803
      %v2808 = vmul.f32 %v2786, %v2803
      %v2809 = vmul.f32 %v2790, %v2803
      %v2810 = vmul.f32 %v2794, %v2803
      %v2811 = vmul.f32 %v2798, %v2803
      %v2812 = vadd.f32 %v2760, %v2804
      %v2813 = vadd.f32 %v2761, %v2805
      %v2814 = vadd.f32 %v2762, %v2806
      %v2815 = vadd.f32 %v2763, %v2807
      %v2816 = vadd.f32 %v2764, %v2808
      %v2817 = vadd.f32 %v2765, %v2809
      %v2818 = vadd.f32 %v2766, %v2810
      %v2819 = vadd.f32 %v2767, %v2811
      %2820 = vset.pattern.permute.xlu0 6
      %2821 = vperm.xlu0 %2820, %v2490
      %v2822 = vpop.permute.xlu0 %2821
      %2824 = vset.pattern.permute.xlu0 6
      %2825 = vperm.xlu0 %2824, %v2491
      %v2826 = vpop.permute.xlu0 %2825
      %2828 = vset.pattern.permute.xlu0 6
      %2829 = vperm.xlu0 %2828, %v2492
      %v2830 = vpop.permute.xlu0 %2829
      %2832 = vset.pattern.permute.xlu0 6
      %2833 = vperm.xlu0 %2832, %v2493
      %v2834 = vpop.permute.xlu0 %2833
      %2836 = vset.pattern.permute.xlu0 6
      %2837 = vperm.xlu0 %2836, %v2494
      %v2838 = vpop.permute.xlu0 %2837
      %2840 = vset.pattern.permute.xlu0 6
      %2841 = vperm.xlu0 %2840, %v2495
      %v2842 = vpop.permute.xlu0 %2841
      %2844 = vset.pattern.permute.xlu0 6
      %2845 = vperm.xlu0 %2844, %v2496
      %v2846 = vpop.permute.xlu0 %2845
      %2848 = vset.pattern.permute.xlu0 6
      %2849 = vperm.xlu0 %2848, %v2497
      %v2850 = vpop.permute.xlu0 %2849
      %v2852 = vlaneseq
      %v2853 = vshrl.u32 %v2852, 7
      %v2854 = vsub.s32 6, %v2853
      %v2855 = vrot.slane %v2499, %v2854
      %v2856 = vmul.f32 %v2822, %v2855
      %v2857 = vmul.f32 %v2826, %v2855
      %v2858 = vmul.f32 %v2830, %v2855
      %v2859 = vmul.f32 %v2834, %v2855
      %v2860 = vmul.f32 %v2838, %v2855
      %v2861 = vmul.f32 %v2842, %v2855
      %v2862 = vmul.f32 %v2846, %v2855
      %v2863 = vmul.f32 %v2850, %v2855
      %v2864 = vadd.f32 %v2812, %v2856
      %v2865 = vadd.f32 %v2813, %v2857
      %v2866 = vadd.f32 %v2814, %v2858
      %v2867 = vadd.f32 %v2815, %v2859
      %v2868 = vadd.f32 %v2816, %v2860
      %v2869 = vadd.f32 %v2817, %v2861
      %v2870 = vadd.f32 %v2818, %v2862
      %v2871 = vadd.f32 %v2819, %v2863
      %2872 = vset.pattern.permute.xlu0 7
      %2873 = vperm.xlu0 %2872, %v2490
      %v2874 = vpop.permute.xlu0 %2873
      %2876 = vset.pattern.permute.xlu0 7
      %2877 = vperm.xlu0 %2876, %v2491
      %v2878 = vpop.permute.xlu0 %2877
      %2880 = vset.pattern.permute.xlu0 7
      %2881 = vperm.xlu0 %2880, %v2492
      %v2882 = vpop.permute.xlu0 %2881
      %2884 = vset.pattern.permute.xlu0 7
      %2885 = vperm.xlu0 %2884, %v2493
      %v2886 = vpop.permute.xlu0 %2885
      %2888 = vset.pattern.permute.xlu0 7
      %2889 = vperm.xlu0 %2888, %v2494
      %v2890 = vpop.permute.xlu0 %2889
      %2892 = vset.pattern.permute.xlu0 7
      %2893 = vperm.xlu0 %2892, %v2495
      %v2894 = vpop.permute.xlu0 %2893
      %2896 = vset.pattern.permute.xlu0 7
      %2897 = vperm.xlu0 %2896, %v2496
      %v2898 = vpop.permute.xlu0 %2897
      %2900 = vset.pattern.permute.xlu0 7
      %2901 = vperm.xlu0 %2900, %v2497
      %v2902 = vpop.permute.xlu0 %2901
      %v2904 = vlaneseq
      %v2905 = vshrl.u32 %v2904, 7
      %v2906 = vsub.s32 7, %v2905
      %v2907 = vrot.slane %v2499, %v2906
      %v2908 = vmul.f32 %v2874, %v2907
      %v2909 = vmul.f32 %v2878, %v2907
      %v2910 = vmul.f32 %v2882, %v2907
      %v2911 = vmul.f32 %v2886, %v2907
      %v2912 = vmul.f32 %v2890, %v2907
      %v2913 = vmul.f32 %v2894, %v2907
      %v2914 = vmul.f32 %v2898, %v2907
      %v2915 = vmul.f32 %v2902, %v2907
      %v2916 = vadd.f32 %v2864, %v2908
      %v2917 = vadd.f32 %v2865, %v2909
      %v2918 = vadd.f32 %v2866, %v2910
      %v2919 = vadd.f32 %v2867, %v2911
      %v2920 = vadd.f32 %v2868, %v2912
      %v2921 = vadd.f32 %v2869, %v2913
      %v2922 = vadd.f32 %v2870, %v2914
      %v2923 = vadd.f32 %v2871, %v2915
      %s2924 = scalar_lea.vmem [#allocation2], 32
      %v2925 = vld [vmem:[%s2924] sm:$0xff]
      %v2926 = vld [vmem:[%s2924 + $0x10] sm:$0xff]
      %v2927 = vld [vmem:[%s2924 + $0x20] sm:$0xff]
      %v2928 = vld [vmem:[%s2924 + $0x30] sm:$0xff]
      %v2929 = vld [vmem:[%s2924 + $0x40] sm:$0xff]
      %v2930 = vld [vmem:[%s2924 + $0x50] sm:$0xff]
      %v2931 = vld [vmem:[%s2924 + $0x60] sm:$0xff]
      %v2932 = vld [vmem:[%s2924 + $0x70] sm:$0xff]
      %s2933 = scalar_lea.vmem %s3, 48
      %v2934 = vld [vmem:[%s2933] sm:$0xff]
      %2936 = vset.pattern.permute.xlu0 0
      %2937 = vperm.xlu0 %2936, %v2925
      %v2938 = vpop.permute.xlu0 %2937
      %2941 = vset.pattern.permute.xlu0 0
      %2942 = vperm.xlu0 %2941, %v2926
      %v2943 = vpop.permute.xlu0 %2942
      %2946 = vset.pattern.permute.xlu0 0
      %2947 = vperm.xlu0 %2946, %v2927
      %v2948 = vpop.permute.xlu0 %2947
      %2951 = vset.pattern.permute.xlu0 0
      %2952 = vperm.xlu0 %2951, %v2928
      %v2953 = vpop.permute.xlu0 %2952
      %2956 = vset.pattern.permute.xlu0 0
      %2957 = vperm.xlu0 %2956, %v2929
      %v2958 = vpop.permute.xlu0 %2957
      %2961 = vset.pattern.permute.xlu0 0
      %2962 = vperm.xlu0 %2961, %v2930
      %v2963 = vpop.permute.xlu0 %2962
      %2966 = vset.pattern.permute.xlu0 0
      %2967 = vperm.xlu0 %2966, %v2931
      %v2968 = vpop.permute.xlu0 %2967
      %2971 = vset.pattern.permute.xlu0 0
      %2972 = vperm.xlu0 %2971, %v2932
      %v2973 = vpop.permute.xlu0 %2972
      %v2975 = vlaneseq
      %v2976 = vshrl.u32 %v2975, 7
      %v2977 = vsub.s32 0, %v2976
      %v2978 = vrot.slane %v2934, %v2977
      %v2979 = vmul.f32 %v2938, %v2978
      %v2980 = vmul.f32 %v2943, %v2978
      %v2981 = vmul.f32 %v2948, %v2978
      %v2982 = vmul.f32 %v2953, %v2978
      %v2983 = vmul.f32 %v2958, %v2978
      %v2984 = vmul.f32 %v2963, %v2978
      %v2985 = vmul.f32 %v2968, %v2978
      %v2986 = vmul.f32 %v2973, %v2978
      %v2987 = vadd.f32 %v2916, %v2979
      %v2988 = vadd.f32 %v2917, %v2980
      %v2989 = vadd.f32 %v2918, %v2981
      %v2990 = vadd.f32 %v2919, %v2982
      %v2991 = vadd.f32 %v2920, %v2983
      %v2992 = vadd.f32 %v2921, %v2984
      %v2993 = vadd.f32 %v2922, %v2985
      %v2994 = vadd.f32 %v2923, %v2986
      %2995 = vset.pattern.permute.xlu0 1
      %2996 = vperm.xlu0 %2995, %v2925
      %v2997 = vpop.permute.xlu0 %2996
      %2999 = vset.pattern.permute.xlu0 1
      %3000 = vperm.xlu0 %2999, %v2926
      %v3001 = vpop.permute.xlu0 %3000
      %3003 = vset.pattern.permute.xlu0 1
      %3004 = vperm.xlu0 %3003, %v2927
      %v3005 = vpop.permute.xlu0 %3004
      %3007 = vset.pattern.permute.xlu0 1
      %3008 = vperm.xlu0 %3007, %v2928
      %v3009 = vpop.permute.xlu0 %3008
      %3011 = vset.pattern.permute.xlu0 1
      %3012 = vperm.xlu0 %3011, %v2929
      %v3013 = vpop.permute.xlu0 %3012
      %3015 = vset.pattern.permute.xlu0 1
      %3016 = vperm.xlu0 %3015, %v2930
      %v3017 = vpop.permute.xlu0 %3016
      %3019 = vset.pattern.permute.xlu0 1
      %3020 = vperm.xlu0 %3019, %v2931
      %v3021 = vpop.permute.xlu0 %3020
      %3023 = vset.pattern.permute.xlu0 1
      %3024 = vperm.xlu0 %3023, %v2932
      %v3025 = vpop.permute.xlu0 %3024
      %v3027 = vlaneseq
      %v3028 = vshrl.u32 %v3027, 7
      %v3029 = vsub.s32 1, %v3028
      %v3030 = vrot.slane %v2934, %v3029
      %v3031 = vmul.f32 %v2997, %v3030
      %v3032 = vmul.f32 %v3001, %v3030
      %v3033 = vmul.f32 %v3005, %v3030
      %v3034 = vmul.f32 %v3009, %v3030
      %v3035 = vmul.f32 %v3013, %v3030
      %v3036 = vmul.f32 %v3017, %v3030
      %v3037 = vmul.f32 %v3021, %v3030
      %v3038 = vmul.f32 %v3025, %v3030
      %v3039 = vadd.f32 %v2987, %v3031
      %v3040 = vadd.f32 %v2988, %v3032
      %v3041 = vadd.f32 %v2989, %v3033
      %v3042 = vadd.f32 %v2990, %v3034
      %v3043 = vadd.f32 %v2991, %v3035
      %v3044 = vadd.f32 %v2992, %v3036
      %v3045 = vadd.f32 %v2993, %v3037
      %v3046 = vadd.f32 %v2994, %v3038
      %3047 = vset.pattern.permute.xlu0 2
      %3048 = vperm.xlu0 %3047, %v2925
      %v3049 = vpop.permute.xlu0 %3048
      %3051 = vset.pattern.permute.xlu0 2
      %3052 = vperm.xlu0 %3051, %v2926
      %v3053 = vpop.permute.xlu0 %3052
      %3055 = vset.pattern.permute.xlu0 2
      %3056 = vperm.xlu0 %3055, %v2927
      %v3057 = vpop.permute.xlu0 %3056
      %3059 = vset.pattern.permute.xlu0 2
      %3060 = vperm.xlu0 %3059, %v2928
      %v3061 = vpop.permute.xlu0 %3060
      %3063 = vset.pattern.permute.xlu0 2
      %3064 = vperm.xlu0 %3063, %v2929
      %v3065 = vpop.permute.xlu0 %3064
      %3067 = vset.pattern.permute.xlu0 2
      %3068 = vperm.xlu0 %3067, %v2930
      %v3069 = vpop.permute.xlu0 %3068
      %3071 = vset.pattern.permute.xlu0 2
      %3072 = vperm.xlu0 %3071, %v2931
      %v3073 = vpop.permute.xlu0 %3072
      %3075 = vset.pattern.permute.xlu0 2
      %3076 = vperm.xlu0 %3075, %v2932
      %v3077 = vpop.permute.xlu0 %3076
      %v3079 = vlaneseq
      %v3080 = vshrl.u32 %v3079, 7
      %v3081 = vsub.s32 2, %v3080
      %v3082 = vrot.slane %v2934, %v3081
      %v3083 = vmul.f32 %v3049, %v3082
      %v3084 = vmul.f32 %v3053, %v3082
      %v3085 = vmul.f32 %v3057, %v3082
      %v3086 = vmul.f32 %v3061, %v3082
      %v3087 = vmul.f32 %v3065, %v3082
      %v3088 = vmul.f32 %v3069, %v3082
      %v3089 = vmul.f32 %v3073, %v3082
      %v3090 = vmul.f32 %v3077, %v3082
      %v3091 = vadd.f32 %v3039, %v3083
      %v3092 = vadd.f32 %v3040, %v3084
      %v3093 = vadd.f32 %v3041, %v3085
      %v3094 = vadd.f32 %v3042, %v3086
      %v3095 = vadd.f32 %v3043, %v3087
      %v3096 = vadd.f32 %v3044, %v3088
      %v3097 = vadd.f32 %v3045, %v3089
      %v3098 = vadd.f32 %v3046, %v3090
      %3099 = vset.pattern.permute.xlu0 3
      %3100 = vperm.xlu0 %3099, %v2925
      %v3101 = vpop.permute.xlu0 %3100
      %3103 = vset.pattern.permute.xlu0 3
      %3104 = vperm.xlu0 %3103, %v2926
      %v3105 = vpop.permute.xlu0 %3104
      %3107 = vset.pattern.permute.xlu0 3
      %3108 = vperm.xlu0 %3107, %v2927
      %v3109 = vpop.permute.xlu0 %3108
      %3111 = vset.pattern.permute.xlu0 3
      %3112 = vperm.xlu0 %3111, %v2928
      %v3113 = vpop.permute.xlu0 %3112
      %3115 = vset.pattern.permute.xlu0 3
      %3116 = vperm.xlu0 %3115, %v2929
      %v3117 = vpop.permute.xlu0 %3116
      %3119 = vset.pattern.permute.xlu0 3
      %3120 = vperm.xlu0 %3119, %v2930
      %v3121 = vpop.permute.xlu0 %3120
      %3123 = vset.pattern.permute.xlu0 3
      %3124 = vperm.xlu0 %3123, %v2931
      %v3125 = vpop.permute.xlu0 %3124
      %3127 = vset.pattern.permute.xlu0 3
      %3128 = vperm.xlu0 %3127, %v2932
      %v3129 = vpop.permute.xlu0 %3128
      %v3131 = vlaneseq
      %v3132 = vshrl.u32 %v3131, 7
      %v3133 = vsub.s32 3, %v3132
      %v3134 = vrot.slane %v2934, %v3133
      %v3135 = vmul.f32 %v3101, %v3134
      %v3136 = vmul.f32 %v3105, %v3134
      %v3137 = vmul.f32 %v3109, %v3134
      %v3138 = vmul.f32 %v3113, %v3134
      %v3139 = vmul.f32 %v3117, %v3134
      %v3140 = vmul.f32 %v3121, %v3134
      %v3141 = vmul.f32 %v3125, %v3134
      %v3142 = vmul.f32 %v3129, %v3134
      %v3143 = vadd.f32 %v3091, %v3135
      %v3144 = vadd.f32 %v3092, %v3136
      %v3145 = vadd.f32 %v3093, %v3137
      %v3146 = vadd.f32 %v3094, %v3138
      %v3147 = vadd.f32 %v3095, %v3139
      %v3148 = vadd.f32 %v3096, %v3140
      %v3149 = vadd.f32 %v3097, %v3141
      %v3150 = vadd.f32 %v3098, %v3142
      %3151 = vset.pattern.permute.xlu0 4
      %3152 = vperm.xlu0 %3151, %v2925
      %v3153 = vpop.permute.xlu0 %3152
      %3155 = vset.pattern.permute.xlu0 4
      %3156 = vperm.xlu0 %3155, %v2926
      %v3157 = vpop.permute.xlu0 %3156
      %3159 = vset.pattern.permute.xlu0 4
      %3160 = vperm.xlu0 %3159, %v2927
      %v3161 = vpop.permute.xlu0 %3160
      %3163 = vset.pattern.permute.xlu0 4
      %3164 = vperm.xlu0 %3163, %v2928
      %v3165 = vpop.permute.xlu0 %3164
      %3167 = vset.pattern.permute.xlu0 4
      %3168 = vperm.xlu0 %3167, %v2929
      %v3169 = vpop.permute.xlu0 %3168
      %3171 = vset.pattern.permute.xlu0 4
      %3172 = vperm.xlu0 %3171, %v2930
      %v3173 = vpop.permute.xlu0 %3172
      %3175 = vset.pattern.permute.xlu0 4
      %3176 = vperm.xlu0 %3175, %v2931
      %v3177 = vpop.permute.xlu0 %3176
      %3179 = vset.pattern.permute.xlu0 4
      %3180 = vperm.xlu0 %3179, %v2932
      %v3181 = vpop.permute.xlu0 %3180
      %v3183 = vlaneseq
      %v3184 = vshrl.u32 %v3183, 7
      %v3185 = vsub.s32 4, %v3184
      %v3186 = vrot.slane %v2934, %v3185
      %v3187 = vmul.f32 %v3153, %v3186
      %v3188 = vmul.f32 %v3157, %v3186
      %v3189 = vmul.f32 %v3161, %v3186
      %v3190 = vmul.f32 %v3165, %v3186
      %v3191 = vmul.f32 %v3169, %v3186
      %v3192 = vmul.f32 %v3173, %v3186
      %v3193 = vmul.f32 %v3177, %v3186
      %v3194 = vmul.f32 %v3181, %v3186
      %v3195 = vadd.f32 %v3143, %v3187
      %v3196 = vadd.f32 %v3144, %v3188
      %v3197 = vadd.f32 %v3145, %v3189
      %v3198 = vadd.f32 %v3146, %v3190
      %v3199 = vadd.f32 %v3147, %v3191
      %v3200 = vadd.f32 %v3148, %v3192
      %v3201 = vadd.f32 %v3149, %v3193
      %v3202 = vadd.f32 %v3150, %v3194
      %3203 = vset.pattern.permute.xlu0 5
      %3204 = vperm.xlu0 %3203, %v2925
      %v3205 = vpop.permute.xlu0 %3204
      %3207 = vset.pattern.permute.xlu0 5
      %3208 = vperm.xlu0 %3207, %v2926
      %v3209 = vpop.permute.xlu0 %3208
      %3211 = vset.pattern.permute.xlu0 5
      %3212 = vperm.xlu0 %3211, %v2927
      %v3213 = vpop.permute.xlu0 %3212
      %3215 = vset.pattern.permute.xlu0 5
      %3216 = vperm.xlu0 %3215, %v2928
      %v3217 = vpop.permute.xlu0 %3216
      %3219 = vset.pattern.permute.xlu0 5
      %3220 = vperm.xlu0 %3219, %v2929
      %v3221 = vpop.permute.xlu0 %3220
      %3223 = vset.pattern.permute.xlu0 5
      %3224 = vperm.xlu0 %3223, %v2930
      %v3225 = vpop.permute.xlu0 %3224
      %3227 = vset.pattern.permute.xlu0 5
      %3228 = vperm.xlu0 %3227, %v2931
      %v3229 = vpop.permute.xlu0 %3228
      %3231 = vset.pattern.permute.xlu0 5
      %3232 = vperm.xlu0 %3231, %v2932
      %v3233 = vpop.permute.xlu0 %3232
      %v3235 = vlaneseq
      %v3236 = vshrl.u32 %v3235, 7
      %v3237 = vsub.s32 5, %v3236
      %v3238 = vrot.slane %v2934, %v3237
      %v3239 = vmul.f32 %v3205, %v3238
      %v3240 = vmul.f32 %v3209, %v3238
      %v3241 = vmul.f32 %v3213, %v3238
      %v3242 = vmul.f32 %v3217, %v3238
      %v3243 = vmul.f32 %v3221, %v3238
      %v3244 = vmul.f32 %v3225, %v3238
      %v3245 = vmul.f32 %v3229, %v3238
      %v3246 = vmul.f32 %v3233, %v3238
      %v3247 = vadd.f32 %v3195, %v3239
      %v3248 = vadd.f32 %v3196, %v3240
      %v3249 = vadd.f32 %v3197, %v3241
      %v3250 = vadd.f32 %v3198, %v3242
      %v3251 = vadd.f32 %v3199, %v3243
      %v3252 = vadd.f32 %v3200, %v3244
      %v3253 = vadd.f32 %v3201, %v3245
      %v3254 = vadd.f32 %v3202, %v3246
      %3255 = vset.pattern.permute.xlu0 6
      %3256 = vperm.xlu0 %3255, %v2925
      %v3257 = vpop.permute.xlu0 %3256
      %3259 = vset.pattern.permute.xlu0 6
      %3260 = vperm.xlu0 %3259, %v2926
      %v3261 = vpop.permute.xlu0 %3260
      %3263 = vset.pattern.permute.xlu0 6
      %3264 = vperm.xlu0 %3263, %v2927
      %v3265 = vpop.permute.xlu0 %3264
      %3267 = vset.pattern.permute.xlu0 6
      %3268 = vperm.xlu0 %3267, %v2928
      %v3269 = vpop.permute.xlu0 %3268
      %3271 = vset.pattern.permute.xlu0 6
      %3272 = vperm.xlu0 %3271, %v2929
      %v3273 = vpop.permute.xlu0 %3272
      %3275 = vset.pattern.permute.xlu0 6
      %3276 = vperm.xlu0 %3275, %v2930
      %v3277 = vpop.permute.xlu0 %3276
      %3279 = vset.pattern.permute.xlu0 6
      %3280 = vperm.xlu0 %3279, %v2931
      %v3281 = vpop.permute.xlu0 %3280
      %3283 = vset.pattern.permute.xlu0 6
      %3284 = vperm.xlu0 %3283, %v2932
      %v3285 = vpop.permute.xlu0 %3284
      %v3287 = vlaneseq
      %v3288 = vshrl.u32 %v3287, 7
      %v3289 = vsub.s32 6, %v3288
      %v3290 = vrot.slane %v2934, %v3289
      %v3291 = vmul.f32 %v3257, %v3290
      %v3292 = vmul.f32 %v3261, %v3290
      %v3293 = vmul.f32 %v3265, %v3290
      %v3294 = vmul.f32 %v3269, %v3290
      %v3295 = vmul.f32 %v3273, %v3290
      %v3296 = vmul.f32 %v3277, %v3290
      %v3297 = vmul.f32 %v3281, %v3290
      %v3298 = vmul.f32 %v3285, %v3290
      %v3299 = vadd.f32 %v3247, %v3291
      %v3300 = vadd.f32 %v3248, %v3292
      %v3301 = vadd.f32 %v3249, %v3293
      %v3302 = vadd.f32 %v3250, %v3294
      %v3303 = vadd.f32 %v3251, %v3295
      %v3304 = vadd.f32 %v3252, %v3296
      %v3305 = vadd.f32 %v3253, %v3297
      %v3306 = vadd.f32 %v3254, %v3298
      %3307 = vset.pattern.permute.xlu0 7
      %3308 = vperm.xlu0 %3307, %v2925
      %v3309 = vpop.permute.xlu0 %3308
      %3311 = vset.pattern.permute.xlu0 7
      %3312 = vperm.xlu0 %3311, %v2926
      %v3313 = vpop.permute.xlu0 %3312
      %3315 = vset.pattern.permute.xlu0 7
      %3316 = vperm.xlu0 %3315, %v2927
      %v3317 = vpop.permute.xlu0 %3316
      %3319 = vset.pattern.permute.xlu0 7
      %3320 = vperm.xlu0 %3319, %v2928
      %v3321 = vpop.permute.xlu0 %3320
      %3323 = vset.pattern.permute.xlu0 7
      %3324 = vperm.xlu0 %3323, %v2929
      %v3325 = vpop.permute.xlu0 %3324
      %3327 = vset.pattern.permute.xlu0 7
      %3328 = vperm.xlu0 %3327, %v2930
      %v3329 = vpop.permute.xlu0 %3328
      %3331 = vset.pattern.permute.xlu0 7
      %3332 = vperm.xlu0 %3331, %v2931
      %v3333 = vpop.permute.xlu0 %3332
      %3335 = vset.pattern.permute.xlu0 7
      %3336 = vperm.xlu0 %3335, %v2932
      %v3337 = vpop.permute.xlu0 %3336
      %v3339 = vlaneseq
      %v3340 = vshrl.u32 %v3339, 7
      %v3341 = vsub.s32 7, %v3340
      %v3342 = vrot.slane %v2934, %v3341
      %v3343 = vmul.f32 %v3309, %v3342
      %v3344 = vmul.f32 %v3313, %v3342
      %v3345 = vmul.f32 %v3317, %v3342
      %v3346 = vmul.f32 %v3321, %v3342
      %v3347 = vmul.f32 %v3325, %v3342
      %v3348 = vmul.f32 %v3329, %v3342
      %v3349 = vmul.f32 %v3333, %v3342
      %v3350 = vmul.f32 %v3337, %v3342
      %v3351 = vadd.f32 %v3299, %v3343
      %v3352 = vadd.f32 %v3300, %v3344
      %v3353 = vadd.f32 %v3301, %v3345
      %v3354 = vadd.f32 %v3302, %v3346
      %v3355 = vadd.f32 %v3303, %v3347
      %v3356 = vadd.f32 %v3304, %v3348
      %v3357 = vadd.f32 %v3305, %v3349
      %v3358 = vadd.f32 %v3306, %v3350
      %v3359 = vld [vmem:[%s2924 + $0x1] sm:$0xff]
      %v3360 = vld [vmem:[%s2924 + $0x11] sm:$0xff]
      %v3361 = vld [vmem:[%s2924 + $0x21] sm:$0xff]
      %v3362 = vld [vmem:[%s2924 + $0x31] sm:$0xff]
      %v3363 = vld [vmem:[%s2924 + $0x41] sm:$0xff]
      %v3364 = vld [vmem:[%s2924 + $0x51] sm:$0xff]
      %v3365 = vld [vmem:[%s2924 + $0x61] sm:$0xff]
      %v3366 = vld [vmem:[%s2924 + $0x71] sm:$0xff]
      %s3367 = scalar_lea.vmem %s3, 56
      %v3368 = vld [vmem:[%s3367] sm:$0xff]
      %3370 = vset.pattern.permute.xlu0 0
      %3371 = vperm.xlu0 %3370, %v3359
      %v3372 = vpop.permute.xlu0 %3371
      %3375 = vset.pattern.permute.xlu0 0
      %3376 = vperm.xlu0 %3375, %v3360
      %v3377 = vpop.permute.xlu0 %3376
      %3380 = vset.pattern.permute.xlu0 0
      %3381 = vperm.xlu0 %3380, %v3361
      %v3382 = vpop.permute.xlu0 %3381
      %3385 = vset.pattern.permute.xlu0 0
      %3386 = vperm.xlu0 %3385, %v3362
      %v3387 = vpop.permute.xlu0 %3386
      %3390 = vset.pattern.permute.xlu0 0
      %3391 = vperm.xlu0 %3390, %v3363
      %v3392 = vpop.permute.xlu0 %3391
      %3395 = vset.pattern.permute.xlu0 0
      %3396 = vperm.xlu0 %3395, %v3364
      %v3397 = vpop.permute.xlu0 %3396
      %3400 = vset.pattern.permute.xlu0 0
      %3401 = vperm.xlu0 %3400, %v3365
      %v3402 = vpop.permute.xlu0 %3401
      %3405 = vset.pattern.permute.xlu0 0
      %3406 = vperm.xlu0 %3405, %v3366
      %v3407 = vpop.permute.xlu0 %3406
      %v3409 = vlaneseq
      %v3410 = vshrl.u32 %v3409, 7
      %v3411 = vsub.s32 0, %v3410
      %v3412 = vrot.slane %v3368, %v3411
      %v3413 = vmul.f32 %v3372, %v3412
      %v3414 = vmul.f32 %v3377, %v3412
      %v3415 = vmul.f32 %v3382, %v3412
      %v3416 = vmul.f32 %v3387, %v3412
      %v3417 = vmul.f32 %v3392, %v3412
      %v3418 = vmul.f32 %v3397, %v3412
      %v3419 = vmul.f32 %v3402, %v3412
      %v3420 = vmul.f32 %v3407, %v3412
      %v3421 = vadd.f32 %v3351, %v3413
      %v3422 = vadd.f32 %v3352, %v3414
      %v3423 = vadd.f32 %v3353, %v3415
      %v3424 = vadd.f32 %v3354, %v3416
      %v3425 = vadd.f32 %v3355, %v3417
      %v3426 = vadd.f32 %v3356, %v3418
      %v3427 = vadd.f32 %v3357, %v3419
      %v3428 = vadd.f32 %v3358, %v3420
      %3429 = vset.pattern.permute.xlu0 1
      %3430 = vperm.xlu0 %3429, %v3359
      %v3431 = vpop.permute.xlu0 %3430
      %3433 = vset.pattern.permute.xlu0 1
      %3434 = vperm.xlu0 %3433, %v3360
      %v3435 = vpop.permute.xlu0 %3434
      %3437 = vset.pattern.permute.xlu0 1
      %3438 = vperm.xlu0 %3437, %v3361
      %v3439 = vpop.permute.xlu0 %3438
      %3441 = vset.pattern.permute.xlu0 1
      %3442 = vperm.xlu0 %3441, %v3362
      %v3443 = vpop.permute.xlu0 %3442
      %3445 = vset.pattern.permute.xlu0 1
      %3446 = vperm.xlu0 %3445, %v3363
      %v3447 = vpop.permute.xlu0 %3446
      %3449 = vset.pattern.permute.xlu0 1
      %3450 = vperm.xlu0 %3449, %v3364
      %v3451 = vpop.permute.xlu0 %3450
      %3453 = vset.pattern.permute.xlu0 1
      %3454 = vperm.xlu0 %3453, %v3365
      %v3455 = vpop.permute.xlu0 %3454
      %3457 = vset.pattern.permute.xlu0 1
      %3458 = vperm.xlu0 %3457, %v3366
      %v3459 = vpop.permute.xlu0 %3458
      %v3461 = vlaneseq
      %v3462 = vshrl.u32 %v3461, 7
      %v3463 = vsub.s32 1, %v3462
      %v3464 = vrot.slane %v3368, %v3463
      %v3465 = vmul.f32 %v3431, %v3464
      %v3466 = vmul.f32 %v3435, %v3464
      %v3467 = vmul.f32 %v3439, %v3464
      %v3468 = vmul.f32 %v3443, %v3464
      %v3469 = vmul.f32 %v3447, %v3464
      %v3470 = vmul.f32 %v3451, %v3464
      %v3471 = vmul.f32 %v3455, %v3464
      %v3472 = vmul.f32 %v3459, %v3464
      %v3473 = vadd.f32 %v3421, %v3465
      %v3474 = vadd.f32 %v3422, %v3466
      %v3475 = vadd.f32 %v3423, %v3467
      %v3476 = vadd.f32 %v3424, %v3468
      %v3477 = vadd.f32 %v3425, %v3469
      %v3478 = vadd.f32 %v3426, %v3470
      %v3479 = vadd.f32 %v3427, %v3471
      %v3480 = vadd.f32 %v3428, %v3472
      %3481 = vset.pattern.permute.xlu0 2
      %3482 = vperm.xlu0 %3481, %v3359
      %v3483 = vpop.permute.xlu0 %3482
      %3485 = vset.pattern.permute.xlu0 2
      %3486 = vperm.xlu0 %3485, %v3360
      %v3487 = vpop.permute.xlu0 %3486
      %3489 = vset.pattern.permute.xlu0 2
      %3490 = vperm.xlu0 %3489, %v3361
      %v3491 = vpop.permute.xlu0 %3490
      %3493 = vset.pattern.permute.xlu0 2
      %3494 = vperm.xlu0 %3493, %v3362
      %v3495 = vpop.permute.xlu0 %3494
      %3497 = vset.pattern.permute.xlu0 2
      %3498 = vperm.xlu0 %3497, %v3363
      %v3499 = vpop.permute.xlu0 %3498
      %3501 = vset.pattern.permute.xlu0 2
      %3502 = vperm.xlu0 %3501, %v3364
      %v3503 = vpop.permute.xlu0 %3502
      %3505 = vset.pattern.permute.xlu0 2
      %3506 = vperm.xlu0 %3505, %v3365
      %v3507 = vpop.permute.xlu0 %3506
      %3509 = vset.pattern.permute.xlu0 2
      %3510 = vperm.xlu0 %3509, %v3366
      %v3511 = vpop.permute.xlu0 %3510
      %v3513 = vlaneseq
      %v3514 = vshrl.u32 %v3513, 7
      %v3515 = vsub.s32 2, %v3514
      %v3516 = vrot.slane %v3368, %v3515
      %v3517 = vmul.f32 %v3483, %v3516
      %v3518 = vmul.f32 %v3487, %v3516
      %v3519 = vmul.f32 %v3491, %v3516
      %v3520 = vmul.f32 %v3495, %v3516
      %v3521 = vmul.f32 %v3499, %v3516
      %v3522 = vmul.f32 %v3503, %v3516
      %v3523 = vmul.f32 %v3507, %v3516
      %v3524 = vmul.f32 %v3511, %v3516
      %v3525 = vadd.f32 %v3473, %v3517
      %v3526 = vadd.f32 %v3474, %v3518
      %v3527 = vadd.f32 %v3475, %v3519
      %v3528 = vadd.f32 %v3476, %v3520
      %v3529 = vadd.f32 %v3477, %v3521
      %v3530 = vadd.f32 %v3478, %v3522
      %v3531 = vadd.f32 %v3479, %v3523
      %v3532 = vadd.f32 %v3480, %v3524
      %3533 = vset.pattern.permute.xlu0 3
      %3534 = vperm.xlu0 %3533, %v3359
      %v3535 = vpop.permute.xlu0 %3534
      %3537 = vset.pattern.permute.xlu0 3
      %3538 = vperm.xlu0 %3537, %v3360
      %v3539 = vpop.permute.xlu0 %3538
      %3541 = vset.pattern.permute.xlu0 3
      %3542 = vperm.xlu0 %3541, %v3361
      %v3543 = vpop.permute.xlu0 %3542
      %3545 = vset.pattern.permute.xlu0 3
      %3546 = vperm.xlu0 %3545, %v3362
      %v3547 = vpop.permute.xlu0 %3546
      %3549 = vset.pattern.permute.xlu0 3
      %3550 = vperm.xlu0 %3549, %v3363
      %v3551 = vpop.permute.xlu0 %3550
      %3553 = vset.pattern.permute.xlu0 3
      %3554 = vperm.xlu0 %3553, %v3364
      %v3555 = vpop.permute.xlu0 %3554
      %3557 = vset.pattern.permute.xlu0 3
      %3558 = vperm.xlu0 %3557, %v3365
      %v3559 = vpop.permute.xlu0 %3558
      %3561 = vset.pattern.permute.xlu0 3
      %3562 = vperm.xlu0 %3561, %v3366
      %v3563 = vpop.permute.xlu0 %3562
      %v3565 = vlaneseq
      %v3566 = vshrl.u32 %v3565, 7
      %v3567 = vsub.s32 3, %v3566
      %v3568 = vrot.slane %v3368, %v3567
      %v3569 = vmul.f32 %v3535, %v3568
      %v3570 = vmul.f32 %v3539, %v3568
      %v3571 = vmul.f32 %v3543, %v3568
      %v3572 = vmul.f32 %v3547, %v3568
      %v3573 = vmul.f32 %v3551, %v3568
      %v3574 = vmul.f32 %v3555, %v3568
      %v3575 = vmul.f32 %v3559, %v3568
      %v3576 = vmul.f32 %v3563, %v3568
      %v3577 = vadd.f32 %v3525, %v3569
      %v3578 = vadd.f32 %v3526, %v3570
      %v3579 = vadd.f32 %v3527, %v3571
      %v3580 = vadd.f32 %v3528, %v3572
      %v3581 = vadd.f32 %v3529, %v3573
      %v3582 = vadd.f32 %v3530, %v3574
      %v3583 = vadd.f32 %v3531, %v3575
      %v3584 = vadd.f32 %v3532, %v3576
      %3585 = vset.pattern.permute.xlu0 4
      %3586 = vperm.xlu0 %3585, %v3359
      %v3587 = vpop.permute.xlu0 %3586
      %3589 = vset.pattern.permute.xlu0 4
      %3590 = vperm.xlu0 %3589, %v3360
      %v3591 = vpop.permute.xlu0 %3590
      %3593 = vset.pattern.permute.xlu0 4
      %3594 = vperm.xlu0 %3593, %v3361
      %v3595 = vpop.permute.xlu0 %3594
      %3597 = vset.pattern.permute.xlu0 4
      %3598 = vperm.xlu0 %3597, %v3362
      %v3599 = vpop.permute.xlu0 %3598
      %3601 = vset.pattern.permute.xlu0 4
      %3602 = vperm.xlu0 %3601, %v3363
      %v3603 = vpop.permute.xlu0 %3602
      %3605 = vset.pattern.permute.xlu0 4
      %3606 = vperm.xlu0 %3605, %v3364
      %v3607 = vpop.permute.xlu0 %3606
      %3609 = vset.pattern.permute.xlu0 4
      %3610 = vperm.xlu0 %3609, %v3365
      %v3611 = vpop.permute.xlu0 %3610
      %3613 = vset.pattern.permute.xlu0 4
      %3614 = vperm.xlu0 %3613, %v3366
      %v3615 = vpop.permute.xlu0 %3614
      %v3617 = vlaneseq
      %v3618 = vshrl.u32 %v3617, 7
      %v3619 = vsub.s32 4, %v3618
      %v3620 = vrot.slane %v3368, %v3619
      %v3621 = vmul.f32 %v3587, %v3620
      %v3622 = vmul.f32 %v3591, %v3620
      %v3623 = vmul.f32 %v3595, %v3620
      %v3624 = vmul.f32 %v3599, %v3620
      %v3625 = vmul.f32 %v3603, %v3620
      %v3626 = vmul.f32 %v3607, %v3620
      %v3627 = vmul.f32 %v3611, %v3620
      %v3628 = vmul.f32 %v3615, %v3620
      %v3629 = vadd.f32 %v3577, %v3621
      %v3630 = vadd.f32 %v3578, %v3622
      %v3631 = vadd.f32 %v3579, %v3623
      %v3632 = vadd.f32 %v3580, %v3624
      %v3633 = vadd.f32 %v3581, %v3625
      %v3634 = vadd.f32 %v3582, %v3626
      %v3635 = vadd.f32 %v3583, %v3627
      %v3636 = vadd.f32 %v3584, %v3628
      %3637 = vset.pattern.permute.xlu0 5
      %3638 = vperm.xlu0 %3637, %v3359
      %v3639 = vpop.permute.xlu0 %3638
      %3641 = vset.pattern.permute.xlu0 5
      %3642 = vperm.xlu0 %3641, %v3360
      %v3643 = vpop.permute.xlu0 %3642
      %3645 = vset.pattern.permute.xlu0 5
      %3646 = vperm.xlu0 %3645, %v3361
      %v3647 = vpop.permute.xlu0 %3646
      %3649 = vset.pattern.permute.xlu0 5
      %3650 = vperm.xlu0 %3649, %v3362
      %v3651 = vpop.permute.xlu0 %3650
      %3653 = vset.pattern.permute.xlu0 5
      %3654 = vperm.xlu0 %3653, %v3363
      %v3655 = vpop.permute.xlu0 %3654
      %3657 = vset.pattern.permute.xlu0 5
      %3658 = vperm.xlu0 %3657, %v3364
      %v3659 = vpop.permute.xlu0 %3658
      %3661 = vset.pattern.permute.xlu0 5
      %3662 = vperm.xlu0 %3661, %v3365
      %v3663 = vpop.permute.xlu0 %3662
      %3665 = vset.pattern.permute.xlu0 5
      %3666 = vperm.xlu0 %3665, %v3366
      %v3667 = vpop.permute.xlu0 %3666
      %v3669 = vlaneseq
      %v3670 = vshrl.u32 %v3669, 7
      %v3671 = vsub.s32 5, %v3670
      %v3672 = vrot.slane %v3368, %v3671
      %v3673 = vmul.f32 %v3639, %v3672
      %v3674 = vmul.f32 %v3643, %v3672
      %v3675 = vmul.f32 %v3647, %v3672
      %v3676 = vmul.f32 %v3651, %v3672
      %v3677 = vmul.f32 %v3655, %v3672
      %v3678 = vmul.f32 %v3659, %v3672
      %v3679 = vmul.f32 %v3663, %v3672
      %v3680 = vmul.f32 %v3667, %v3672
      %v3681 = vadd.f32 %v3629, %v3673
      %v3682 = vadd.f32 %v3630, %v3674
      %v3683 = vadd.f32 %v3631, %v3675
      %v3684 = vadd.f32 %v3632, %v3676
      %v3685 = vadd.f32 %v3633, %v3677
      %v3686 = vadd.f32 %v3634, %v3678
      %v3687 = vadd.f32 %v3635, %v3679
      %v3688 = vadd.f32 %v3636, %v3680
      %3689 = vset.pattern.permute.xlu0 6
      %3690 = vperm.xlu0 %3689, %v3359
      %v3691 = vpop.permute.xlu0 %3690
      %3693 = vset.pattern.permute.xlu0 6
      %3694 = vperm.xlu0 %3693, %v3360
      %v3695 = vpop.permute.xlu0 %3694
      %3697 = vset.pattern.permute.xlu0 6
      %3698 = vperm.xlu0 %3697, %v3361
      %v3699 = vpop.permute.xlu0 %3698
      %3701 = vset.pattern.permute.xlu0 6
      %3702 = vperm.xlu0 %3701, %v3362
      %v3703 = vpop.permute.xlu0 %3702
      %3705 = vset.pattern.permute.xlu0 6
      %3706 = vperm.xlu0 %3705, %v3363
      %v3707 = vpop.permute.xlu0 %3706
      %3709 = vset.pattern.permute.xlu0 6
      %3710 = vperm.xlu0 %3709, %v3364
      %v3711 = vpop.permute.xlu0 %3710
      %3713 = vset.pattern.permute.xlu0 6
      %3714 = vperm.xlu0 %3713, %v3365
      %v3715 = vpop.permute.xlu0 %3714
      %3717 = vset.pattern.permute.xlu0 6
      %3718 = vperm.xlu0 %3717, %v3366
      %v3719 = vpop.permute.xlu0 %3718
      %v3721 = vlaneseq
      %v3722 = vshrl.u32 %v3721, 7
      %v3723 = vsub.s32 6, %v3722
      %v3724 = vrot.slane %v3368, %v3723
      %v3725 = vmul.f32 %v3691, %v3724
      %v3726 = vmul.f32 %v3695, %v3724
      %v3727 = vmul.f32 %v3699, %v3724
      %v3728 = vmul.f32 %v3703, %v3724
      %v3729 = vmul.f32 %v3707, %v3724
      %v3730 = vmul.f32 %v3711, %v3724
      %v3731 = vmul.f32 %v3715, %v3724
      %v3732 = vmul.f32 %v3719, %v3724
      %v3733 = vadd.f32 %v3681, %v3725
      %v3734 = vadd.f32 %v3682, %v3726
      %v3735 = vadd.f32 %v3683, %v3727
      %v3736 = vadd.f32 %v3684, %v3728
      %v3737 = vadd.f32 %v3685, %v3729
      %v3738 = vadd.f32 %v3686, %v3730
      %v3739 = vadd.f32 %v3687, %v3731
      %v3740 = vadd.f32 %v3688, %v3732
      %3741 = vset.pattern.permute.xlu0 7
      %3742 = vperm.xlu0 %3741, %v3359
      %v3743 = vpop.permute.xlu0 %3742
      %3745 = vset.pattern.permute.xlu0 7
      %3746 = vperm.xlu0 %3745, %v3360
      %v3747 = vpop.permute.xlu0 %3746
      %3749 = vset.pattern.permute.xlu0 7
      %3750 = vperm.xlu0 %3749, %v3361
      %v3751 = vpop.permute.xlu0 %3750
      %3753 = vset.pattern.permute.xlu0 7
      %3754 = vperm.xlu0 %3753, %v3362
      %v3755 = vpop.permute.xlu0 %3754
      %3757 = vset.pattern.permute.xlu0 7
      %3758 = vperm.xlu0 %3757, %v3363
      %v3759 = vpop.permute.xlu0 %3758
      %3761 = vset.pattern.permute.xlu0 7
      %3762 = vperm.xlu0 %3761, %v3364
      %v3763 = vpop.permute.xlu0 %3762
      %3765 = vset.pattern.permute.xlu0 7
      %3766 = vperm.xlu0 %3765, %v3365
      %v3767 = vpop.permute.xlu0 %3766
      %3769 = vset.pattern.permute.xlu0 7
      %3770 = vperm.xlu0 %3769, %v3366
      %v3771 = vpop.permute.xlu0 %3770
      %v3773 = vlaneseq
      %v3774 = vshrl.u32 %v3773, 7
      %v3775 = vsub.s32 7, %v3774
      %v3776 = vrot.slane %v3368, %v3775
      %v3777 = vmul.f32 %v3743, %v3776
      %v3778 = vmul.f32 %v3747, %v3776
      %v3779 = vmul.f32 %v3751, %v3776
      %v3780 = vmul.f32 %v3755, %v3776
      %v3781 = vmul.f32 %v3759, %v3776
      %v3782 = vmul.f32 %v3763, %v3776
      %v3783 = vmul.f32 %v3767, %v3776
      %v3784 = vmul.f32 %v3771, %v3776
      %v3785 = vadd.f32 %v3733, %v3777
      %v3786 = vadd.f32 %v3734, %v3778
      %v3787 = vadd.f32 %v3735, %v3779
      %v3788 = vadd.f32 %v3736, %v3780
      %v3789 = vadd.f32 %v3737, %v3781
      %v3790 = vadd.f32 %v3738, %v3782
      %v3791 = vadd.f32 %v3739, %v3783
      %v3792 = vadd.f32 %v3740, %v3784
      %v3793 = vld [vmem:[%s2924 + $0x2] sm:$0xff]
      %v3794 = vld [vmem:[%s2924 + $0x12] sm:$0xff]
      %v3795 = vld [vmem:[%s2924 + $0x22] sm:$0xff]
      %v3796 = vld [vmem:[%s2924 + $0x32] sm:$0xff]
      %v3797 = vld [vmem:[%s2924 + $0x42] sm:$0xff]
      %v3798 = vld [vmem:[%s2924 + $0x52] sm:$0xff]
      %v3799 = vld [vmem:[%s2924 + $0x62] sm:$0xff]
      %v3800 = vld [vmem:[%s2924 + $0x72] sm:$0xff]
      %s3801 = scalar_lea.vmem %s3, 64
      %v3802 = vld [vmem:[%s3801] sm:$0xff]
      %3804 = vset.pattern.permute.xlu0 0
      %3805 = vperm.xlu0 %3804, %v3793
      %v3806 = vpop.permute.xlu0 %3805
      %3809 = vset.pattern.permute.xlu0 0
      %3810 = vperm.xlu0 %3809, %v3794
      %v3811 = vpop.permute.xlu0 %3810
      %3814 = vset.pattern.permute.xlu0 0
      %3815 = vperm.xlu0 %3814, %v3795
      %v3816 = vpop.permute.xlu0 %3815
      %3819 = vset.pattern.permute.xlu0 0
      %3820 = vperm.xlu0 %3819, %v3796
      %v3821 = vpop.permute.xlu0 %3820
      %3824 = vset.pattern.permute.xlu0 0
      %3825 = vperm.xlu0 %3824, %v3797
      %v3826 = vpop.permute.xlu0 %3825
      %3829 = vset.pattern.permute.xlu0 0
      %3830 = vperm.xlu0 %3829, %v3798
      %v3831 = vpop.permute.xlu0 %3830
      %3834 = vset.pattern.permute.xlu0 0
      %3835 = vperm.xlu0 %3834, %v3799
      %v3836 = vpop.permute.xlu0 %3835
      %3839 = vset.pattern.permute.xlu0 0
      %3840 = vperm.xlu0 %3839, %v3800
      %v3841 = vpop.permute.xlu0 %3840
      %v3843 = vlaneseq
      %v3844 = vshrl.u32 %v3843, 7
      %v3845 = vsub.s32 0, %v3844
      %v3846 = vrot.slane %v3802, %v3845
      %v3847 = vmul.f32 %v3806, %v3846
      %v3848 = vmul.f32 %v3811, %v3846
      %v3849 = vmul.f32 %v3816, %v3846
      %v3850 = vmul.f32 %v3821, %v3846
      %v3851 = vmul.f32 %v3826, %v3846
      %v3852 = vmul.f32 %v3831, %v3846
      %v3853 = vmul.f32 %v3836, %v3846
      %v3854 = vmul.f32 %v3841, %v3846
      %v3855 = vadd.f32 %v3785, %v3847
      %v3856 = vadd.f32 %v3786, %v3848
      %v3857 = vadd.f32 %v3787, %v3849
      %v3858 = vadd.f32 %v3788, %v3850
      %v3859 = vadd.f32 %v3789, %v3851
      %v3860 = vadd.f32 %v3790, %v3852
      %v3861 = vadd.f32 %v3791, %v3853
      %v3862 = vadd.f32 %v3792, %v3854
      %3863 = vset.pattern.permute.xlu0 1
      %3864 = vperm.xlu0 %3863, %v3793
      %v3865 = vpop.permute.xlu0 %3864
      %3867 = vset.pattern.permute.xlu0 1
      %3868 = vperm.xlu0 %3867, %v3794
      %v3869 = vpop.permute.xlu0 %3868
      %3871 = vset.pattern.permute.xlu0 1
      %3872 = vperm.xlu0 %3871, %v3795
      %v3873 = vpop.permute.xlu0 %3872
      %3875 = vset.pattern.permute.xlu0 1
      %3876 = vperm.xlu0 %3875, %v3796
      %v3877 = vpop.permute.xlu0 %3876
      %3879 = vset.pattern.permute.xlu0 1
      %3880 = vperm.xlu0 %3879, %v3797
      %v3881 = vpop.permute.xlu0 %3880
      %3883 = vset.pattern.permute.xlu0 1
      %3884 = vperm.xlu0 %3883, %v3798
      %v3885 = vpop.permute.xlu0 %3884
      %3887 = vset.pattern.permute.xlu0 1
      %3888 = vperm.xlu0 %3887, %v3799
      %v3889 = vpop.permute.xlu0 %3888
      %3891 = vset.pattern.permute.xlu0 1
      %3892 = vperm.xlu0 %3891, %v3800
      %v3893 = vpop.permute.xlu0 %3892
      %v3895 = vlaneseq
      %v3896 = vshrl.u32 %v3895, 7
      %v3897 = vsub.s32 1, %v3896
      %v3898 = vrot.slane %v3802, %v3897
      %v3899 = vmul.f32 %v3865, %v3898
      %v3900 = vmul.f32 %v3869, %v3898
      %v3901 = vmul.f32 %v3873, %v3898
      %v3902 = vmul.f32 %v3877, %v3898
      %v3903 = vmul.f32 %v3881, %v3898
      %v3904 = vmul.f32 %v3885, %v3898
      %v3905 = vmul.f32 %v3889, %v3898
      %v3906 = vmul.f32 %v3893, %v3898
      %v3907 = vadd.f32 %v3855, %v3899
      %v3908 = vadd.f32 %v3856, %v3900
      %v3909 = vadd.f32 %v3857, %v3901
      %v3910 = vadd.f32 %v3858, %v3902
      %v3911 = vadd.f32 %v3859, %v3903
      %v3912 = vadd.f32 %v3860, %v3904
      %v3913 = vadd.f32 %v3861, %v3905
      %v3914 = vadd.f32 %v3862, %v3906
      %3915 = vset.pattern.permute.xlu0 2
      %3916 = vperm.xlu0 %3915, %v3793
      %v3917 = vpop.permute.xlu0 %3916
      %3919 = vset.pattern.permute.xlu0 2
      %3920 = vperm.xlu0 %3919, %v3794
      %v3921 = vpop.permute.xlu0 %3920
      %3923 = vset.pattern.permute.xlu0 2
      %3924 = vperm.xlu0 %3923, %v3795
      %v3925 = vpop.permute.xlu0 %3924
      %3927 = vset.pattern.permute.xlu0 2
      %3928 = vperm.xlu0 %3927, %v3796
      %v3929 = vpop.permute.xlu0 %3928
      %3931 = vset.pattern.permute.xlu0 2
      %3932 = vperm.xlu0 %3931, %v3797
      %v3933 = vpop.permute.xlu0 %3932
      %3935 = vset.pattern.permute.xlu0 2
      %3936 = vperm.xlu0 %3935, %v3798
      %v3937 = vpop.permute.xlu0 %3936
      %3939 = vset.pattern.permute.xlu0 2
      %3940 = vperm.xlu0 %3939, %v3799
      %v3941 = vpop.permute.xlu0 %3940
      %3943 = vset.pattern.permute.xlu0 2
      %3944 = vperm.xlu0 %3943, %v3800
      %v3945 = vpop.permute.xlu0 %3944
      %v3947 = vlaneseq
      %v3948 = vshrl.u32 %v3947, 7
      %v3949 = vsub.s32 2, %v3948
      %v3950 = vrot.slane %v3802, %v3949
      %v3951 = vmul.f32 %v3917, %v3950
      %v3952 = vmul.f32 %v3921, %v3950
      %v3953 = vmul.f32 %v3925, %v3950
      %v3954 = vmul.f32 %v3929, %v3950
      %v3955 = vmul.f32 %v3933, %v3950
      %v3956 = vmul.f32 %v3937, %v3950
      %v3957 = vmul.f32 %v3941, %v3950
      %v3958 = vmul.f32 %v3945, %v3950
      %v3959 = vadd.f32 %v3907, %v3951
      %v3960 = vadd.f32 %v3908, %v3952
      %v3961 = vadd.f32 %v3909, %v3953
      %v3962 = vadd.f32 %v3910, %v3954
      %v3963 = vadd.f32 %v3911, %v3955
      %v3964 = vadd.f32 %v3912, %v3956
      %v3965 = vadd.f32 %v3913, %v3957
      %v3966 = vadd.f32 %v3914, %v3958
      %3967 = vset.pattern.permute.xlu0 3
      %3968 = vperm.xlu0 %3967, %v3793
      %v3969 = vpop.permute.xlu0 %3968
      %3971 = vset.pattern.permute.xlu0 3
      %3972 = vperm.xlu0 %3971, %v3794
      %v3973 = vpop.permute.xlu0 %3972
      %3975 = vset.pattern.permute.xlu0 3
      %3976 = vperm.xlu0 %3975, %v3795
      %v3977 = vpop.permute.xlu0 %3976
      %3979 = vset.pattern.permute.xlu0 3
      %3980 = vperm.xlu0 %3979, %v3796
      %v3981 = vpop.permute.xlu0 %3980
      %3983 = vset.pattern.permute.xlu0 3
      %3984 = vperm.xlu0 %3983, %v3797
      %v3985 = vpop.permute.xlu0 %3984
      %3987 = vset.pattern.permute.xlu0 3
      %3988 = vperm.xlu0 %3987, %v3798
      %v3989 = vpop.permute.xlu0 %3988
      %3991 = vset.pattern.permute.xlu0 3
      %3992 = vperm.xlu0 %3991, %v3799
      %v3993 = vpop.permute.xlu0 %3992
      %3995 = vset.pattern.permute.xlu0 3
      %3996 = vperm.xlu0 %3995, %v3800
      %v3997 = vpop.permute.xlu0 %3996
      %v3999 = vlaneseq
      %v4000 = vshrl.u32 %v3999, 7
      %v4001 = vsub.s32 3, %v4000
      %v4002 = vrot.slane %v3802, %v4001
      %v4003 = vmul.f32 %v3969, %v4002
      %v4004 = vmul.f32 %v3973, %v4002
      %v4005 = vmul.f32 %v3977, %v4002
      %v4006 = vmul.f32 %v3981, %v4002
      %v4007 = vmul.f32 %v3985, %v4002
      %v4008 = vmul.f32 %v3989, %v4002
      %v4009 = vmul.f32 %v3993, %v4002
      %v4010 = vmul.f32 %v3997, %v4002
      %v4011 = vadd.f32 %v3959, %v4003
      %v4012 = vadd.f32 %v3960, %v4004
      %v4013 = vadd.f32 %v3961, %v4005
      %v4014 = vadd.f32 %v3962, %v4006
      %v4015 = vadd.f32 %v3963, %v4007
      %v4016 = vadd.f32 %v3964, %v4008
      %v4017 = vadd.f32 %v3965, %v4009
      %v4018 = vadd.f32 %v3966, %v4010
      %4019 = vset.pattern.permute.xlu0 4
      %4020 = vperm.xlu0 %4019, %v3793
      %v4021 = vpop.permute.xlu0 %4020
      %4023 = vset.pattern.permute.xlu0 4
      %4024 = vperm.xlu0 %4023, %v3794
      %v4025 = vpop.permute.xlu0 %4024
      %4027 = vset.pattern.permute.xlu0 4
      %4028 = vperm.xlu0 %4027, %v3795
      %v4029 = vpop.permute.xlu0 %4028
      %4031 = vset.pattern.permute.xlu0 4
      %4032 = vperm.xlu0 %4031, %v3796
      %v4033 = vpop.permute.xlu0 %4032
      %4035 = vset.pattern.permute.xlu0 4
      %4036 = vperm.xlu0 %4035, %v3797
      %v4037 = vpop.permute.xlu0 %4036
      %4039 = vset.pattern.permute.xlu0 4
      %4040 = vperm.xlu0 %4039, %v3798
      %v4041 = vpop.permute.xlu0 %4040
      %4043 = vset.pattern.permute.xlu0 4
      %4044 = vperm.xlu0 %4043, %v3799
      %v4045 = vpop.permute.xlu0 %4044
      %4047 = vset.pattern.permute.xlu0 4
      %4048 = vperm.xlu0 %4047, %v3800
      %v4049 = vpop.permute.xlu0 %4048
      %v4051 = vlaneseq
      %v4052 = vshrl.u32 %v4051, 7
      %v4053 = vsub.s32 4, %v4052
      %v4054 = vrot.slane %v3802, %v4053
      %v4055 = vmul.f32 %v4021, %v4054
      %v4056 = vmul.f32 %v4025, %v4054
      %v4057 = vmul.f32 %v4029, %v4054
      %v4058 = vmul.f32 %v4033, %v4054
      %v4059 = vmul.f32 %v4037, %v4054
      %v4060 = vmul.f32 %v4041, %v4054
      %v4061 = vmul.f32 %v4045, %v4054
      %v4062 = vmul.f32 %v4049, %v4054
      %v4063 = vadd.f32 %v4011, %v4055
      %v4064 = vadd.f32 %v4012, %v4056
      %v4065 = vadd.f32 %v4013, %v4057
      %v4066 = vadd.f32 %v4014, %v4058
      %v4067 = vadd.f32 %v4015, %v4059
      %v4068 = vadd.f32 %v4016, %v4060
      %v4069 = vadd.f32 %v4017, %v4061
      %v4070 = vadd.f32 %v4018, %v4062
      %4071 = vset.pattern.permute.xlu0 5
      %4072 = vperm.xlu0 %4071, %v3793
      %v4073 = vpop.permute.xlu0 %4072
      %4075 = vset.pattern.permute.xlu0 5
      %4076 = vperm.xlu0 %4075, %v3794
      %v4077 = vpop.permute.xlu0 %4076
      %4079 = vset.pattern.permute.xlu0 5
      %4080 = vperm.xlu0 %4079, %v3795
      %v4081 = vpop.permute.xlu0 %4080
      %4083 = vset.pattern.permute.xlu0 5
      %4084 = vperm.xlu0 %4083, %v3796
      %v4085 = vpop.permute.xlu0 %4084
      %4087 = vset.pattern.permute.xlu0 5
      %4088 = vperm.xlu0 %4087, %v3797
      %v4089 = vpop.permute.xlu0 %4088
      %4091 = vset.pattern.permute.xlu0 5
      %4092 = vperm.xlu0 %4091, %v3798
      %v4093 = vpop.permute.xlu0 %4092
      %4095 = vset.pattern.permute.xlu0 5
      %4096 = vperm.xlu0 %4095, %v3799
      %v4097 = vpop.permute.xlu0 %4096
      %4099 = vset.pattern.permute.xlu0 5
      %4100 = vperm.xlu0 %4099, %v3800
      %v4101 = vpop.permute.xlu0 %4100
      %v4103 = vlaneseq
      %v4104 = vshrl.u32 %v4103, 7
      %v4105 = vsub.s32 5, %v4104
      %v4106 = vrot.slane %v3802, %v4105
      %v4107 = vmul.f32 %v4073, %v4106
      %v4108 = vmul.f32 %v4077, %v4106
      %v4109 = vmul.f32 %v4081, %v4106
      %v4110 = vmul.f32 %v4085, %v4106
      %v4111 = vmul.f32 %v4089, %v4106
      %v4112 = vmul.f32 %v4093, %v4106
      %v4113 = vmul.f32 %v4097, %v4106
      %v4114 = vmul.f32 %v4101, %v4106
      %v4115 = vadd.f32 %v4063, %v4107
      %v4116 = vadd.f32 %v4064, %v4108
      %v4117 = vadd.f32 %v4065, %v4109
      %v4118 = vadd.f32 %v4066, %v4110
      %v4119 = vadd.f32 %v4067, %v4111
      %v4120 = vadd.f32 %v4068, %v4112
      %v4121 = vadd.f32 %v4069, %v4113
      %v4122 = vadd.f32 %v4070, %v4114
      %4123 = vset.pattern.permute.xlu0 6
      %4124 = vperm.xlu0 %4123, %v3793
      %v4125 = vpop.permute.xlu0 %4124
      %4127 = vset.pattern.permute.xlu0 6
      %4128 = vperm.xlu0 %4127, %v3794
      %v4129 = vpop.permute.xlu0 %4128
      %4131 = vset.pattern.permute.xlu0 6
      %4132 = vperm.xlu0 %4131, %v3795
      %v4133 = vpop.permute.xlu0 %4132
      %4135 = vset.pattern.permute.xlu0 6
      %4136 = vperm.xlu0 %4135, %v3796
      %v4137 = vpop.permute.xlu0 %4136
      %4139 = vset.pattern.permute.xlu0 6
      %4140 = vperm.xlu0 %4139, %v3797
      %v4141 = vpop.permute.xlu0 %4140
      %4143 = vset.pattern.permute.xlu0 6
      %4144 = vperm.xlu0 %4143, %v3798
      %v4145 = vpop.permute.xlu0 %4144
      %4147 = vset.pattern.permute.xlu0 6
      %4148 = vperm.xlu0 %4147, %v3799
      %v4149 = vpop.permute.xlu0 %4148
      %4151 = vset.pattern.permute.xlu0 6
      %4152 = vperm.xlu0 %4151, %v3800
      %v4153 = vpop.permute.xlu0 %4152
      %v4155 = vlaneseq
      %v4156 = vshrl.u32 %v4155, 7
      %v4157 = vsub.s32 6, %v4156
      %v4158 = vrot.slane %v3802, %v4157
      %v4159 = vmul.f32 %v4125, %v4158
      %v4160 = vmul.f32 %v4129, %v4158
      %v4161 = vmul.f32 %v4133, %v4158
      %v4162 = vmul.f32 %v4137, %v4158
      %v4163 = vmul.f32 %v4141, %v4158
      %v4164 = vmul.f32 %v4145, %v4158
      %v4165 = vmul.f32 %v4149, %v4158
      %v4166 = vmul.f32 %v4153, %v4158
      %v4167 = vadd.f32 %v4115, %v4159
      %v4168 = vadd.f32 %v4116, %v4160
      %v4169 = vadd.f32 %v4117, %v4161
      %v4170 = vadd.f32 %v4118, %v4162
      %v4171 = vadd.f32 %v4119, %v4163
      %v4172 = vadd.f32 %v4120, %v4164
      %v4173 = vadd.f32 %v4121, %v4165
      %v4174 = vadd.f32 %v4122, %v4166
      %4175 = vset.pattern.permute.xlu0 7
      %4176 = vperm.xlu0 %4175, %v3793
      %v4177 = vpop.permute.xlu0 %4176
      %4179 = vset.pattern.permute.xlu0 7
      %4180 = vperm.xlu0 %4179, %v3794
      %v4181 = vpop.permute.xlu0 %4180
      %4183 = vset.pattern.permute.xlu0 7
      %4184 = vperm.xlu0 %4183, %v3795
      %v4185 = vpop.permute.xlu0 %4184
      %4187 = vset.pattern.permute.xlu0 7
      %4188 = vperm.xlu0 %4187, %v3796
      %v4189 = vpop.permute.xlu0 %4188
      %4191 = vset.pattern.permute.xlu0 7
      %4192 = vperm.xlu0 %4191, %v3797
      %v4193 = vpop.permute.xlu0 %4192
      %4195 = vset.pattern.permute.xlu0 7
      %4196 = vperm.xlu0 %4195, %v3798
      %v4197 = vpop.permute.xlu0 %4196
      %4199 = vset.pattern.permute.xlu0 7
      %4200 = vperm.xlu0 %4199, %v3799
      %v4201 = vpop.permute.xlu0 %4200
      %4203 = vset.pattern.permute.xlu0 7
      %4204 = vperm.xlu0 %4203, %v3800
      %v4205 = vpop.permute.xlu0 %4204
      %v4207 = vlaneseq
      %v4208 = vshrl.u32 %v4207, 7
      %v4209 = vsub.s32 7, %v4208
      %v4210 = vrot.slane %v3802, %v4209
      %v4211 = vmul.f32 %v4177, %v4210
      %v4212 = vmul.f32 %v4181, %v4210
      %v4213 = vmul.f32 %v4185, %v4210
      %v4214 = vmul.f32 %v4189, %v4210
      %v4215 = vmul.f32 %v4193, %v4210
      %v4216 = vmul.f32 %v4197, %v4210
      %v4217 = vmul.f32 %v4201, %v4210
      %v4218 = vmul.f32 %v4205, %v4210
      %v4219 = vadd.f32 %v4167, %v4211
      %v4220 = vadd.f32 %v4168, %v4212
      %v4221 = vadd.f32 %v4169, %v4213
      %v4222 = vadd.f32 %v4170, %v4214
      %v4223 = vadd.f32 %v4171, %v4215
      %v4224 = vadd.f32 %v4172, %v4216
      %v4225 = vadd.f32 %v4173, %v4217
      %v4226 = vadd.f32 %v4174, %v4218
      %v4227 = vpack.c.bf16 %v4220, %v4219
      %v4228 = vpack.c.bf16 %v4222, %v4221
      %v4229 = vpack.c.bf16 %v4224, %v4223
      %v4230 = vpack.c.bf16 %v4226, %v4225
      %v4235 = vunpack.c.l.b16 %v4227
      %v4236 = vunpack.c.h.b16 %v4227
      %v4237 = vunpack.c.l.b16 %v4228
      %v4238 = vunpack.c.h.b16 %v4228
      %v4239 = vunpack.c.l.b16 %v4229
      %v4240 = vunpack.c.h.b16 %v4229
      %v4241 = vunpack.c.l.b16 %v4230
      %v4242 = vunpack.c.h.b16 %v4230
      %v4243 = vpack.c.b16 %v4235, %v4235
      %v4244 = vpack.c.b16 %v4236, %v4236
      %v4245 = vpack.c.b16 %v4237, %v4237
      %v4246 = vpack.c.b16 %v4238, %v4238
      %v4247 = vpack.c.b16 %v4239, %v4239
      %v4248 = vpack.c.b16 %v4240, %v4240
      %v4249 = vpack.c.b16 %v4241, %v4241
      %v4250 = vpack.c.b16 %v4242, %v4242
      %vm4259 = vcmask 60416
      %4260 = vst.msk [vmem:[%s231] sm:$0xf] %vm4259, %v4243
      %4261 = vst.msk [vmem:[%s231 + $0x4] sm:$0xf] %vm4259, %v4244
      %4262 = vst.msk [vmem:[%s231 + $0x8] sm:$0xf] %vm4259, %v4245
      %4263 = vst.msk [vmem:[%s231 + $0xc] sm:$0xf] %vm4259, %v4246
      %4264 = vst.msk [vmem:[%s231 + $0x10] sm:$0xf] %vm4259, %v4247
      %4265 = vst.msk [vmem:[%s231 + $0x14] sm:$0xf] %vm4259, %v4248
      %4266 = vst.msk [vmem:[%s231 + $0x18] sm:$0xf] %vm4259, %v4249
      %4267 = vst.msk [vmem:[%s231 + $0x1c] sm:$0xf] %vm4259, %v4250
      %v4268 = vsel %vm290, %v4219, 0.0
      %v4269 = vsel %vm290, %v4220, 0.0
      %v4270 = vadd.f32 %v4268, %v4269
      %v4271 = vsel %vm290, %v4221, 0.0
      %v4272 = vadd.f32 %v4270, %v4271
      %v4273 = vsel %vm290, %v4222, 0.0
      %v4274 = vadd.f32 %v4272, %v4273
      %v4275 = vsel %vm290, %v4223, 0.0
      %v4276 = vadd.f32 %v4274, %v4275
      %v4277 = vsel %vm290, %v4224, 0.0
      %v4278 = vadd.f32 %v4276, %v4277
      %v4279 = vsel %vm290, %v4225, 0.0
      %v4280 = vadd.f32 %v4278, %v4279
      %v4281 = vsel %vm290, %v4226, 0.0
      %v4282 = vadd.f32 %v4280, %v4281
      %v4283 = vrot.slane %v4282, 4
      %v4284 = vadd.f32 %v4282, %v4283
      %v4285 = vrot.slane %v4284, 2
      %v4286 = vadd.f32 %v4284, %v4285
      %v4287 = vrot.slane %v4286, 1
      %v4288 = vadd.f32 %v4286, %v4287
      %v4289 = vmul.f32 %v4288, 0.015625
      %v4290 = vsub.f32 %v4219, %v4289
      %v4291 = vsub.f32 %v4220, %v4289
      %v4292 = vsub.f32 %v4221, %v4289
      %v4293 = vsub.f32 %v4222, %v4289
      %v4294 = vsub.f32 %v4223, %v4289
      %v4295 = vsub.f32 %v4224, %v4289
      %v4296 = vsub.f32 %v4225, %v4289
      %v4297 = vsub.f32 %v4226, %v4289
      %v4298 = vmul.f32 %v4290, %v4290
      %v4299 = vmul.f32 %v4291, %v4291
      %v4300 = vmul.f32 %v4292, %v4292
      %v4301 = vmul.f32 %v4293, %v4293
      %v4302 = vmul.f32 %v4294, %v4294
      %v4303 = vmul.f32 %v4295, %v4295
      %v4304 = vmul.f32 %v4296, %v4296
      %v4305 = vmul.f32 %v4297, %v4297
      %v4306 = vsel %vm290, %v4298, 0.0
      %v4307 = vsel %vm290, %v4299, 0.0
      %v4308 = vadd.f32 %v4306, %v4307
      %v4309 = vsel %vm290, %v4300, 0.0
      %v4310 = vadd.f32 %v4308, %v4309
      %v4311 = vsel %vm290, %v4301, 0.0
      %v4312 = vadd.f32 %v4310, %v4311
      %v4313 = vsel %vm290, %v4302, 0.0
      %v4314 = vadd.f32 %v4312, %v4313
      %v4315 = vsel %vm290, %v4303, 0.0
      %v4316 = vadd.f32 %v4314, %v4315
      %v4317 = vsel %vm290, %v4304, 0.0
      %v4318 = vadd.f32 %v4316, %v4317
      %v4319 = vsel %vm290, %v4305, 0.0
      %v4320 = vadd.f32 %v4318, %v4319
      %v4321 = vrot.slane %v4320, 4
      %v4322 = vadd.f32 %v4320, %v4321
      %v4323 = vrot.slane %v4322, 2
      %v4324 = vadd.f32 %v4322, %v4323
      %v4325 = vrot.slane %v4324, 1
      %v4326 = vadd.f32 %v4324, %v4325
      %vm4327 = vcmask 1040384
      %v4328 = vsel %vm4327, %v4288, %v4326
      %4329 = vst.msk [vmem:[%s235] sm:$0x3] %vm292, %v4328
      %p4330 = scmp.lt.s32.totalorder %s17, 1
      %s4331 = scalar_select %p4330, %s17, 1
      %s4332 = smul.addr %s4331, 8
      %s4333 = smul.addr %s4332, 4
      %s4334 = scalar_lea.vmem %s4, %s4333
      %p4335 = scmp.lt.s32.totalorder %s17, 1
      %s4336 = scalar_select %p4335, %s17, 1
      %s4337 = smul.addr %s4336, 2
      %s4338 = scalar_lea.vmem %s5, %s4337
      // Predicated region
      $region37: #{downscale_forward.4} parent=35 // pred_check
        %p4339 = pneg %p124
      $region38: #{downscale_forward.4} parent=35 // pred_check_branch
        %4341 = sbr.rel (%p4339) target = $region40
      $region39: #{downscale_forward.4} parent=35 // pred_region
        _
      $region40: #{downscale_forward.4} parent=35 // pred_fallthru
        _
      // Predicated region
      $region41: #{downscale_forward.4} parent=35 // pred_check
        %p4342 = pneg %p150
      $region42: #{downscale_forward.4} parent=35 // pred_check_branch
        %4344 = sbr.rel (%p4342) target = $region44
      $region43: #{downscale_forward.4} parent=35 // pred_region
        _
      $region44: #{downscale_forward.4} parent=35 // pred_fallthru
        _
    $region36: #{downscale_forward.4} parent=5 // pred_fallthru
      _
    %p4345 = scmp.le.s32.totalorder 2, %s12
    // Predicated region
    $region45: #{downscale_forward.4} parent=5 // pred_check
      %p4346 = pneg %p4345
    $region46: #{downscale_forward.4} parent=5 // pred_check_branch
      %4348 = sbr.rel (%p4346) target = $region48
    $region47: #{downscale_forward.4} parent=5 // pred_region
      %s4349 = ssub.s32 %s12, 2
      // Predicated region
      $region49: #{downscale_forward.4} parent=47 // pred_check
        %p4350 = pneg %p130
      $region50: #{downscale_forward.4} parent=47 // pred_check_branch
        %4352 = sbr.rel (%p4350) target = $region52
      $region51: #{downscale_forward.4} parent=47 // pred_region
        %p4353 = scmp.lt.s32.totalorder %s18, 1
        %s4354 = scalar_select %p4353, %s18, 1
        %s4355 = smul.addr %s4354, 8
        %s4356 = smul.addr %s4355, 4
        %s4357 = scalar_lea.vmem %s4, %s4356
      $region52: #{downscale_forward.4} parent=47 // pred_fallthru
        _
      // Predicated region
      $region53: #{downscale_forward.4} parent=47 // pred_check
        %p4358 = pneg %p156
      $region54: #{downscale_forward.4} parent=47 // pred_check_branch
        %4360 = sbr.rel (%p4358) target = $region56
      $region55: #{downscale_forward.4} parent=47 // pred_region
        %p4361 = scmp.lt.s32.totalorder %s18, 1
        %s4362 = scalar_select %p4361, %s18, 1
        %s4363 = smul.addr %s4362, 2
        %s4364 = scalar_lea.vmem %s5, %s4363
      $region56: #{downscale_forward.4} parent=47 // pred_fallthru
        _
    $region48: #{downscale_forward.4} parent=5 // pred_fallthru
      _
  $region6: #{downscale_forward.4} parent=0 // loop_footer
    %s16 = sadd.s32 1, %s12
  $region7: #{downscale_forward.4} parent=0 // loop_footer_branch
    %11 = sbr.rel target = $region3
  $region8: #{downscale_forward.4} parent=0 // loop_exit
    _

</llo_original>
